<compile_context>
chip_gen: v5e
topology: v5e:2x2
jax: 0.10.0
libtpu: 0.0.40
codegen_flags: <defaults>
</compile_context>

<pallas_src>
import functools

import numpy as np

import jax
import jax.numpy as jnp
from jax.experimental import pallas as pl
from jax.experimental.pallas import tpu as pltpu


LANE = 128            # K / output-channel padding unit (optimal on v5e; fine on v6e/v7x)
SUBLANE_BF16 = 16     # bf16 sublane packing granularity for the row tile
TM_CAP = 512          # row-tile cap: keeps >=2 grid steps for M>512 (v7x megacore sharding)
VMEM_CAP = 32 * 1024 * 1024
VMEM_FLOOR = 8 * 1024 * 1024


def _round_up(x, m):
    return ((x + m - 1) // m) * m


# ----------------------------------------------------------------------------
# Optional single-buffering of the grid-invariant weight/bias operands (v7x VMEM)
# ----------------------------------------------------------------------------
_WEIGHTS_SINGLE_BUFFERED = None


def _probe_single_buffered_weights():
    """On-device check that pipeline_mode=pl.Buffered(1) is supported; else fall back."""
    try:
        def kern(x_ref, w_ref, o_ref):
            o_ref[...] = x_ref[...] + w_ref[...]

        x = jnp.ones((16, 128), jnp.float32)
        w = jnp.ones((8, 128), jnp.float32)
        out = pl.pallas_call(
            kern,
            out_shape=jax.ShapeDtypeStruct((16, 128), jnp.float32),
            grid=(2,),
            in_specs=[
                pl.BlockSpec((8, 128), lambda i: (i, 0)),
                pl.BlockSpec((8, 128), lambda i: (0, 0), pipeline_mode=pl.Buffered(1)),
            ],
            out_specs=pl.BlockSpec((8, 128), lambda i: (i, 0)),
        )(x, w)
        jax.block_until_ready(out)
        return bool(jnp.all(out == 2.0))
    except Exception:  # feature probe only; default double-buffering is always correct
        return False


def weights_single_buffered():
    global _WEIGHTS_SINGLE_BUFFERED
    if _WEIGHTS_SINGLE_BUFFERED is None:
        _WEIGHTS_SINGLE_BUFFERED = _probe_single_buffered_weights()
    return _WEIGHTS_SINGLE_BUFFERED


def _const_spec(shape, single_buffered):
    """BlockSpec for a grid-invariant (VMEM-resident) operand."""
    if single_buffered:
        return pl.BlockSpec(shape, lambda i: (0, 0), pipeline_mode=pl.Buffered(1))
    return pl.BlockSpec(shape, lambda i: (0, 0))


# ----------------------------------------------------------------------------
# Pallas kernels
# ----------------------------------------------------------------------------
def _apply_act(x, act):
    if act == "lrelu":
        return jnp.where(x >= 0, x, 0.2 * x)
    if act == "tanh":
        return jnp.tanh(x)
    if act == "relu":
        return jnp.maximum(x, 0.0)
    return x  # 'none'


def _gated_fused_kernel(act, cp, x_ref, w_ref, b_ref, o_ref):
    # x: (tm, K_pad) bf16 im2col patches
    # w: (K_pad, 2*cp) bf16 = [feature-weights | gate-weights], lane-padded
    # b: (1, 2*cp) f32
    x = x_ref[...]
    y = jnp.dot(x, w_ref[...], preferred_element_type=jnp.float32) + b_ref[...]
    conv = _apply_act(y[:, :cp], act)              # all elementwise math stays f32
    gate = jax.nn.sigmoid(y[:, cp:])
    o_ref[...] = (conv * gate).astype(o_ref.dtype)  # bf16 store (f32 for final layer)


def _plain_kernel(act, x_ref, w_ref, b_ref, o_ref):
    y = jnp.dot(x_ref[...], w_ref[...], preferred_element_type=jnp.float32) + b_ref[...]
    o_ref[...] = _apply_act(y, act).astype(o_ref.dtype)


def _tiled_matmul_call(kernel_fn, x2d, w, b, out_lanes, out_dtype, transcendental_lanes):
    """Grid over M rows; weights/bias VMEM-resident; lane-dense output."""
    M, K = x2d.shape
    n_out = w.shape[1]
    assert K == w.shape[0]
    assert K % LANE == 0 and n_out % LANE == 0 and out_lanes % LANE == 0

    tm = min(_round_up(max(M, 1), SUBLANE_BF16), TM_CAP)
    M_pad = _round_up(M, tm)
    if M_pad != M:
        x2d = jnp.pad(x2d, ((0, M_pad - M), (0, 0)))
    x2d = x2d.astype(jnp.bfloat16)   # no-op: activations already flow bf16

    single_buf = weights_single_buffered()
    out_isize = jnp.dtype(out_dtype).itemsize
    w_bufs = 1 if single_buf else 2
    footprint = (2 * tm * K * 2                      # double-buffered bf16 x tiles
                 + w_bufs * (K * n_out * 2 + n_out * 4)
                 + 2 * tm * out_lanes * out_isize    # double-buffered out tiles
                 + tm * n_out * 4 + tm * out_lanes * 4)  # f32 matmul / elementwise temps
    vmem_limit = int(min(VMEM_CAP, max(VMEM_FLOOR, 2 * footprint)))

    cost = pl.CostEstimate(
        flops=int(2 * M_pad * K * n_out),
        transcendentals=int(M_pad * transcendental_lanes),
        bytes_accessed=int(x2d.size * 2 + w.size * 2 + b.size * 4
                           + M_pad * out_lanes * out_isize),
    )
    out = pl.pallas_call(
        kernel_fn,
        out_shape=jax.ShapeDtypeStruct((M_pad, out_lanes), out_dtype),
        grid=(M_pad // tm,),
        in_specs=[
            pl.BlockSpec((tm, K), lambda i: (i, 0)),    # streamed bf16 row tiles
            _const_spec((K, n_out), single_buf),        # resident fused weight
            _const_spec((1, n_out), single_buf),        # resident bias
        ],
        out_specs=pl.BlockSpec((tm, out_lanes), lambda i: (i, 0)),
        compiler_params=pltpu.CompilerParams(
            dimension_semantics=("parallel",),          # megacore-shard row tiles
            vmem_limit_bytes=vmem_limit,
        ),
        cost_estimate=cost,
    )(x2d, w, b)
    return out, M


def gated_matmul(x2d, w_fused, b_fused, act, cout, out_dtype):
    cp = w_fused.shape[1] // 2
    trans = cp * (2 if act == "tanh" else 1)   # sigmoid gate (+ tanh feature)
    out, M = _tiled_matmul_call(
        functools.partial(_gated_fused_kernel, act, cp),
        x2d, w_fused, b_fused, cp, out_dtype, trans)
    return out[:M, :cout]      # no-op slice when cout / M already lane / tile aligned


def plain_matmul(x2d, w, b, act, cout, out_dtype):
    cp = w.shape[1]
    trans = cp if act == "tanh" else 0
    out, M = _tiled_matmul_call(
        functools.partial(_plain_kernel, act), x2d, w, b, cp, out_dtype, trans)
    return out[:M, :cout]


# ----------------------------------------------------------------------------
# JAX glue: im2col (K padded) and upsample-fused im2col
# ----------------------------------------------------------------------------
def _out_dim(size, k, stride, pad, dil):
    eff = dil * (k - 1) + 1
    return (size + 2 * pad - eff) // stride + 1


def im2col(x, k, stride, pad, dil):
    """x: (N,H,W,C) bf16 -> (N*Ho*Wo, K_pad) bf16 with K zero-padded to 128 lanes."""
    # TODO(synk): at production resolutions, pull the k*k patch gather into the Pallas
    # pipeline (haloed row-band input blocks + an "arbitrary" tap reduction axis) so each
    # input byte is read from HBM once instead of k^2 times; kept wrapper-side here
    # because the tiny demo shapes (spatial down to 1x1, stride 2/3, dilation up to 16)
    # make the in-kernel strided-slice/reshape path too fragile to land safely.
    N, H, W, C = x.shape
    xp = jnp.pad(x, ((0, 0), (pad, pad), (pad, pad), (0, 0)))
    Ho = _out_dim(H, k, stride, pad, dil)
    Wo = _out_dim(W, k, stride, pad, dil)
    cols = []
    for i in range(k):
        for j in range(k):
            cols.append(
                xp[:,
                   i * dil: i * dil + (Ho - 1) * stride + 1: stride,
                   j * dil: j * dil + (Wo - 1) * stride + 1: stride,
                   :])
    K = k * k * C
    K_pad = _round_up(K, LANE)
    if K_pad != K:
        cols.append(jnp.zeros((N, Ho, Wo, K_pad - K), x.dtype))
    col = jnp.concatenate(cols, axis=-1)             # single fused materialization
    return col.reshape(N * Ho * Wo, K_pad), (N, Ho, Wo)


def im2col_nearest_up2(x, k, stride, pad, dil):
    """2x nearest-upsample fused into the patch gather (no 4x intermediate in HBM)."""
    N, H, W, C = x.shape
    Hu, Wu = 2 * H, 2 * W
    Ho = _out_dim(Hu, k, stride, pad, dil)
    Wo = _out_dim(Wu, k, stride, pad, dil)
    cols = []
    for i in range(k):
        for j in range(k):
            uh = np.arange(Ho) * stride + i * dil - pad     # upsampled-grid coords
            uw = np.arange(Wo) * stride + j * dil - pad
            vh = (uh >= 0) & (uh < Hu)
            vw = (uw >= 0) & (uw < Wu)
            sh = np.clip(uh, 0, Hu - 1) // 2                # nearest source row/col
            sw = np.clip(uw, 0, Wu - 1) // 2
            patch = x[:, sh][:, :, sw]                      # (N, Ho, Wo, C) gather
            valid = vh[:, None] & vw[None, :]
            if not valid.all():                             # zero-pad region of the conv
                patch = patch * jnp.asarray(valid[None, :, :, None], x.dtype)
            cols.append(patch)
    K = k * k * C
    K_pad = _round_up(K, LANE)
    if K_pad != K:
        cols.append(jnp.zeros((N, Ho, Wo, K_pad - K), x.dtype))
    col = jnp.concatenate(cols, axis=-1)
    return col.reshape(N * Ho * Wo, K_pad), (N, Ho, Wo)


# ----------------------------------------------------------------------------
# Layer configs (kind, cin, cout, kernel, stride, pad, dilation, activation)
# ----------------------------------------------------------------------------
def _branch_cfg(cin, L, cout, third_layer):
    return [
        ("gated", cin, L, 7, 1, 3, 1, "lrelu"),
        ("gated", L, 2 * L, 4, 2, 1, 1, "lrelu"),
        third_layer,
        ("gated", 4 * L, 4 * L, 4, 2, 1, 1, "lrelu"),
        ("gated", 4 * L, 4 * L, 3, 1, 1, 1, "lrelu"),
        ("gated", 4 * L, 4 * L, 3, 1, 1, 1, "lrelu"),
        ("gated", 4 * L, 4 * L, 3, 1, 2, 2, "lrelu"),
        ("gated", 4 * L, 4 * L, 3, 1, 4, 4, "lrelu"),
        ("gated", 4 * L, 4 * L, 3, 1, 8, 8, "lrelu"),
        ("gated", 4 * L, 4 * L, 3, 1, 16, 16, "lrelu"),
        ("gated", 4 * L, 4 * L, 3, 1, 1, 1, "lrelu"),
        ("gated", 4 * L, 4 * L, 3, 1, 1, 1, "lrelu"),
        ("transpose", 4 * L, 2 * L, 3, 1, 1, 1, "lrelu"),
        ("gated", 2 * L, 2 * L, 3, 1, 1, 1, "lrelu"),
        ("transpose", 2 * L, L, 3, 1, 1, 1, "lrelu"),
        ("gated", L, cout, 7, 1, 3, 1, "tanh"),  # norm='norm' -> identity
    ]


def coarse_cfg(cin, L, cout):
    return _branch_cfg(cin, L, cout, ("gated", 2 * L, 4 * L, 4, 3, 1, 1, "lrelu"))


def refine_cfg(cin, L, cout):
    return _branch_cfg(cin, L, cout, ("gated", 2 * L, 4 * L, 3, 1, 1, 1, "lrelu"))


def init_branch_params(key, cfg):
    params = []
    for (kind, cin, cout, k, _s, _p, _d, _act) in cfg:
        key, k1, k2 = jax.random.split(key, 3)
        K = k * k * cin
        K_pad = _round_up(K, LANE)       # K rows padded with zeros -> lane-dense MXU feed
        cp = _round_up(cout, LANE)
        if kind == "gated":
            wf = 0.05 * jax.random.normal(k1, (K, cout), jnp.float32)
            wg = 0.05 * jax.random.normal(k2, (K, cout), jnp.float32)
            wf = jnp.pad(wf, ((0, K_pad - K), (0, cp - cout)))
            wg = jnp.pad(wg, ((0, K_pad - K), (0, cp - cout)))
            params.append(dict(
                w=jnp.concatenate([wf, wg], axis=1).astype(jnp.bfloat16),
                b=jnp.zeros((1, 2 * cp), jnp.float32)))
        else:  # transpose (nearest-upsample + plain conv)
            w = 0.05 * jax.random.normal(k1, (K, cout), jnp.float32)
            w = jnp.pad(w, ((0, K_pad - K), (0, cp - cout)))
            params.append(dict(
                w=w.astype(jnp.bfloat16),
                b=jnp.zeros((1, cp), jnp.float32)))
    return params


def run_branch(x, params, cfg):
    x = x.astype(jnp.bfloat16)                 # activations flow bf16 between layers
    n_layers = len(cfg)
    for idx, ((kind, _cin, cout, k, s, p, d, act), pr) in enumerate(zip(cfg, params)):
        out_dtype = jnp.float32 if idx == n_layers - 1 else jnp.bfloat16
        if kind == "transpose":
            cols, (N, Ho, Wo) = im2col_nearest_up2(x, k, s, p, d)
            y = plain_matmul(cols, pr["w"], pr["b"], act, cout, out_dtype)
        else:
            cols, (N, Ho, Wo) = im2col(x, k, s, p, d)
            y = gated_matmul(cols, pr["w"], pr["b"], act, cout, out_dtype)
        x = y.reshape(N, Ho, Wo, cout)
    return x


# ----------------------------------------------------------------------------
# GatedGenerator forward
# ----------------------------------------------------------------------------
def gated_generator_forward(params, img_nchw, mask_nchw, cfgs):
    c_cfg, r_cfg = cfgs
    img = jnp.transpose(img_nchw, (0, 2, 3, 1))    # NCHW -> NHWC
    mask = jnp.transpose(mask_nchw, (0, 2, 3, 1))

    first_masked_img = img * (1.0 - mask) + mask
    coarse_input = jnp.concatenate([first_masked_img, mask], axis=-1)
    coarse_out = run_branch(coarse_input, params["coarse"], c_cfg)

    # TODO(synk): the PyTorch coarse branch downsamples by 12x but only upsamples by 4x,
    # so `img*(1-mask)+coarse_out` cannot broadcast in the reference either; nearest-
    # upsample coarse_out back to the image grid to keep the refine stage well-defined.
    factor = img.shape[1] // coarse_out.shape[1]
    coarse_up = coarse_out
    if factor > 1:
        coarse_up = jnp.repeat(jnp.repeat(coarse_out, factor, axis=1), factor, axis=2)

    refine_masked_img = img * (1.0 - mask) + coarse_up
    refine_input = jnp.concatenate([refine_masked_img, mask], axis=-1)
    refine_out = run_branch(refine_input, params["refinement"], r_cfg)

    return (
        jnp.transpose(coarse_out, (0, 3, 1, 2)),   # back to NCHW, f32
        jnp.transpose(refine_out, (0, 3, 1, 2)),
    )


# ----------------------------------------------------------------------------
# Demo
# ----------------------------------------------------------------------------
if __name__ == "__main__":
    # Feature probe (runs one tiny eager pallas_call): single-buffer resident weights
    # via pl.Buffered(1) if this JAX/Mosaic build supports it, else default buffering.
    weights_single_buffered()

    # small config: img 3ch + mask 1ch => in_channels=4, latent=8, out_channels=3
    N, C_IMG, H, W = 2, 3, 12, 12
    IN_CH, LATENT, OUT_CH = C_IMG + 1, 8, C_IMG

    c_cfg = coarse_cfg(IN_CH, LATENT, OUT_CH)
    r_cfg = refine_cfg(IN_CH, LATENT, OUT_CH)

    key = jax.random.PRNGKey(0)
    k_img, k_mask, k_c, k_r = jax.random.split(key, 4)
    img = jax.random.uniform(k_img, (N, C_IMG, H, W), jnp.float32)
    mask = (jax.random.uniform(k_mask, (N, 1, H, W)) > 0.5).astype(jnp.float32)

    params = dict(
        coarse=init_branch_params(k_c, c_cfg),
        refinement=init_branch_params(k_r, r_cfg),
    )

    fwd = jax.jit(functools.partial(gated_generator_forward, cfgs=(c_cfg, r_cfg)))
    coarse_out, refine_out = fwd(params, img, mask)
    jax.block_until_ready((coarse_out, refine_out))

    assert coarse_out.shape == (N, OUT_CH, 4, 4), coarse_out.shape
    assert refine_out.shape == (N, OUT_CH, H, W), refine_out.shape
    assert jnp.all(jnp.isfinite(coarse_out)) and jnp.all(jnp.isfinite(refine_out))
    print("KERNEL_OK")
</pallas_src>

<mosaic_0001>
module attributes {stable_mosaic.version = 11 : i64} {
  func.func @kern(%arg0: i32, %arg1: memref<8x128xf32, #tpu.memory_space<vmem>>, %arg2: memref<8x128xf32, #tpu.memory_space<vmem>>, %arg3: memref<8x128xf32, #tpu.memory_space<vmem>>) attributes {dimension_semantics = [#tpu.dimension_semantics<arbitrary>], iteration_bounds = array<i64: 2>, scalar_prefetch = 0 : i64, scratch_operands = 0 : i64, tpu.core_type = #tpu.core_type<tc>, window_params = [{transform_indices = @transform_0, window_bounds = array<i64: 8, 128>}, {pipeline_mode = #tpu.pipeline_mode<synchronous>, transform_indices = @transform_1, window_bounds = array<i64: 8, 128>}, {transform_indices = @transform_2, window_bounds = array<i64: 8, 128>}]} {
    %c0 = arith.constant 0 : index
    %c0_0 = arith.constant 0 : index
    %0 = vector.load %arg1[%c0, %c0_0] : memref<8x128xf32, #tpu.memory_space<vmem>>, vector<8x128xf32>
    %c0_1 = arith.constant 0 : index
    %c0_2 = arith.constant 0 : index
    %1 = vector.load %arg2[%c0_1, %c0_2] : memref<8x128xf32, #tpu.memory_space<vmem>>, vector<8x128xf32>
    %2 = arith.addf %0, %1 : vector<8x128xf32>
    %c0_3 = arith.constant 0 : index
    %c0_4 = arith.constant 0 : index
    %3 = vector.load %arg3[%c0_3, %c0_4] : memref<8x128xf32, #tpu.memory_space<vmem>>, vector<8x128xf32>
    tpu.vector_store %arg3[%c0_3, %c0_4], %2 {strides = array<i32>} : memref<8x128xf32, #tpu.memory_space<vmem>>, vector<8x128xf32>,
    return
  }
  func.func @transform_0(%arg0: i32) -> (i32, i32) {
    %c0_i32 = arith.constant 0 : i32
    %c0_i32_0 = arith.constant 0 : i32
    return %arg0, %c0_i32 : i32, i32
  }
  func.func @transform_1(%arg0: i32) -> (i32, i32) {
    %c0_i32 = arith.constant 0 : i32
    %c0_i32_0 = arith.constant 0 : i32
    %c0_i32_1 = arith.constant 0 : i32
    return %c0_i32, %c0_i32_0 : i32, i32
  }
  func.func @transform_2(%arg0: i32) -> (i32, i32) {
    %c0_i32 = arith.constant 0 : i32
    %c0_i32_0 = arith.constant 0 : i32
    return %arg0, %c0_i32 : i32, i32
  }
}

module attributes {stable_mosaic.version = 11 : i64} {
  func.func @_gated_fused_kernel(%arg0: i32, %arg1: memref<288x256xbf16, #tpu.memory_space<vmem>>, %arg2: memref<256x256xbf16, #tpu.memory_space<vmem>>, %arg3: memref<1x256xf32, #tpu.memory_space<vmem>>, %arg4: memref<288x128xbf16, #tpu.memory_space<vmem>>) attributes {dimension_semantics = [#tpu.dimension_semantics<parallel>], iteration_bounds = array<i64: 1>, scalar_prefetch = 0 : i64, scratch_operands = 0 : i64, tpu.core_type = #tpu.core_type<tc>, window_params = [{transform_indices = @transform_0, window_bounds = array<i64: 288, 256>}, {pipeline_mode = #tpu.pipeline_mode<synchronous>, transform_indices = @transform_1, window_bounds = array<i64: 256, 256>}, {pipeline_mode = #tpu.pipeline_mode<synchronous>, transform_indices = @transform_2, window_bounds = array<i64: 1, 256>}, {transform_indices = @transform_3, window_bounds = array<i64: 288, 128>}]} {
    %c0 = arith.constant 0 : index
    %c0_0 = arith.constant 0 : index
    %0 = vector.load %arg1[%c0, %c0_0] : memref<288x256xbf16, #tpu.memory_space<vmem>>, vector<288x256xbf16>
    %c0_1 = arith.constant 0 : index
    %c0_2 = arith.constant 0 : index
    %1 = vector.load %arg2[%c0_1, %c0_2] : memref<256x256xbf16, #tpu.memory_space<vmem>>, vector<256x256xbf16>
    %cst = arith.constant dense<0.000000e+00> : vector<288x256xf32>
    %2 = tpu.matmul %0, %1, %cst {dimension_numbers = #tpu.dot_dimension_numbers<[1], [0], [0], [1], [0, 0, 1, 1], [], []>} : vector<288x256xbf16>, vector<256x256xbf16>, vector<288x256xf32> -> vector<288x256xf32>
    %c0_3 = arith.constant 0 : index
    %c0_4 = arith.constant 0 : index
    %3 = vector.load %arg3[%c0_3, %c0_4] : memref<1x256xf32, #tpu.memory_space<vmem>>, vector<1x256xf32>
    %4 = vector.broadcast %3 : vector<1x256xf32> to vector<288x256xf32>
    %5 = arith.addf %2, %4 : vector<288x256xf32>
    %6 = vector.extract_strided_slice %5 {offsets = [0, 0], sizes = [288, 128], strides = [1, 1]} : vector<288x256xf32> to vector<288x128xf32>
    %cst_5 = arith.constant 0.000000e+00 : f32
    %7 = vector.broadcast %cst_5 : f32 to vector<288x128xf32>
    %8 = arith.cmpf oge, %6, %7 : vector<288x128xf32>
    %cst_6 = arith.constant 2.000000e-01 : f32
    %9 = vector.broadcast %cst_6 : f32 to vector<288x128xf32>
    %10 = arith.mulf %9, %6 : vector<288x128xf32>
    %11 = arith.select %8, %6, %10 : vector<288x128xi1>, vector<288x128xf32>
    %12 = vector.extract_strided_slice %5 {offsets = [0, 128], sizes = [288, 128], strides = [1, 1]} : vector<288x256xf32> to vector<288x128xf32>
    %13 = arith.negf %12 : vector<288x128xf32>
    %14 = math.exp %13 : vector<288x128xf32>
    %cst_7 = arith.constant 1.000000e+00 : f32
    %15 = vector.broadcast %cst_7 : f32 to vector<288x128xf32>
    %16 = arith.addf %15, %14 : vector<288x128xf32>
    %17 = arith.divf %15, %16 : vector<288x128xf32>
    %18 = arith.mulf %11, %17 : vector<288x128xf32>
    %19 = arith.truncf %18 : vector<288x128xf32> to vector<288x128xbf16>
    %c0_8 = arith.constant 0 : index
    %c0_9 = arith.constant 0 : index
    %20 = vector.load %arg4[%c0_8, %c0_9] : memref<288x128xbf16, #tpu.memory_space<vmem>>, vector<288x128xbf16>
    tpu.vector_store %arg4[%c0_8, %c0_9], %19 {strides = array<i32>} : memref<288x128xbf16, #tpu.memory_space<vmem>>, vector<288x128xbf16>,
    return
  }
  func.func @transform_0(%arg0: i32) -> (i32, i32) {
    %c0_i32 = arith.constant 0 : i32
    %c0_i32_0 = arith.constant 0 : i32
    return %arg0, %c0_i32 : i32, i32
  }
  func.func @transform_1(%arg0: i32) -> (i32, i32) {
    %c0_i32 = arith.constant 0 : i32
    %c0_i32_0 = arith.constant 0 : i32
    %c0_i32_1 = arith.constant 0 : i32
    return %c0_i32, %c0_i32_0 : i32, i32
  }
  func.func @transform_2(%arg0: i32) -> (i32, i32) {
    %c0_i32 = arith.constant 0 : i32
    %c0_i32_0 = arith.constant 0 : i32
    %c0_i32_1 = arith.constant 0 : i32
    return %c0_i32, %c0_i32_0 : i32, i32
  }
  func.func @transform_3(%arg0: i32) -> (i32, i32) {
    %c0_i32 = arith.constant 0 : i32
    %c0_i32_0 = arith.constant 0 : i32
    return %arg0, %c0_i32 : i32, i32
  }
}

module attributes {stable_mosaic.version = 11 : i64} {
  func.func @_gated_fused_kernel(%arg0: i32, %arg1: memref<80x128xbf16, #tpu.memory_space<vmem>>, %arg2: memref<128x256xbf16, #tpu.memory_space<vmem>>, %arg3: memref<1x256xf32, #tpu.memory_space<vmem>>, %arg4: memref<80x128xbf16, #tpu.memory_space<vmem>>) attributes {dimension_semantics = [#tpu.dimension_semantics<parallel>], iteration_bounds = array<i64: 1>, scalar_prefetch = 0 : i64, scratch_operands = 0 : i64, tpu.core_type = #tpu.core_type<tc>, window_params = [{transform_indices = @transform_0, window_bounds = array<i64: 80, 128>}, {pipeline_mode = #tpu.pipeline_mode<synchronous>, transform_indices = @transform_1, window_bounds = array<i64: 128, 256>}, {pipeline_mode = #tpu.pipeline_mode<synchronous>, transform_indices = @transform_2, window_bounds = array<i64: 1, 256>}, {transform_indices = @transform_3, window_bounds = array<i64: 80, 128>}]} {
    %c0 = arith.constant 0 : index
    %c0_0 = arith.constant 0 : index
    %0 = vector.load %arg1[%c0, %c0_0] : memref<80x128xbf16, #tpu.memory_space<vmem>>, vector<80x128xbf16>
    %c0_1 = arith.constant 0 : index
    %c0_2 = arith.constant 0 : index
    %1 = vector.load %arg2[%c0_1, %c0_2] : memref<128x256xbf16, #tpu.memory_space<vmem>>, vector<128x256xbf16>
    %cst = arith.constant dense<0.000000e+00> : vector<80x256xf32>
    %2 = tpu.matmul %0, %1, %cst {dimension_numbers = #tpu.dot_dimension_numbers<[1], [0], [0], [1], [0, 0, 1, 1], [], []>} : vector<80x128xbf16>, vector<128x256xbf16>, vector<80x256xf32> -> vector<80x256xf32>
    %c0_3 = arith.constant 0 : index
    %c0_4 = arith.constant 0 : index
    %3 = vector.load %arg3[%c0_3, %c0_4] : memref<1x256xf32, #tpu.memory_space<vmem>>, vector<1x256xf32>
    %4 = vector.broadcast %3 : vector<1x256xf32> to vector<80x256xf32>
    %5 = arith.addf %2, %4 : vector<80x256xf32>
    %6 = vector.extract_strided_slice %5 {offsets = [0, 0], sizes = [80, 128], strides = [1, 1]} : vector<80x256xf32> to vector<80x128xf32>
    %cst_5 = arith.constant 0.000000e+00 : f32
    %7 = vector.broadcast %cst_5 : f32 to vector<80x128xf32>
    %8 = arith.cmpf oge, %6, %7 : vector<80x128xf32>
    %cst_6 = arith.constant 2.000000e-01 : f32
    %9 = vector.broadcast %cst_6 : f32 to vector<80x128xf32>
    %10 = arith.mulf %9, %6 : vector<80x128xf32>
    %11 = arith.select %8, %6, %10 : vector<80x128xi1>, vector<80x128xf32>
    %12 = vector.extract_strided_slice %5 {offsets = [0, 128], sizes = [80, 128], strides = [1, 1]} : vector<80x256xf32> to vector<80x128xf32>
    %13 = arith.negf %12 : vector<80x128xf32>
    %14 = math.exp %13 : vector<80x128xf32>
    %cst_7 = arith.constant 1.000000e+00 : f32
    %15 = vector.broadcast %cst_7 : f32 to vector<80x128xf32>
    %16 = arith.addf %15, %14 : vector<80x128xf32>
    %17 = arith.divf %15, %16 : vector<80x128xf32>
    %18 = arith.mulf %11, %17 : vector<80x128xf32>
    %19 = arith.truncf %18 : vector<80x128xf32> to vector<80x128xbf16>
    %c0_8 = arith.constant 0 : index
    %c0_9 = arith.constant 0 : index
    %20 = vector.load %arg4[%c0_8, %c0_9] : memref<80x128xbf16, #tpu.memory_space<vmem>>, vector<80x128xbf16>
    tpu.vector_store %arg4[%c0_8, %c0_9], %19 {strides = array<i32>} : memref<80x128xbf16, #tpu.memory_space<vmem>>, vector<80x128xbf16>,
    return
  }
  func.func @transform_0(%arg0: i32) -> (i32, i32) {
    %c0_i32 = arith.constant 0 : i32
    %c0_i32_0 = arith.constant 0 : i32
    return %arg0, %c0_i32 : i32, i32
  }
  func.func @transform_1(%arg0: i32) -> (i32, i32) {
    %c0_i32 = arith.constant 0 : i32
    %c0_i32_0 = arith.constant 0 : i32
    %c0_i32_1 = arith.constant 0 : i32
    return %c0_i32, %c0_i32_0 : i32, i32
  }
  func.func @transform_2(%arg0: i32) -> (i32, i32) {
    %c0_i32 = arith.constant 0 : i32
    %c0_i32_0 = arith.constant 0 : i32
    %c0_i32_1 = arith.constant 0 : i32
    return %c0_i32, %c0_i32_0 : i32, i32
  }
  func.func @transform_3(%arg0: i32) -> (i32, i32) {
    %c0_i32 = arith.constant 0 : i32
    %c0_i32_0 = arith.constant 0 : i32
    return %arg0, %c0_i32 : i32, i32
  }
}

module attributes {stable_mosaic.version = 11 : i64} {
  func.func @_gated_fused_kernel(%arg0: i32, %arg1: memref<16x256xbf16, #tpu.memory_space<vmem>>, %arg2: memref<256x256xbf16, #tpu.memory_space<vmem>>, %arg3: memref<1x256xf32, #tpu.memory_space<vmem>>, %arg4: memref<16x128xbf16, #tpu.memory_space<vmem>>) attributes {dimension_semantics = [#tpu.dimension_semantics<parallel>], iteration_bounds = array<i64: 1>, scalar_prefetch = 0 : i64, scratch_operands = 0 : i64, tpu.core_type = #tpu.core_type<tc>, window_params = [{transform_indices = @transform_0, window_bounds = array<i64: 16, 256>}, {pipeline_mode = #tpu.pipeline_mode<synchronous>, transform_indices = @transform_1, window_bounds = array<i64: 256, 256>}, {pipeline_mode = #tpu.pipeline_mode<synchronous>, transform_indices = @transform_2, window_bounds = array<i64: 1, 256>}, {transform_indices = @transform_3, window_bounds = array<i64: 16, 128>}]} {
    %c0 = arith.constant 0 : index
    %c0_0 = arith.constant 0 : index
    %0 = vector.load %arg1[%c0, %c0_0] : memref<16x256xbf16, #tpu.memory_space<vmem>>, vector<16x256xbf16>
    %c0_1 = arith.constant 0 : index
    %c0_2 = arith.constant 0 : index
    %1 = vector.load %arg2[%c0_1, %c0_2] : memref<256x256xbf16, #tpu.memory_space<vmem>>, vector<256x256xbf16>
    %cst = arith.constant dense<0.000000e+00> : vector<16x256xf32>
    %2 = tpu.matmul %0, %1, %cst {dimension_numbers = #tpu.dot_dimension_numbers<[1], [0], [0], [1], [0, 0, 1, 1], [], []>} : vector<16x256xbf16>, vector<256x256xbf16>, vector<16x256xf32> -> vector<16x256xf32>
    %c0_3 = arith.constant 0 : index
    %c0_4 = arith.constant 0 : index
    %3 = vector.load %arg3[%c0_3, %c0_4] : memref<1x256xf32, #tpu.memory_space<vmem>>, vector<1x256xf32>
    %4 = vector.broadcast %3 : vector<1x256xf32> to vector<16x256xf32>
    %5 = arith.addf %2, %4 : vector<16x256xf32>
    %6 = vector.extract_strided_slice %5 {offsets = [0, 0], sizes = [16, 128], strides = [1, 1]} : vector<16x256xf32> to vector<16x128xf32>
    %cst_5 = arith.constant 0.000000e+00 : f32
    %7 = vector.broadcast %cst_5 : f32 to vector<16x128xf32>
    %8 = arith.cmpf oge, %6, %7 : vector<16x128xf32>
    %cst_6 = arith.constant 2.000000e-01 : f32
    %9 = vector.broadcast %cst_6 : f32 to vector<16x128xf32>
    %10 = arith.mulf %9, %6 : vector<16x128xf32>
    %11 = arith.select %8, %6, %10 : vector<16x128xi1>, vector<16x128xf32>
    %12 = vector.extract_strided_slice %5 {offsets = [0, 128], sizes = [16, 128], strides = [1, 1]} : vector<16x256xf32> to vector<16x128xf32>
    %13 = arith.negf %12 : vector<16x128xf32>
    %14 = math.exp %13 : vector<16x128xf32>
    %cst_7 = arith.constant 1.000000e+00 : f32
    %15 = vector.broadcast %cst_7 : f32 to vector<16x128xf32>
    %16 = arith.addf %15, %14 : vector<16x128xf32>
    %17 = arith.divf %15, %16 : vector<16x128xf32>
    %18 = arith.mulf %11, %17 : vector<16x128xf32>
    %19 = arith.truncf %18 : vector<16x128xf32> to vector<16x128xbf16>
    %c0_8 = arith.constant 0 : index
    %c0_9 = arith.constant 0 : index
    %20 = vector.load %arg4[%c0_8, %c0_9] : memref<16x128xbf16, #tpu.memory_space<vmem>>, vector<16x128xbf16>
    tpu.vector_store %arg4[%c0_8, %c0_9], %19 {strides = array<i32>} : memref<16x128xbf16, #tpu.memory_space<vmem>>, vector<16x128xbf16>,
    return
  }
  func.func @transform_0(%arg0: i32) -> (i32, i32) {
    %c0_i32 = arith.constant 0 : i32
    %c0_i32_0 = arith.constant 0 : i32
    return %arg0, %c0_i32 : i32, i32
  }
  func.func @transform_1(%arg0: i32) -> (i32, i32) {
    %c0_i32 = arith.constant 0 : i32
    %c0_i32_0 = arith.constant 0 : i32
    %c0_i32_1 = arith.constant 0 : i32
    return %c0_i32, %c0_i32_0 : i32, i32
  }
  func.func @transform_2(%arg0: i32) -> (i32, i32) {
    %c0_i32 = arith.constant 0 : i32
    %c0_i32_0 = arith.constant 0 : i32
    %c0_i32_1 = arith.constant 0 : i32
    return %c0_i32, %c0_i32_0 : i32, i32
  }
  func.func @transform_3(%arg0: i32) -> (i32, i32) {
    %c0_i32 = arith.constant 0 : i32
    %c0_i32_0 = arith.constant 0 : i32
    return %arg0, %c0_i32 : i32, i32
  }
}

module attributes {stable_mosaic.version = 11 : i64} {
  func.func @_gated_fused_kernel(%arg0: i32, %arg1: memref<16x512xbf16, #tpu.memory_space<vmem>>, %arg2: memref<512x256xbf16, #tpu.memory_space<vmem>>, %arg3: memref<1x256xf32, #tpu.memory_space<vmem>>, %arg4: memref<16x128xbf16, #tpu.memory_space<vmem>>) attributes {dimension_semantics = [#tpu.dimension_semantics<parallel>], iteration_bounds = array<i64: 1>, scalar_prefetch = 0 : i64, scratch_operands = 0 : i64, tpu.core_type = #tpu.core_type<tc>, window_params = [{transform_indices = @transform_0, window_bounds = array<i64: 16, 512>}, {pipeline_mode = #tpu.pipeline_mode<synchronous>, transform_indices = @transform_1, window_bounds = array<i64: 512, 256>}, {pipeline_mode = #tpu.pipeline_mode<synchronous>, transform_indices = @transform_2, window_bounds = array<i64: 1, 256>}, {transform_indices = @transform_3, window_bounds = array<i64: 16, 128>}]} {
    %c0 = arith.constant 0 : index
    %c0_0 = arith.constant 0 : index
    %0 = vector.load %arg1[%c0, %c0_0] : memref<16x512xbf16, #tpu.memory_space<vmem>>, vector<16x512xbf16>
    %c0_1 = arith.constant 0 : index
    %c0_2 = arith.constant 0 : index
    %1 = vector.load %arg2[%c0_1, %c0_2] : memref<512x256xbf16, #tpu.memory_space<vmem>>, vector<512x256xbf16>
    %cst = arith.constant dense<0.000000e+00> : vector<16x256xf32>
    %2 = tpu.matmul %0, %1, %cst {dimension_numbers = #tpu.dot_dimension_numbers<[1], [0], [0], [1], [0, 0, 1, 1], [], []>} : vector<16x512xbf16>, vector<512x256xbf16>, vector<16x256xf32> -> vector<16x256xf32>
    %c0_3 = arith.constant 0 : index
    %c0_4 = arith.constant 0 : index
    %3 = vector.load %arg3[%c0_3, %c0_4] : memref<1x256xf32, #tpu.memory_space<vmem>>, vector<1x256xf32>
    %4 = vector.broadcast %3 : vector<1x256xf32> to vector<16x256xf32>
    %5 = arith.addf %2, %4 : vector<16x256xf32>
    %6 = vector.extract_strided_slice %5 {offsets = [0, 0], sizes = [16, 128], strides = [1, 1]} : vector<16x256xf32> to vector<16x128xf32>
    %cst_5 = arith.constant 0.000000e+00 : f32
    %7 = vector.broadcast %cst_5 : f32 to vector<16x128xf32>
    %8 = arith.cmpf oge, %6, %7 : vector<16x128xf32>
    %cst_6 = arith.constant 2.000000e-01 : f32
    %9 = vector.broadcast %cst_6 : f32 to vector<16x128xf32>
    %10 = arith.mulf %9, %6 : vector<16x128xf32>
    %11 = arith.select %8, %6, %10 : vector<16x128xi1>, vector<16x128xf32>
    %12 = vector.extract_strided_slice %5 {offsets = [0, 128], sizes = [16, 128], strides = [1, 1]} : vector<16x256xf32> to vector<16x128xf32>
    %13 = arith.negf %12 : vector<16x128xf32>
    %14 = math.exp %13 : vector<16x128xf32>
    %cst_7 = arith.constant 1.000000e+00 : f32
    %15 = vector.broadcast %cst_7 : f32 to vector<16x128xf32>
    %16 = arith.addf %15, %14 : vector<16x128xf32>
    %17 = arith.divf %15, %16 : vector<16x128xf32>
    %18 = arith.mulf %11, %17 : vector<16x128xf32>
    %19 = arith.truncf %18 : vector<16x128xf32> to vector<16x128xbf16>
    %c0_8 = arith.constant 0 : index
    %c0_9 = arith.constant 0 : index
    %20 = vector.load %arg4[%c0_8, %c0_9] : memref<16x128xbf16, #tpu.memory_space<vmem>>, vector<16x128xbf16>
    tpu.vector_store %arg4[%c0_8, %c0_9], %19 {strides = array<i32>} : memref<16x128xbf16, #tpu.memory_space<vmem>>, vector<16x128xbf16>,
    return
  }
  func.func @transform_0(%arg0: i32) -> (i32, i32) {
    %c0_i32 = arith.constant 0 : i32
    %c0_i32_0 = arith.constant 0 : i32
    return %arg0, %c0_i32 : i32, i32
  }
  func.func @transform_1(%arg0: i32) -> (i32, i32) {
    %c0_i32 = arith.constant 0 : i32
    %c0_i32_0 = arith.constant 0 : i32
    %c0_i32_1 = arith.constant 0 : i32
    return %c0_i32, %c0_i32_0 : i32, i32
  }
  func.func @transform_2(%arg0: i32) -> (i32, i32) {
    %c0_i32 = arith.constant 0 : i32
    %c0_i32_0 = arith.constant 0 : i32
    %c0_i32_1 = arith.constant 0 : i32
    return %c0_i32, %c0_i32_0 : i32, i32
  }
  func.func @transform_3(%arg0: i32) -> (i32, i32) {
    %c0_i32 = arith.constant 0 : i32
    %c0_i32_0 = arith.constant 0 : i32
    return %arg0, %c0_i32 : i32, i32
  }
}

module attributes {stable_mosaic.version = 11 : i64} {
  func.func @_gated_fused_kernel(%arg0: i32, %arg1: memref<16x384xbf16, #tpu.memory_space<vmem>>, %arg2: memref<384x256xbf16, #tpu.memory_space<vmem>>, %arg3: memref<1x256xf32, #tpu.memory_space<vmem>>, %arg4: memref<16x128xbf16, #tpu.memory_space<vmem>>) attributes {dimension_semantics = [#tpu.dimension_semantics<parallel>], iteration_bounds = array<i64: 1>, scalar_prefetch = 0 : i64, scratch_operands = 0 : i64, tpu.core_type = #tpu.core_type<tc>, window_params = [{transform_indices = @transform_0, window_bounds = array<i64: 16, 384>}, {pipeline_mode = #tpu.pipeline_mode<synchronous>, transform_indices = @transform_1, window_bounds = array<i64: 384, 256>}, {pipeline_mode = #tpu.pipeline_mode<synchronous>, transform_indices = @transform_2, window_bounds = array<i64: 1, 256>}, {transform_indices = @transform_3, window_bounds = array<i64: 16, 128>}]} {
    %c0 = arith.constant 0 : index
    %c0_0 = arith.constant 0 : index
    %0 = vector.load %arg1[%c0, %c0_0] : memref<16x384xbf16, #tpu.memory_space<vmem>>, vector<16x384xbf16>
    %c0_1 = arith.constant 0 : index
    %c0_2 = arith.constant 0 : index
    %1 = vector.load %arg2[%c0_1, %c0_2] : memref<384x256xbf16, #tpu.memory_space<vmem>>, vector<384x256xbf16>
    %cst = arith.constant dense<0.000000e+00> : vector<16x256xf32>
    %2 = tpu.matmul %0, %1, %cst {dimension_numbers = #tpu.dot_dimension_numbers<[1], [0], [0], [1], [0, 0, 1, 1], [], []>} : vector<16x384xbf16>, vector<384x256xbf16>, vector<16x256xf32> -> vector<16x256xf32>
    %c0_3 = arith.constant 0 : index
    %c0_4 = arith.constant 0 : index
    %3 = vector.load %arg3[%c0_3, %c0_4] : memref<1x256xf32, #tpu.memory_space<vmem>>, vector<1x256xf32>
    %4 = vector.broadcast %3 : vector<1x256xf32> to vector<16x256xf32>
    %5 = arith.addf %2, %4 : vector<16x256xf32>
    %6 = vector.extract_strided_slice %5 {offsets = [0, 0], sizes = [16, 128], strides = [1, 1]} : vector<16x256xf32> to vector<16x128xf32>
    %cst_5 = arith.constant 0.000000e+00 : f32
    %7 = vector.broadcast %cst_5 : f32 to vector<16x128xf32>
    %8 = arith.cmpf oge, %6, %7 : vector<16x128xf32>
    %cst_6 = arith.constant 2.000000e-01 : f32
    %9 = vector.broadcast %cst_6 : f32 to vector<16x128xf32>
    %10 = arith.mulf %9, %6 : vector<16x128xf32>
    %11 = arith.select %8, %6, %10 : vector<16x128xi1>, vector<16x128xf32>
    %12 = vector.extract_strided_slice %5 {offsets = [0, 128], sizes = [16, 128], strides = [1, 1]} : vector<16x256xf32> to vector<16x128xf32>
    %13 = arith.negf %12 : vector<16x128xf32>
    %14 = math.exp %13 : vector<16x128xf32>
    %cst_7 = arith.constant 1.000000e+00 : f32
    %15 = vector.broadcast %cst_7 : f32 to vector<16x128xf32>
    %16 = arith.addf %15, %14 : vector<16x128xf32>
    %17 = arith.divf %15, %16 : vector<16x128xf32>
    %18 = arith.mulf %11, %17 : vector<16x128xf32>
    %19 = arith.truncf %18 : vector<16x128xf32> to vector<16x128xbf16>
    %c0_8 = arith.constant 0 : index
    %c0_9 = arith.constant 0 : index
    %20 = vector.load %arg4[%c0_8, %c0_9] : memref<16x128xbf16, #tpu.memory_space<vmem>>, vector<16x128xbf16>
    tpu.vector_store %arg4[%c0_8, %c0_9], %19 {strides = array<i32>} : memref<16x128xbf16, #tpu.memory_space<vmem>>, vector<16x128xbf16>,
    return
  }
  func.func @transform_0(%arg0: i32) -> (i32, i32) {
    %c0_i32 = arith.constant 0 : i32
    %c0_i32_0 = arith.constant 0 : i32
    return %arg0, %c0_i32 : i32, i32
  }
  func.func @transform_1(%arg0: i32) -> (i32, i32) {
    %c0_i32 = arith.constant 0 : i32
    %c0_i32_0 = arith.constant 0 : i32
    %c0_i32_1 = arith.constant 0 : i32
    return %c0_i32, %c0_i32_0 : i32, i32
  }
  func.func @transform_2(%arg0: i32) -> (i32, i32) {
    %c0_i32 = arith.constant 0 : i32
    %c0_i32_0 = arith.constant 0 : i32
    %c0_i32_1 = arith.constant 0 : i32
    return %c0_i32, %c0_i32_0 : i32, i32
  }
  func.func @transform_3(%arg0: i32) -> (i32, i32) {
    %c0_i32 = arith.constant 0 : i32
    %c0_i32_0 = arith.constant 0 : i32
    return %arg0, %c0_i32 : i32, i32
  }
}

module attributes {stable_mosaic.version = 11 : i64} {
  func.func @_plain_kernel(%arg0: i32, %arg1: memref<16x384xbf16, #tpu.memory_space<vmem>>, %arg2: memref<384x128xbf16, #tpu.memory_space<vmem>>, %arg3: memref<1x128xf32, #tpu.memory_space<vmem>>, %arg4: memref<16x128xbf16, #tpu.memory_space<vmem>>) attributes {dimension_semantics = [#tpu.dimension_semantics<parallel>], iteration_bounds = array<i64: 1>, scalar_prefetch = 0 : i64, scratch_operands = 0 : i64, tpu.core_type = #tpu.core_type<tc>, window_params = [{transform_indices = @transform_0, window_bounds = array<i64: 16, 384>}, {pipeline_mode = #tpu.pipeline_mode<synchronous>, transform_indices = @transform_1, window_bounds = array<i64: 384, 128>}, {pipeline_mode = #tpu.pipeline_mode<synchronous>, transform_indices = @transform_2, window_bounds = array<i64: 1, 128>}, {transform_indices = @transform_3, window_bounds = array<i64: 16, 128>}]} {
    %c0 = arith.constant 0 : index
    %c0_0 = arith.constant 0 : index
    %0 = vector.load %arg1[%c0, %c0_0] : memref<16x384xbf16, #tpu.memory_space<vmem>>, vector<16x384xbf16>
    %c0_1 = arith.constant 0 : index
    %c0_2 = arith.constant 0 : index
    %1 = vector.load %arg2[%c0_1, %c0_2] : memref<384x128xbf16, #tpu.memory_space<vmem>>, vector<384x128xbf16>
    %cst = arith.constant dense<0.000000e+00> : vector<16x128xf32>
    %2 = tpu.matmul %0, %1, %cst {dimension_numbers = #tpu.dot_dimension_numbers<[1], [0], [0], [1], [0, 0, 1, 1], [], []>} : vector<16x384xbf16>, vector<384x128xbf16>, vector<16x128xf32> -> vector<16x128xf32>
    %c0_3 = arith.constant 0 : index
    %c0_4 = arith.constant 0 : index
    %3 = vector.load %arg3[%c0_3, %c0_4] : memref<1x128xf32, #tpu.memory_space<vmem>>, vector<1x128xf32>
    %4 = vector.broadcast %3 : vector<1x128xf32> to vector<16x128xf32>
    %5 = arith.addf %2, %4 : vector<16x128xf32>
    %cst_5 = arith.constant 0.000000e+00 : f32
    %6 = vector.broadcast %cst_5 : f32 to vector<16x128xf32>
    %7 = arith.cmpf oge, %5, %6 : vector<16x128xf32>
    %cst_6 = arith.constant 2.000000e-01 : f32
    %8 = vector.broadcast %cst_6 : f32 to vector<16x128xf32>
    %9 = arith.mulf %8, %5 : vector<16x128xf32>
    %10 = arith.select %7, %5, %9 : vector<16x128xi1>, vector<16x128xf32>
    %11 = arith.truncf %10 : vector<16x128xf32> to vector<16x128xbf16>
    %c0_7 = arith.constant 0 : index
    %c0_8 = arith.constant 0 : index
    %12 = vector.load %arg4[%c0_7, %c0_8] : memref<16x128xbf16, #tpu.memory_space<vmem>>, vector<16x128xbf16>
    tpu.vector_store %arg4[%c0_7, %c0_8], %11 {strides = array<i32>} : memref<16x128xbf16, #tpu.memory_space<vmem>>, vector<16x128xbf16>,
    return
  }
  func.func @transform_0(%arg0: i32) -> (i32, i32) {
    %c0_i32 = arith.constant 0 : i32
    %c0_i32_0 = arith.constant 0 : i32
    return %arg0, %c0_i32 : i32, i32
  }
  func.func @transform_1(%arg0: i32) -> (i32, i32) {
    %c0_i32 = arith.constant 0 : i32
    %c0_i32_0 = arith.constant 0 : i32
    %c0_i32_1 = arith.constant 0 : i32
    return %c0_i32, %c0_i32_0 : i32, i32
  }
  func.func @transform_2(%arg0: i32) -> (i32, i32) {
    %c0_i32 = arith.constant 0 : i32
    %c0_i32_0 = arith.constant 0 : i32
    %c0_i32_1 = arith.constant 0 : i32
    return %c0_i32, %c0_i32_0 : i32, i32
  }
  func.func @transform_3(%arg0: i32) -> (i32, i32) {
    %c0_i32 = arith.constant 0 : i32
    %c0_i32_0 = arith.constant 0 : i32
    return %arg0, %c0_i32 : i32, i32
  }
}

module attributes {stable_mosaic.version = 11 : i64} {
  func.func @_gated_fused_kernel(%arg0: i32, %arg1: memref<32x512xbf16, #tpu.memory_space<vmem>>, %arg2: memref<512x256xbf16, #tpu.memory_space<vmem>>, %arg3: memref<1x256xf32, #tpu.memory_space<vmem>>, %arg4: memref<32x128xf32, #tpu.memory_space<vmem>>) attributes {dimension_semantics = [#tpu.dimension_semantics<parallel>], iteration_bounds = array<i64: 1>, scalar_prefetch = 0 : i64, scratch_operands = 0 : i64, tpu.core_type = #tpu.core_type<tc>, window_params = [{transform_indices = @transform_0, window_bounds = array<i64: 32, 512>}, {pipeline_mode = #tpu.pipeline_mode<synchronous>, transform_indices = @transform_1, window_bounds = array<i64: 512, 256>}, {pipeline_mode = #tpu.pipeline_mode<synchronous>, transform_indices = @transform_2, window_bounds = array<i64: 1, 256>}, {transform_indices = @transform_3, window_bounds = array<i64: 32, 128>}]} {
    %c0 = arith.constant 0 : index
    %c0_0 = arith.constant 0 : index
    %0 = vector.load %arg1[%c0, %c0_0] : memref<32x512xbf16, #tpu.memory_space<vmem>>, vector<32x512xbf16>
    %c0_1 = arith.constant 0 : index
    %c0_2 = arith.constant 0 : index
    %1 = vector.load %arg2[%c0_1, %c0_2] : memref<512x256xbf16, #tpu.memory_space<vmem>>, vector<512x256xbf16>
    %cst = arith.constant dense<0.000000e+00> : vector<32x256xf32>
    %2 = tpu.matmul %0, %1, %cst {dimension_numbers = #tpu.dot_dimension_numbers<[1], [0], [0], [1], [0, 0, 1, 1], [], []>} : vector<32x512xbf16>, vector<512x256xbf16>, vector<32x256xf32> -> vector<32x256xf32>
    %c0_3 = arith.constant 0 : index
    %c0_4 = arith.constant 0 : index
    %3 = vector.load %arg3[%c0_3, %c0_4] : memref<1x256xf32, #tpu.memory_space<vmem>>, vector<1x256xf32>
    %4 = vector.broadcast %3 : vector<1x256xf32> to vector<32x256xf32>
    %5 = arith.addf %2, %4 : vector<32x256xf32>
    %6 = vector.extract_strided_slice %5 {offsets = [0, 0], sizes = [32, 128], strides = [1, 1]} : vector<32x256xf32> to vector<32x128xf32>
    %7 = math.tanh %6 : vector<32x128xf32>
    %8 = vector.extract_strided_slice %5 {offsets = [0, 128], sizes = [32, 128], strides = [1, 1]} : vector<32x256xf32> to vector<32x128xf32>
    %9 = arith.negf %8 : vector<32x128xf32>
    %10 = math.exp %9 : vector<32x128xf32>
    %cst_5 = arith.constant 1.000000e+00 : f32
    %11 = vector.broadcast %cst_5 : f32 to vector<32x128xf32>
    %12 = arith.addf %11, %10 : vector<32x128xf32>
    %13 = arith.divf %11, %12 : vector<32x128xf32>
    %14 = arith.mulf %7, %13 : vector<32x128xf32>
    %c0_6 = arith.constant 0 : index
    %c0_7 = arith.constant 0 : index
    %15 = vector.load %arg4[%c0_6, %c0_7] : memref<32x128xf32, #tpu.memory_space<vmem>>, vector<32x128xf32>
    tpu.vector_store %arg4[%c0_6, %c0_7], %14 {strides = array<i32>} : memref<32x128xf32, #tpu.memory_space<vmem>>, vector<32x128xf32>,
    return
  }
  func.func @transform_0(%arg0: i32) -> (i32, i32) {
    %c0_i32 = arith.constant 0 : i32
    %c0_i32_0 = arith.constant 0 : i32
    return %arg0, %c0_i32 : i32, i32
  }
  func.func @transform_1(%arg0: i32) -> (i32, i32) {
    %c0_i32 = arith.constant 0 : i32
    %c0_i32_0 = arith.constant 0 : i32
    %c0_i32_1 = arith.constant 0 : i32
    return %c0_i32, %c0_i32_0 : i32, i32
  }
  func.func @transform_2(%arg0: i32) -> (i32, i32) {
    %c0_i32 = arith.constant 0 : i32
    %c0_i32_0 = arith.constant 0 : i32
    %c0_i32_1 = arith.constant 0 : i32
    return %c0_i32, %c0_i32_0 : i32, i32
  }
  func.func @transform_3(%arg0: i32) -> (i32, i32) {
    %c0_i32 = arith.constant 0 : i32
    %c0_i32_0 = arith.constant 0 : i32
    return %arg0, %c0_i32 : i32, i32
  }
}

module attributes {stable_mosaic.version = 11 : i64} {
  func.func @_plain_kernel(%arg0: i32, %arg1: memref<32x256xbf16, #tpu.memory_space<vmem>>, %arg2: memref<256x128xbf16, #tpu.memory_space<vmem>>, %arg3: memref<1x128xf32, #tpu.memory_space<vmem>>, %arg4: memref<32x128xbf16, #tpu.memory_space<vmem>>) attributes {dimension_semantics = [#tpu.dimension_semantics<parallel>], iteration_bounds = array<i64: 1>, scalar_prefetch = 0 : i64, scratch_operands = 0 : i64, tpu.core_type = #tpu.core_type<tc>, window_params = [{transform_indices = @transform_0, window_bounds = array<i64: 32, 256>}, {pipeline_mode = #tpu.pipeline_mode<synchronous>, transform_indices = @transform_1, window_bounds = array<i64: 256, 128>}, {pipeline_mode = #tpu.pipeline_mode<synchronous>, transform_indices = @transform_2, window_bounds = array<i64: 1, 128>}, {transform_indices = @transform_3, window_bounds = array<i64: 32, 128>}]} {
    %c0 = arith.constant 0 : index
    %c0_0 = arith.constant 0 : index
    %0 = vector.load %arg1[%c0, %c0_0] : memref<32x256xbf16, #tpu.memory_space<vmem>>, vector<32x256xbf16>
    %c0_1 = arith.constant 0 : index
    %c0_2 = arith.constant 0 : index
    %1 = vector.load %arg2[%c0_1, %c0_2] : memref<256x128xbf16, #tpu.memory_space<vmem>>, vector<256x128xbf16>
    %cst = arith.constant dense<0.000000e+00> : vector<32x128xf32>
    %2 = tpu.matmul %0, %1, %cst {dimension_numbers = #tpu.dot_dimension_numbers<[1], [0], [0], [1], [0, 0, 1, 1], [], []>} : vector<32x256xbf16>, vector<256x128xbf16>, vector<32x128xf32> -> vector<32x128xf32>
    %c0_3 = arith.constant 0 : index
    %c0_4 = arith.constant 0 : index
    %3 = vector.load %arg3[%c0_3, %c0_4] : memref<1x128xf32, #tpu.memory_space<vmem>>, vector<1x128xf32>
    %4 = vector.broadcast %3 : vector<1x128xf32> to vector<32x128xf32>
    %5 = arith.addf %2, %4 : vector<32x128xf32>
    %cst_5 = arith.constant 0.000000e+00 : f32
    %6 = vector.broadcast %cst_5 : f32 to vector<32x128xf32>
    %7 = arith.cmpf oge, %5, %6 : vector<32x128xf32>
    %cst_6 = arith.constant 2.000000e-01 : f32
    %8 = vector.broadcast %cst_6 : f32 to vector<32x128xf32>
    %9 = arith.mulf %8, %5 : vector<32x128xf32>
    %10 = arith.select %7, %5, %9 : vector<32x128xi1>, vector<32x128xf32>
    %11 = arith.truncf %10 : vector<32x128xf32> to vector<32x128xbf16>
    %c0_7 = arith.constant 0 : index
    %c0_8 = arith.constant 0 : index
    %12 = vector.load %arg4[%c0_7, %c0_8] : memref<32x128xbf16, #tpu.memory_space<vmem>>, vector<32x128xbf16>
    tpu.vector_store %arg4[%c0_7, %c0_8], %11 {strides = array<i32>} : memref<32x128xbf16, #tpu.memory_space<vmem>>, vector<32x128xbf16>,
    return
  }
  func.func @transform_0(%arg0: i32) -> (i32, i32) {
    %c0_i32 = arith.constant 0 : i32
    %c0_i32_0 = arith.constant 0 : i32
    return %arg0, %c0_i32 : i32, i32
  }
  func.func @transform_1(%arg0: i32) -> (i32, i32) {
    %c0_i32 = arith.constant 0 : i32
    %c0_i32_0 = arith.constant 0 : i32
    %c0_i32_1 = arith.constant 0 : i32
    return %c0_i32, %c0_i32_0 : i32, i32
  }
  func.func @transform_2(%arg0: i32) -> (i32, i32) {
    %c0_i32 = arith.constant 0 : i32
    %c0_i32_0 = arith.constant 0 : i32
    %c0_i32_1 = arith.constant 0 : i32
    return %c0_i32, %c0_i32_0 : i32, i32
  }
  func.func @transform_3(%arg0: i32) -> (i32, i32) {
    %c0_i32 = arith.constant 0 : i32
    %c0_i32_0 = arith.constant 0 : i32
    return %arg0, %c0_i32 : i32, i32
  }
}

module attributes {stable_mosaic.version = 11 : i64} {
  func.func @_gated_fused_kernel(%arg0: i32, %arg1: memref<80x256xbf16, #tpu.memory_space<vmem>>, %arg2: memref<256x256xbf16, #tpu.memory_space<vmem>>, %arg3: memref<1x256xf32, #tpu.memory_space<vmem>>, %arg4: memref<80x128xbf16, #tpu.memory_space<vmem>>) attributes {dimension_semantics = [#tpu.dimension_semantics<parallel>], iteration_bounds = array<i64: 1>, scalar_prefetch = 0 : i64, scratch_operands = 0 : i64, tpu.core_type = #tpu.core_type<tc>, window_params = [{transform_indices = @transform_0, window_bounds = array<i64: 80, 256>}, {pipeline_mode = #tpu.pipeline_mode<synchronous>, transform_indices = @transform_1, window_bounds = array<i64: 256, 256>}, {pipeline_mode = #tpu.pipeline_mode<synchronous>, transform_indices = @transform_2, window_bounds = array<i64: 1, 256>}, {transform_indices = @transform_3, window_bounds = array<i64: 80, 128>}]} {
    %c0 = arith.constant 0 : index
    %c0_0 = arith.constant 0 : index
    %0 = vector.load %arg1[%c0, %c0_0] : memref<80x256xbf16, #tpu.memory_space<vmem>>, vector<80x256xbf16>
    %c0_1 = arith.constant 0 : index
    %c0_2 = arith.constant 0 : index
    %1 = vector.load %arg2[%c0_1, %c0_2] : memref<256x256xbf16, #tpu.memory_space<vmem>>, vector<256x256xbf16>
    %cst = arith.constant dense<0.000000e+00> : vector<80x256xf32>
    %2 = tpu.matmul %0, %1, %cst {dimension_numbers = #tpu.dot_dimension_numbers<[1], [0], [0], [1], [0, 0, 1, 1], [], []>} : vector<80x256xbf16>, vector<256x256xbf16>, vector<80x256xf32> -> vector<80x256xf32>
    %c0_3 = arith.constant 0 : index
    %c0_4 = arith.constant 0 : index
    %3 = vector.load %arg3[%c0_3, %c0_4] : memref<1x256xf32, #tpu.memory_space<vmem>>, vector<1x256xf32>
    %4 = vector.broadcast %3 : vector<1x256xf32> to vector<80x256xf32>
    %5 = arith.addf %2, %4 : vector<80x256xf32>
    %6 = vector.extract_strided_slice %5 {offsets = [0, 0], sizes = [80, 128], strides = [1, 1]} : vector<80x256xf32> to vector<80x128xf32>
    %cst_5 = arith.constant 0.000000e+00 : f32
    %7 = vector.broadcast %cst_5 : f32 to vector<80x128xf32>
    %8 = arith.cmpf oge, %6, %7 : vector<80x128xf32>
    %cst_6 = arith.constant 2.000000e-01 : f32
    %9 = vector.broadcast %cst_6 : f32 to vector<80x128xf32>
    %10 = arith.mulf %9, %6 : vector<80x128xf32>
    %11 = arith.select %8, %6, %10 : vector<80x128xi1>, vector<80x128xf32>
    %12 = vector.extract_strided_slice %5 {offsets = [0, 128], sizes = [80, 128], strides = [1, 1]} : vector<80x256xf32> to vector<80x128xf32>
    %13 = arith.negf %12 : vector<80x128xf32>
    %14 = math.exp %13 : vector<80x128xf32>
    %cst_7 = arith.constant 1.000000e+00 : f32
    %15 = vector.broadcast %cst_7 : f32 to vector<80x128xf32>
    %16 = arith.addf %15, %14 : vector<80x128xf32>
    %17 = arith.divf %15, %16 : vector<80x128xf32>
    %18 = arith.mulf %11, %17 : vector<80x128xf32>
    %19 = arith.truncf %18 : vector<80x128xf32> to vector<80x128xbf16>
    %c0_8 = arith.constant 0 : index
    %c0_9 = arith.constant 0 : index
    %20 = vector.load %arg4[%c0_8, %c0_9] : memref<80x128xbf16, #tpu.memory_space<vmem>>, vector<80x128xbf16>
    tpu.vector_store %arg4[%c0_8, %c0_9], %19 {strides = array<i32>} : memref<80x128xbf16, #tpu.memory_space<vmem>>, vector<80x128xbf16>,
    return
  }
  func.func @transform_0(%arg0: i32) -> (i32, i32) {
    %c0_i32 = arith.constant 0 : i32
    %c0_i32_0 = arith.constant 0 : i32
    return %arg0, %c0_i32 : i32, i32
  }
  func.func @transform_1(%arg0: i32) -> (i32, i32) {
    %c0_i32 = arith.constant 0 : i32
    %c0_i32_0 = arith.constant 0 : i32
    %c0_i32_1 = arith.constant 0 : i32
    return %c0_i32, %c0_i32_0 : i32, i32
  }
  func.func @transform_2(%arg0: i32) -> (i32, i32) {
    %c0_i32 = arith.constant 0 : i32
    %c0_i32_0 = arith.constant 0 : i32
    %c0_i32_1 = arith.constant 0 : i32
    return %c0_i32, %c0_i32_0 : i32, i32
  }
  func.func @transform_3(%arg0: i32) -> (i32, i32) {
    %c0_i32 = arith.constant 0 : i32
    %c0_i32_0 = arith.constant 0 : i32
    return %arg0, %c0_i32 : i32, i32
  }
}

module attributes {stable_mosaic.version = 11 : i64} {
  func.func @_gated_fused_kernel(%arg0: i32, %arg1: memref<32x512xbf16, #tpu.memory_space<vmem>>, %arg2: memref<512x256xbf16, #tpu.memory_space<vmem>>, %arg3: memref<1x256xf32, #tpu.memory_space<vmem>>, %arg4: memref<32x128xbf16, #tpu.memory_space<vmem>>) attributes {dimension_semantics = [#tpu.dimension_semantics<parallel>], iteration_bounds = array<i64: 1>, scalar_prefetch = 0 : i64, scratch_operands = 0 : i64, tpu.core_type = #tpu.core_type<tc>, window_params = [{transform_indices = @transform_0, window_bounds = array<i64: 32, 512>}, {pipeline_mode = #tpu.pipeline_mode<synchronous>, transform_indices = @transform_1, window_bounds = array<i64: 512, 256>}, {pipeline_mode = #tpu.pipeline_mode<synchronous>, transform_indices = @transform_2, window_bounds = array<i64: 1, 256>}, {transform_indices = @transform_3, window_bounds = array<i64: 32, 128>}]} {
    %c0 = arith.constant 0 : index
    %c0_0 = arith.constant 0 : index
    %0 = vector.load %arg1[%c0, %c0_0] : memref<32x512xbf16, #tpu.memory_space<vmem>>, vector<32x512xbf16>
    %c0_1 = arith.constant 0 : index
    %c0_2 = arith.constant 0 : index
    %1 = vector.load %arg2[%c0_1, %c0_2] : memref<512x256xbf16, #tpu.memory_space<vmem>>, vector<512x256xbf16>
    %cst = arith.constant dense<0.000000e+00> : vector<32x256xf32>
    %2 = tpu.matmul %0, %1, %cst {dimension_numbers = #tpu.dot_dimension_numbers<[1], [0], [0], [1], [0, 0, 1, 1], [], []>} : vector<32x512xbf16>, vector<512x256xbf16>, vector<32x256xf32> -> vector<32x256xf32>
    %c0_3 = arith.constant 0 : index
    %c0_4 = arith.constant 0 : index
    %3 = vector.load %arg3[%c0_3, %c0_4] : memref<1x256xf32, #tpu.memory_space<vmem>>, vector<1x256xf32>
    %4 = vector.broadcast %3 : vector<1x256xf32> to vector<32x256xf32>
    %5 = arith.addf %2, %4 : vector<32x256xf32>
    %6 = vector.extract_strided_slice %5 {offsets = [0, 0], sizes = [32, 128], strides = [1, 1]} : vector<32x256xf32> to vector<32x128xf32>
    %cst_5 = arith.constant 0.000000e+00 : f32
    %7 = vector.broadcast %cst_5 : f32 to vector<32x128xf32>
    %8 = arith.cmpf oge, %6, %7 : vector<32x128xf32>
    %cst_6 = arith.constant 2.000000e-01 : f32
    %9 = vector.broadcast %cst_6 : f32 to vector<32x128xf32>
    %10 = arith.mulf %9, %6 : vector<32x128xf32>
    %11 = arith.select %8, %6, %10 : vector<32x128xi1>, vector<32x128xf32>
    %12 = vector.extract_strided_slice %5 {offsets = [0, 128], sizes = [32, 128], strides = [1, 1]} : vector<32x256xf32> to vector<32x128xf32>
    %13 = arith.negf %12 : vector<32x128xf32>
    %14 = math.exp %13 : vector<32x128xf32>
    %cst_7 = arith.constant 1.000000e+00 : f32
    %15 = vector.broadcast %cst_7 : f32 to vector<32x128xf32>
    %16 = arith.addf %15, %14 : vector<32x128xf32>
    %17 = arith.divf %15, %16 : vector<32x128xf32>
    %18 = arith.mulf %11, %17 : vector<32x128xf32>
    %19 = arith.truncf %18 : vector<32x128xf32> to vector<32x128xbf16>
    %c0_8 = arith.constant 0 : index
    %c0_9 = arith.constant 0 : index
    %20 = vector.load %arg4[%c0_8, %c0_9] : memref<32x128xbf16, #tpu.memory_space<vmem>>, vector<32x128xbf16>
    tpu.vector_store %arg4[%c0_8, %c0_9], %19 {strides = array<i32>} : memref<32x128xbf16, #tpu.memory_space<vmem>>, vector<32x128xbf16>,
    return
  }
  func.func @transform_0(%arg0: i32) -> (i32, i32) {
    %c0_i32 = arith.constant 0 : i32
    %c0_i32_0 = arith.constant 0 : i32
    return %arg0, %c0_i32 : i32, i32
  }
  func.func @transform_1(%arg0: i32) -> (i32, i32) {
    %c0_i32 = arith.constant 0 : i32
    %c0_i32_0 = arith.constant 0 : i32
    %c0_i32_1 = arith.constant 0 : i32
    return %c0_i32, %c0_i32_0 : i32, i32
  }
  func.func @transform_2(%arg0: i32) -> (i32, i32) {
    %c0_i32 = arith.constant 0 : i32
    %c0_i32_0 = arith.constant 0 : i32
    %c0_i32_1 = arith.constant 0 : i32
    return %c0_i32, %c0_i32_0 : i32, i32
  }
  func.func @transform_3(%arg0: i32) -> (i32, i32) {
    %c0_i32 = arith.constant 0 : i32
    %c0_i32_0 = arith.constant 0 : i32
    return %arg0, %c0_i32 : i32, i32
  }
}

module attributes {stable_mosaic.version = 11 : i64} {
  func.func @_gated_fused_kernel(%arg0: i32, %arg1: memref<32x384xbf16, #tpu.memory_space<vmem>>, %arg2: memref<384x256xbf16, #tpu.memory_space<vmem>>, %arg3: memref<1x256xf32, #tpu.memory_space<vmem>>, %arg4: memref<32x128xbf16, #tpu.memory_space<vmem>>) attributes {dimension_semantics = [#tpu.dimension_semantics<parallel>], iteration_bounds = array<i64: 1>, scalar_prefetch = 0 : i64, scratch_operands = 0 : i64, tpu.core_type = #tpu.core_type<tc>, window_params = [{transform_indices = @transform_0, window_bounds = array<i64: 32, 384>}, {pipeline_mode = #tpu.pipeline_mode<synchronous>, transform_indices = @transform_1, window_bounds = array<i64: 384, 256>}, {pipeline_mode = #tpu.pipeline_mode<synchronous>, transform_indices = @transform_2, window_bounds = array<i64: 1, 256>}, {transform_indices = @transform_3, window_bounds = array<i64: 32, 128>}]} {
    %c0 = arith.constant 0 : index
    %c0_0 = arith.constant 0 : index
    %0 = vector.load %arg1[%c0, %c0_0] : memref<32x384xbf16, #tpu.memory_space<vmem>>, vector<32x384xbf16>
    %c0_1 = arith.constant 0 : index
    %c0_2 = arith.constant 0 : index
    %1 = vector.load %arg2[%c0_1, %c0_2] : memref<384x256xbf16, #tpu.memory_space<vmem>>, vector<384x256xbf16>
    %cst = arith.constant dense<0.000000e+00> : vector<32x256xf32>
    %2 = tpu.matmul %0, %1, %cst {dimension_numbers = #tpu.dot_dimension_numbers<[1], [0], [0], [1], [0, 0, 1, 1], [], []>} : vector<32x384xbf16>, vector<384x256xbf16>, vector<32x256xf32> -> vector<32x256xf32>
    %c0_3 = arith.constant 0 : index
    %c0_4 = arith.constant 0 : index
    %3 = vector.load %arg3[%c0_3, %c0_4] : memref<1x256xf32, #tpu.memory_space<vmem>>, vector<1x256xf32>
    %4 = vector.broadcast %3 : vector<1x256xf32> to vector<32x256xf32>
    %5 = arith.addf %2, %4 : vector<32x256xf32>
    %6 = vector.extract_strided_slice %5 {offsets = [0, 0], sizes = [32, 128], strides = [1, 1]} : vector<32x256xf32> to vector<32x128xf32>
    %cst_5 = arith.constant 0.000000e+00 : f32
    %7 = vector.broadcast %cst_5 : f32 to vector<32x128xf32>
    %8 = arith.cmpf oge, %6, %7 : vector<32x128xf32>
    %cst_6 = arith.constant 2.000000e-01 : f32
    %9 = vector.broadcast %cst_6 : f32 to vector<32x128xf32>
    %10 = arith.mulf %9, %6 : vector<32x128xf32>
    %11 = arith.select %8, %6, %10 : vector<32x128xi1>, vector<32x128xf32>
    %12 = vector.extract_strided_slice %5 {offsets = [0, 128], sizes = [32, 128], strides = [1, 1]} : vector<32x256xf32> to vector<32x128xf32>
    %13 = arith.negf %12 : vector<32x128xf32>
    %14 = math.exp %13 : vector<32x128xf32>
    %cst_7 = arith.constant 1.000000e+00 : f32
    %15 = vector.broadcast %cst_7 : f32 to vector<32x128xf32>
    %16 = arith.addf %15, %14 : vector<32x128xf32>
    %17 = arith.divf %15, %16 : vector<32x128xf32>
    %18 = arith.mulf %11, %17 : vector<32x128xf32>
    %19 = arith.truncf %18 : vector<32x128xf32> to vector<32x128xbf16>
    %c0_8 = arith.constant 0 : index
    %c0_9 = arith.constant 0 : index
    %20 = vector.load %arg4[%c0_8, %c0_9] : memref<32x128xbf16, #tpu.memory_space<vmem>>, vector<32x128xbf16>
    tpu.vector_store %arg4[%c0_8, %c0_9], %19 {strides = array<i32>} : memref<32x128xbf16, #tpu.memory_space<vmem>>, vector<32x128xbf16>,
    return
  }
  func.func @transform_0(%arg0: i32) -> (i32, i32) {
    %c0_i32 = arith.constant 0 : i32
    %c0_i32_0 = arith.constant 0 : i32
    return %arg0, %c0_i32 : i32, i32
  }
  func.func @transform_1(%arg0: i32) -> (i32, i32) {
    %c0_i32 = arith.constant 0 : i32
    %c0_i32_0 = arith.constant 0 : i32
    %c0_i32_1 = arith.constant 0 : i32
    return %c0_i32, %c0_i32_0 : i32, i32
  }
  func.func @transform_2(%arg0: i32) -> (i32, i32) {
    %c0_i32 = arith.constant 0 : i32
    %c0_i32_0 = arith.constant 0 : i32
    %c0_i32_1 = arith.constant 0 : i32
    return %c0_i32, %c0_i32_0 : i32, i32
  }
  func.func @transform_3(%arg0: i32) -> (i32, i32) {
    %c0_i32 = arith.constant 0 : i32
    %c0_i32_0 = arith.constant 0 : i32
    return %arg0, %c0_i32 : i32, i32
  }
}

module attributes {stable_mosaic.version = 11 : i64} {
  func.func @_plain_kernel(%arg0: i32, %arg1: memref<80x384xbf16, #tpu.memory_space<vmem>>, %arg2: memref<384x128xbf16, #tpu.memory_space<vmem>>, %arg3: memref<1x128xf32, #tpu.memory_space<vmem>>, %arg4: memref<80x128xbf16, #tpu.memory_space<vmem>>) attributes {dimension_semantics = [#tpu.dimension_semantics<parallel>], iteration_bounds = array<i64: 1>, scalar_prefetch = 0 : i64, scratch_operands = 0 : i64, tpu.core_type = #tpu.core_type<tc>, window_params = [{transform_indices = @transform_0, window_bounds = array<i64: 80, 384>}, {pipeline_mode = #tpu.pipeline_mode<synchronous>, transform_indices = @transform_1, window_bounds = array<i64: 384, 128>}, {pipeline_mode = #tpu.pipeline_mode<synchronous>, transform_indices = @transform_2, window_bounds = array<i64: 1, 128>}, {transform_indices = @transform_3, window_bounds = array<i64: 80, 128>}]} {
    %c0 = arith.constant 0 : index
    %c0_0 = arith.constant 0 : index
    %0 = vector.load %arg1[%c0, %c0_0] : memref<80x384xbf16, #tpu.memory_space<vmem>>, vector<80x384xbf16>
    %c0_1 = arith.constant 0 : index
    %c0_2 = arith.constant 0 : index
    %1 = vector.load %arg2[%c0_1, %c0_2] : memref<384x128xbf16, #tpu.memory_space<vmem>>, vector<384x128xbf16>
    %cst = arith.constant dense<0.000000e+00> : vector<80x128xf32>
    %2 = tpu.matmul %0, %1, %cst {dimension_numbers = #tpu.dot_dimension_numbers<[1], [0], [0], [1], [0, 0, 1, 1], [], []>} : vector<80x384xbf16>, vector<384x128xbf16>, vector<80x128xf32> -> vector<80x128xf32>
    %c0_3 = arith.constant 0 : index
    %c0_4 = arith.constant 0 : index
    %3 = vector.load %arg3[%c0_3, %c0_4] : memref<1x128xf32, #tpu.memory_space<vmem>>, vector<1x128xf32>
    %4 = vector.broadcast %3 : vector<1x128xf32> to vector<80x128xf32>
    %5 = arith.addf %2, %4 : vector<80x128xf32>
    %cst_5 = arith.constant 0.000000e+00 : f32
    %6 = vector.broadcast %cst_5 : f32 to vector<80x128xf32>
    %7 = arith.cmpf oge, %5, %6 : vector<80x128xf32>
    %cst_6 = arith.constant 2.000000e-01 : f32
    %8 = vector.broadcast %cst_6 : f32 to vector<80x128xf32>
    %9 = arith.mulf %8, %5 : vector<80x128xf32>
    %10 = arith.select %7, %5, %9 : vector<80x128xi1>, vector<80x128xf32>
    %11 = arith.truncf %10 : vector<80x128xf32> to vector<80x128xbf16>
    %c0_7 = arith.constant 0 : index
    %c0_8 = arith.constant 0 : index
    %12 = vector.load %arg4[%c0_7, %c0_8] : memref<80x128xbf16, #tpu.memory_space<vmem>>, vector<80x128xbf16>
    tpu.vector_store %arg4[%c0_7, %c0_8], %11 {strides = array<i32>} : memref<80x128xbf16, #tpu.memory_space<vmem>>, vector<80x128xbf16>,
    return
  }
  func.func @transform_0(%arg0: i32) -> (i32, i32) {
    %c0_i32 = arith.constant 0 : i32
    %c0_i32_0 = arith.constant 0 : i32
    return %arg0, %c0_i32 : i32, i32
  }
  func.func @transform_1(%arg0: i32) -> (i32, i32) {
    %c0_i32 = arith.constant 0 : i32
    %c0_i32_0 = arith.constant 0 : i32
    %c0_i32_1 = arith.constant 0 : i32
    return %c0_i32, %c0_i32_0 : i32, i32
  }
  func.func @transform_2(%arg0: i32) -> (i32, i32) {
    %c0_i32 = arith.constant 0 : i32
    %c0_i32_0 = arith.constant 0 : i32
    %c0_i32_1 = arith.constant 0 : i32
    return %c0_i32, %c0_i32_0 : i32, i32
  }
  func.func @transform_3(%arg0: i32) -> (i32, i32) {
    %c0_i32 = arith.constant 0 : i32
    %c0_i32_0 = arith.constant 0 : i32
    return %arg0, %c0_i32 : i32, i32
  }
}

module attributes {stable_mosaic.version = 11 : i64} {
  func.func @_plain_kernel(%arg0: i32, %arg1: memref<288x256xbf16, #tpu.memory_space<vmem>>, %arg2: memref<256x128xbf16, #tpu.memory_space<vmem>>, %arg3: memref<1x128xf32, #tpu.memory_space<vmem>>, %arg4: memref<288x128xbf16, #tpu.memory_space<vmem>>) attributes {dimension_semantics = [#tpu.dimension_semantics<parallel>], iteration_bounds = array<i64: 1>, scalar_prefetch = 0 : i64, scratch_operands = 0 : i64, tpu.core_type = #tpu.core_type<tc>, window_params = [{transform_indices = @transform_0, window_bounds = array<i64: 288, 256>}, {pipeline_mode = #tpu.pipeline_mode<synchronous>, transform_indices = @transform_1, window_bounds = array<i64: 256, 128>}, {pipeline_mode = #tpu.pipeline_mode<synchronous>, transform_indices = @transform_2, window_bounds = array<i64: 1, 128>}, {transform_indices = @transform_3, window_bounds = array<i64: 288, 128>}]} {
    %c0 = arith.constant 0 : index
    %c0_0 = arith.constant 0 : index
    %0 = vector.load %arg1[%c0, %c0_0] : memref<288x256xbf16, #tpu.memory_space<vmem>>, vector<288x256xbf16>
    %c0_1 = arith.constant 0 : index
    %c0_2 = arith.constant 0 : index
    %1 = vector.load %arg2[%c0_1, %c0_2] : memref<256x128xbf16, #tpu.memory_space<vmem>>, vector<256x128xbf16>
    %cst = arith.constant dense<0.000000e+00> : vector<288x128xf32>
    %2 = tpu.matmul %0, %1, %cst {dimension_numbers = #tpu.dot_dimension_numbers<[1], [0], [0], [1], [0, 0, 1, 1], [], []>} : vector<288x256xbf16>, vector<256x128xbf16>, vector<288x128xf32> -> vector<288x128xf32>
    %c0_3 = arith.constant 0 : index
    %c0_4 = arith.constant 0 : index
    %3 = vector.load %arg3[%c0_3, %c0_4] : memref<1x128xf32, #tpu.memory_space<vmem>>, vector<1x128xf32>
    %4 = vector.broadcast %3 : vector<1x128xf32> to vector<288x128xf32>
    %5 = arith.addf %2, %4 : vector<288x128xf32>
    %cst_5 = arith.constant 0.000000e+00 : f32
    %6 = vector.broadcast %cst_5 : f32 to vector<288x128xf32>
    %7 = arith.cmpf oge, %5, %6 : vector<288x128xf32>
    %cst_6 = arith.constant 2.000000e-01 : f32
    %8 = vector.broadcast %cst_6 : f32 to vector<288x128xf32>
    %9 = arith.mulf %8, %5 : vector<288x128xf32>
    %10 = arith.select %7, %5, %9 : vector<288x128xi1>, vector<288x128xf32>
    %11 = arith.truncf %10 : vector<288x128xf32> to vector<288x128xbf16>
    %c0_7 = arith.constant 0 : index
    %c0_8 = arith.constant 0 : index
    %12 = vector.load %arg4[%c0_7, %c0_8] : memref<288x128xbf16, #tpu.memory_space<vmem>>, vector<288x128xbf16>
    tpu.vector_store %arg4[%c0_7, %c0_8], %11 {strides = array<i32>} : memref<288x128xbf16, #tpu.memory_space<vmem>>, vector<288x128xbf16>,
    return
  }
  func.func @transform_0(%arg0: i32) -> (i32, i32) {
    %c0_i32 = arith.constant 0 : i32
    %c0_i32_0 = arith.constant 0 : i32
    return %arg0, %c0_i32 : i32, i32
  }
  func.func @transform_1(%arg0: i32) -> (i32, i32) {
    %c0_i32 = arith.constant 0 : i32
    %c0_i32_0 = arith.constant 0 : i32
    %c0_i32_1 = arith.constant 0 : i32
    return %c0_i32, %c0_i32_0 : i32, i32
  }
  func.func @transform_2(%arg0: i32) -> (i32, i32) {
    %c0_i32 = arith.constant 0 : i32
    %c0_i32_0 = arith.constant 0 : i32
    %c0_i32_1 = arith.constant 0 : i32
    return %c0_i32, %c0_i32_0 : i32, i32
  }
  func.func @transform_3(%arg0: i32) -> (i32, i32) {
    %c0_i32 = arith.constant 0 : i32
    %c0_i32_0 = arith.constant 0 : i32
    return %arg0, %c0_i32 : i32, i32
  }
}

module attributes {stable_mosaic.version = 11 : i64} {
  func.func @_gated_fused_kernel(%arg0: i32, %arg1: memref<288x512xbf16, #tpu.memory_space<vmem>>, %arg2: memref<512x256xbf16, #tpu.memory_space<vmem>>, %arg3: memref<1x256xf32, #tpu.memory_space<vmem>>, %arg4: memref<288x128xf32, #tpu.memory_space<vmem>>) attributes {dimension_semantics = [#tpu.dimension_semantics<parallel>], iteration_bounds = array<i64: 1>, scalar_prefetch = 0 : i64, scratch_operands = 0 : i64, tpu.core_type = #tpu.core_type<tc>, window_params = [{transform_indices = @transform_0, window_bounds = array<i64: 288, 512>}, {pipeline_mode = #tpu.pipeline_mode<synchronous>, transform_indices = @transform_1, window_bounds = array<i64: 512, 256>}, {pipeline_mode = #tpu.pipeline_mode<synchronous>, transform_indices = @transform_2, window_bounds = array<i64: 1, 256>}, {transform_indices = @transform_3, window_bounds = array<i64: 288, 128>}]} {
    %c0 = arith.constant 0 : index
    %c0_0 = arith.constant 0 : index
    %0 = vector.load %arg1[%c0, %c0_0] : memref<288x512xbf16, #tpu.memory_space<vmem>>, vector<288x512xbf16>
    %c0_1 = arith.constant 0 : index
    %c0_2 = arith.constant 0 : index
    %1 = vector.load %arg2[%c0_1, %c0_2] : memref<512x256xbf16, #tpu.memory_space<vmem>>, vector<512x256xbf16>
    %cst = arith.constant dense<0.000000e+00> : vector<288x256xf32>
    %2 = tpu.matmul %0, %1, %cst {dimension_numbers = #tpu.dot_dimension_numbers<[1], [0], [0], [1], [0, 0, 1, 1], [], []>} : vector<288x512xbf16>, vector<512x256xbf16>, vector<288x256xf32> -> vector<288x256xf32>
    %c0_3 = arith.constant 0 : index
    %c0_4 = arith.constant 0 : index
    %3 = vector.load %arg3[%c0_3, %c0_4] : memref<1x256xf32, #tpu.memory_space<vmem>>, vector<1x256xf32>
    %4 = vector.broadcast %3 : vector<1x256xf32> to vector<288x256xf32>
    %5 = arith.addf %2, %4 : vector<288x256xf32>
    %6 = vector.extract_strided_slice %5 {offsets = [0, 0], sizes = [288, 128], strides = [1, 1]} : vector<288x256xf32> to vector<288x128xf32>
    %7 = math.tanh %6 : vector<288x128xf32>
    %8 = vector.extract_strided_slice %5 {offsets = [0, 128], sizes = [288, 128], strides = [1, 1]} : vector<288x256xf32> to vector<288x128xf32>
    %9 = arith.negf %8 : vector<288x128xf32>
    %10 = math.exp %9 : vector<288x128xf32>
    %cst_5 = arith.constant 1.000000e+00 : f32
    %11 = vector.broadcast %cst_5 : f32 to vector<288x128xf32>
    %12 = arith.addf %11, %10 : vector<288x128xf32>
    %13 = arith.divf %11, %12 : vector<288x128xf32>
    %14 = arith.mulf %7, %13 : vector<288x128xf32>
    %c0_6 = arith.constant 0 : index
    %c0_7 = arith.constant 0 : index
    %15 = vector.load %arg4[%c0_6, %c0_7] : memref<288x128xf32, #tpu.memory_space<vmem>>, vector<288x128xf32>
    tpu.vector_store %arg4[%c0_6, %c0_7], %14 {strides = array<i32>} : memref<288x128xf32, #tpu.memory_space<vmem>>, vector<288x128xf32>,
    return
  }
  func.func @transform_0(%arg0: i32) -> (i32, i32) {
    %c0_i32 = arith.constant 0 : i32
    %c0_i32_0 = arith.constant 0 : i32
    return %arg0, %c0_i32 : i32, i32
  }
  func.func @transform_1(%arg0: i32) -> (i32, i32) {
    %c0_i32 = arith.constant 0 : i32
    %c0_i32_0 = arith.constant 0 : i32
    %c0_i32_1 = arith.constant 0 : i32
    return %c0_i32, %c0_i32_0 : i32, i32
  }
  func.func @transform_2(%arg0: i32) -> (i32, i32) {
    %c0_i32 = arith.constant 0 : i32
    %c0_i32_0 = arith.constant 0 : i32
    %c0_i32_1 = arith.constant 0 : i32
    return %c0_i32, %c0_i32_0 : i32, i32
  }
  func.func @transform_3(%arg0: i32) -> (i32, i32) {
    %c0_i32 = arith.constant 0 : i32
    %c0_i32_0 = arith.constant 0 : i32
    return %arg0, %c0_i32 : i32, i32
  }
}

</mosaic_0001>

<llo_original>
// kernel: tpu_custom_call.1
$region0: #{tpu_custom_call.1}
  #allocation0 [shape = 'u32[]', space=smem, size = 0x4, offset = 0x4, fixed_abs, tag = 'smem constant byte address 0x4 - core index']
  #allocation1 [shape = 'u32[72,128]{1,0:T(1,128)}', space=vmem, size = 0x9000, scoped, tag = 'internal scratch']
  %s0 = inlined_call_operand.hbm [shape: f32[16,128], index: 0, kind: input, shape index: {}]
  %s1 = inlined_call_operand.hbm [shape: f32[8,128], index: 1, kind: input, shape index: {}]
  %s2 = inlined_call_operand.hbm [shape: f32[16,128], index: 2, kind: output, shape index: {}]
  %s3 = sld [smem:[#allocation0]]
  $region49: #{tpu_custom_call.1} parent=0
    _
  %s5 = ssub.s32 1, %s3
  %s6 = scalar_select 0, %s5, %s3
  $region1: #{tpu_custom_call.1} parent=0
    #allocation2 [shape = 'u8[8192]{0}', space=vmem, size = 0x2000, scoped, tag = 'input window, operand 0']
    #allocation3 [shape = 's32[2]{0}', space=sflag, size = 0x8, scoped, tag = 'scoped memory for tpu_custom_call.1']
    #allocation4 [shape = 's32[2]{0}', space=sflag, size = 0x8, scoped, tag = 'scoped memory for tpu_custom_call.1']
    #allocation5 [shape = 'u8[4096]{0}', space=vmem, size = 0x1000, scoped, tag = 'input window, operand 1, single buffered']
    #allocation6 [shape = 's32[1]{0}', space=sflag, size = 0x4, scoped, tag = 'scoped memory for tpu_custom_call.1']
    #allocation7 [shape = 'u8[8192]{0}', space=vmem, size = 0x2000, scoped, tag = 'output window, operand 0']
    %7 = vsyncpa [#allocation3], 0
    %s8 = scalar_lea.sflag [#allocation3], 1
    %9 = vsyncpa %s8, 0
    %10 = vsyncpa [#allocation6], 0
    %11 = vsyncpa [#allocation4], 0
    %s12 = scalar_lea.sflag [#allocation4], 1
    %13 = vsyncpa %s12, 0
    loop: start=0, step=1, limit=4
    $region2: #{tpu_custom_call.1} parent=1 // loop_pre_header
      _
    $region3: #{tpu_custom_call.1} parent=1 // loop_header
      %s15 = sphi 0, %s19
      %p16 = scmp.ge.s32.totalorder %s15, 4
      %s25 = sphi 0, %s27
      %s28 = sphi 0, %s25
      %s29 = sphi 0, %s28
      %s45 = sphi 0, %s29
      %s49 = sphi 0, %s49
      %s51 = sphi 0, %s49
      %s52 = sphi 0, %s51
      %s66 = sphi 0, %s52
      %s72 = sphi 0, %s74
      %s75 = sphi 0, %s72
      %s76 = sphi 0, %s75
      %s92 = sphi 0, %s76
    $region4: #{tpu_custom_call.1} parent=1 // loop_header_branch
      %18 = sbr.rel (%p16) target = $region8
    $region5: #{tpu_custom_call.1} parent=1 // loop_body
      %s20 = ssub.s32 %s15, 1
      %s21 = ssub.s32 %s15, 2
      %s22 = sadd.s32 %s15, 1
      %s23 = ssub.s32 %s15, %s22
      %p24 = scmp.eq.s32.totalorder %s23, 0
      %s26 = sadd.s32 %s25, 1
      %s27 = scalar_select %p24, %s25, %s26
      %p30 = pneg %p24
      %p31 = scmp.eq.s32.totalorder %s15, 1
      %p32 = por %p30, %p31
      %p33 = scmp.ne.s32.totalorder %s25, %s28
      %p34 = scmp.eq.s32.totalorder %s15, 0
      %p35 = por %p33, %p34
      %p36 = scmp.ne.s32.totalorder %s25, %s28
      %p37 = scmp.eq.s32.totalorder %s20, 1
      %p38 = por %p36, %p37
      %p39 = scmp.ne.s32.totalorder %s28, %s29
      %p40 = scmp.eq.s32.totalorder %s20, 0
      %p41 = por %p39, %p40
      %p42 = scmp.ne.s32.totalorder %s28, %s29
      %p43 = scmp.eq.s32.totalorder %s21, 1
      %p44 = por %p42, %p43
      %p46 = scmp.ne.s32.totalorder %s29, %s45
      %p47 = scmp.eq.s32.totalorder %s21, 0
      %p48 = por %p46, %p47
      %s50 = sadd.s32 %s49, 1
      %p53 = scmp.eq.s32.totalorder %s15, 1
      %p54 = scmp.ne.s32.totalorder %s49, %s51
      %p55 = scmp.eq.s32.totalorder %s15, 0
      %p56 = por %p54, %p55
      %p57 = scmp.ne.s32.totalorder %s49, %s51
      %p58 = scmp.eq.s32.totalorder %s20, 1
      %p59 = por %p57, %p58
      %p60 = scmp.ne.s32.totalorder %s51, %s52
      %p61 = scmp.eq.s32.totalorder %s20, 0
      %p62 = por %p60, %p61
      %p63 = scmp.ne.s32.totalorder %s51, %s52
      %p64 = scmp.eq.s32.totalorder %s21, 1
      %p65 = por %p63, %p64
      %p67 = scmp.ne.s32.totalorder %s52, %s66
      %p68 = scmp.eq.s32.totalorder %s21, 0
      %p69 = por %p67, %p68
      %s70 = ssub.s32 %s15, %s22
      %p71 = scmp.eq.s32.totalorder %s70, 0
      %s73 = sadd.s32 %s72, 1
      %s74 = scalar_select %p71, %s72, %s73
      %p77 = pneg %p71
      %p78 = scmp.eq.s32.totalorder %s15, 1
      %p79 = por %p77, %p78
      %p80 = scmp.ne.s32.totalorder %s72, %s75
      %p81 = scmp.eq.s32.totalorder %s15, 0
      %p82 = por %p80, %p81
      %p83 = scmp.ne.s32.totalorder %s72, %s75
      %p84 = scmp.eq.s32.totalorder %s20, 1
      %p85 = por %p83, %p84
      %p86 = scmp.ne.s32.totalorder %s75, %s76
      %p87 = scmp.eq.s32.totalorder %s20, 0
      %p88 = por %p86, %p87
      %p89 = scmp.ne.s32.totalorder %s75, %s76
      %p90 = scmp.eq.s32.totalorder %s21, 1
      %p91 = por %p89, %p90
      %p93 = scmp.ne.s32.totalorder %s76, %s92
      %p94 = scmp.eq.s32.totalorder %s21, 0
      %p95 = por %p93, %p94
      %p96 = scmp.le.s32.totalorder 1, %s15
      %p97 = scmp.lt.s32.totalorder %s15, 3
      %p98 = pnand %p96, %p97
      %p99 = pneg %p98
      // Predicated region
      $region9: #{tpu_custom_call.1} parent=5 // pred_check
        _
      $region10: #{tpu_custom_call.1} parent=5 // pred_check_branch
        %101 = sbr.rel (%p98) target = $region12
      $region11: #{tpu_custom_call.1} parent=5 // pred_region
        %s102 = ssub.s32 %s15, 1
        // Predicated region
        $region13: #{tpu_custom_call.1} parent=11 // pred_check
          %p103 = pneg %p62
        $region14: #{tpu_custom_call.1} parent=11 // pred_check_branch
          %105 = sbr.rel (%p103) target = $region16
        $region15: #{tpu_custom_call.1} parent=11 // pred_region
          %107 = vsyncadd [#allocation6], 0
          %s109 = sshll.u32 %s1, 4
          %s110 = int_to_ptr.hbm [resolvable:$true] %s109
          %s111 = sshll.u32 [#allocation5], 4
          %s112 = int_to_ptr.vmem [resolvable:$true] %s111
          %114 = dma.hbm_to_vmem [thread:$0]  %s110, 128, %s112, [#allocation6]
        $region16: #{tpu_custom_call.1} parent=11 // pred_fallthru
          _
      $region12: #{tpu_custom_call.1} parent=5 // pred_fallthru
        _
      %p115 = scmp.lt.s32.totalorder %s15, 2
      // Predicated region
      $region17: #{tpu_custom_call.1} parent=5 // pred_check
        %p116 = pneg %p115
      $region18: #{tpu_custom_call.1} parent=5 // pred_check_branch
        %118 = sbr.rel (%p116) target = $region20
      $region19: #{tpu_custom_call.1} parent=5 // pred_region
        // Predicated region
        $region21: #{tpu_custom_call.1} parent=19 // pred_check
          %p119 = pneg %p35
        $region22: #{tpu_custom_call.1} parent=19 // pred_check_branch
          %121 = sbr.rel (%p119) target = $region24
        $region23: #{tpu_custom_call.1} parent=19 // pred_region
          %s122 = sand.u32 %s25, 1
          %s123 = scalar_lea.sflag [#allocation3], %s122
          %s124 = sand.u32 %s25, 1
          %s125 = smul.addr %s124, 8
          %s126 = scalar_lea.vmem [#allocation2], %s125
          %128 = vsyncadd %s123, 0
          %s129 = smul.addr %s15, 8
          %s130 = scalar_lea.hbm %s0, %s129
          %s132 = sshll.u32 %s130, 4
          %s133 = int_to_ptr.hbm [resolvable:$true] %s132
          %s134 = sshll.u32 %s126, 4
          %s135 = int_to_ptr.vmem [resolvable:$true] %s134
          %137 = dma.hbm_to_vmem [thread:$0]  %s133, 128, %s135, %s123
        $region24: #{tpu_custom_call.1} parent=19 // pred_fallthru
          _
      $region20: #{tpu_custom_call.1} parent=5 // pred_fallthru
        _
      %p138 = scmp.le.s32.totalorder 1, %s15
      %p139 = scmp.lt.s32.totalorder %s15, 3
      %p140 = pnand %p138, %p139
      %p141 = pneg %p140
      // Predicated region
      $region25: #{tpu_custom_call.1} parent=5 // pred_check
        _
      $region26: #{tpu_custom_call.1} parent=5 // pred_check_branch
        %143 = sbr.rel (%p140) target = $region28
      $region27: #{tpu_custom_call.1} parent=5 // pred_region
        %s144 = ssub.s32 %s15, 1
        %s145 = sand.u32 %s28, 1
        %s146 = scalar_lea.sflag [#allocation3], %s145
        %s147 = sand.u32 %s28, 1
        %s148 = smul.addr %s147, 8
        %s149 = scalar_lea.vmem [#allocation2], %s148
        // Predicated region
        $region29: #{tpu_custom_call.1} parent=27 // pred_check
          %p150 = pneg %p41
        $region30: #{tpu_custom_call.1} parent=27 // pred_check_branch
          %152 = sbr.rel (%p150) target = $region32
        $region31: #{tpu_custom_call.1} parent=27 // pred_region
          %154 = dma.done %s146, 128
        $region32: #{tpu_custom_call.1} parent=27 // pred_fallthru
          _
        // Predicated region
        $region33: #{tpu_custom_call.1} parent=27 // pred_check
          %p155 = pneg %p62
        $region34: #{tpu_custom_call.1} parent=27 // pred_check_branch
          %157 = sbr.rel (%p155) target = $region36
        $region35: #{tpu_custom_call.1} parent=27 // pred_region
          %159 = dma.done [#allocation6], 128
        $region36: #{tpu_custom_call.1} parent=27 // pred_fallthru
          _
        %s160 = sand.u32 %s28, 1
        %s161 = scalar_lea.sflag [#allocation3], %s160
        %s162 = sand.u32 %s28, 1
        %s163 = smul.addr %s162, 8
        %s164 = scalar_lea.vmem [#allocation2], %s163
        %p165 = pneg %p41
        %p166 = pneg %p38
        %p167 = pneg %p62
        %p168 = pneg %p59
        %p169 = pneg %p88
        %p170 = pneg %p85
        %s171 = sand.u32 %s75, 1
        %s172 = scalar_lea.sflag [#allocation4], %s171
        %s173 = sand.u32 %s75, 1
        %s174 = smul.addr %s173, 8
        %s175 = scalar_lea.vmem [#allocation7], %s174
        %v176 = vld [vmem:[%s149] sm:$0xff]
        %v177 = vld [vmem:[#allocation5] sm:$0xff]
        %v178 = vadd.f32 %v176, %v177
        %179 = vst [vmem:[%s175] sm:$0xff] %v178
        %s180 = sand.u32 %s75, 1
        %s181 = scalar_lea.sflag [#allocation4], %s180
        %s182 = sand.u32 %s75, 1
        %s183 = smul.addr %s182, 8
        %s184 = scalar_lea.vmem [#allocation7], %s183
        // Predicated region
        $region37: #{tpu_custom_call.1} parent=27 // pred_check
          %p185 = pneg %p85
        $region38: #{tpu_custom_call.1} parent=27 // pred_check_branch
          %187 = sbr.rel (%p185) target = $region40
        $region39: #{tpu_custom_call.1} parent=27 // pred_region
          %189 = vsyncadd %s181, 0
          %s190 = smul.addr %s20, 8
          %s191 = scalar_lea.hbm %s2, %s190
          %s193 = sshll.u32 %s184, 4
          %s194 = int_to_ptr.vmem [resolvable:$true] %s193
          %s195 = sshll.u32 %s191, 4
          %s196 = int_to_ptr.hbm [resolvable:$true] %s195
          %198 = dma.vmem_to_hbm [thread:$0]  %s194, 128, %s196, %s181
        $region40: #{tpu_custom_call.1} parent=27 // pred_fallthru
          _
      $region28: #{tpu_custom_call.1} parent=5 // pred_fallthru
        _
      %p199 = scmp.le.s32.totalorder 2, %s15
      // Predicated region
      $region41: #{tpu_custom_call.1} parent=5 // pred_check
        %p200 = pneg %p199
      $region42: #{tpu_custom_call.1} parent=5 // pred_check_branch
        %202 = sbr.rel (%p200) target = $region44
      $region43: #{tpu_custom_call.1} parent=5 // pred_region
        %s203 = ssub.s32 %s15, 2
        // Predicated region
        $region45: #{tpu_custom_call.1} parent=43 // pred_check
          %p204 = pneg %p91
        $region46: #{tpu_custom_call.1} parent=43 // pred_check_branch
          %206 = sbr.rel (%p204) target = $region48
        $region47: #{tpu_custom_call.1} parent=43 // pred_region
          %s207 = sand.u32 %s76, 1
          %s208 = scalar_lea.sflag [#allocation4], %s207
          %s209 = sand.u32 %s76, 1
          %s210 = smul.addr %s209, 8
          %s211 = scalar_lea.vmem [#allocation7], %s210
          %213 = dma.done %s208, 128
        $region48: #{tpu_custom_call.1} parent=43 // pred_fallthru
          _
      $region44: #{tpu_custom_call.1} parent=5 // pred_fallthru
        _
    $region6: #{tpu_custom_call.1} parent=1 // loop_footer
      %s19 = sadd.s32 1, %s15
    $region7: #{tpu_custom_call.1} parent=1 // loop_footer_branch
      %14 = sbr.rel target = $region3
    $region8: #{tpu_custom_call.1} parent=1 // loop_exit
      _
    %214 = vsyncpa [#allocation3], 1
    %s215 = scalar_lea.sflag [#allocation3], 1
    %216 = vsyncpa %s215, 1
    %217 = vsyncpa [#allocation6], 1
    %218 = vsyncpa [#allocation4], 1
    %s219 = scalar_lea.sflag [#allocation4], 1
    %220 = vsyncpa %s219, 1

// kernel: gated_generator_forward.32
$region0: #{gated_generator_forward.32}
  #allocation0 [shape = 'u32[]', space=smem, size = 0x4, offset = 0x4, fixed_abs, tag = 'smem constant byte address 0x4 - core index']
  #allocation1 [shape = 'u32[72,128]{1,0:T(1,128)}', space=vmem, size = 0x9000, scoped, tag = 'internal scratch']
  %s0 = inlined_call_operand.vmem [shape: bf16[288,256], index: 0, kind: input, shape index: {}]
  %s1 = inlined_call_operand.vmem [shape: bf16[256,256], index: 1, kind: input, shape index: {}]
  %s2 = inlined_call_operand.vmem [shape: f32[1,256], index: 2, kind: input, shape index: {}]
  %s3 = inlined_call_operand.vmem [shape: bf16[288,128], index: 3, kind: output, shape index: {}]
  %s4 = sld [smem:[#allocation0]]
  $region22: #{gated_generator_forward.32} parent=0
    _
  %s6 = ssub.s32 1, %s4
  %s7 = scalar_select 0, %s6, %s4
  // Predicated region
  $region2: #{gated_generator_forward.32} parent=0 // pred_check
    _
  $region3: #{gated_generator_forward.32} parent=0 // pred_check_branch
    %9 = sbr.rel (0) target = $region5
  $region4: #{gated_generator_forward.32} parent=0 // pred_region
    _
  $region5: #{gated_generator_forward.32} parent=0 // pred_fallthru
    _
  // Predicated region
  $region6: #{gated_generator_forward.32} parent=0 // pred_check
    _
  $region7: #{gated_generator_forward.32} parent=0 // pred_check_branch
    %11 = sbr.rel (0) target = $region9
  $region8: #{gated_generator_forward.32} parent=0 // pred_region
    _
  $region9: #{gated_generator_forward.32} parent=0 // pred_fallthru
    _
  // Predicated region
  $region10: #{gated_generator_forward.32} parent=0 // pred_check
    _
  $region11: #{gated_generator_forward.32} parent=0 // pred_check_branch
    %13 = sbr.rel (0) target = $region13
  $region12: #{gated_generator_forward.32} parent=0 // pred_region
    _
  $region13: #{gated_generator_forward.32} parent=0 // pred_fallthru
    _
  %v14 = vld [vmem:[%s0] sm:$0xff]
  %v15 = vld [vmem:[%s0 + $0x8] sm:$0xff]
  %v16 = vld [vmem:[%s0 + $0x10] sm:$0xff]
  %v17 = vld [vmem:[%s0 + $0x18] sm:$0xff]
  %v18 = vld [vmem:[%s0 + $0x20] sm:$0xff]
  %v19 = vld [vmem:[%s0 + $0x28] sm:$0xff]
  %v20 = vld [vmem:[%s0 + $0x30] sm:$0xff]
  %v21 = vld [vmem:[%s0 + $0x38] sm:$0xff]
  %v22 = vld [vmem:[%s0 + $0x40] sm:$0xff]
  %v23 = vld [vmem:[%s0 + $0x48] sm:$0xff]
  %v24 = vld [vmem:[%s0 + $0x50] sm:$0xff]
  %v25 = vld [vmem:[%s0 + $0x58] sm:$0xff]
  %v26 = vld [vmem:[%s0 + $0x60] sm:$0xff]
  %v27 = vld [vmem:[%s0 + $0x68] sm:$0xff]
  %v28 = vld [vmem:[%s0 + $0x70] sm:$0xff]
  %v29 = vld [vmem:[%s0 + $0x78] sm:$0xff]
  %v30 = vld [vmem:[%s0 + $0x80] sm:$0xff]
  %v31 = vld [vmem:[%s0 + $0x88] sm:$0xff]
  %v32 = vld [vmem:[%s0 + $0x90] sm:$0xff]
  %v33 = vld [vmem:[%s0 + $0x98] sm:$0xff]
  %v34 = vld [vmem:[%s0 + $0xa0] sm:$0xff]
  %v35 = vld [vmem:[%s0 + $0xa8] sm:$0xff]
  %v36 = vld [vmem:[%s0 + $0xb0] sm:$0xff]
  %v37 = vld [vmem:[%s0 + $0xb8] sm:$0xff]
  %v38 = vld [vmem:[%s0 + $0xc0] sm:$0xff]
  %v39 = vld [vmem:[%s0 + $0xc8] sm:$0xff]
  %v40 = vld [vmem:[%s0 + $0xd0] sm:$0xff]
  %v41 = vld [vmem:[%s0 + $0xd8] sm:$0xff]
  %v42 = vld [vmem:[%s0 + $0xe0] sm:$0xff]
  %v43 = vld [vmem:[%s0 + $0xe8] sm:$0xff]
  %v44 = vld [vmem:[%s0 + $0xf0] sm:$0xff]
  %v45 = vld [vmem:[%s0 + $0xf8] sm:$0xff]
  %v46 = vld [vmem:[%s0 + $0x100] sm:$0xff]
  %v47 = vld [vmem:[%s0 + $0x108] sm:$0xff]
  %v48 = vld [vmem:[%s0 + $0x110] sm:$0xff]
  %v49 = vld [vmem:[%s0 + $0x118] sm:$0xff]
  %v50 = vld [vmem:[%s1] sm:$0xff]
  %v51 = vld [vmem:[%s1 + $0x8] sm:$0xff]
  %v52 = vld [vmem:[%s1 + $0x10] sm:$0xff]
  %v53 = vld [vmem:[%s1 + $0x18] sm:$0xff]
  %v54 = vld [vmem:[%s1 + $0x20] sm:$0xff]
  %v55 = vld [vmem:[%s1 + $0x28] sm:$0xff]
  %v56 = vld [vmem:[%s1 + $0x30] sm:$0xff]
  %v57 = vld [vmem:[%s1 + $0x38] sm:$0xff]
  %v58 = vld [vmem:[%s1 + $0x40] sm:$0xff]
  %v59 = vld [vmem:[%s1 + $0x48] sm:$0xff]
  %v60 = vld [vmem:[%s1 + $0x50] sm:$0xff]
  %v61 = vld [vmem:[%s1 + $0x58] sm:$0xff]
  %v62 = vld [vmem:[%s1 + $0x60] sm:$0xff]
  %v63 = vld [vmem:[%s1 + $0x68] sm:$0xff]
  %v64 = vld [vmem:[%s1 + $0x70] sm:$0xff]
  %v65 = vld [vmem:[%s1 + $0x78] sm:$0xff]
  %v66 = vld [vmem:[%s1 + $0x80] sm:$0xff]
  %v67 = vld [vmem:[%s1 + $0x88] sm:$0xff]
  %v68 = vld [vmem:[%s1 + $0x90] sm:$0xff]
  %v69 = vld [vmem:[%s1 + $0x98] sm:$0xff]
  %v70 = vld [vmem:[%s1 + $0xa0] sm:$0xff]
  %v71 = vld [vmem:[%s1 + $0xa8] sm:$0xff]
  %v72 = vld [vmem:[%s1 + $0xb0] sm:$0xff]
  %v73 = vld [vmem:[%s1 + $0xb8] sm:$0xff]
  %v74 = vld [vmem:[%s1 + $0xc0] sm:$0xff]
  %v75 = vld [vmem:[%s1 + $0xc8] sm:$0xff]
  %v76 = vld [vmem:[%s1 + $0xd0] sm:$0xff]
  %v77 = vld [vmem:[%s1 + $0xd8] sm:$0xff]
  %v78 = vld [vmem:[%s1 + $0xe0] sm:$0xff]
  %v79 = vld [vmem:[%s1 + $0xe8] sm:$0xff]
  %v80 = vld [vmem:[%s1 + $0xf0] sm:$0xff]
  %v81 = vld [vmem:[%s1 + $0xf8] sm:$0xff]
  %v82 = vld [vmem:[%s2] sm:$0x3]
  %v84 = vperm.slane %v82, 0
  %v85 = vperm.slane %v82, 1
  %v124 = vunpack.c.l.b16 %v14
  %v125 = vunpack.c.h.b16 %v14
  %v126 = vunpack.c.l.b16 %v15
  %v127 = vunpack.c.h.b16 %v15
  %v128 = vunpack.c.l.b16 %v16
  %v129 = vunpack.c.h.b16 %v16
  %v130 = vunpack.c.l.b16 %v17
  %v131 = vunpack.c.h.b16 %v17
  %v132 = vunpack.c.l.b16 %v18
  %v133 = vunpack.c.h.b16 %v18
  %v134 = vunpack.c.l.b16 %v19
  %v135 = vunpack.c.h.b16 %v19
  %v136 = vunpack.c.l.b16 %v20
  %v137 = vunpack.c.h.b16 %v20
  %v138 = vunpack.c.l.b16 %v21
  %v139 = vunpack.c.h.b16 %v21
  %v140 = vunpack.c.l.b16 %v22
  %v141 = vunpack.c.h.b16 %v22
  %v142 = vunpack.c.l.b16 %v23
  %v143 = vunpack.c.h.b16 %v23
  %v144 = vunpack.c.l.b16 %v24
  %v145 = vunpack.c.h.b16 %v24
  %v146 = vunpack.c.l.b16 %v25
  %v147 = vunpack.c.h.b16 %v25
  %v148 = vunpack.c.l.b16 %v26
  %v149 = vunpack.c.h.b16 %v26
  %v150 = vunpack.c.l.b16 %v27
  %v151 = vunpack.c.h.b16 %v27
  %v152 = vunpack.c.l.b16 %v28
  %v153 = vunpack.c.h.b16 %v28
  %v154 = vunpack.c.l.b16 %v29
  %v155 = vunpack.c.h.b16 %v29
  %v156 = vunpack.c.l.b16 %v30
  %v157 = vunpack.c.h.b16 %v30
  %v158 = vunpack.c.l.b16 %v31
  %v159 = vunpack.c.h.b16 %v31
  %v160 = vunpack.c.l.b16 %v32
  %v161 = vunpack.c.h.b16 %v32
  %v162 = vunpack.c.l.b16 %v33
  %v163 = vunpack.c.h.b16 %v33
  %v164 = vunpack.c.l.b16 %v34
  %v165 = vunpack.c.h.b16 %v34
  %v166 = vunpack.c.l.b16 %v35
  %v167 = vunpack.c.h.b16 %v35
  %v168 = vunpack.c.l.b16 %v36
  %v169 = vunpack.c.h.b16 %v36
  %v170 = vunpack.c.l.b16 %v37
  %v171 = vunpack.c.h.b16 %v37
  %v172 = vunpack.c.l.b16 %v38
  %v173 = vunpack.c.h.b16 %v38
  %v174 = vunpack.c.l.b16 %v39
  %v175 = vunpack.c.h.b16 %v39
  %v176 = vunpack.c.l.b16 %v40
  %v177 = vunpack.c.h.b16 %v40
  %v178 = vunpack.c.l.b16 %v41
  %v179 = vunpack.c.h.b16 %v41
  %v180 = vunpack.c.l.b16 %v42
  %v181 = vunpack.c.h.b16 %v42
  %v182 = vunpack.c.l.b16 %v43
  %v183 = vunpack.c.h.b16 %v43
  %v184 = vunpack.c.l.b16 %v44
  %v185 = vunpack.c.h.b16 %v44
  %v186 = vunpack.c.l.b16 %v45
  %v187 = vunpack.c.h.b16 %v45
  %v188 = vunpack.c.l.b16 %v46
  %v189 = vunpack.c.h.b16 %v46
  %v190 = vunpack.c.l.b16 %v47
  %v191 = vunpack.c.h.b16 %v47
  %v192 = vunpack.c.l.b16 %v48
  %v193 = vunpack.c.h.b16 %v48
  %v194 = vunpack.c.l.b16 %v49
  %v195 = vunpack.c.h.b16 %v49
  %v196 = vpack.c.b16 %v126, %v124
  %v197 = vpack.c.b16 %v127, %v125
  %v198 = vpack.c.b16 %v130, %v128
  %v199 = vpack.c.b16 %v131, %v129
  %v200 = vpack.c.b16 %v134, %v132
  %v201 = vpack.c.b16 %v135, %v133
  %v202 = vpack.c.b16 %v138, %v136
  %v203 = vpack.c.b16 %v139, %v137
  %v204 = vpack.c.b16 %v142, %v140
  %v205 = vpack.c.b16 %v143, %v141
  %v206 = vpack.c.b16 %v146, %v144
  %v207 = vpack.c.b16 %v147, %v145
  %v208 = vpack.c.b16 %v150, %v148
  %v209 = vpack.c.b16 %v151, %v149
  %v210 = vpack.c.b16 %v154, %v152
  %v211 = vpack.c.b16 %v155, %v153
  %v212 = vpack.c.b16 %v158, %v156
  %v213 = vpack.c.b16 %v159, %v157
  %v214 = vpack.c.b16 %v162, %v160
  %v215 = vpack.c.b16 %v163, %v161
  %v216 = vpack.c.b16 %v166, %v164
  %v217 = vpack.c.b16 %v167, %v165
  %v218 = vpack.c.b16 %v170, %v168
  %v219 = vpack.c.b16 %v171, %v169
  %v220 = vpack.c.b16 %v174, %v172
  %v221 = vpack.c.b16 %v175, %v173
  %v222 = vpack.c.b16 %v178, %v176
  %v223 = vpack.c.b16 %v179, %v177
  %v224 = vpack.c.b16 %v182, %v180
  %v225 = vpack.c.b16 %v183, %v181
  %v226 = vpack.c.b16 %v186, %v184
  %v227 = vpack.c.b16 %v187, %v185
  %v228 = vpack.c.b16 %v190, %v188
  %v229 = vpack.c.b16 %v191, %v189
  %v230 = vpack.c.b16 %v194, %v192
  %v231 = vpack.c.b16 %v195, %v193
  %v300 = vunpack.c.l.b16 %v50
  %v301 = vunpack.c.h.b16 %v50
  %v302 = vunpack.c.l.b16 %v51
  %v303 = vunpack.c.h.b16 %v51
  %v304 = vunpack.c.l.b16 %v52
  %v305 = vunpack.c.h.b16 %v52
  %v306 = vunpack.c.l.b16 %v53
  %v307 = vunpack.c.h.b16 %v53
  %v308 = vunpack.c.l.b16 %v54
  %v309 = vunpack.c.h.b16 %v54
  %v310 = vunpack.c.l.b16 %v55
  %v311 = vunpack.c.h.b16 %v55
  %v312 = vunpack.c.l.b16 %v56
  %v313 = vunpack.c.h.b16 %v56
  %v314 = vunpack.c.l.b16 %v57
  %v315 = vunpack.c.h.b16 %v57
  %v316 = vunpack.c.l.b16 %v58
  %v317 = vunpack.c.h.b16 %v58
  %v318 = vunpack.c.l.b16 %v59
  %v319 = vunpack.c.h.b16 %v59
  %v320 = vunpack.c.l.b16 %v60
  %v321 = vunpack.c.h.b16 %v60
  %v322 = vunpack.c.l.b16 %v61
  %v323 = vunpack.c.h.b16 %v61
  %v324 = vunpack.c.l.b16 %v62
  %v325 = vunpack.c.h.b16 %v62
  %v326 = vunpack.c.l.b16 %v63
  %v327 = vunpack.c.h.b16 %v63
  %v328 = vunpack.c.l.b16 %v64
  %v329 = vunpack.c.h.b16 %v64
  %v330 = vunpack.c.l.b16 %v65
  %v331 = vunpack.c.h.b16 %v65
  %v332 = vunpack.c.l.b16 %v66
  %v333 = vunpack.c.h.b16 %v66
  %v334 = vunpack.c.l.b16 %v67
  %v335 = vunpack.c.h.b16 %v67
  %v336 = vunpack.c.l.b16 %v68
  %v337 = vunpack.c.h.b16 %v68
  %v338 = vunpack.c.l.b16 %v69
  %v339 = vunpack.c.h.b16 %v69
  %v340 = vunpack.c.l.b16 %v70
  %v341 = vunpack.c.h.b16 %v70
  %v342 = vunpack.c.l.b16 %v71
  %v343 = vunpack.c.h.b16 %v71
  %v344 = vunpack.c.l.b16 %v72
  %v345 = vunpack.c.h.b16 %v72
  %v346 = vunpack.c.l.b16 %v73
  %v347 = vunpack.c.h.b16 %v73
  %v348 = vunpack.c.l.b16 %v74
  %v349 = vunpack.c.h.b16 %v74
  %v350 = vunpack.c.l.b16 %v75
  %v351 = vunpack.c.h.b16 %v75
  %v352 = vunpack.c.l.b16 %v76
  %v353 = vunpack.c.h.b16 %v76
  %v354 = vunpack.c.l.b16 %v77
  %v355 = vunpack.c.h.b16 %v77
  %v356 = vunpack.c.l.b16 %v78
  %v357 = vunpack.c.h.b16 %v78
  %v358 = vunpack.c.l.b16 %v79
  %v359 = vunpack.c.h.b16 %v79
  %v360 = vunpack.c.l.b16 %v80
  %v361 = vunpack.c.h.b16 %v80
  %v362 = vunpack.c.l.b16 %v81
  %v363 = vunpack.c.h.b16 %v81
  %v364 = vpack.c.b16 %v302, %v300
  %v365 = vpack.c.b16 %v303, %v301
  %v366 = vpack.c.b16 %v306, %v304
  %v367 = vpack.c.b16 %v307, %v305
  %v368 = vpack.c.b16 %v310, %v308
  %v369 = vpack.c.b16 %v311, %v309
  %v370 = vpack.c.b16 %v314, %v312
  %v371 = vpack.c.b16 %v315, %v313
  %v372 = vpack.c.b16 %v318, %v316
  %v373 = vpack.c.b16 %v319, %v317
  %v374 = vpack.c.b16 %v322, %v320
  %v375 = vpack.c.b16 %v323, %v321
  %v376 = vpack.c.b16 %v326, %v324
  %v377 = vpack.c.b16 %v327, %v325
  %v378 = vpack.c.b16 %v330, %v328
  %v379 = vpack.c.b16 %v331, %v329
  %v380 = vpack.c.b16 %v334, %v332
  %v381 = vpack.c.b16 %v335, %v333
  %v382 = vpack.c.b16 %v338, %v336
  %v383 = vpack.c.b16 %v339, %v337
  %v384 = vpack.c.b16 %v342, %v340
  %v385 = vpack.c.b16 %v343, %v341
  %v386 = vpack.c.b16 %v346, %v344
  %v387 = vpack.c.b16 %v347, %v345
  %v388 = vpack.c.b16 %v350, %v348
  %v389 = vpack.c.b16 %v351, %v349
  %v390 = vpack.c.b16 %v354, %v352
  %v391 = vpack.c.b16 %v355, %v353
  %v392 = vpack.c.b16 %v358, %v356
  %v393 = vpack.c.b16 %v359, %v357
  %v394 = vpack.c.b16 %v362, %v360
  %v395 = vpack.c.b16 %v363, %v361
  %428 = vmatpush.bf16.msra.mxu0 %v378
  %429 = vmatpush.bf16.msra.mxu0 %v376
  %430 = vmatpush.bf16.msra.mxu0 %v374
  %431 = vmatpush.bf16.msra.mxu0 %v372
  %432 = vmatpush.bf16.msra.mxu0 %v370
  %433 = vmatpush.bf16.msra.mxu0 %v368
  %434 = vmatpush.bf16.msra.mxu0 %v366
  %435 = vmatpush.bf16.msra.mxu0 %v364
  %436 = vmatmul.bf16.gmra.mxu0 %v196
  %v437 = vpop.f32.mrf.mxu0
  %v438 = vadd.f32 %v84, %v437
  %v439 = vpop.f32.mrf.mxu0
  %v440 = vadd.f32 %v84, %v439
  %441 = vmatmul.bf16.gmra.mxu0 %v198
  %v442 = vpop.f32.mrf.mxu0
  %v443 = vadd.f32 %v84, %v442
  %v444 = vpop.f32.mrf.mxu0
  %v445 = vadd.f32 %v84, %v444
  %446 = vmatmul.bf16.gmra.mxu0 %v200
  %v447 = vpop.f32.mrf.mxu0
  %v448 = vadd.f32 %v84, %v447
  %v449 = vpop.f32.mrf.mxu0
  %v450 = vadd.f32 %v84, %v449
  %451 = vmatmul.bf16.gmra.mxu0 %v202
  %v452 = vpop.f32.mrf.mxu0
  %v453 = vadd.f32 %v84, %v452
  %v454 = vpop.f32.mrf.mxu0
  %v455 = vadd.f32 %v84, %v454
  %456 = vmatmul.bf16.gmra.mxu0 %v204
  %v457 = vpop.f32.mrf.mxu0
  %v458 = vadd.f32 %v84, %v457
  %v459 = vpop.f32.mrf.mxu0
  %v460 = vadd.f32 %v84, %v459
  %461 = vmatmul.bf16.gmra.mxu0 %v206
  %v462 = vpop.f32.mrf.mxu0
  %v463 = vadd.f32 %v84, %v462
  %v464 = vpop.f32.mrf.mxu0
  %v465 = vadd.f32 %v84, %v464
  %466 = vmatmul.bf16.gmra.mxu0 %v208
  %v467 = vpop.f32.mrf.mxu0
  %v468 = vadd.f32 %v84, %v467
  %v469 = vpop.f32.mrf.mxu0
  %v470 = vadd.f32 %v84, %v469
  %471 = vmatmul.bf16.gmra.mxu0 %v210
  %v472 = vpop.f32.mrf.mxu0
  %v473 = vadd.f32 %v84, %v472
  %v474 = vpop.f32.mrf.mxu0
  %v475 = vadd.f32 %v84, %v474
  %476 = vmatmul.bf16.gmra.mxu0 %v212
  %v477 = vpop.f32.mrf.mxu0
  %v478 = vadd.f32 %v84, %v477
  %v479 = vpop.f32.mrf.mxu0
  %v480 = vadd.f32 %v84, %v479
  %481 = vmatmul.bf16.gmra.mxu0 %v214
  %v482 = vpop.f32.mrf.mxu0
  %v483 = vadd.f32 %v84, %v482
  %v484 = vpop.f32.mrf.mxu0
  %v485 = vadd.f32 %v84, %v484
  %486 = vmatmul.bf16.gmra.mxu0 %v216
  %v487 = vpop.f32.mrf.mxu0
  %v488 = vadd.f32 %v84, %v487
  %v489 = vpop.f32.mrf.mxu0
  %v490 = vadd.f32 %v84, %v489
  %491 = vmatmul.bf16.gmra.mxu0 %v218
  %v492 = vpop.f32.mrf.mxu0
  %v493 = vadd.f32 %v84, %v492
  %v494 = vpop.f32.mrf.mxu0
  %v495 = vadd.f32 %v84, %v494
  %496 = vmatmul.bf16.gmra.mxu0 %v220
  %v497 = vpop.f32.mrf.mxu0
  %v498 = vadd.f32 %v84, %v497
  %v499 = vpop.f32.mrf.mxu0
  %v500 = vadd.f32 %v84, %v499
  %501 = vmatmul.bf16.gmra.mxu0 %v222
  %v502 = vpop.f32.mrf.mxu0
  %v503 = vadd.f32 %v84, %v502
  %v504 = vpop.f32.mrf.mxu0
  %v505 = vadd.f32 %v84, %v504
  %506 = vmatmul.bf16.gmra.mxu0 %v224
  %v507 = vpop.f32.mrf.mxu0
  %v508 = vadd.f32 %v84, %v507
  %v509 = vpop.f32.mrf.mxu0
  %v510 = vadd.f32 %v84, %v509
  %511 = vmatmul.bf16.gmra.mxu0 %v226
  %v512 = vpop.f32.mrf.mxu0
  %v513 = vadd.f32 %v84, %v512
  %v514 = vpop.f32.mrf.mxu0
  %v515 = vadd.f32 %v84, %v514
  %516 = vmatmul.bf16.gmra.mxu0 %v228
  %v517 = vpop.f32.mrf.mxu0
  %v518 = vadd.f32 %v84, %v517
  %v519 = vpop.f32.mrf.mxu0
  %v520 = vadd.f32 %v84, %v519
  %521 = vmatmul.bf16.gmra.mxu0 %v230
  %v522 = vpop.f32.mrf.mxu0
  %v523 = vadd.f32 %v84, %v522
  %v524 = vpop.f32.mrf.mxu0
  %v525 = vadd.f32 %v84, %v524
  %526 = vdwg.mxu0
  %527 = vmatpush.bf16.msra.mxu0 %v394
  %528 = vmatpush.bf16.msra.mxu0 %v392
  %529 = vmatpush.bf16.msra.mxu0 %v390
  %530 = vmatpush.bf16.msra.mxu0 %v388
  %531 = vmatpush.bf16.msra.mxu0 %v386
  %532 = vmatpush.bf16.msra.mxu0 %v384
  %533 = vmatpush.bf16.msra.mxu0 %v382
  %534 = vmatpush.bf16.msra.mxu0 %v380
  %535 = vmatmul.bf16.gmra.mxu0 %v197
  %v536 = vpop.f32.mrf.mxu0
  %v537 = vadd.f32 %v438, %v536
  %v538 = vpop.f32.mrf.mxu0
  %v539 = vadd.f32 %v440, %v538
  %540 = vmatmul.bf16.gmra.mxu0 %v199
  %v541 = vpop.f32.mrf.mxu0
  %v542 = vadd.f32 %v443, %v541
  %v543 = vpop.f32.mrf.mxu0
  %v544 = vadd.f32 %v445, %v543
  %545 = vmatmul.bf16.gmra.mxu0 %v201
  %v546 = vpop.f32.mrf.mxu0
  %v547 = vadd.f32 %v448, %v546
  %v548 = vpop.f32.mrf.mxu0
  %v549 = vadd.f32 %v450, %v548
  %550 = vmatmul.bf16.gmra.mxu0 %v203
  %v551 = vpop.f32.mrf.mxu0
  %v552 = vadd.f32 %v453, %v551
  %v553 = vpop.f32.mrf.mxu0
  %v554 = vadd.f32 %v455, %v553
  %555 = vmatmul.bf16.gmra.mxu0 %v205
  %v556 = vpop.f32.mrf.mxu0
  %v557 = vadd.f32 %v458, %v556
  %v558 = vpop.f32.mrf.mxu0
  %v559 = vadd.f32 %v460, %v558
  %560 = vmatmul.bf16.gmra.mxu0 %v207
  %v561 = vpop.f32.mrf.mxu0
  %v562 = vadd.f32 %v463, %v561
  %v563 = vpop.f32.mrf.mxu0
  %v564 = vadd.f32 %v465, %v563
  %565 = vmatmul.bf16.gmra.mxu0 %v209
  %v566 = vpop.f32.mrf.mxu0
  %v567 = vadd.f32 %v468, %v566
  %v568 = vpop.f32.mrf.mxu0
  %v569 = vadd.f32 %v470, %v568
  %570 = vmatmul.bf16.gmra.mxu0 %v211
  %v571 = vpop.f32.mrf.mxu0
  %v572 = vadd.f32 %v473, %v571
  %v573 = vpop.f32.mrf.mxu0
  %v574 = vadd.f32 %v475, %v573
  %575 = vmatmul.bf16.gmra.mxu0 %v213
  %v576 = vpop.f32.mrf.mxu0
  %v577 = vadd.f32 %v478, %v576
  %v578 = vpop.f32.mrf.mxu0
  %v579 = vadd.f32 %v480, %v578
  %580 = vmatmul.bf16.gmra.mxu0 %v215
  %v581 = vpop.f32.mrf.mxu0
  %v582 = vadd.f32 %v483, %v581
  %v583 = vpop.f32.mrf.mxu0
  %v584 = vadd.f32 %v485, %v583
  %585 = vmatmul.bf16.gmra.mxu0 %v217
  %v586 = vpop.f32.mrf.mxu0
  %v587 = vadd.f32 %v488, %v586
  %v588 = vpop.f32.mrf.mxu0
  %v589 = vadd.f32 %v490, %v588
  %590 = vmatmul.bf16.gmra.mxu0 %v219
  %v591 = vpop.f32.mrf.mxu0
  %v592 = vadd.f32 %v493, %v591
  %v593 = vpop.f32.mrf.mxu0
  %v594 = vadd.f32 %v495, %v593
  %595 = vmatmul.bf16.gmra.mxu0 %v221
  %v596 = vpop.f32.mrf.mxu0
  %v597 = vadd.f32 %v498, %v596
  %v598 = vpop.f32.mrf.mxu0
  %v599 = vadd.f32 %v500, %v598
  %600 = vmatmul.bf16.gmra.mxu0 %v223
  %v601 = vpop.f32.mrf.mxu0
  %v602 = vadd.f32 %v503, %v601
  %v603 = vpop.f32.mrf.mxu0
  %v604 = vadd.f32 %v505, %v603
  %605 = vmatmul.bf16.gmra.mxu0 %v225
  %v606 = vpop.f32.mrf.mxu0
  %v607 = vadd.f32 %v508, %v606
  %v608 = vpop.f32.mrf.mxu0
  %v609 = vadd.f32 %v510, %v608
  %610 = vmatmul.bf16.gmra.mxu0 %v227
  %v611 = vpop.f32.mrf.mxu0
  %v612 = vadd.f32 %v513, %v611
  %v613 = vpop.f32.mrf.mxu0
  %v614 = vadd.f32 %v515, %v613
  %615 = vmatmul.bf16.gmra.mxu0 %v229
  %v616 = vpop.f32.mrf.mxu0
  %v617 = vadd.f32 %v518, %v616
  %v618 = vpop.f32.mrf.mxu0
  %v619 = vadd.f32 %v520, %v618
  %620 = vmatmul.bf16.gmra.mxu0 %v231
  %v621 = vpop.f32.mrf.mxu0
  %v622 = vadd.f32 %v523, %v621
  %v623 = vpop.f32.mrf.mxu0
  %v624 = vadd.f32 %v525, %v623
  %625 = vdwg.mxu0
  %626 = vmatpush.bf16.msra.mxu0 %v379
  %627 = vmatpush.bf16.msra.mxu0 %v377
  %628 = vmatpush.bf16.msra.mxu0 %v375
  %629 = vmatpush.bf16.msra.mxu0 %v373
  %630 = vmatpush.bf16.msra.mxu0 %v371
  %631 = vmatpush.bf16.msra.mxu0 %v369
  %632 = vmatpush.bf16.msra.mxu0 %v367
  %633 = vmatpush.bf16.msra.mxu0 %v365
  %634 = vmatmul.bf16.gmra.mxu0 %v196
  %v635 = vpop.f32.mrf.mxu0
  %v636 = vadd.f32 %v85, %v635
  %v637 = vpop.f32.mrf.mxu0
  %v638 = vadd.f32 %v85, %v637
  %639 = vmatmul.bf16.gmra.mxu0 %v198
  %v640 = vpop.f32.mrf.mxu0
  %v641 = vadd.f32 %v85, %v640
  %v642 = vpop.f32.mrf.mxu0
  %v643 = vadd.f32 %v85, %v642
  %644 = vmatmul.bf16.gmra.mxu0 %v200
  %v645 = vpop.f32.mrf.mxu0
  %v646 = vadd.f32 %v85, %v645
  %v647 = vpop.f32.mrf.mxu0
  %v648 = vadd.f32 %v85, %v647
  %649 = vmatmul.bf16.gmra.mxu0 %v202
  %v650 = vpop.f32.mrf.mxu0
  %v651 = vadd.f32 %v85, %v650
  %v652 = vpop.f32.mrf.mxu0
  %v653 = vadd.f32 %v85, %v652
  %654 = vmatmul.bf16.gmra.mxu0 %v204
  %v655 = vpop.f32.mrf.mxu0
  %v656 = vadd.f32 %v85, %v655
  %v657 = vpop.f32.mrf.mxu0
  %v658 = vadd.f32 %v85, %v657
  %659 = vmatmul.bf16.gmra.mxu0 %v206
  %v660 = vpop.f32.mrf.mxu0
  %v661 = vadd.f32 %v85, %v660
  %v662 = vpop.f32.mrf.mxu0
  %v663 = vadd.f32 %v85, %v662
  %664 = vmatmul.bf16.gmra.mxu0 %v208
  %v665 = vpop.f32.mrf.mxu0
  %v666 = vadd.f32 %v85, %v665
  %v667 = vpop.f32.mrf.mxu0
  %v668 = vadd.f32 %v85, %v667
  %669 = vmatmul.bf16.gmra.mxu0 %v210
  %v670 = vpop.f32.mrf.mxu0
  %v671 = vadd.f32 %v85, %v670
  %v672 = vpop.f32.mrf.mxu0
  %v673 = vadd.f32 %v85, %v672
  %674 = vmatmul.bf16.gmra.mxu0 %v212
  %v675 = vpop.f32.mrf.mxu0
  %v676 = vadd.f32 %v85, %v675
  %v677 = vpop.f32.mrf.mxu0
  %v678 = vadd.f32 %v85, %v677
  %679 = vmatmul.bf16.gmra.mxu0 %v214
  %v680 = vpop.f32.mrf.mxu0
  %v681 = vadd.f32 %v85, %v680
  %v682 = vpop.f32.mrf.mxu0
  %v683 = vadd.f32 %v85, %v682
  %684 = vmatmul.bf16.gmra.mxu0 %v216
  %v685 = vpop.f32.mrf.mxu0
  %v686 = vadd.f32 %v85, %v685
  %v687 = vpop.f32.mrf.mxu0
  %v688 = vadd.f32 %v85, %v687
  %689 = vmatmul.bf16.gmra.mxu0 %v218
  %v690 = vpop.f32.mrf.mxu0
  %v691 = vadd.f32 %v85, %v690
  %v692 = vpop.f32.mrf.mxu0
  %v693 = vadd.f32 %v85, %v692
  %694 = vmatmul.bf16.gmra.mxu0 %v220
  %v695 = vpop.f32.mrf.mxu0
  %v696 = vadd.f32 %v85, %v695
  %v697 = vpop.f32.mrf.mxu0
  %v698 = vadd.f32 %v85, %v697
  %699 = vmatmul.bf16.gmra.mxu0 %v222
  %v700 = vpop.f32.mrf.mxu0
  %v701 = vadd.f32 %v85, %v700
  %v702 = vpop.f32.mrf.mxu0
  %v703 = vadd.f32 %v85, %v702
  %704 = vmatmul.bf16.gmra.mxu0 %v224
  %v705 = vpop.f32.mrf.mxu0
  %v706 = vadd.f32 %v85, %v705
  %v707 = vpop.f32.mrf.mxu0
  %v708 = vadd.f32 %v85, %v707
  %709 = vmatmul.bf16.gmra.mxu0 %v226
  %v710 = vpop.f32.mrf.mxu0
  %v711 = vadd.f32 %v85, %v710
  %v712 = vpop.f32.mrf.mxu0
  %v713 = vadd.f32 %v85, %v712
  %714 = vmatmul.bf16.gmra.mxu0 %v228
  %v715 = vpop.f32.mrf.mxu0
  %v716 = vadd.f32 %v85, %v715
  %v717 = vpop.f32.mrf.mxu0
  %v718 = vadd.f32 %v85, %v717
  %719 = vmatmul.bf16.gmra.mxu0 %v230
  %v720 = vpop.f32.mrf.mxu0
  %v721 = vadd.f32 %v85, %v720
  %v722 = vpop.f32.mrf.mxu0
  %v723 = vadd.f32 %v85, %v722
  %724 = vdwg.mxu0
  %725 = vmatpush.bf16.msra.mxu0 %v395
  %726 = vmatpush.bf16.msra.mxu0 %v393
  %727 = vmatpush.bf16.msra.mxu0 %v391
  %728 = vmatpush.bf16.msra.mxu0 %v389
  %729 = vmatpush.bf16.msra.mxu0 %v387
  %730 = vmatpush.bf16.msra.mxu0 %v385
  %731 = vmatpush.bf16.msra.mxu0 %v383
  %732 = vmatpush.bf16.msra.mxu0 %v381
  %733 = vmatmul.bf16.gmra.mxu0 %v197
  %v734 = vpop.f32.mrf.mxu0
  %v735 = vadd.f32 %v636, %v734
  %v736 = vpop.f32.mrf.mxu0
  %v737 = vadd.f32 %v638, %v736
  %738 = vmatmul.bf16.gmra.mxu0 %v199
  %v739 = vpop.f32.mrf.mxu0
  %v740 = vadd.f32 %v641, %v739
  %v741 = vpop.f32.mrf.mxu0
  %v742 = vadd.f32 %v643, %v741
  %743 = vmatmul.bf16.gmra.mxu0 %v201
  %v744 = vpop.f32.mrf.mxu0
  %v745 = vadd.f32 %v646, %v744
  %v746 = vpop.f32.mrf.mxu0
  %v747 = vadd.f32 %v648, %v746
  %748 = vmatmul.bf16.gmra.mxu0 %v203
  %v749 = vpop.f32.mrf.mxu0
  %v750 = vadd.f32 %v651, %v749
  %v751 = vpop.f32.mrf.mxu0
  %v752 = vadd.f32 %v653, %v751
  %753 = vmatmul.bf16.gmra.mxu0 %v205
  %v754 = vpop.f32.mrf.mxu0
  %v755 = vadd.f32 %v656, %v754
  %v756 = vpop.f32.mrf.mxu0
  %v757 = vadd.f32 %v658, %v756
  %758 = vmatmul.bf16.gmra.mxu0 %v207
  %v759 = vpop.f32.mrf.mxu0
  %v760 = vadd.f32 %v661, %v759
  %v761 = vpop.f32.mrf.mxu0
  %v762 = vadd.f32 %v663, %v761
  %763 = vmatmul.bf16.gmra.mxu0 %v209
  %v764 = vpop.f32.mrf.mxu0
  %v765 = vadd.f32 %v666, %v764
  %v766 = vpop.f32.mrf.mxu0
  %v767 = vadd.f32 %v668, %v766
  %768 = vmatmul.bf16.gmra.mxu0 %v211
  %v769 = vpop.f32.mrf.mxu0
  %v770 = vadd.f32 %v671, %v769
  %v771 = vpop.f32.mrf.mxu0
  %v772 = vadd.f32 %v673, %v771
  %773 = vmatmul.bf16.gmra.mxu0 %v213
  %v774 = vpop.f32.mrf.mxu0
  %v775 = vadd.f32 %v676, %v774
  %v776 = vpop.f32.mrf.mxu0
  %v777 = vadd.f32 %v678, %v776
  %778 = vmatmul.bf16.gmra.mxu0 %v215
  %v779 = vpop.f32.mrf.mxu0
  %v780 = vadd.f32 %v681, %v779
  %v781 = vpop.f32.mrf.mxu0
  %v782 = vadd.f32 %v683, %v781
  %783 = vmatmul.bf16.gmra.mxu0 %v217
  %v784 = vpop.f32.mrf.mxu0
  %v785 = vadd.f32 %v686, %v784
  %v786 = vpop.f32.mrf.mxu0
  %v787 = vadd.f32 %v688, %v786
  %788 = vmatmul.bf16.gmra.mxu0 %v219
  %v789 = vpop.f32.mrf.mxu0
  %v790 = vadd.f32 %v691, %v789
  %v791 = vpop.f32.mrf.mxu0
  %v792 = vadd.f32 %v693, %v791
  %793 = vmatmul.bf16.gmra.mxu0 %v221
  %v794 = vpop.f32.mrf.mxu0
  %v795 = vadd.f32 %v696, %v794
  %v796 = vpop.f32.mrf.mxu0
  %v797 = vadd.f32 %v698, %v796
  %798 = vmatmul.bf16.gmra.mxu0 %v223
  %v799 = vpop.f32.mrf.mxu0
  %v800 = vadd.f32 %v701, %v799
  %v801 = vpop.f32.mrf.mxu0
  %v802 = vadd.f32 %v703, %v801
  %803 = vmatmul.bf16.gmra.mxu0 %v225
  %v804 = vpop.f32.mrf.mxu0
  %v805 = vadd.f32 %v706, %v804
  %v806 = vpop.f32.mrf.mxu0
  %v807 = vadd.f32 %v708, %v806
  %808 = vmatmul.bf16.gmra.mxu0 %v227
  %v809 = vpop.f32.mrf.mxu0
  %v810 = vadd.f32 %v711, %v809
  %v811 = vpop.f32.mrf.mxu0
  %v812 = vadd.f32 %v713, %v811
  %813 = vmatmul.bf16.gmra.mxu0 %v229
  %v814 = vpop.f32.mrf.mxu0
  %v815 = vadd.f32 %v716, %v814
  %v816 = vpop.f32.mrf.mxu0
  %v817 = vadd.f32 %v718, %v816
  %818 = vmatmul.bf16.gmra.mxu0 %v231
  %v819 = vpop.f32.mrf.mxu0
  %v820 = vadd.f32 %v721, %v819
  %v821 = vpop.f32.mrf.mxu0
  %v822 = vadd.f32 %v723, %v821
  %823 = vdwg.mxu0
  %vm824 = vcmp.ge.f32.partialorder %v537, 0.0
  %vm825 = vcmp.ge.f32.partialorder %v539, 0.0
  %vm826 = vcmp.ge.f32.partialorder %v542, 0.0
  %vm827 = vcmp.ge.f32.partialorder %v544, 0.0
  %vm828 = vcmp.ge.f32.partialorder %v547, 0.0
  %vm829 = vcmp.ge.f32.partialorder %v549, 0.0
  %vm830 = vcmp.ge.f32.partialorder %v552, 0.0
  %vm831 = vcmp.ge.f32.partialorder %v554, 0.0
  %vm832 = vcmp.ge.f32.partialorder %v557, 0.0
  %vm833 = vcmp.ge.f32.partialorder %v559, 0.0
  %vm834 = vcmp.ge.f32.partialorder %v562, 0.0
  %vm835 = vcmp.ge.f32.partialorder %v564, 0.0
  %vm836 = vcmp.ge.f32.partialorder %v567, 0.0
  %vm837 = vcmp.ge.f32.partialorder %v569, 0.0
  %vm838 = vcmp.ge.f32.partialorder %v572, 0.0
  %vm839 = vcmp.ge.f32.partialorder %v574, 0.0
  %vm840 = vcmp.ge.f32.partialorder %v577, 0.0
  %vm841 = vcmp.ge.f32.partialorder %v579, 0.0
  %vm842 = vcmp.ge.f32.partialorder %v582, 0.0
  %vm843 = vcmp.ge.f32.partialorder %v584, 0.0
  %vm844 = vcmp.ge.f32.partialorder %v587, 0.0
  %vm845 = vcmp.ge.f32.partialorder %v589, 0.0
  %vm846 = vcmp.ge.f32.partialorder %v592, 0.0
  %vm847 = vcmp.ge.f32.partialorder %v594, 0.0
  %vm848 = vcmp.ge.f32.partialorder %v597, 0.0
  %vm849 = vcmp.ge.f32.partialorder %v599, 0.0
  %vm850 = vcmp.ge.f32.partialorder %v602, 0.0
  %vm851 = vcmp.ge.f32.partialorder %v604, 0.0
  %vm852 = vcmp.ge.f32.partialorder %v607, 0.0
  %vm853 = vcmp.ge.f32.partialorder %v609, 0.0
  %vm854 = vcmp.ge.f32.partialorder %v612, 0.0
  %vm855 = vcmp.ge.f32.partialorder %v614, 0.0
  %vm856 = vcmp.ge.f32.partialorder %v617, 0.0
  %vm857 = vcmp.ge.f32.partialorder %v619, 0.0
  %vm858 = vcmp.ge.f32.partialorder %v622, 0.0
  %vm859 = vcmp.ge.f32.partialorder %v624, 0.0
  %v860 = vmul.f32 %v537, 0.2
  %v861 = vmul.f32 %v539, 0.2
  %v862 = vmul.f32 %v542, 0.2
  %v863 = vmul.f32 %v544, 0.2
  %v864 = vmul.f32 %v547, 0.2
  %v865 = vmul.f32 %v549, 0.2
  %v866 = vmul.f32 %v552, 0.2
  %v867 = vmul.f32 %v554, 0.2
  %v868 = vmul.f32 %v557, 0.2
  %v869 = vmul.f32 %v559, 0.2
  %v870 = vmul.f32 %v562, 0.2
  %v871 = vmul.f32 %v564, 0.2
  %v872 = vmul.f32 %v567, 0.2
  %v873 = vmul.f32 %v569, 0.2
  %v874 = vmul.f32 %v572, 0.2
  %v875 = vmul.f32 %v574, 0.2
  %v876 = vmul.f32 %v577, 0.2
  %v877 = vmul.f32 %v579, 0.2
  %v878 = vmul.f32 %v582, 0.2
  %v879 = vmul.f32 %v584, 0.2
  %v880 = vmul.f32 %v587, 0.2
  %v881 = vmul.f32 %v589, 0.2
  %v882 = vmul.f32 %v592, 0.2
  %v883 = vmul.f32 %v594, 0.2
  %v884 = vmul.f32 %v597, 0.2
  %v885 = vmul.f32 %v599, 0.2
  %v886 = vmul.f32 %v602, 0.2
  %v887 = vmul.f32 %v604, 0.2
  %v888 = vmul.f32 %v607, 0.2
  %v889 = vmul.f32 %v609, 0.2
  %v890 = vmul.f32 %v612, 0.2
  %v891 = vmul.f32 %v614, 0.2
  %v892 = vmul.f32 %v617, 0.2
  %v893 = vmul.f32 %v619, 0.2
  %v894 = vmul.f32 %v622, 0.2
  %v895 = vmul.f32 %v624, 0.2
  %v896 = vsel %vm824, %v537, %v860
  %v897 = vsel %vm825, %v539, %v861
  %v898 = vsel %vm826, %v542, %v862
  %v899 = vsel %vm827, %v544, %v863
  %v900 = vsel %vm828, %v547, %v864
  %v901 = vsel %vm829, %v549, %v865
  %v902 = vsel %vm830, %v552, %v866
  %v903 = vsel %vm831, %v554, %v867
  %v904 = vsel %vm832, %v557, %v868
  %v905 = vsel %vm833, %v559, %v869
  %v906 = vsel %vm834, %v562, %v870
  %v907 = vsel %vm835, %v564, %v871
  %v908 = vsel %vm836, %v567, %v872
  %v909 = vsel %vm837, %v569, %v873
  %v910 = vsel %vm838, %v572, %v874
  %v911 = vsel %vm839, %v574, %v875
  %v912 = vsel %vm840, %v577, %v876
  %v913 = vsel %vm841, %v579, %v877
  %v914 = vsel %vm842, %v582, %v878
  %v915 = vsel %vm843, %v584, %v879
  %v916 = vsel %vm844, %v587, %v880
  %v917 = vsel %vm845, %v589, %v881
  %v918 = vsel %vm846, %v592, %v882
  %v919 = vsel %vm847, %v594, %v883
  %v920 = vsel %vm848, %v597, %v884
  %v921 = vsel %vm849, %v599, %v885
  %v922 = vsel %vm850, %v602, %v886
  %v923 = vsel %vm851, %v604, %v887
  %v924 = vsel %vm852, %v607, %v888
  %v925 = vsel %vm853, %v609, %v889
  %v926 = vsel %vm854, %v612, %v890
  %v927 = vsel %vm855, %v614, %v891
  %v928 = vsel %vm856, %v617, %v892
  %v929 = vsel %vm857, %v619, %v893
  %v930 = vsel %vm858, %v622, %v894
  %v931 = vsel %vm859, %v624, %v895
  %v932 = vxor.u32 %v735, 2147483648
  %v933 = vxor.u32 %v737, 2147483648
  %v934 = vxor.u32 %v740, 2147483648
  %v935 = vxor.u32 %v742, 2147483648
  %v936 = vxor.u32 %v745, 2147483648
  %v937 = vxor.u32 %v747, 2147483648
  %v938 = vxor.u32 %v750, 2147483648
  %v939 = vxor.u32 %v752, 2147483648
  %v940 = vxor.u32 %v755, 2147483648
  %v941 = vxor.u32 %v757, 2147483648
  %v942 = vxor.u32 %v760, 2147483648
  %v943 = vxor.u32 %v762, 2147483648
  %v944 = vxor.u32 %v765, 2147483648
  %v945 = vxor.u32 %v767, 2147483648
  %v946 = vxor.u32 %v770, 2147483648
  %v947 = vxor.u32 %v772, 2147483648
  %v948 = vxor.u32 %v775, 2147483648
  %v949 = vxor.u32 %v777, 2147483648
  %v950 = vxor.u32 %v780, 2147483648
  %v951 = vxor.u32 %v782, 2147483648
  %v952 = vxor.u32 %v785, 2147483648
  %v953 = vxor.u32 %v787, 2147483648
  %v954 = vxor.u32 %v790, 2147483648
  %v955 = vxor.u32 %v792, 2147483648
  %v956 = vxor.u32 %v795, 2147483648
  %v957 = vxor.u32 %v797, 2147483648
  %v958 = vxor.u32 %v800, 2147483648
  %v959 = vxor.u32 %v802, 2147483648
  %v960 = vxor.u32 %v805, 2147483648
  %v961 = vxor.u32 %v807, 2147483648
  %v962 = vxor.u32 %v810, 2147483648
  %v963 = vxor.u32 %v812, 2147483648
  %v964 = vxor.u32 %v815, 2147483648
  %v965 = vxor.u32 %v817, 2147483648
  %v966 = vxor.u32 %v820, 2147483648
  %v967 = vxor.u32 %v822, 2147483648
  %v968 = vmul.f32 %v932, 1.442695
  %v969 = vpow.pop %v968
  %v970 = vmul.f32 %v933, 1.442695
  %v971 = vpow.pop %v970
  %v972 = vmul.f32 %v934, 1.442695
  %v973 = vpow.pop %v972
  %v974 = vmul.f32 %v935, 1.442695
  %v975 = vpow.pop %v974
  %v976 = vmul.f32 %v936, 1.442695
  %v977 = vpow.pop %v976
  %v978 = vmul.f32 %v937, 1.442695
  %v979 = vpow.pop %v978
  %v980 = vmul.f32 %v938, 1.442695
  %v981 = vpow.pop %v980
  %v982 = vmul.f32 %v939, 1.442695
  %v983 = vpow.pop %v982
  %v984 = vmul.f32 %v940, 1.442695
  %v985 = vpow.pop %v984
  %v986 = vmul.f32 %v941, 1.442695
  %v987 = vpow.pop %v986
  %v988 = vmul.f32 %v942, 1.442695
  %v989 = vpow.pop %v988
  %v990 = vmul.f32 %v943, 1.442695
  %v991 = vpow.pop %v990
  %v992 = vmul.f32 %v944, 1.442695
  %v993 = vpow.pop %v992
  %v994 = vmul.f32 %v945, 1.442695
  %v995 = vpow.pop %v994
  %v996 = vmul.f32 %v946, 1.442695
  %v997 = vpow.pop %v996
  %v998 = vmul.f32 %v947, 1.442695
  %v999 = vpow.pop %v998
  %v1000 = vmul.f32 %v948, 1.442695
  %v1001 = vpow.pop %v1000
  %v1002 = vmul.f32 %v949, 1.442695
  %v1003 = vpow.pop %v1002
  %v1004 = vmul.f32 %v950, 1.442695
  %v1005 = vpow.pop %v1004
  %v1006 = vmul.f32 %v951, 1.442695
  %v1007 = vpow.pop %v1006
  %v1008 = vmul.f32 %v952, 1.442695
  %v1009 = vpow.pop %v1008
  %v1010 = vmul.f32 %v953, 1.442695
  %v1011 = vpow.pop %v1010
  %v1012 = vmul.f32 %v954, 1.442695
  %v1013 = vpow.pop %v1012
  %v1014 = vmul.f32 %v955, 1.442695
  %v1015 = vpow.pop %v1014
  %v1016 = vmul.f32 %v956, 1.442695
  %v1017 = vpow.pop %v1016
  %v1018 = vmul.f32 %v957, 1.442695
  %v1019 = vpow.pop %v1018
  %v1020 = vmul.f32 %v958, 1.442695
  %v1021 = vpow.pop %v1020
  %v1022 = vmul.f32 %v959, 1.442695
  %v1023 = vpow.pop %v1022
  %v1024 = vmul.f32 %v960, 1.442695
  %v1025 = vpow.pop %v1024
  %v1026 = vmul.f32 %v961, 1.442695
  %v1027 = vpow.pop %v1026
  %v1028 = vmul.f32 %v962, 1.442695
  %v1029 = vpow.pop %v1028
  %v1030 = vmul.f32 %v963, 1.442695
  %v1031 = vpow.pop %v1030
  %v1032 = vmul.f32 %v964, 1.442695
  %v1033 = vpow.pop %v1032
  %v1034 = vmul.f32 %v965, 1.442695
  %v1035 = vpow.pop %v1034
  %v1036 = vmul.f32 %v966, 1.442695
  %v1037 = vpow.pop %v1036
  %v1038 = vmul.f32 %v967, 1.442695
  %v1039 = vpow.pop %v1038
  %v1040 = vadd.f32 %v969, 1.0
  %v1041 = vadd.f32 %v971, 1.0
  %v1042 = vadd.f32 %v973, 1.0
  %v1043 = vadd.f32 %v975, 1.0
  %v1044 = vadd.f32 %v977, 1.0
  %v1045 = vadd.f32 %v979, 1.0
  %v1046 = vadd.f32 %v981, 1.0
  %v1047 = vadd.f32 %v983, 1.0
  %v1048 = vadd.f32 %v985, 1.0
  %v1049 = vadd.f32 %v987, 1.0
  %v1050 = vadd.f32 %v989, 1.0
  %v1051 = vadd.f32 %v991, 1.0
  %v1052 = vadd.f32 %v993, 1.0
  %v1053 = vadd.f32 %v995, 1.0
  %v1054 = vadd.f32 %v997, 1.0
  %v1055 = vadd.f32 %v999, 1.0
  %v1056 = vadd.f32 %v1001, 1.0
  %v1057 = vadd.f32 %v1003, 1.0
  %v1058 = vadd.f32 %v1005, 1.0
  %v1059 = vadd.f32 %v1007, 1.0
  %v1060 = vadd.f32 %v1009, 1.0
  %v1061 = vadd.f32 %v1011, 1.0
  %v1062 = vadd.f32 %v1013, 1.0
  %v1063 = vadd.f32 %v1015, 1.0
  %v1064 = vadd.f32 %v1017, 1.0
  %v1065 = vadd.f32 %v1019, 1.0
  %v1066 = vadd.f32 %v1021, 1.0
  %v1067 = vadd.f32 %v1023, 1.0
  %v1068 = vadd.f32 %v1025, 1.0
  %v1069 = vadd.f32 %v1027, 1.0
  %v1070 = vadd.f32 %v1029, 1.0
  %v1071 = vadd.f32 %v1031, 1.0
  %v1072 = vadd.f32 %v1033, 1.0
  %v1073 = vadd.f32 %v1035, 1.0
  %v1074 = vadd.f32 %v1037, 1.0
  %v1075 = vadd.f32 %v1039, 1.0
  %v1076 = vrcp.pop %v1040
  %v1077 = vmul.f32 %v1040, %v1076
  %v1078 = vsub.f32 1.0, %v1077
  %v1079 = vmul.f32 %v1076, %v1078
  %v1080 = vadd.f32 %v1076, %v1079
  %vm1081 = vweird.f32 %v1040
  %vm1082 = vweird.f32 %v1076
  %vm1083 = vmor %vm1081, %vm1082
  %v1084 = vsel %vm1083, %v1076, %v1080
  %v1085 = vand.u32 2147483647, %v1040
  %vm1086 = vcmp.eq.f32.partialorder %v1085, 8.507059e+37
  %v1087 = vand.u32 %v1040, 2147483648
  %v1088 = vor.u32 1.1754944e-38, %v1087
  %v1089 = vsel %vm1086, %v1088, %v1084
  %v1090 = vmul.f32 1.0, %v1089
  %v1091 = vrcp.pop %v1041
  %v1092 = vmul.f32 %v1041, %v1091
  %v1093 = vsub.f32 1.0, %v1092
  %v1094 = vmul.f32 %v1091, %v1093
  %v1095 = vadd.f32 %v1091, %v1094
  %vm1096 = vweird.f32 %v1041
  %vm1097 = vweird.f32 %v1091
  %vm1098 = vmor %vm1096, %vm1097
  %v1099 = vsel %vm1098, %v1091, %v1095
  %v1100 = vand.u32 2147483647, %v1041
  %vm1101 = vcmp.eq.f32.partialorder %v1100, 8.507059e+37
  %v1102 = vand.u32 %v1041, 2147483648
  %v1103 = vor.u32 1.1754944e-38, %v1102
  %v1104 = vsel %vm1101, %v1103, %v1099
  %v1105 = vmul.f32 1.0, %v1104
  %v1106 = vrcp.pop %v1042
  %v1107 = vmul.f32 %v1042, %v1106
  %v1108 = vsub.f32 1.0, %v1107
  %v1109 = vmul.f32 %v1106, %v1108
  %v1110 = vadd.f32 %v1106, %v1109
  %vm1111 = vweird.f32 %v1042
  %vm1112 = vweird.f32 %v1106
  %vm1113 = vmor %vm1111, %vm1112
  %v1114 = vsel %vm1113, %v1106, %v1110
  %v1115 = vand.u32 2147483647, %v1042
  %vm1116 = vcmp.eq.f32.partialorder %v1115, 8.507059e+37
  %v1117 = vand.u32 %v1042, 2147483648
  %v1118 = vor.u32 1.1754944e-38, %v1117
  %v1119 = vsel %vm1116, %v1118, %v1114
  %v1120 = vmul.f32 1.0, %v1119
  %v1121 = vrcp.pop %v1043
  %v1122 = vmul.f32 %v1043, %v1121
  %v1123 = vsub.f32 1.0, %v1122
  %v1124 = vmul.f32 %v1121, %v1123
  %v1125 = vadd.f32 %v1121, %v1124
  %vm1126 = vweird.f32 %v1043
  %vm1127 = vweird.f32 %v1121
  %vm1128 = vmor %vm1126, %vm1127
  %v1129 = vsel %vm1128, %v1121, %v1125
  %v1130 = vand.u32 2147483647, %v1043
  %vm1131 = vcmp.eq.f32.partialorder %v1130, 8.507059e+37
  %v1132 = vand.u32 %v1043, 2147483648
  %v1133 = vor.u32 1.1754944e-38, %v1132
  %v1134 = vsel %vm1131, %v1133, %v1129
  %v1135 = vmul.f32 1.0, %v1134
  %v1136 = vrcp.pop %v1044
  %v1137 = vmul.f32 %v1044, %v1136
  %v1138 = vsub.f32 1.0, %v1137
  %v1139 = vmul.f32 %v1136, %v1138
  %v1140 = vadd.f32 %v1136, %v1139
  %vm1141 = vweird.f32 %v1044
  %vm1142 = vweird.f32 %v1136
  %vm1143 = vmor %vm1141, %vm1142
  %v1144 = vsel %vm1143, %v1136, %v1140
  %v1145 = vand.u32 2147483647, %v1044
  %vm1146 = vcmp.eq.f32.partialorder %v1145, 8.507059e+37
  %v1147 = vand.u32 %v1044, 2147483648
  %v1148 = vor.u32 1.1754944e-38, %v1147
  %v1149 = vsel %vm1146, %v1148, %v1144
  %v1150 = vmul.f32 1.0, %v1149
  %v1151 = vrcp.pop %v1045
  %v1152 = vmul.f32 %v1045, %v1151
  %v1153 = vsub.f32 1.0, %v1152
  %v1154 = vmul.f32 %v1151, %v1153
  %v1155 = vadd.f32 %v1151, %v1154
  %vm1156 = vweird.f32 %v1045
  %vm1157 = vweird.f32 %v1151
  %vm1158 = vmor %vm1156, %vm1157
  %v1159 = vsel %vm1158, %v1151, %v1155
  %v1160 = vand.u32 2147483647, %v1045
  %vm1161 = vcmp.eq.f32.partialorder %v1160, 8.507059e+37
  %v1162 = vand.u32 %v1045, 2147483648
  %v1163 = vor.u32 1.1754944e-38, %v1162
  %v1164 = vsel %vm1161, %v1163, %v1159
  %v1165 = vmul.f32 1.0, %v1164
  %v1166 = vrcp.pop %v1046
  %v1167 = vmul.f32 %v1046, %v1166
  %v1168 = vsub.f32 1.0, %v1167
  %v1169 = vmul.f32 %v1166, %v1168
  %v1170 = vadd.f32 %v1166, %v1169
  %vm1171 = vweird.f32 %v1046
  %vm1172 = vweird.f32 %v1166
  %vm1173 = vmor %vm1171, %vm1172
  %v1174 = vsel %vm1173, %v1166, %v1170
  %v1175 = vand.u32 2147483647, %v1046
  %vm1176 = vcmp.eq.f32.partialorder %v1175, 8.507059e+37
  %v1177 = vand.u32 %v1046, 2147483648
  %v1178 = vor.u32 1.1754944e-38, %v1177
  %v1179 = vsel %vm1176, %v1178, %v1174
  %v1180 = vmul.f32 1.0, %v1179
  %v1181 = vrcp.pop %v1047
  %v1182 = vmul.f32 %v1047, %v1181
  %v1183 = vsub.f32 1.0, %v1182
  %v1184 = vmul.f32 %v1181, %v1183
  %v1185 = vadd.f32 %v1181, %v1184
  %vm1186 = vweird.f32 %v1047
  %vm1187 = vweird.f32 %v1181
  %vm1188 = vmor %vm1186, %vm1187
  %v1189 = vsel %vm1188, %v1181, %v1185
  %v1190 = vand.u32 2147483647, %v1047
  %vm1191 = vcmp.eq.f32.partialorder %v1190, 8.507059e+37
  %v1192 = vand.u32 %v1047, 2147483648
  %v1193 = vor.u32 1.1754944e-38, %v1192
  %v1194 = vsel %vm1191, %v1193, %v1189
  %v1195 = vmul.f32 1.0, %v1194
  %v1196 = vrcp.pop %v1048
  %v1197 = vmul.f32 %v1048, %v1196
  %v1198 = vsub.f32 1.0, %v1197
  %v1199 = vmul.f32 %v1196, %v1198
  %v1200 = vadd.f32 %v1196, %v1199
  %vm1201 = vweird.f32 %v1048
  %vm1202 = vweird.f32 %v1196
  %vm1203 = vmor %vm1201, %vm1202
  %v1204 = vsel %vm1203, %v1196, %v1200
  %v1205 = vand.u32 2147483647, %v1048
  %vm1206 = vcmp.eq.f32.partialorder %v1205, 8.507059e+37
  %v1207 = vand.u32 %v1048, 2147483648
  %v1208 = vor.u32 1.1754944e-38, %v1207
  %v1209 = vsel %vm1206, %v1208, %v1204
  %v1210 = vmul.f32 1.0, %v1209
  %v1211 = vrcp.pop %v1049
  %v1212 = vmul.f32 %v1049, %v1211
  %v1213 = vsub.f32 1.0, %v1212
  %v1214 = vmul.f32 %v1211, %v1213
  %v1215 = vadd.f32 %v1211, %v1214
  %vm1216 = vweird.f32 %v1049
  %vm1217 = vweird.f32 %v1211
  %vm1218 = vmor %vm1216, %vm1217
  %v1219 = vsel %vm1218, %v1211, %v1215
  %v1220 = vand.u32 2147483647, %v1049
  %vm1221 = vcmp.eq.f32.partialorder %v1220, 8.507059e+37
  %v1222 = vand.u32 %v1049, 2147483648
  %v1223 = vor.u32 1.1754944e-38, %v1222
  %v1224 = vsel %vm1221, %v1223, %v1219
  %v1225 = vmul.f32 1.0, %v1224
  %v1226 = vrcp.pop %v1050
  %v1227 = vmul.f32 %v1050, %v1226
  %v1228 = vsub.f32 1.0, %v1227
  %v1229 = vmul.f32 %v1226, %v1228
  %v1230 = vadd.f32 %v1226, %v1229
  %vm1231 = vweird.f32 %v1050
  %vm1232 = vweird.f32 %v1226
  %vm1233 = vmor %vm1231, %vm1232
  %v1234 = vsel %vm1233, %v1226, %v1230
  %v1235 = vand.u32 2147483647, %v1050
  %vm1236 = vcmp.eq.f32.partialorder %v1235, 8.507059e+37
  %v1237 = vand.u32 %v1050, 2147483648
  %v1238 = vor.u32 1.1754944e-38, %v1237
  %v1239 = vsel %vm1236, %v1238, %v1234
  %v1240 = vmul.f32 1.0, %v1239
  %v1241 = vrcp.pop %v1051
  %v1242 = vmul.f32 %v1051, %v1241
  %v1243 = vsub.f32 1.0, %v1242
  %v1244 = vmul.f32 %v1241, %v1243
  %v1245 = vadd.f32 %v1241, %v1244
  %vm1246 = vweird.f32 %v1051
  %vm1247 = vweird.f32 %v1241
  %vm1248 = vmor %vm1246, %vm1247
  %v1249 = vsel %vm1248, %v1241, %v1245
  %v1250 = vand.u32 2147483647, %v1051
  %vm1251 = vcmp.eq.f32.partialorder %v1250, 8.507059e+37
  %v1252 = vand.u32 %v1051, 2147483648
  %v1253 = vor.u32 1.1754944e-38, %v1252
  %v1254 = vsel %vm1251, %v1253, %v1249
  %v1255 = vmul.f32 1.0, %v1254
  %v1256 = vrcp.pop %v1052
  %v1257 = vmul.f32 %v1052, %v1256
  %v1258 = vsub.f32 1.0, %v1257
  %v1259 = vmul.f32 %v1256, %v1258
  %v1260 = vadd.f32 %v1256, %v1259
  %vm1261 = vweird.f32 %v1052
  %vm1262 = vweird.f32 %v1256
  %vm1263 = vmor %vm1261, %vm1262
  %v1264 = vsel %vm1263, %v1256, %v1260
  %v1265 = vand.u32 2147483647, %v1052
  %vm1266 = vcmp.eq.f32.partialorder %v1265, 8.507059e+37
  %v1267 = vand.u32 %v1052, 2147483648
  %v1268 = vor.u32 1.1754944e-38, %v1267
  %v1269 = vsel %vm1266, %v1268, %v1264
  %v1270 = vmul.f32 1.0, %v1269
  %v1271 = vrcp.pop %v1053
  %v1272 = vmul.f32 %v1053, %v1271
  %v1273 = vsub.f32 1.0, %v1272
  %v1274 = vmul.f32 %v1271, %v1273
  %v1275 = vadd.f32 %v1271, %v1274
  %vm1276 = vweird.f32 %v1053
  %vm1277 = vweird.f32 %v1271
  %vm1278 = vmor %vm1276, %vm1277
  %v1279 = vsel %vm1278, %v1271, %v1275
  %v1280 = vand.u32 2147483647, %v1053
  %vm1281 = vcmp.eq.f32.partialorder %v1280, 8.507059e+37
  %v1282 = vand.u32 %v1053, 2147483648
  %v1283 = vor.u32 1.1754944e-38, %v1282
  %v1284 = vsel %vm1281, %v1283, %v1279
  %v1285 = vmul.f32 1.0, %v1284
  %v1286 = vrcp.pop %v1054
  %v1287 = vmul.f32 %v1054, %v1286
  %v1288 = vsub.f32 1.0, %v1287
  %v1289 = vmul.f32 %v1286, %v1288
  %v1290 = vadd.f32 %v1286, %v1289
  %vm1291 = vweird.f32 %v1054
  %vm1292 = vweird.f32 %v1286
  %vm1293 = vmor %vm1291, %vm1292
  %v1294 = vsel %vm1293, %v1286, %v1290
  %v1295 = vand.u32 2147483647, %v1054
  %vm1296 = vcmp.eq.f32.partialorder %v1295, 8.507059e+37
  %v1297 = vand.u32 %v1054, 2147483648
  %v1298 = vor.u32 1.1754944e-38, %v1297
  %v1299 = vsel %vm1296, %v1298, %v1294
  %v1300 = vmul.f32 1.0, %v1299
  %v1301 = vrcp.pop %v1055
  %v1302 = vmul.f32 %v1055, %v1301
  %v1303 = vsub.f32 1.0, %v1302
  %v1304 = vmul.f32 %v1301, %v1303
  %v1305 = vadd.f32 %v1301, %v1304
  %vm1306 = vweird.f32 %v1055
  %vm1307 = vweird.f32 %v1301
  %vm1308 = vmor %vm1306, %vm1307
  %v1309 = vsel %vm1308, %v1301, %v1305
  %v1310 = vand.u32 2147483647, %v1055
  %vm1311 = vcmp.eq.f32.partialorder %v1310, 8.507059e+37
  %v1312 = vand.u32 %v1055, 2147483648
  %v1313 = vor.u32 1.1754944e-38, %v1312
  %v1314 = vsel %vm1311, %v1313, %v1309
  %v1315 = vmul.f32 1.0, %v1314
  %v1316 = vrcp.pop %v1056
  %v1317 = vmul.f32 %v1056, %v1316
  %v1318 = vsub.f32 1.0, %v1317
  %v1319 = vmul.f32 %v1316, %v1318
  %v1320 = vadd.f32 %v1316, %v1319
  %vm1321 = vweird.f32 %v1056
  %vm1322 = vweird.f32 %v1316
  %vm1323 = vmor %vm1321, %vm1322
  %v1324 = vsel %vm1323, %v1316, %v1320
  %v1325 = vand.u32 2147483647, %v1056
  %vm1326 = vcmp.eq.f32.partialorder %v1325, 8.507059e+37
  %v1327 = vand.u32 %v1056, 2147483648
  %v1328 = vor.u32 1.1754944e-38, %v1327
  %v1329 = vsel %vm1326, %v1328, %v1324
  %v1330 = vmul.f32 1.0, %v1329
  %v1331 = vrcp.pop %v1057
  %v1332 = vmul.f32 %v1057, %v1331
  %v1333 = vsub.f32 1.0, %v1332
  %v1334 = vmul.f32 %v1331, %v1333
  %v1335 = vadd.f32 %v1331, %v1334
  %vm1336 = vweird.f32 %v1057
  %vm1337 = vweird.f32 %v1331
  %vm1338 = vmor %vm1336, %vm1337
  %v1339 = vsel %vm1338, %v1331, %v1335
  %v1340 = vand.u32 2147483647, %v1057
  %vm1341 = vcmp.eq.f32.partialorder %v1340, 8.507059e+37
  %v1342 = vand.u32 %v1057, 2147483648
  %v1343 = vor.u32 1.1754944e-38, %v1342
  %v1344 = vsel %vm1341, %v1343, %v1339
  %v1345 = vmul.f32 1.0, %v1344
  %v1346 = vrcp.pop %v1058
  %v1347 = vmul.f32 %v1058, %v1346
  %v1348 = vsub.f32 1.0, %v1347
  %v1349 = vmul.f32 %v1346, %v1348
  %v1350 = vadd.f32 %v1346, %v1349
  %vm1351 = vweird.f32 %v1058
  %vm1352 = vweird.f32 %v1346
  %vm1353 = vmor %vm1351, %vm1352
  %v1354 = vsel %vm1353, %v1346, %v1350
  %v1355 = vand.u32 2147483647, %v1058
  %vm1356 = vcmp.eq.f32.partialorder %v1355, 8.507059e+37
  %v1357 = vand.u32 %v1058, 2147483648
  %v1358 = vor.u32 1.1754944e-38, %v1357
  %v1359 = vsel %vm1356, %v1358, %v1354
  %v1360 = vmul.f32 1.0, %v1359
  %v1361 = vrcp.pop %v1059
  %v1362 = vmul.f32 %v1059, %v1361
  %v1363 = vsub.f32 1.0, %v1362
  %v1364 = vmul.f32 %v1361, %v1363
  %v1365 = vadd.f32 %v1361, %v1364
  %vm1366 = vweird.f32 %v1059
  %vm1367 = vweird.f32 %v1361
  %vm1368 = vmor %vm1366, %vm1367
  %v1369 = vsel %vm1368, %v1361, %v1365
  %v1370 = vand.u32 2147483647, %v1059
  %vm1371 = vcmp.eq.f32.partialorder %v1370, 8.507059e+37
  %v1372 = vand.u32 %v1059, 2147483648
  %v1373 = vor.u32 1.1754944e-38, %v1372
  %v1374 = vsel %vm1371, %v1373, %v1369
  %v1375 = vmul.f32 1.0, %v1374
  %v1376 = vrcp.pop %v1060
  %v1377 = vmul.f32 %v1060, %v1376
  %v1378 = vsub.f32 1.0, %v1377
  %v1379 = vmul.f32 %v1376, %v1378
  %v1380 = vadd.f32 %v1376, %v1379
  %vm1381 = vweird.f32 %v1060
  %vm1382 = vweird.f32 %v1376
  %vm1383 = vmor %vm1381, %vm1382
  %v1384 = vsel %vm1383, %v1376, %v1380
  %v1385 = vand.u32 2147483647, %v1060
  %vm1386 = vcmp.eq.f32.partialorder %v1385, 8.507059e+37
  %v1387 = vand.u32 %v1060, 2147483648
  %v1388 = vor.u32 1.1754944e-38, %v1387
  %v1389 = vsel %vm1386, %v1388, %v1384
  %v1390 = vmul.f32 1.0, %v1389
  %v1391 = vrcp.pop %v1061
  %v1392 = vmul.f32 %v1061, %v1391
  %v1393 = vsub.f32 1.0, %v1392
  %v1394 = vmul.f32 %v1391, %v1393
  %v1395 = vadd.f32 %v1391, %v1394
  %vm1396 = vweird.f32 %v1061
  %vm1397 = vweird.f32 %v1391
  %vm1398 = vmor %vm1396, %vm1397
  %v1399 = vsel %vm1398, %v1391, %v1395
  %v1400 = vand.u32 2147483647, %v1061
  %vm1401 = vcmp.eq.f32.partialorder %v1400, 8.507059e+37
  %v1402 = vand.u32 %v1061, 2147483648
  %v1403 = vor.u32 1.1754944e-38, %v1402
  %v1404 = vsel %vm1401, %v1403, %v1399
  %v1405 = vmul.f32 1.0, %v1404
  %v1406 = vrcp.pop %v1062
  %v1407 = vmul.f32 %v1062, %v1406
  %v1408 = vsub.f32 1.0, %v1407
  %v1409 = vmul.f32 %v1406, %v1408
  %v1410 = vadd.f32 %v1406, %v1409
  %vm1411 = vweird.f32 %v1062
  %vm1412 = vweird.f32 %v1406
  %vm1413 = vmor %vm1411, %vm1412
  %v1414 = vsel %vm1413, %v1406, %v1410
  %v1415 = vand.u32 2147483647, %v1062
  %vm1416 = vcmp.eq.f32.partialorder %v1415, 8.507059e+37
  %v1417 = vand.u32 %v1062, 2147483648
  %v1418 = vor.u32 1.1754944e-38, %v1417
  %v1419 = vsel %vm1416, %v1418, %v1414
  %v1420 = vmul.f32 1.0, %v1419
  %v1421 = vrcp.pop %v1063
  %v1422 = vmul.f32 %v1063, %v1421
  %v1423 = vsub.f32 1.0, %v1422
  %v1424 = vmul.f32 %v1421, %v1423
  %v1425 = vadd.f32 %v1421, %v1424
  %vm1426 = vweird.f32 %v1063
  %vm1427 = vweird.f32 %v1421
  %vm1428 = vmor %vm1426, %vm1427
  %v1429 = vsel %vm1428, %v1421, %v1425
  %v1430 = vand.u32 2147483647, %v1063
  %vm1431 = vcmp.eq.f32.partialorder %v1430, 8.507059e+37
  %v1432 = vand.u32 %v1063, 2147483648
  %v1433 = vor.u32 1.1754944e-38, %v1432
  %v1434 = vsel %vm1431, %v1433, %v1429
  %v1435 = vmul.f32 1.0, %v1434
  %v1436 = vrcp.pop %v1064
  %v1437 = vmul.f32 %v1064, %v1436
  %v1438 = vsub.f32 1.0, %v1437
  %v1439 = vmul.f32 %v1436, %v1438
  %v1440 = vadd.f32 %v1436, %v1439
  %vm1441 = vweird.f32 %v1064
  %vm1442 = vweird.f32 %v1436
  %vm1443 = vmor %vm1441, %vm1442
  %v1444 = vsel %vm1443, %v1436, %v1440
  %v1445 = vand.u32 2147483647, %v1064
  %vm1446 = vcmp.eq.f32.partialorder %v1445, 8.507059e+37
  %v1447 = vand.u32 %v1064, 2147483648
  %v1448 = vor.u32 1.1754944e-38, %v1447
  %v1449 = vsel %vm1446, %v1448, %v1444
  %v1450 = vmul.f32 1.0, %v1449
  %v1451 = vrcp.pop %v1065
  %v1452 = vmul.f32 %v1065, %v1451
  %v1453 = vsub.f32 1.0, %v1452
  %v1454 = vmul.f32 %v1451, %v1453
  %v1455 = vadd.f32 %v1451, %v1454
  %vm1456 = vweird.f32 %v1065
  %vm1457 = vweird.f32 %v1451
  %vm1458 = vmor %vm1456, %vm1457
  %v1459 = vsel %vm1458, %v1451, %v1455
  %v1460 = vand.u32 2147483647, %v1065
  %vm1461 = vcmp.eq.f32.partialorder %v1460, 8.507059e+37
  %v1462 = vand.u32 %v1065, 2147483648
  %v1463 = vor.u32 1.1754944e-38, %v1462
  %v1464 = vsel %vm1461, %v1463, %v1459
  %v1465 = vmul.f32 1.0, %v1464
  %v1466 = vrcp.pop %v1066
  %v1467 = vmul.f32 %v1066, %v1466
  %v1468 = vsub.f32 1.0, %v1467
  %v1469 = vmul.f32 %v1466, %v1468
  %v1470 = vadd.f32 %v1466, %v1469
  %vm1471 = vweird.f32 %v1066
  %vm1472 = vweird.f32 %v1466
  %vm1473 = vmor %vm1471, %vm1472
  %v1474 = vsel %vm1473, %v1466, %v1470
  %v1475 = vand.u32 2147483647, %v1066
  %vm1476 = vcmp.eq.f32.partialorder %v1475, 8.507059e+37
  %v1477 = vand.u32 %v1066, 2147483648
  %v1478 = vor.u32 1.1754944e-38, %v1477
  %v1479 = vsel %vm1476, %v1478, %v1474
  %v1480 = vmul.f32 1.0, %v1479
  %v1481 = vrcp.pop %v1067
  %v1482 = vmul.f32 %v1067, %v1481
  %v1483 = vsub.f32 1.0, %v1482
  %v1484 = vmul.f32 %v1481, %v1483
  %v1485 = vadd.f32 %v1481, %v1484
  %vm1486 = vweird.f32 %v1067
  %vm1487 = vweird.f32 %v1481
  %vm1488 = vmor %vm1486, %vm1487
  %v1489 = vsel %vm1488, %v1481, %v1485
  %v1490 = vand.u32 2147483647, %v1067
  %vm1491 = vcmp.eq.f32.partialorder %v1490, 8.507059e+37
  %v1492 = vand.u32 %v1067, 2147483648
  %v1493 = vor.u32 1.1754944e-38, %v1492
  %v1494 = vsel %vm1491, %v1493, %v1489
  %v1495 = vmul.f32 1.0, %v1494
  %v1496 = vrcp.pop %v1068
  %v1497 = vmul.f32 %v1068, %v1496
  %v1498 = vsub.f32 1.0, %v1497
  %v1499 = vmul.f32 %v1496, %v1498
  %v1500 = vadd.f32 %v1496, %v1499
  %vm1501 = vweird.f32 %v1068
  %vm1502 = vweird.f32 %v1496
  %vm1503 = vmor %vm1501, %vm1502
  %v1504 = vsel %vm1503, %v1496, %v1500
  %v1505 = vand.u32 2147483647, %v1068
  %vm1506 = vcmp.eq.f32.partialorder %v1505, 8.507059e+37
  %v1507 = vand.u32 %v1068, 2147483648
  %v1508 = vor.u32 1.1754944e-38, %v1507
  %v1509 = vsel %vm1506, %v1508, %v1504
  %v1510 = vmul.f32 1.0, %v1509
  %v1511 = vrcp.pop %v1069
  %v1512 = vmul.f32 %v1069, %v1511
  %v1513 = vsub.f32 1.0, %v1512
  %v1514 = vmul.f32 %v1511, %v1513
  %v1515 = vadd.f32 %v1511, %v1514
  %vm1516 = vweird.f32 %v1069
  %vm1517 = vweird.f32 %v1511
  %vm1518 = vmor %vm1516, %vm1517
  %v1519 = vsel %vm1518, %v1511, %v1515
  %v1520 = vand.u32 2147483647, %v1069
  %vm1521 = vcmp.eq.f32.partialorder %v1520, 8.507059e+37
  %v1522 = vand.u32 %v1069, 2147483648
  %v1523 = vor.u32 1.1754944e-38, %v1522
  %v1524 = vsel %vm1521, %v1523, %v1519
  %v1525 = vmul.f32 1.0, %v1524
  %v1526 = vrcp.pop %v1070
  %v1527 = vmul.f32 %v1070, %v1526
  %v1528 = vsub.f32 1.0, %v1527
  %v1529 = vmul.f32 %v1526, %v1528
  %v1530 = vadd.f32 %v1526, %v1529
  %vm1531 = vweird.f32 %v1070
  %vm1532 = vweird.f32 %v1526
  %vm1533 = vmor %vm1531, %vm1532
  %v1534 = vsel %vm1533, %v1526, %v1530
  %v1535 = vand.u32 2147483647, %v1070
  %vm1536 = vcmp.eq.f32.partialorder %v1535, 8.507059e+37
  %v1537 = vand.u32 %v1070, 2147483648
  %v1538 = vor.u32 1.1754944e-38, %v1537
  %v1539 = vsel %vm1536, %v1538, %v1534
  %v1540 = vmul.f32 1.0, %v1539
  %v1541 = vrcp.pop %v1071
  %v1542 = vmul.f32 %v1071, %v1541
  %v1543 = vsub.f32 1.0, %v1542
  %v1544 = vmul.f32 %v1541, %v1543
  %v1545 = vadd.f32 %v1541, %v1544
  %vm1546 = vweird.f32 %v1071
  %vm1547 = vweird.f32 %v1541
  %vm1548 = vmor %vm1546, %vm1547
  %v1549 = vsel %vm1548, %v1541, %v1545
  %v1550 = vand.u32 2147483647, %v1071
  %vm1551 = vcmp.eq.f32.partialorder %v1550, 8.507059e+37
  %v1552 = vand.u32 %v1071, 2147483648
  %v1553 = vor.u32 1.1754944e-38, %v1552
  %v1554 = vsel %vm1551, %v1553, %v1549
  %v1555 = vmul.f32 1.0, %v1554
  %v1556 = vrcp.pop %v1072
  %v1557 = vmul.f32 %v1072, %v1556
  %v1558 = vsub.f32 1.0, %v1557
  %v1559 = vmul.f32 %v1556, %v1558
  %v1560 = vadd.f32 %v1556, %v1559
  %vm1561 = vweird.f32 %v1072
  %vm1562 = vweird.f32 %v1556
  %vm1563 = vmor %vm1561, %vm1562
  %v1564 = vsel %vm1563, %v1556, %v1560
  %v1565 = vand.u32 2147483647, %v1072
  %vm1566 = vcmp.eq.f32.partialorder %v1565, 8.507059e+37
  %v1567 = vand.u32 %v1072, 2147483648
  %v1568 = vor.u32 1.1754944e-38, %v1567
  %v1569 = vsel %vm1566, %v1568, %v1564
  %v1570 = vmul.f32 1.0, %v1569
  %v1571 = vrcp.pop %v1073
  %v1572 = vmul.f32 %v1073, %v1571
  %v1573 = vsub.f32 1.0, %v1572
  %v1574 = vmul.f32 %v1571, %v1573
  %v1575 = vadd.f32 %v1571, %v1574
  %vm1576 = vweird.f32 %v1073
  %vm1577 = vweird.f32 %v1571
  %vm1578 = vmor %vm1576, %vm1577
  %v1579 = vsel %vm1578, %v1571, %v1575
  %v1580 = vand.u32 2147483647, %v1073
  %vm1581 = vcmp.eq.f32.partialorder %v1580, 8.507059e+37
  %v1582 = vand.u32 %v1073, 2147483648
  %v1583 = vor.u32 1.1754944e-38, %v1582
  %v1584 = vsel %vm1581, %v1583, %v1579
  %v1585 = vmul.f32 1.0, %v1584
  %v1586 = vrcp.pop %v1074
  %v1587 = vmul.f32 %v1074, %v1586
  %v1588 = vsub.f32 1.0, %v1587
  %v1589 = vmul.f32 %v1586, %v1588
  %v1590 = vadd.f32 %v1586, %v1589
  %vm1591 = vweird.f32 %v1074
  %vm1592 = vweird.f32 %v1586
  %vm1593 = vmor %vm1591, %vm1592
  %v1594 = vsel %vm1593, %v1586, %v1590
  %v1595 = vand.u32 2147483647, %v1074
  %vm1596 = vcmp.eq.f32.partialorder %v1595, 8.507059e+37
  %v1597 = vand.u32 %v1074, 2147483648
  %v1598 = vor.u32 1.1754944e-38, %v1597
  %v1599 = vsel %vm1596, %v1598, %v1594
  %v1600 = vmul.f32 1.0, %v1599
  %v1601 = vrcp.pop %v1075
  %v1602 = vmul.f32 %v1075, %v1601
  %v1603 = vsub.f32 1.0, %v1602
  %v1604 = vmul.f32 %v1601, %v1603
  %v1605 = vadd.f32 %v1601, %v1604
  %vm1606 = vweird.f32 %v1075
  %vm1607 = vweird.f32 %v1601
  %vm1608 = vmor %vm1606, %vm1607
  %v1609 = vsel %vm1608, %v1601, %v1605
  %v1610 = vand.u32 2147483647, %v1075
  %vm1611 = vcmp.eq.f32.partialorder %v1610, 8.507059e+37
  %v1612 = vand.u32 %v1075, 2147483648
  %v1613 = vor.u32 1.1754944e-38, %v1612
  %v1614 = vsel %vm1611, %v1613, %v1609
  %v1615 = vmul.f32 1.0, %v1614
  %v1616 = vmul.f32 %v896, %v1090
  %v1617 = vmul.f32 %v897, %v1105
  %v1618 = vmul.f32 %v898, %v1120
  %v1619 = vmul.f32 %v899, %v1135
  %v1620 = vmul.f32 %v900, %v1150
  %v1621 = vmul.f32 %v901, %v1165
  %v1622 = vmul.f32 %v902, %v1180
  %v1623 = vmul.f32 %v903, %v1195
  %v1624 = vmul.f32 %v904, %v1210
  %v1625 = vmul.f32 %v905, %v1225
  %v1626 = vmul.f32 %v906, %v1240
  %v1627 = vmul.f32 %v907, %v1255
  %v1628 = vmul.f32 %v908, %v1270
  %v1629 = vmul.f32 %v909, %v1285
  %v1630 = vmul.f32 %v910, %v1300
  %v1631 = vmul.f32 %v911, %v1315
  %v1632 = vmul.f32 %v912, %v1330
  %v1633 = vmul.f32 %v913, %v1345
  %v1634 = vmul.f32 %v914, %v1360
  %v1635 = vmul.f32 %v915, %v1375
  %v1636 = vmul.f32 %v916, %v1390
  %v1637 = vmul.f32 %v917, %v1405
  %v1638 = vmul.f32 %v918, %v1420
  %v1639 = vmul.f32 %v919, %v1435
  %v1640 = vmul.f32 %v920, %v1450
  %v1641 = vmul.f32 %v921, %v1465
  %v1642 = vmul.f32 %v922, %v1480
  %v1643 = vmul.f32 %v923, %v1495
  %v1644 = vmul.f32 %v924, %v1510
  %v1645 = vmul.f32 %v925, %v1525
  %v1646 = vmul.f32 %v926, %v1540
  %v1647 = vmul.f32 %v927, %v1555
  %v1648 = vmul.f32 %v928, %v1570
  %v1649 = vmul.f32 %v929, %v1585
  %v1650 = vmul.f32 %v930, %v1600
  %v1651 = vmul.f32 %v931, %v1615
  %v1652 = vpack.c.bf16 %v1616, %v1616
  %v1653 = vpack.c.bf16 %v1617, %v1617
  %v1654 = vpack.c.bf16 %v1618, %v1618
  %v1655 = vpack.c.bf16 %v1619, %v1619
  %v1656 = vpack.c.bf16 %v1620, %v1620
  %v1657 = vpack.c.bf16 %v1621, %v1621
  %v1658 = vpack.c.bf16 %v1622, %v1622
  %v1659 = vpack.c.bf16 %v1623, %v1623
  %v1660 = vpack.c.bf16 %v1624, %v1624
  %v1661 = vpack.c.bf16 %v1625, %v1625
  %v1662 = vpack.c.bf16 %v1626, %v1626
  %v1663 = vpack.c.bf16 %v1627, %v1627
  %v1664 = vpack.c.bf16 %v1628, %v1628
  %v1665 = vpack.c.bf16 %v1629, %v1629
  %v1666 = vpack.c.bf16 %v1630, %v1630
  %v1667 = vpack.c.bf16 %v1631, %v1631
  %v1668 = vpack.c.bf16 %v1632, %v1632
  %v1669 = vpack.c.bf16 %v1633, %v1633
  %v1670 = vpack.c.bf16 %v1634, %v1634
  %v1671 = vpack.c.bf16 %v1635, %v1635
  %v1672 = vpack.c.bf16 %v1636, %v1636
  %v1673 = vpack.c.bf16 %v1637, %v1637
  %v1674 = vpack.c.bf16 %v1638, %v1638
  %v1675 = vpack.c.bf16 %v1639, %v1639
  %v1676 = vpack.c.bf16 %v1640, %v1640
  %v1677 = vpack.c.bf16 %v1641, %v1641
  %v1678 = vpack.c.bf16 %v1642, %v1642
  %v1679 = vpack.c.bf16 %v1643, %v1643
  %v1680 = vpack.c.bf16 %v1644, %v1644
  %v1681 = vpack.c.bf16 %v1645, %v1645
  %v1682 = vpack.c.bf16 %v1646, %v1646
  %v1683 = vpack.c.bf16 %v1647, %v1647
  %v1684 = vpack.c.bf16 %v1648, %v1648
  %v1685 = vpack.c.bf16 %v1649, %v1649
  %v1686 = vpack.c.bf16 %v1650, %v1650
  %v1687 = vpack.c.bf16 %v1651, %v1651
  %1688 = vst [vmem:[%s3] sm:$0xf] %v1652
  %1689 = vst [vmem:[%s3 + $0x4] sm:$0xf] %v1653
  %1690 = vst [vmem:[%s3 + $0x8] sm:$0xf] %v1654
  %1691 = vst [vmem:[%s3 + $0xc] sm:$0xf] %v1655
  %1692 = vst [vmem:[%s3 + $0x10] sm:$0xf] %v1656
  %1693 = vst [vmem:[%s3 + $0x14] sm:$0xf] %v1657
  %1694 = vst [vmem:[%s3 + $0x18] sm:$0xf] %v1658
  %1695 = vst [vmem:[%s3 + $0x1c] sm:$0xf] %v1659
  %1696 = vst [vmem:[%s3 + $0x20] sm:$0xf] %v1660
  %1697 = vst [vmem:[%s3 + $0x24] sm:$0xf] %v1661
  %1698 = vst [vmem:[%s3 + $0x28] sm:$0xf] %v1662
  %1699 = vst [vmem:[%s3 + $0x2c] sm:$0xf] %v1663
  %1700 = vst [vmem:[%s3 + $0x30] sm:$0xf] %v1664
  %1701 = vst [vmem:[%s3 + $0x34] sm:$0xf] %v1665
  %1702 = vst [vmem:[%s3 + $0x38] sm:$0xf] %v1666
  %1703 = vst [vmem:[%s3 + $0x3c] sm:$0xf] %v1667
  %1704 = vst [vmem:[%s3 + $0x40] sm:$0xf] %v1668
  %1705 = vst [vmem:[%s3 + $0x44] sm:$0xf] %v1669
  %1706 = vst [vmem:[%s3 + $0x48] sm:$0xf] %v1670
  %1707 = vst [vmem:[%s3 + $0x4c] sm:$0xf] %v1671
  %1708 = vst [vmem:[%s3 + $0x50] sm:$0xf] %v1672
  %1709 = vst [vmem:[%s3 + $0x54] sm:$0xf] %v1673
  %1710 = vst [vmem:[%s3 + $0x58] sm:$0xf] %v1674
  %1711 = vst [vmem:[%s3 + $0x5c] sm:$0xf] %v1675
  %1712 = vst [vmem:[%s3 + $0x60] sm:$0xf] %v1676
  %1713 = vst [vmem:[%s3 + $0x64] sm:$0xf] %v1677
  %1714 = vst [vmem:[%s3 + $0x68] sm:$0xf] %v1678
  %1715 = vst [vmem:[%s3 + $0x6c] sm:$0xf] %v1679
  %1716 = vst [vmem:[%s3 + $0x70] sm:$0xf] %v1680
  %1717 = vst [vmem:[%s3 + $0x74] sm:$0xf] %v1681
  %1718 = vst [vmem:[%s3 + $0x78] sm:$0xf] %v1682
  %1719 = vst [vmem:[%s3 + $0x7c] sm:$0xf] %v1683
  %1720 = vst [vmem:[%s3 + $0x80] sm:$0xf] %v1684
  %1721 = vst [vmem:[%s3 + $0x84] sm:$0xf] %v1685
  %1722 = vst [vmem:[%s3 + $0x88] sm:$0xf] %v1686
  %1723 = vst [vmem:[%s3 + $0x8c] sm:$0xf] %v1687
  // Predicated region
  $region14: #{gated_generator_forward.32} parent=0 // pred_check
    _
  $region15: #{gated_generator_forward.32} parent=0 // pred_check_branch
    %1725 = sbr.rel (0) target = $region17
  $region16: #{gated_generator_forward.32} parent=0 // pred_region
    _
  $region17: #{gated_generator_forward.32} parent=0 // pred_fallthru
    _
  // Predicated region
  $region18: #{gated_generator_forward.32} parent=0 // pred_check
    _
  $region19: #{gated_generator_forward.32} parent=0 // pred_check_branch
    %1727 = sbr.rel (0) target = $region21
  $region20: #{gated_generator_forward.32} parent=0 // pred_region
    _
  $region21: #{gated_generator_forward.32} parent=0 // pred_fallthru
    _

// kernel: gated_generator_forward.33
$region0: #{gated_generator_forward.33}
  #allocation0 [shape = 'u32[]', space=smem, size = 0x4, offset = 0x4, fixed_abs, tag = 'smem constant byte address 0x4 - core index']
  #allocation1 [shape = 'u32[72,128]{1,0:T(1,128)}', space=vmem, size = 0x9000, scoped, tag = 'internal scratch']
  %s0 = inlined_call_operand.vmem [shape: bf16[80,128], index: 0, kind: input, shape index: {}]
  %s1 = inlined_call_operand.vmem [shape: bf16[128,256], index: 1, kind: input, shape index: {}]
  %s2 = inlined_call_operand.vmem [shape: f32[1,256], index: 2, kind: input, shape index: {}]
  %s3 = inlined_call_operand.vmem [shape: bf16[80,128], index: 3, kind: output, shape index: {}]
  %s4 = sld [smem:[#allocation0]]
  $region22: #{gated_generator_forward.33} parent=0
    _
  %s6 = ssub.s32 1, %s4
  %s7 = scalar_select 0, %s6, %s4
  // Predicated region
  $region2: #{gated_generator_forward.33} parent=0 // pred_check
    _
  $region3: #{gated_generator_forward.33} parent=0 // pred_check_branch
    %9 = sbr.rel (0) target = $region5
  $region4: #{gated_generator_forward.33} parent=0 // pred_region
    _
  $region5: #{gated_generator_forward.33} parent=0 // pred_fallthru
    _
  // Predicated region
  $region6: #{gated_generator_forward.33} parent=0 // pred_check
    _
  $region7: #{gated_generator_forward.33} parent=0 // pred_check_branch
    %11 = sbr.rel (0) target = $region9
  $region8: #{gated_generator_forward.33} parent=0 // pred_region
    _
  $region9: #{gated_generator_forward.33} parent=0 // pred_fallthru
    _
  // Predicated region
  $region10: #{gated_generator_forward.33} parent=0 // pred_check
    _
  $region11: #{gated_generator_forward.33} parent=0 // pred_check_branch
    %13 = sbr.rel (0) target = $region13
  $region12: #{gated_generator_forward.33} parent=0 // pred_region
    _
  $region13: #{gated_generator_forward.33} parent=0 // pred_fallthru
    _
  %v14 = vld [vmem:[%s0] sm:$0xf]
  %v15 = vld [vmem:[%s0 + $0x4] sm:$0xf]
  %v16 = vld [vmem:[%s0 + $0x8] sm:$0xf]
  %v17 = vld [vmem:[%s0 + $0xc] sm:$0xf]
  %v18 = vld [vmem:[%s0 + $0x10] sm:$0xf]
  %v19 = vld [vmem:[%s0 + $0x14] sm:$0xf]
  %v20 = vld [vmem:[%s0 + $0x18] sm:$0xf]
  %v21 = vld [vmem:[%s0 + $0x1c] sm:$0xf]
  %v22 = vld [vmem:[%s0 + $0x20] sm:$0xf]
  %v23 = vld [vmem:[%s0 + $0x24] sm:$0xf]
  %v24 = vld [vmem:[%s1] sm:$0xff]
  %v25 = vld [vmem:[%s1 + $0x8] sm:$0xff]
  %v26 = vld [vmem:[%s1 + $0x10] sm:$0xff]
  %v27 = vld [vmem:[%s1 + $0x18] sm:$0xff]
  %v28 = vld [vmem:[%s1 + $0x20] sm:$0xff]
  %v29 = vld [vmem:[%s1 + $0x28] sm:$0xff]
  %v30 = vld [vmem:[%s1 + $0x30] sm:$0xff]
  %v31 = vld [vmem:[%s1 + $0x38] sm:$0xff]
  %v32 = vld [vmem:[%s1 + $0x40] sm:$0xff]
  %v33 = vld [vmem:[%s1 + $0x48] sm:$0xff]
  %v34 = vld [vmem:[%s1 + $0x50] sm:$0xff]
  %v35 = vld [vmem:[%s1 + $0x58] sm:$0xff]
  %v36 = vld [vmem:[%s1 + $0x60] sm:$0xff]
  %v37 = vld [vmem:[%s1 + $0x68] sm:$0xff]
  %v38 = vld [vmem:[%s1 + $0x70] sm:$0xff]
  %v39 = vld [vmem:[%s1 + $0x78] sm:$0xff]
  %v40 = vld [vmem:[%s2] sm:$0x3]
  %v42 = vperm.slane %v40, 0
  %v43 = vperm.slane %v40, 1
  %v56 = vunpack.c.l.b16 %v14
  %v57 = vunpack.c.l.b16 %v15
  %v58 = vunpack.c.l.b16 %v16
  %v59 = vunpack.c.l.b16 %v17
  %v60 = vunpack.c.l.b16 %v18
  %v61 = vunpack.c.l.b16 %v19
  %v62 = vunpack.c.l.b16 %v20
  %v63 = vunpack.c.l.b16 %v21
  %v64 = vunpack.c.l.b16 %v22
  %v65 = vunpack.c.l.b16 %v23
  %v66 = vpack.c.b16 %v57, %v56
  %v67 = vpack.c.b16 %v59, %v58
  %v68 = vpack.c.b16 %v61, %v60
  %v69 = vpack.c.b16 %v63, %v62
  %v70 = vpack.c.b16 %v65, %v64
  %v92 = vunpack.c.l.b16 %v24
  %v93 = vunpack.c.h.b16 %v24
  %v94 = vunpack.c.l.b16 %v25
  %v95 = vunpack.c.h.b16 %v25
  %v96 = vunpack.c.l.b16 %v26
  %v97 = vunpack.c.h.b16 %v26
  %v98 = vunpack.c.l.b16 %v27
  %v99 = vunpack.c.h.b16 %v27
  %v100 = vunpack.c.l.b16 %v28
  %v101 = vunpack.c.h.b16 %v28
  %v102 = vunpack.c.l.b16 %v29
  %v103 = vunpack.c.h.b16 %v29
  %v104 = vunpack.c.l.b16 %v30
  %v105 = vunpack.c.h.b16 %v30
  %v106 = vunpack.c.l.b16 %v31
  %v107 = vunpack.c.h.b16 %v31
  %v108 = vunpack.c.l.b16 %v32
  %v109 = vunpack.c.h.b16 %v32
  %v110 = vunpack.c.l.b16 %v33
  %v111 = vunpack.c.h.b16 %v33
  %v112 = vunpack.c.l.b16 %v34
  %v113 = vunpack.c.h.b16 %v34
  %v114 = vunpack.c.l.b16 %v35
  %v115 = vunpack.c.h.b16 %v35
  %v116 = vunpack.c.l.b16 %v36
  %v117 = vunpack.c.h.b16 %v36
  %v118 = vunpack.c.l.b16 %v37
  %v119 = vunpack.c.h.b16 %v37
  %v120 = vunpack.c.l.b16 %v38
  %v121 = vunpack.c.h.b16 %v38
  %v122 = vunpack.c.l.b16 %v39
  %v123 = vunpack.c.h.b16 %v39
  %v124 = vpack.c.b16 %v94, %v92
  %v125 = vpack.c.b16 %v95, %v93
  %v126 = vpack.c.b16 %v98, %v96
  %v127 = vpack.c.b16 %v99, %v97
  %v128 = vpack.c.b16 %v102, %v100
  %v129 = vpack.c.b16 %v103, %v101
  %v130 = vpack.c.b16 %v106, %v104
  %v131 = vpack.c.b16 %v107, %v105
  %v132 = vpack.c.b16 %v110, %v108
  %v133 = vpack.c.b16 %v111, %v109
  %v134 = vpack.c.b16 %v114, %v112
  %v135 = vpack.c.b16 %v115, %v113
  %v136 = vpack.c.b16 %v118, %v116
  %v137 = vpack.c.b16 %v119, %v117
  %v138 = vpack.c.b16 %v122, %v120
  %v139 = vpack.c.b16 %v123, %v121
  %156 = vmatpush.bf16.msra.mxu0 %v138
  %157 = vmatpush.bf16.msra.mxu0 %v136
  %158 = vmatpush.bf16.msra.mxu0 %v134
  %159 = vmatpush.bf16.msra.mxu0 %v132
  %160 = vmatpush.bf16.msra.mxu0 %v130
  %161 = vmatpush.bf16.msra.mxu0 %v128
  %162 = vmatpush.bf16.msra.mxu0 %v126
  %163 = vmatpush.bf16.msra.mxu0 %v124
  %164 = vmatmul.bf16.gmra.mxu0 %v66
  %v165 = vpop.f32.mrf.mxu0
  %v166 = vadd.f32 %v42, %v165
  %v167 = vpop.f32.mrf.mxu0
  %v168 = vadd.f32 %v42, %v167
  %169 = vmatmul.bf16.gmra.mxu0 %v67
  %v170 = vpop.f32.mrf.mxu0
  %v171 = vadd.f32 %v42, %v170
  %v172 = vpop.f32.mrf.mxu0
  %v173 = vadd.f32 %v42, %v172
  %174 = vmatmul.bf16.gmra.mxu0 %v68
  %v175 = vpop.f32.mrf.mxu0
  %v176 = vadd.f32 %v42, %v175
  %v177 = vpop.f32.mrf.mxu0
  %v178 = vadd.f32 %v42, %v177
  %179 = vmatmul.bf16.gmra.mxu0 %v69
  %v180 = vpop.f32.mrf.mxu0
  %v181 = vadd.f32 %v42, %v180
  %v182 = vpop.f32.mrf.mxu0
  %v183 = vadd.f32 %v42, %v182
  %184 = vmatmul.bf16.gmra.mxu0 %v70
  %v185 = vpop.f32.mrf.mxu0
  %v186 = vadd.f32 %v42, %v185
  %v187 = vpop.f32.mrf.mxu0
  %v188 = vadd.f32 %v42, %v187
  %189 = vdwg.mxu0
  %190 = vmatpush.bf16.msra.mxu0 %v139
  %191 = vmatpush.bf16.msra.mxu0 %v137
  %192 = vmatpush.bf16.msra.mxu0 %v135
  %193 = vmatpush.bf16.msra.mxu0 %v133
  %194 = vmatpush.bf16.msra.mxu0 %v131
  %195 = vmatpush.bf16.msra.mxu0 %v129
  %196 = vmatpush.bf16.msra.mxu0 %v127
  %197 = vmatpush.bf16.msra.mxu0 %v125
  %198 = vmatmul.bf16.gmra.mxu0 %v66
  %v199 = vpop.f32.mrf.mxu0
  %v200 = vadd.f32 %v43, %v199
  %v201 = vpop.f32.mrf.mxu0
  %v202 = vadd.f32 %v43, %v201
  %203 = vmatmul.bf16.gmra.mxu0 %v67
  %v204 = vpop.f32.mrf.mxu0
  %v205 = vadd.f32 %v43, %v204
  %v206 = vpop.f32.mrf.mxu0
  %v207 = vadd.f32 %v43, %v206
  %208 = vmatmul.bf16.gmra.mxu0 %v68
  %v209 = vpop.f32.mrf.mxu0
  %v210 = vadd.f32 %v43, %v209
  %v211 = vpop.f32.mrf.mxu0
  %v212 = vadd.f32 %v43, %v211
  %213 = vmatmul.bf16.gmra.mxu0 %v69
  %v214 = vpop.f32.mrf.mxu0
  %v215 = vadd.f32 %v43, %v214
  %v216 = vpop.f32.mrf.mxu0
  %v217 = vadd.f32 %v43, %v216
  %218 = vmatmul.bf16.gmra.mxu0 %v70
  %v219 = vpop.f32.mrf.mxu0
  %v220 = vadd.f32 %v43, %v219
  %v221 = vpop.f32.mrf.mxu0
  %v222 = vadd.f32 %v43, %v221
  %223 = vdwg.mxu0
  %vm224 = vcmp.ge.f32.partialorder %v166, 0.0
  %vm225 = vcmp.ge.f32.partialorder %v168, 0.0
  %vm226 = vcmp.ge.f32.partialorder %v171, 0.0
  %vm227 = vcmp.ge.f32.partialorder %v173, 0.0
  %vm228 = vcmp.ge.f32.partialorder %v176, 0.0
  %vm229 = vcmp.ge.f32.partialorder %v178, 0.0
  %vm230 = vcmp.ge.f32.partialorder %v181, 0.0
  %vm231 = vcmp.ge.f32.partialorder %v183, 0.0
  %vm232 = vcmp.ge.f32.partialorder %v186, 0.0
  %vm233 = vcmp.ge.f32.partialorder %v188, 0.0
  %v234 = vmul.f32 %v166, 0.2
  %v235 = vmul.f32 %v168, 0.2
  %v236 = vmul.f32 %v171, 0.2
  %v237 = vmul.f32 %v173, 0.2
  %v238 = vmul.f32 %v176, 0.2
  %v239 = vmul.f32 %v178, 0.2
  %v240 = vmul.f32 %v181, 0.2
  %v241 = vmul.f32 %v183, 0.2
  %v242 = vmul.f32 %v186, 0.2
  %v243 = vmul.f32 %v188, 0.2
  %v244 = vsel %vm224, %v166, %v234
  %v245 = vsel %vm225, %v168, %v235
  %v246 = vsel %vm226, %v171, %v236
  %v247 = vsel %vm227, %v173, %v237
  %v248 = vsel %vm228, %v176, %v238
  %v249 = vsel %vm229, %v178, %v239
  %v250 = vsel %vm230, %v181, %v240
  %v251 = vsel %vm231, %v183, %v241
  %v252 = vsel %vm232, %v186, %v242
  %v253 = vsel %vm233, %v188, %v243
  %v254 = vxor.u32 %v200, 2147483648
  %v255 = vxor.u32 %v202, 2147483648
  %v256 = vxor.u32 %v205, 2147483648
  %v257 = vxor.u32 %v207, 2147483648
  %v258 = vxor.u32 %v210, 2147483648
  %v259 = vxor.u32 %v212, 2147483648
  %v260 = vxor.u32 %v215, 2147483648
  %v261 = vxor.u32 %v217, 2147483648
  %v262 = vxor.u32 %v220, 2147483648
  %v263 = vxor.u32 %v222, 2147483648
  %v264 = vmul.f32 %v254, 1.442695
  %v265 = vpow.pop %v264
  %v266 = vmul.f32 %v255, 1.442695
  %v267 = vpow.pop %v266
  %v268 = vmul.f32 %v256, 1.442695
  %v269 = vpow.pop %v268
  %v270 = vmul.f32 %v257, 1.442695
  %v271 = vpow.pop %v270
  %v272 = vmul.f32 %v258, 1.442695
  %v273 = vpow.pop %v272
  %v274 = vmul.f32 %v259, 1.442695
  %v275 = vpow.pop %v274
  %v276 = vmul.f32 %v260, 1.442695
  %v277 = vpow.pop %v276
  %v278 = vmul.f32 %v261, 1.442695
  %v279 = vpow.pop %v278
  %v280 = vmul.f32 %v262, 1.442695
  %v281 = vpow.pop %v280
  %v282 = vmul.f32 %v263, 1.442695
  %v283 = vpow.pop %v282
  %v284 = vadd.f32 %v265, 1.0
  %v285 = vadd.f32 %v267, 1.0
  %v286 = vadd.f32 %v269, 1.0
  %v287 = vadd.f32 %v271, 1.0
  %v288 = vadd.f32 %v273, 1.0
  %v289 = vadd.f32 %v275, 1.0
  %v290 = vadd.f32 %v277, 1.0
  %v291 = vadd.f32 %v279, 1.0
  %v292 = vadd.f32 %v281, 1.0
  %v293 = vadd.f32 %v283, 1.0
  %v294 = vrcp.pop %v284
  %v295 = vmul.f32 %v284, %v294
  %v296 = vsub.f32 1.0, %v295
  %v297 = vmul.f32 %v294, %v296
  %v298 = vadd.f32 %v294, %v297
  %vm299 = vweird.f32 %v284
  %vm300 = vweird.f32 %v294
  %vm301 = vmor %vm299, %vm300
  %v302 = vsel %vm301, %v294, %v298
  %v303 = vand.u32 2147483647, %v284
  %vm304 = vcmp.eq.f32.partialorder %v303, 8.507059e+37
  %v305 = vand.u32 %v284, 2147483648
  %v306 = vor.u32 1.1754944e-38, %v305
  %v307 = vsel %vm304, %v306, %v302
  %v308 = vmul.f32 1.0, %v307
  %v309 = vrcp.pop %v285
  %v310 = vmul.f32 %v285, %v309
  %v311 = vsub.f32 1.0, %v310
  %v312 = vmul.f32 %v309, %v311
  %v313 = vadd.f32 %v309, %v312
  %vm314 = vweird.f32 %v285
  %vm315 = vweird.f32 %v309
  %vm316 = vmor %vm314, %vm315
  %v317 = vsel %vm316, %v309, %v313
  %v318 = vand.u32 2147483647, %v285
  %vm319 = vcmp.eq.f32.partialorder %v318, 8.507059e+37
  %v320 = vand.u32 %v285, 2147483648
  %v321 = vor.u32 1.1754944e-38, %v320
  %v322 = vsel %vm319, %v321, %v317
  %v323 = vmul.f32 1.0, %v322
  %v324 = vrcp.pop %v286
  %v325 = vmul.f32 %v286, %v324
  %v326 = vsub.f32 1.0, %v325
  %v327 = vmul.f32 %v324, %v326
  %v328 = vadd.f32 %v324, %v327
  %vm329 = vweird.f32 %v286
  %vm330 = vweird.f32 %v324
  %vm331 = vmor %vm329, %vm330
  %v332 = vsel %vm331, %v324, %v328
  %v333 = vand.u32 2147483647, %v286
  %vm334 = vcmp.eq.f32.partialorder %v333, 8.507059e+37
  %v335 = vand.u32 %v286, 2147483648
  %v336 = vor.u32 1.1754944e-38, %v335
  %v337 = vsel %vm334, %v336, %v332
  %v338 = vmul.f32 1.0, %v337
  %v339 = vrcp.pop %v287
  %v340 = vmul.f32 %v287, %v339
  %v341 = vsub.f32 1.0, %v340
  %v342 = vmul.f32 %v339, %v341
  %v343 = vadd.f32 %v339, %v342
  %vm344 = vweird.f32 %v287
  %vm345 = vweird.f32 %v339
  %vm346 = vmor %vm344, %vm345
  %v347 = vsel %vm346, %v339, %v343
  %v348 = vand.u32 2147483647, %v287
  %vm349 = vcmp.eq.f32.partialorder %v348, 8.507059e+37
  %v350 = vand.u32 %v287, 2147483648
  %v351 = vor.u32 1.1754944e-38, %v350
  %v352 = vsel %vm349, %v351, %v347
  %v353 = vmul.f32 1.0, %v352
  %v354 = vrcp.pop %v288
  %v355 = vmul.f32 %v288, %v354
  %v356 = vsub.f32 1.0, %v355
  %v357 = vmul.f32 %v354, %v356
  %v358 = vadd.f32 %v354, %v357
  %vm359 = vweird.f32 %v288
  %vm360 = vweird.f32 %v354
  %vm361 = vmor %vm359, %vm360
  %v362 = vsel %vm361, %v354, %v358
  %v363 = vand.u32 2147483647, %v288
  %vm364 = vcmp.eq.f32.partialorder %v363, 8.507059e+37
  %v365 = vand.u32 %v288, 2147483648
  %v366 = vor.u32 1.1754944e-38, %v365
  %v367 = vsel %vm364, %v366, %v362
  %v368 = vmul.f32 1.0, %v367
  %v369 = vrcp.pop %v289
  %v370 = vmul.f32 %v289, %v369
  %v371 = vsub.f32 1.0, %v370
  %v372 = vmul.f32 %v369, %v371
  %v373 = vadd.f32 %v369, %v372
  %vm374 = vweird.f32 %v289
  %vm375 = vweird.f32 %v369
  %vm376 = vmor %vm374, %vm375
  %v377 = vsel %vm376, %v369, %v373
  %v378 = vand.u32 2147483647, %v289
  %vm379 = vcmp.eq.f32.partialorder %v378, 8.507059e+37
  %v380 = vand.u32 %v289, 2147483648
  %v381 = vor.u32 1.1754944e-38, %v380
  %v382 = vsel %vm379, %v381, %v377
  %v383 = vmul.f32 1.0, %v382
  %v384 = vrcp.pop %v290
  %v385 = vmul.f32 %v290, %v384
  %v386 = vsub.f32 1.0, %v385
  %v387 = vmul.f32 %v384, %v386
  %v388 = vadd.f32 %v384, %v387
  %vm389 = vweird.f32 %v290
  %vm390 = vweird.f32 %v384
  %vm391 = vmor %vm389, %vm390
  %v392 = vsel %vm391, %v384, %v388
  %v393 = vand.u32 2147483647, %v290
  %vm394 = vcmp.eq.f32.partialorder %v393, 8.507059e+37
  %v395 = vand.u32 %v290, 2147483648
  %v396 = vor.u32 1.1754944e-38, %v395
  %v397 = vsel %vm394, %v396, %v392
  %v398 = vmul.f32 1.0, %v397
  %v399 = vrcp.pop %v291
  %v400 = vmul.f32 %v291, %v399
  %v401 = vsub.f32 1.0, %v400
  %v402 = vmul.f32 %v399, %v401
  %v403 = vadd.f32 %v399, %v402
  %vm404 = vweird.f32 %v291
  %vm405 = vweird.f32 %v399
  %vm406 = vmor %vm404, %vm405
  %v407 = vsel %vm406, %v399, %v403
  %v408 = vand.u32 2147483647, %v291
  %vm409 = vcmp.eq.f32.partialorder %v408, 8.507059e+37
  %v410 = vand.u32 %v291, 2147483648
  %v411 = vor.u32 1.1754944e-38, %v410
  %v412 = vsel %vm409, %v411, %v407
  %v413 = vmul.f32 1.0, %v412
  %v414 = vrcp.pop %v292
  %v415 = vmul.f32 %v292, %v414
  %v416 = vsub.f32 1.0, %v415
  %v417 = vmul.f32 %v414, %v416
  %v418 = vadd.f32 %v414, %v417
  %vm419 = vweird.f32 %v292
  %vm420 = vweird.f32 %v414
  %vm421 = vmor %vm419, %vm420
  %v422 = vsel %vm421, %v414, %v418
  %v423 = vand.u32 2147483647, %v292
  %vm424 = vcmp.eq.f32.partialorder %v423, 8.507059e+37
  %v425 = vand.u32 %v292, 2147483648
  %v426 = vor.u32 1.1754944e-38, %v425
  %v427 = vsel %vm424, %v426, %v422
  %v428 = vmul.f32 1.0, %v427
  %v429 = vrcp.pop %v293
  %v430 = vmul.f32 %v293, %v429
  %v431 = vsub.f32 1.0, %v430
  %v432 = vmul.f32 %v429, %v431
  %v433 = vadd.f32 %v429, %v432
  %vm434 = vweird.f32 %v293
  %vm435 = vweird.f32 %v429
  %vm436 = vmor %vm434, %vm435
  %v437 = vsel %vm436, %v429, %v433
  %v438 = vand.u32 2147483647, %v293
  %vm439 = vcmp.eq.f32.partialorder %v438, 8.507059e+37
  %v440 = vand.u32 %v293, 2147483648
  %v441 = vor.u32 1.1754944e-38, %v440
  %v442 = vsel %vm439, %v441, %v437
  %v443 = vmul.f32 1.0, %v442
  %v444 = vmul.f32 %v244, %v308
  %v445 = vmul.f32 %v245, %v323
  %v446 = vmul.f32 %v246, %v338
  %v447 = vmul.f32 %v247, %v353
  %v448 = vmul.f32 %v248, %v368
  %v449 = vmul.f32 %v249, %v383
  %v450 = vmul.f32 %v250, %v398
  %v451 = vmul.f32 %v251, %v413
  %v452 = vmul.f32 %v252, %v428
  %v453 = vmul.f32 %v253, %v443
  %v454 = vpack.c.bf16 %v444, %v444
  %v455 = vpack.c.bf16 %v445, %v445
  %v456 = vpack.c.bf16 %v446, %v446
  %v457 = vpack.c.bf16 %v447, %v447
  %v458 = vpack.c.bf16 %v448, %v448
  %v459 = vpack.c.bf16 %v449, %v449
  %v460 = vpack.c.bf16 %v450, %v450
  %v461 = vpack.c.bf16 %v451, %v451
  %v462 = vpack.c.bf16 %v452, %v452
  %v463 = vpack.c.bf16 %v453, %v453
  %464 = vst [vmem:[%s3] sm:$0xf] %v454
  %465 = vst [vmem:[%s3 + $0x4] sm:$0xf] %v455
  %466 = vst [vmem:[%s3 + $0x8] sm:$0xf] %v456
  %467 = vst [vmem:[%s3 + $0xc] sm:$0xf] %v457
  %468 = vst [vmem:[%s3 + $0x10] sm:$0xf] %v458
  %469 = vst [vmem:[%s3 + $0x14] sm:$0xf] %v459
  %470 = vst [vmem:[%s3 + $0x18] sm:$0xf] %v460
  %471 = vst [vmem:[%s3 + $0x1c] sm:$0xf] %v461
  %472 = vst [vmem:[%s3 + $0x20] sm:$0xf] %v462
  %473 = vst [vmem:[%s3 + $0x24] sm:$0xf] %v463
  // Predicated region
  $region14: #{gated_generator_forward.33} parent=0 // pred_check
    _
  $region15: #{gated_generator_forward.33} parent=0 // pred_check_branch
    %475 = sbr.rel (0) target = $region17
  $region16: #{gated_generator_forward.33} parent=0 // pred_region
    _
  $region17: #{gated_generator_forward.33} parent=0 // pred_fallthru
    _
  // Predicated region
  $region18: #{gated_generator_forward.33} parent=0 // pred_check
    _
  $region19: #{gated_generator_forward.33} parent=0 // pred_check_branch
    %477 = sbr.rel (0) target = $region21
  $region20: #{gated_generator_forward.33} parent=0 // pred_region
    _
  $region21: #{gated_generator_forward.33} parent=0 // pred_fallthru
    _

// kernel: gated_generator_forward.34
$region0: #{gated_generator_forward.34}
  #allocation0 [shape = 'u32[]', space=smem, size = 0x4, offset = 0x4, fixed_abs, tag = 'smem constant byte address 0x4 - core index']
  #allocation1 [shape = 'u32[72,128]{1,0:T(1,128)}', space=vmem, size = 0x9000, scoped, tag = 'internal scratch']
  %s0 = inlined_call_operand.vmem [shape: bf16[16,256], index: 0, kind: input, shape index: {}]
  %s1 = inlined_call_operand.vmem [shape: bf16[256,256], index: 1, kind: input, shape index: {}]
  %s2 = inlined_call_operand.vmem [shape: f32[1,256], index: 2, kind: input, shape index: {}]
  %s3 = inlined_call_operand.vmem [shape: bf16[16,128], index: 3, kind: output, shape index: {}]
  %s4 = sld [smem:[#allocation0]]
  $region22: #{gated_generator_forward.34} parent=0
    _
  %s6 = ssub.s32 1, %s4
  %s7 = scalar_select 0, %s6, %s4
  // Predicated region
  $region2: #{gated_generator_forward.34} parent=0 // pred_check
    _
  $region3: #{gated_generator_forward.34} parent=0 // pred_check_branch
    %9 = sbr.rel (0) target = $region5
  $region4: #{gated_generator_forward.34} parent=0 // pred_region
    _
  $region5: #{gated_generator_forward.34} parent=0 // pred_fallthru
    _
  // Predicated region
  $region6: #{gated_generator_forward.34} parent=0 // pred_check
    _
  $region7: #{gated_generator_forward.34} parent=0 // pred_check_branch
    %11 = sbr.rel (0) target = $region9
  $region8: #{gated_generator_forward.34} parent=0 // pred_region
    _
  $region9: #{gated_generator_forward.34} parent=0 // pred_fallthru
    _
  // Predicated region
  $region10: #{gated_generator_forward.34} parent=0 // pred_check
    _
  $region11: #{gated_generator_forward.34} parent=0 // pred_check_branch
    %13 = sbr.rel (0) target = $region13
  $region12: #{gated_generator_forward.34} parent=0 // pred_region
    _
  $region13: #{gated_generator_forward.34} parent=0 // pred_fallthru
    _
  %v14 = vld [vmem:[%s0] sm:$0xff]
  %v15 = vld [vmem:[%s0 + $0x8] sm:$0xff]
  %v16 = vld [vmem:[%s1] sm:$0xff]
  %v17 = vld [vmem:[%s1 + $0x8] sm:$0xff]
  %v18 = vld [vmem:[%s1 + $0x10] sm:$0xff]
  %v19 = vld [vmem:[%s1 + $0x18] sm:$0xff]
  %v20 = vld [vmem:[%s1 + $0x20] sm:$0xff]
  %v21 = vld [vmem:[%s1 + $0x28] sm:$0xff]
  %v22 = vld [vmem:[%s1 + $0x30] sm:$0xff]
  %v23 = vld [vmem:[%s1 + $0x38] sm:$0xff]
  %v24 = vld [vmem:[%s1 + $0x40] sm:$0xff]
  %v25 = vld [vmem:[%s1 + $0x48] sm:$0xff]
  %v26 = vld [vmem:[%s1 + $0x50] sm:$0xff]
  %v27 = vld [vmem:[%s1 + $0x58] sm:$0xff]
  %v28 = vld [vmem:[%s1 + $0x60] sm:$0xff]
  %v29 = vld [vmem:[%s1 + $0x68] sm:$0xff]
  %v30 = vld [vmem:[%s1 + $0x70] sm:$0xff]
  %v31 = vld [vmem:[%s1 + $0x78] sm:$0xff]
  %v32 = vld [vmem:[%s1 + $0x80] sm:$0xff]
  %v33 = vld [vmem:[%s1 + $0x88] sm:$0xff]
  %v34 = vld [vmem:[%s1 + $0x90] sm:$0xff]
  %v35 = vld [vmem:[%s1 + $0x98] sm:$0xff]
  %v36 = vld [vmem:[%s1 + $0xa0] sm:$0xff]
  %v37 = vld [vmem:[%s1 + $0xa8] sm:$0xff]
  %v38 = vld [vmem:[%s1 + $0xb0] sm:$0xff]
  %v39 = vld [vmem:[%s1 + $0xb8] sm:$0xff]
  %v40 = vld [vmem:[%s1 + $0xc0] sm:$0xff]
  %v41 = vld [vmem:[%s1 + $0xc8] sm:$0xff]
  %v42 = vld [vmem:[%s1 + $0xd0] sm:$0xff]
  %v43 = vld [vmem:[%s1 + $0xd8] sm:$0xff]
  %v44 = vld [vmem:[%s1 + $0xe0] sm:$0xff]
  %v45 = vld [vmem:[%s1 + $0xe8] sm:$0xff]
  %v46 = vld [vmem:[%s1 + $0xf0] sm:$0xff]
  %v47 = vld [vmem:[%s1 + $0xf8] sm:$0xff]
  %v48 = vld [vmem:[%s2] sm:$0x3]
  %v50 = vperm.slane %v48, 0
  %v51 = vperm.slane %v48, 1
  %v56 = vunpack.c.l.b16 %v14
  %v57 = vunpack.c.h.b16 %v14
  %v58 = vunpack.c.l.b16 %v15
  %v59 = vunpack.c.h.b16 %v15
  %v60 = vpack.c.b16 %v58, %v56
  %v61 = vpack.c.b16 %v59, %v57
  %v96 = vunpack.c.l.b16 %v16
  %v97 = vunpack.c.h.b16 %v16
  %v98 = vunpack.c.l.b16 %v17
  %v99 = vunpack.c.h.b16 %v17
  %v100 = vunpack.c.l.b16 %v18
  %v101 = vunpack.c.h.b16 %v18
  %v102 = vunpack.c.l.b16 %v19
  %v103 = vunpack.c.h.b16 %v19
  %v104 = vunpack.c.l.b16 %v20
  %v105 = vunpack.c.h.b16 %v20
  %v106 = vunpack.c.l.b16 %v21
  %v107 = vunpack.c.h.b16 %v21
  %v108 = vunpack.c.l.b16 %v22
  %v109 = vunpack.c.h.b16 %v22
  %v110 = vunpack.c.l.b16 %v23
  %v111 = vunpack.c.h.b16 %v23
  %v112 = vunpack.c.l.b16 %v24
  %v113 = vunpack.c.h.b16 %v24
  %v114 = vunpack.c.l.b16 %v25
  %v115 = vunpack.c.h.b16 %v25
  %v116 = vunpack.c.l.b16 %v26
  %v117 = vunpack.c.h.b16 %v26
  %v118 = vunpack.c.l.b16 %v27
  %v119 = vunpack.c.h.b16 %v27
  %v120 = vunpack.c.l.b16 %v28
  %v121 = vunpack.c.h.b16 %v28
  %v122 = vunpack.c.l.b16 %v29
  %v123 = vunpack.c.h.b16 %v29
  %v124 = vunpack.c.l.b16 %v30
  %v125 = vunpack.c.h.b16 %v30
  %v126 = vunpack.c.l.b16 %v31
  %v127 = vunpack.c.h.b16 %v31
  %v128 = vunpack.c.l.b16 %v32
  %v129 = vunpack.c.h.b16 %v32
  %v130 = vunpack.c.l.b16 %v33
  %v131 = vunpack.c.h.b16 %v33
  %v132 = vunpack.c.l.b16 %v34
  %v133 = vunpack.c.h.b16 %v34
  %v134 = vunpack.c.l.b16 %v35
  %v135 = vunpack.c.h.b16 %v35
  %v136 = vunpack.c.l.b16 %v36
  %v137 = vunpack.c.h.b16 %v36
  %v138 = vunpack.c.l.b16 %v37
  %v139 = vunpack.c.h.b16 %v37
  %v140 = vunpack.c.l.b16 %v38
  %v141 = vunpack.c.h.b16 %v38
  %v142 = vunpack.c.l.b16 %v39
  %v143 = vunpack.c.h.b16 %v39
  %v144 = vunpack.c.l.b16 %v40
  %v145 = vunpack.c.h.b16 %v40
  %v146 = vunpack.c.l.b16 %v41
  %v147 = vunpack.c.h.b16 %v41
  %v148 = vunpack.c.l.b16 %v42
  %v149 = vunpack.c.h.b16 %v42
  %v150 = vunpack.c.l.b16 %v43
  %v151 = vunpack.c.h.b16 %v43
  %v152 = vunpack.c.l.b16 %v44
  %v153 = vunpack.c.h.b16 %v44
  %v154 = vunpack.c.l.b16 %v45
  %v155 = vunpack.c.h.b16 %v45
  %v156 = vunpack.c.l.b16 %v46
  %v157 = vunpack.c.h.b16 %v46
  %v158 = vunpack.c.l.b16 %v47
  %v159 = vunpack.c.h.b16 %v47
  %v160 = vpack.c.b16 %v98, %v96
  %v161 = vpack.c.b16 %v99, %v97
  %v162 = vpack.c.b16 %v102, %v100
  %v163 = vpack.c.b16 %v103, %v101
  %v164 = vpack.c.b16 %v106, %v104
  %v165 = vpack.c.b16 %v107, %v105
  %v166 = vpack.c.b16 %v110, %v108
  %v167 = vpack.c.b16 %v111, %v109
  %v168 = vpack.c.b16 %v114, %v112
  %v169 = vpack.c.b16 %v115, %v113
  %v170 = vpack.c.b16 %v118, %v116
  %v171 = vpack.c.b16 %v119, %v117
  %v172 = vpack.c.b16 %v122, %v120
  %v173 = vpack.c.b16 %v123, %v121
  %v174 = vpack.c.b16 %v126, %v124
  %v175 = vpack.c.b16 %v127, %v125
  %v176 = vpack.c.b16 %v130, %v128
  %v177 = vpack.c.b16 %v131, %v129
  %v178 = vpack.c.b16 %v134, %v132
  %v179 = vpack.c.b16 %v135, %v133
  %v180 = vpack.c.b16 %v138, %v136
  %v181 = vpack.c.b16 %v139, %v137
  %v182 = vpack.c.b16 %v142, %v140
  %v183 = vpack.c.b16 %v143, %v141
  %v184 = vpack.c.b16 %v146, %v144
  %v185 = vpack.c.b16 %v147, %v145
  %v186 = vpack.c.b16 %v150, %v148
  %v187 = vpack.c.b16 %v151, %v149
  %v188 = vpack.c.b16 %v154, %v152
  %v189 = vpack.c.b16 %v155, %v153
  %v190 = vpack.c.b16 %v158, %v156
  %v191 = vpack.c.b16 %v159, %v157
  %224 = vmatpush.bf16.msra.mxu0 %v174
  %225 = vmatpush.bf16.msra.mxu0 %v172
  %226 = vmatpush.bf16.msra.mxu0 %v170
  %227 = vmatpush.bf16.msra.mxu0 %v168
  %228 = vmatpush.bf16.msra.mxu0 %v166
  %229 = vmatpush.bf16.msra.mxu0 %v164
  %230 = vmatpush.bf16.msra.mxu0 %v162
  %231 = vmatpush.bf16.msra.mxu0 %v160
  %232 = vmatmul.bf16.gmra.mxu0 %v60
  %v233 = vpop.f32.mrf.mxu0
  %v234 = vadd.f32 %v50, %v233
  %v235 = vpop.f32.mrf.mxu0
  %v236 = vadd.f32 %v50, %v235
  %237 = vdwg.mxu0
  %238 = vmatpush.bf16.msra.mxu0 %v190
  %239 = vmatpush.bf16.msra.mxu0 %v188
  %240 = vmatpush.bf16.msra.mxu0 %v186
  %241 = vmatpush.bf16.msra.mxu0 %v184
  %242 = vmatpush.bf16.msra.mxu0 %v182
  %243 = vmatpush.bf16.msra.mxu0 %v180
  %244 = vmatpush.bf16.msra.mxu0 %v178
  %245 = vmatpush.bf16.msra.mxu0 %v176
  %246 = vmatmul.bf16.gmra.mxu0 %v61
  %v247 = vpop.f32.mrf.mxu0
  %v248 = vadd.f32 %v234, %v247
  %v249 = vpop.f32.mrf.mxu0
  %v250 = vadd.f32 %v236, %v249
  %251 = vdwg.mxu0
  %252 = vmatpush.bf16.msra.mxu0 %v175
  %253 = vmatpush.bf16.msra.mxu0 %v173
  %254 = vmatpush.bf16.msra.mxu0 %v171
  %255 = vmatpush.bf16.msra.mxu0 %v169
  %256 = vmatpush.bf16.msra.mxu0 %v167
  %257 = vmatpush.bf16.msra.mxu0 %v165
  %258 = vmatpush.bf16.msra.mxu0 %v163
  %259 = vmatpush.bf16.msra.mxu0 %v161
  %260 = vmatmul.bf16.gmra.mxu0 %v60
  %v261 = vpop.f32.mrf.mxu0
  %v262 = vadd.f32 %v51, %v261
  %v263 = vpop.f32.mrf.mxu0
  %v264 = vadd.f32 %v51, %v263
  %265 = vdwg.mxu0
  %266 = vmatpush.bf16.msra.mxu0 %v191
  %267 = vmatpush.bf16.msra.mxu0 %v189
  %268 = vmatpush.bf16.msra.mxu0 %v187
  %269 = vmatpush.bf16.msra.mxu0 %v185
  %270 = vmatpush.bf16.msra.mxu0 %v183
  %271 = vmatpush.bf16.msra.mxu0 %v181
  %272 = vmatpush.bf16.msra.mxu0 %v179
  %273 = vmatpush.bf16.msra.mxu0 %v177
  %274 = vmatmul.bf16.gmra.mxu0 %v61
  %v275 = vpop.f32.mrf.mxu0
  %v276 = vadd.f32 %v262, %v275
  %v277 = vpop.f32.mrf.mxu0
  %v278 = vadd.f32 %v264, %v277
  %279 = vdwg.mxu0
  %vm280 = vcmp.ge.f32.partialorder %v248, 0.0
  %vm281 = vcmp.ge.f32.partialorder %v250, 0.0
  %v282 = vmul.f32 %v248, 0.2
  %v283 = vmul.f32 %v250, 0.2
  %v284 = vsel %vm280, %v248, %v282
  %v285 = vsel %vm281, %v250, %v283
  %v286 = vxor.u32 %v276, 2147483648
  %v287 = vxor.u32 %v278, 2147483648
  %v288 = vmul.f32 %v286, 1.442695
  %v289 = vpow.pop %v288
  %v290 = vmul.f32 %v287, 1.442695
  %v291 = vpow.pop %v290
  %v292 = vadd.f32 %v289, 1.0
  %v293 = vadd.f32 %v291, 1.0
  %v294 = vrcp.pop %v292
  %v295 = vmul.f32 %v292, %v294
  %v296 = vsub.f32 1.0, %v295
  %v297 = vmul.f32 %v294, %v296
  %v298 = vadd.f32 %v294, %v297
  %vm299 = vweird.f32 %v292
  %vm300 = vweird.f32 %v294
  %vm301 = vmor %vm299, %vm300
  %v302 = vsel %vm301, %v294, %v298
  %v303 = vand.u32 2147483647, %v292
  %vm304 = vcmp.eq.f32.partialorder %v303, 8.507059e+37
  %v305 = vand.u32 %v292, 2147483648
  %v306 = vor.u32 1.1754944e-38, %v305
  %v307 = vsel %vm304, %v306, %v302
  %v308 = vmul.f32 1.0, %v307
  %v309 = vrcp.pop %v293
  %v310 = vmul.f32 %v293, %v309
  %v311 = vsub.f32 1.0, %v310
  %v312 = vmul.f32 %v309, %v311
  %v313 = vadd.f32 %v309, %v312
  %vm314 = vweird.f32 %v293
  %vm315 = vweird.f32 %v309
  %vm316 = vmor %vm314, %vm315
  %v317 = vsel %vm316, %v309, %v313
  %v318 = vand.u32 2147483647, %v293
  %vm319 = vcmp.eq.f32.partialorder %v318, 8.507059e+37
  %v320 = vand.u32 %v293, 2147483648
  %v321 = vor.u32 1.1754944e-38, %v320
  %v322 = vsel %vm319, %v321, %v317
  %v323 = vmul.f32 1.0, %v322
  %v324 = vmul.f32 %v284, %v308
  %v325 = vmul.f32 %v285, %v323
  %v326 = vpack.c.bf16 %v324, %v324
  %v327 = vpack.c.bf16 %v325, %v325
  %328 = vst [vmem:[%s3] sm:$0xf] %v326
  %329 = vst [vmem:[%s3 + $0x4] sm:$0xf] %v327
  // Predicated region
  $region14: #{gated_generator_forward.34} parent=0 // pred_check
    _
  $region15: #{gated_generator_forward.34} parent=0 // pred_check_branch
    %331 = sbr.rel (0) target = $region17
  $region16: #{gated_generator_forward.34} parent=0 // pred_region
    _
  $region17: #{gated_generator_forward.34} parent=0 // pred_fallthru
    _
  // Predicated region
  $region18: #{gated_generator_forward.34} parent=0 // pred_check
    _
  $region19: #{gated_generator_forward.34} parent=0 // pred_check_branch
    %333 = sbr.rel (0) target = $region21
  $region20: #{gated_generator_forward.34} parent=0 // pred_region
    _
  $region21: #{gated_generator_forward.34} parent=0 // pred_fallthru
    _

// kernel: gated_generator_forward.35
$region0: #{gated_generator_forward.35}
  #allocation0 [shape = 'u32[]', space=smem, size = 0x4, offset = 0x4, fixed_abs, tag = 'smem constant byte address 0x4 - core index']
  #allocation1 [shape = 'u32[72,128]{1,0:T(1,128)}', space=vmem, size = 0x9000, scoped, tag = 'internal scratch']
  %s0 = inlined_call_operand.vmem [shape: bf16[16,512], index: 0, kind: input, shape index: {}]
  %s1 = inlined_call_operand.vmem [shape: bf16[512,256], index: 1, kind: input, shape index: {}]
  %s2 = inlined_call_operand.vmem [shape: f32[1,256], index: 2, kind: input, shape index: {}]
  %s3 = inlined_call_operand.vmem [shape: bf16[16,128], index: 3, kind: output, shape index: {}]
  %s4 = sld [smem:[#allocation0]]
  $region22: #{gated_generator_forward.35} parent=0
    _
  %s6 = ssub.s32 1, %s4
  %s7 = scalar_select 0, %s6, %s4
  // Predicated region
  $region2: #{gated_generator_forward.35} parent=0 // pred_check
    _
  $region3: #{gated_generator_forward.35} parent=0 // pred_check_branch
    %9 = sbr.rel (0) target = $region5
  $region4: #{gated_generator_forward.35} parent=0 // pred_region
    _
  $region5: #{gated_generator_forward.35} parent=0 // pred_fallthru
    _
  // Predicated region
  $region6: #{gated_generator_forward.35} parent=0 // pred_check
    _
  $region7: #{gated_generator_forward.35} parent=0 // pred_check_branch
    %11 = sbr.rel (0) target = $region9
  $region8: #{gated_generator_forward.35} parent=0 // pred_region
    _
  $region9: #{gated_generator_forward.35} parent=0 // pred_fallthru
    _
  // Predicated region
  $region10: #{gated_generator_forward.35} parent=0 // pred_check
    _
  $region11: #{gated_generator_forward.35} parent=0 // pred_check_branch
    %13 = sbr.rel (0) target = $region13
  $region12: #{gated_generator_forward.35} parent=0 // pred_region
    _
  $region13: #{gated_generator_forward.35} parent=0 // pred_fallthru
    _
  %v14 = vld [vmem:[%s0] sm:$0xff]
  %v15 = vld [vmem:[%s0 + $0x8] sm:$0xff]
  %v16 = vld [vmem:[%s0 + $0x10] sm:$0xff]
  %v17 = vld [vmem:[%s0 + $0x18] sm:$0xff]
  %v18 = vld [vmem:[%s1] sm:$0xff]
  %v19 = vld [vmem:[%s1 + $0x8] sm:$0xff]
  %v20 = vld [vmem:[%s1 + $0x10] sm:$0xff]
  %v21 = vld [vmem:[%s1 + $0x18] sm:$0xff]
  %v22 = vld [vmem:[%s1 + $0x20] sm:$0xff]
  %v23 = vld [vmem:[%s1 + $0x28] sm:$0xff]
  %v24 = vld [vmem:[%s1 + $0x30] sm:$0xff]
  %v25 = vld [vmem:[%s1 + $0x38] sm:$0xff]
  %v26 = vld [vmem:[%s1 + $0x40] sm:$0xff]
  %v27 = vld [vmem:[%s1 + $0x48] sm:$0xff]
  %v28 = vld [vmem:[%s1 + $0x50] sm:$0xff]
  %v29 = vld [vmem:[%s1 + $0x58] sm:$0xff]
  %v30 = vld [vmem:[%s1 + $0x60] sm:$0xff]
  %v31 = vld [vmem:[%s1 + $0x68] sm:$0xff]
  %v32 = vld [vmem:[%s1 + $0x70] sm:$0xff]
  %v33 = vld [vmem:[%s1 + $0x78] sm:$0xff]
  %v34 = vld [vmem:[%s1 + $0x80] sm:$0xff]
  %v35 = vld [vmem:[%s1 + $0x88] sm:$0xff]
  %v36 = vld [vmem:[%s1 + $0x90] sm:$0xff]
  %v37 = vld [vmem:[%s1 + $0x98] sm:$0xff]
  %v38 = vld [vmem:[%s1 + $0xa0] sm:$0xff]
  %v39 = vld [vmem:[%s1 + $0xa8] sm:$0xff]
  %v40 = vld [vmem:[%s1 + $0xb0] sm:$0xff]
  %v41 = vld [vmem:[%s1 + $0xb8] sm:$0xff]
  %v42 = vld [vmem:[%s1 + $0xc0] sm:$0xff]
  %v43 = vld [vmem:[%s1 + $0xc8] sm:$0xff]
  %v44 = vld [vmem:[%s1 + $0xd0] sm:$0xff]
  %v45 = vld [vmem:[%s1 + $0xd8] sm:$0xff]
  %v46 = vld [vmem:[%s1 + $0xe0] sm:$0xff]
  %v47 = vld [vmem:[%s1 + $0xe8] sm:$0xff]
  %v48 = vld [vmem:[%s1 + $0xf0] sm:$0xff]
  %v49 = vld [vmem:[%s1 + $0xf8] sm:$0xff]
  %v50 = vld [vmem:[%s1 + $0x100] sm:$0xff]
  %v51 = vld [vmem:[%s1 + $0x108] sm:$0xff]
  %v52 = vld [vmem:[%s1 + $0x110] sm:$0xff]
  %v53 = vld [vmem:[%s1 + $0x118] sm:$0xff]
  %v54 = vld [vmem:[%s1 + $0x120] sm:$0xff]
  %v55 = vld [vmem:[%s1 + $0x128] sm:$0xff]
  %v56 = vld [vmem:[%s1 + $0x130] sm:$0xff]
  %v57 = vld [vmem:[%s1 + $0x138] sm:$0xff]
  %v58 = vld [vmem:[%s1 + $0x140] sm:$0xff]
  %v59 = vld [vmem:[%s1 + $0x148] sm:$0xff]
  %v60 = vld [vmem:[%s1 + $0x150] sm:$0xff]
  %v61 = vld [vmem:[%s1 + $0x158] sm:$0xff]
  %v62 = vld [vmem:[%s1 + $0x160] sm:$0xff]
  %v63 = vld [vmem:[%s1 + $0x168] sm:$0xff]
  %v64 = vld [vmem:[%s1 + $0x170] sm:$0xff]
  %v65 = vld [vmem:[%s1 + $0x178] sm:$0xff]
  %v66 = vld [vmem:[%s1 + $0x180] sm:$0xff]
  %v67 = vld [vmem:[%s1 + $0x188] sm:$0xff]
  %v68 = vld [vmem:[%s1 + $0x190] sm:$0xff]
  %v69 = vld [vmem:[%s1 + $0x198] sm:$0xff]
  %v70 = vld [vmem:[%s1 + $0x1a0] sm:$0xff]
  %v71 = vld [vmem:[%s1 + $0x1a8] sm:$0xff]
  %v72 = vld [vmem:[%s1 + $0x1b0] sm:$0xff]
  %v73 = vld [vmem:[%s1 + $0x1b8] sm:$0xff]
  %v74 = vld [vmem:[%s1 + $0x1c0] sm:$0xff]
  %v75 = vld [vmem:[%s1 + $0x1c8] sm:$0xff]
  %v76 = vld [vmem:[%s1 + $0x1d0] sm:$0xff]
  %v77 = vld [vmem:[%s1 + $0x1d8] sm:$0xff]
  %v78 = vld [vmem:[%s1 + $0x1e0] sm:$0xff]
  %v79 = vld [vmem:[%s1 + $0x1e8] sm:$0xff]
  %v80 = vld [vmem:[%s1 + $0x1f0] sm:$0xff]
  %v81 = vld [vmem:[%s1 + $0x1f8] sm:$0xff]
  %v82 = vld [vmem:[%s2] sm:$0x3]
  %v84 = vperm.slane %v82, 0
  %v85 = vperm.slane %v82, 1
  %v92 = vunpack.c.l.b16 %v14
  %v93 = vunpack.c.h.b16 %v14
  %v94 = vunpack.c.l.b16 %v15
  %v95 = vunpack.c.h.b16 %v15
  %v96 = vunpack.c.l.b16 %v16
  %v97 = vunpack.c.h.b16 %v16
  %v98 = vunpack.c.l.b16 %v17
  %v99 = vunpack.c.h.b16 %v17
  %v100 = vpack.c.b16 %v96, %v92
  %v101 = vpack.c.b16 %v97, %v93
  %v102 = vpack.c.b16 %v98, %v94
  %v103 = vpack.c.b16 %v99, %v95
  %v172 = vunpack.c.l.b16 %v18
  %v173 = vunpack.c.h.b16 %v18
  %v174 = vunpack.c.l.b16 %v19
  %v175 = vunpack.c.h.b16 %v19
  %v176 = vunpack.c.l.b16 %v20
  %v177 = vunpack.c.h.b16 %v20
  %v178 = vunpack.c.l.b16 %v21
  %v179 = vunpack.c.h.b16 %v21
  %v180 = vunpack.c.l.b16 %v22
  %v181 = vunpack.c.h.b16 %v22
  %v182 = vunpack.c.l.b16 %v23
  %v183 = vunpack.c.h.b16 %v23
  %v184 = vunpack.c.l.b16 %v24
  %v185 = vunpack.c.h.b16 %v24
  %v186 = vunpack.c.l.b16 %v25
  %v187 = vunpack.c.h.b16 %v25
  %v188 = vunpack.c.l.b16 %v26
  %v189 = vunpack.c.h.b16 %v26
  %v190 = vunpack.c.l.b16 %v27
  %v191 = vunpack.c.h.b16 %v27
  %v192 = vunpack.c.l.b16 %v28
  %v193 = vunpack.c.h.b16 %v28
  %v194 = vunpack.c.l.b16 %v29
  %v195 = vunpack.c.h.b16 %v29
  %v196 = vunpack.c.l.b16 %v30
  %v197 = vunpack.c.h.b16 %v30
  %v198 = vunpack.c.l.b16 %v31
  %v199 = vunpack.c.h.b16 %v31
  %v200 = vunpack.c.l.b16 %v32
  %v201 = vunpack.c.h.b16 %v32
  %v202 = vunpack.c.l.b16 %v33
  %v203 = vunpack.c.h.b16 %v33
  %v204 = vunpack.c.l.b16 %v34
  %v205 = vunpack.c.h.b16 %v34
  %v206 = vunpack.c.l.b16 %v35
  %v207 = vunpack.c.h.b16 %v35
  %v208 = vunpack.c.l.b16 %v36
  %v209 = vunpack.c.h.b16 %v36
  %v210 = vunpack.c.l.b16 %v37
  %v211 = vunpack.c.h.b16 %v37
  %v212 = vunpack.c.l.b16 %v38
  %v213 = vunpack.c.h.b16 %v38
  %v214 = vunpack.c.l.b16 %v39
  %v215 = vunpack.c.h.b16 %v39
  %v216 = vunpack.c.l.b16 %v40
  %v217 = vunpack.c.h.b16 %v40
  %v218 = vunpack.c.l.b16 %v41
  %v219 = vunpack.c.h.b16 %v41
  %v220 = vunpack.c.l.b16 %v42
  %v221 = vunpack.c.h.b16 %v42
  %v222 = vunpack.c.l.b16 %v43
  %v223 = vunpack.c.h.b16 %v43
  %v224 = vunpack.c.l.b16 %v44
  %v225 = vunpack.c.h.b16 %v44
  %v226 = vunpack.c.l.b16 %v45
  %v227 = vunpack.c.h.b16 %v45
  %v228 = vunpack.c.l.b16 %v46
  %v229 = vunpack.c.h.b16 %v46
  %v230 = vunpack.c.l.b16 %v47
  %v231 = vunpack.c.h.b16 %v47
  %v232 = vunpack.c.l.b16 %v48
  %v233 = vunpack.c.h.b16 %v48
  %v234 = vunpack.c.l.b16 %v49
  %v235 = vunpack.c.h.b16 %v49
  %v236 = vunpack.c.l.b16 %v50
  %v237 = vunpack.c.h.b16 %v50
  %v238 = vunpack.c.l.b16 %v51
  %v239 = vunpack.c.h.b16 %v51
  %v240 = vunpack.c.l.b16 %v52
  %v241 = vunpack.c.h.b16 %v52
  %v242 = vunpack.c.l.b16 %v53
  %v243 = vunpack.c.h.b16 %v53
  %v244 = vunpack.c.l.b16 %v54
  %v245 = vunpack.c.h.b16 %v54
  %v246 = vunpack.c.l.b16 %v55
  %v247 = vunpack.c.h.b16 %v55
  %v248 = vunpack.c.l.b16 %v56
  %v249 = vunpack.c.h.b16 %v56
  %v250 = vunpack.c.l.b16 %v57
  %v251 = vunpack.c.h.b16 %v57
  %v252 = vunpack.c.l.b16 %v58
  %v253 = vunpack.c.h.b16 %v58
  %v254 = vunpack.c.l.b16 %v59
  %v255 = vunpack.c.h.b16 %v59
  %v256 = vunpack.c.l.b16 %v60
  %v257 = vunpack.c.h.b16 %v60
  %v258 = vunpack.c.l.b16 %v61
  %v259 = vunpack.c.h.b16 %v61
  %v260 = vunpack.c.l.b16 %v62
  %v261 = vunpack.c.h.b16 %v62
  %v262 = vunpack.c.l.b16 %v63
  %v263 = vunpack.c.h.b16 %v63
  %v264 = vunpack.c.l.b16 %v64
  %v265 = vunpack.c.h.b16 %v64
  %v266 = vunpack.c.l.b16 %v65
  %v267 = vunpack.c.h.b16 %v65
  %v268 = vunpack.c.l.b16 %v66
  %v269 = vunpack.c.h.b16 %v66
  %v270 = vunpack.c.l.b16 %v67
  %v271 = vunpack.c.h.b16 %v67
  %v272 = vunpack.c.l.b16 %v68
  %v273 = vunpack.c.h.b16 %v68
  %v274 = vunpack.c.l.b16 %v69
  %v275 = vunpack.c.h.b16 %v69
  %v276 = vunpack.c.l.b16 %v70
  %v277 = vunpack.c.h.b16 %v70
  %v278 = vunpack.c.l.b16 %v71
  %v279 = vunpack.c.h.b16 %v71
  %v280 = vunpack.c.l.b16 %v72
  %v281 = vunpack.c.h.b16 %v72
  %v282 = vunpack.c.l.b16 %v73
  %v283 = vunpack.c.h.b16 %v73
  %v284 = vunpack.c.l.b16 %v74
  %v285 = vunpack.c.h.b16 %v74
  %v286 = vunpack.c.l.b16 %v75
  %v287 = vunpack.c.h.b16 %v75
  %v288 = vunpack.c.l.b16 %v76
  %v289 = vunpack.c.h.b16 %v76
  %v290 = vunpack.c.l.b16 %v77
  %v291 = vunpack.c.h.b16 %v77
  %v292 = vunpack.c.l.b16 %v78
  %v293 = vunpack.c.h.b16 %v78
  %v294 = vunpack.c.l.b16 %v79
  %v295 = vunpack.c.h.b16 %v79
  %v296 = vunpack.c.l.b16 %v80
  %v297 = vunpack.c.h.b16 %v80
  %v298 = vunpack.c.l.b16 %v81
  %v299 = vunpack.c.h.b16 %v81
  %v300 = vpack.c.b16 %v174, %v172
  %v301 = vpack.c.b16 %v175, %v173
  %v302 = vpack.c.b16 %v178, %v176
  %v303 = vpack.c.b16 %v179, %v177
  %v304 = vpack.c.b16 %v182, %v180
  %v305 = vpack.c.b16 %v183, %v181
  %v306 = vpack.c.b16 %v186, %v184
  %v307 = vpack.c.b16 %v187, %v185
  %v308 = vpack.c.b16 %v190, %v188
  %v309 = vpack.c.b16 %v191, %v189
  %v310 = vpack.c.b16 %v194, %v192
  %v311 = vpack.c.b16 %v195, %v193
  %v312 = vpack.c.b16 %v198, %v196
  %v313 = vpack.c.b16 %v199, %v197
  %v314 = vpack.c.b16 %v202, %v200
  %v315 = vpack.c.b16 %v203, %v201
  %v316 = vpack.c.b16 %v206, %v204
  %v317 = vpack.c.b16 %v207, %v205
  %v318 = vpack.c.b16 %v210, %v208
  %v319 = vpack.c.b16 %v211, %v209
  %v320 = vpack.c.b16 %v214, %v212
  %v321 = vpack.c.b16 %v215, %v213
  %v322 = vpack.c.b16 %v218, %v216
  %v323 = vpack.c.b16 %v219, %v217
  %v324 = vpack.c.b16 %v222, %v220
  %v325 = vpack.c.b16 %v223, %v221
  %v326 = vpack.c.b16 %v226, %v224
  %v327 = vpack.c.b16 %v227, %v225
  %v328 = vpack.c.b16 %v230, %v228
  %v329 = vpack.c.b16 %v231, %v229
  %v330 = vpack.c.b16 %v234, %v232
  %v331 = vpack.c.b16 %v235, %v233
  %v332 = vpack.c.b16 %v238, %v236
  %v333 = vpack.c.b16 %v239, %v237
  %v334 = vpack.c.b16 %v242, %v240
  %v335 = vpack.c.b16 %v243, %v241
  %v336 = vpack.c.b16 %v246, %v244
  %v337 = vpack.c.b16 %v247, %v245
  %v338 = vpack.c.b16 %v250, %v248
  %v339 = vpack.c.b16 %v251, %v249
  %v340 = vpack.c.b16 %v254, %v252
  %v341 = vpack.c.b16 %v255, %v253
  %v342 = vpack.c.b16 %v258, %v256
  %v343 = vpack.c.b16 %v259, %v257
  %v344 = vpack.c.b16 %v262, %v260
  %v345 = vpack.c.b16 %v263, %v261
  %v346 = vpack.c.b16 %v266, %v264
  %v347 = vpack.c.b16 %v267, %v265
  %v348 = vpack.c.b16 %v270, %v268
  %v349 = vpack.c.b16 %v271, %v269
  %v350 = vpack.c.b16 %v274, %v272
  %v351 = vpack.c.b16 %v275, %v273
  %v352 = vpack.c.b16 %v278, %v276
  %v353 = vpack.c.b16 %v279, %v277
  %v354 = vpack.c.b16 %v282, %v280
  %v355 = vpack.c.b16 %v283, %v281
  %v356 = vpack.c.b16 %v286, %v284
  %v357 = vpack.c.b16 %v287, %v285
  %v358 = vpack.c.b16 %v290, %v288
  %v359 = vpack.c.b16 %v291, %v289
  %v360 = vpack.c.b16 %v294, %v292
  %v361 = vpack.c.b16 %v295, %v293
  %v362 = vpack.c.b16 %v298, %v296
  %v363 = vpack.c.b16 %v299, %v297
  %428 = vmatpush.bf16.msra.mxu0 %v314
  %429 = vmatpush.bf16.msra.mxu0 %v312
  %430 = vmatpush.bf16.msra.mxu0 %v310
  %431 = vmatpush.bf16.msra.mxu0 %v308
  %432 = vmatpush.bf16.msra.mxu0 %v306
  %433 = vmatpush.bf16.msra.mxu0 %v304
  %434 = vmatpush.bf16.msra.mxu0 %v302
  %435 = vmatpush.bf16.msra.mxu0 %v300
  %436 = vmatmul.bf16.gmra.mxu0 %v100
  %v437 = vpop.f32.mrf.mxu0
  %v438 = vadd.f32 %v84, %v437
  %v439 = vpop.f32.mrf.mxu0
  %v440 = vadd.f32 %v84, %v439
  %441 = vdwg.mxu0
  %442 = vmatpush.bf16.msra.mxu0 %v330
  %443 = vmatpush.bf16.msra.mxu0 %v328
  %444 = vmatpush.bf16.msra.mxu0 %v326
  %445 = vmatpush.bf16.msra.mxu0 %v324
  %446 = vmatpush.bf16.msra.mxu0 %v322
  %447 = vmatpush.bf16.msra.mxu0 %v320
  %448 = vmatpush.bf16.msra.mxu0 %v318
  %449 = vmatpush.bf16.msra.mxu0 %v316
  %450 = vmatmul.bf16.gmra.mxu0 %v101
  %v451 = vpop.f32.mrf.mxu0
  %v452 = vadd.f32 %v438, %v451
  %v453 = vpop.f32.mrf.mxu0
  %v454 = vadd.f32 %v440, %v453
  %455 = vdwg.mxu0
  %456 = vmatpush.bf16.msra.mxu0 %v346
  %457 = vmatpush.bf16.msra.mxu0 %v344
  %458 = vmatpush.bf16.msra.mxu0 %v342
  %459 = vmatpush.bf16.msra.mxu0 %v340
  %460 = vmatpush.bf16.msra.mxu0 %v338
  %461 = vmatpush.bf16.msra.mxu0 %v336
  %462 = vmatpush.bf16.msra.mxu0 %v334
  %463 = vmatpush.bf16.msra.mxu0 %v332
  %464 = vmatmul.bf16.gmra.mxu0 %v102
  %v465 = vpop.f32.mrf.mxu0
  %v466 = vadd.f32 %v452, %v465
  %v467 = vpop.f32.mrf.mxu0
  %v468 = vadd.f32 %v454, %v467
  %469 = vdwg.mxu0
  %470 = vmatpush.bf16.msra.mxu0 %v362
  %471 = vmatpush.bf16.msra.mxu0 %v360
  %472 = vmatpush.bf16.msra.mxu0 %v358
  %473 = vmatpush.bf16.msra.mxu0 %v356
  %474 = vmatpush.bf16.msra.mxu0 %v354
  %475 = vmatpush.bf16.msra.mxu0 %v352
  %476 = vmatpush.bf16.msra.mxu0 %v350
  %477 = vmatpush.bf16.msra.mxu0 %v348
  %478 = vmatmul.bf16.gmra.mxu0 %v103
  %v479 = vpop.f32.mrf.mxu0
  %v480 = vadd.f32 %v466, %v479
  %v481 = vpop.f32.mrf.mxu0
  %v482 = vadd.f32 %v468, %v481
  %483 = vdwg.mxu0
  %484 = vmatpush.bf16.msra.mxu0 %v315
  %485 = vmatpush.bf16.msra.mxu0 %v313
  %486 = vmatpush.bf16.msra.mxu0 %v311
  %487 = vmatpush.bf16.msra.mxu0 %v309
  %488 = vmatpush.bf16.msra.mxu0 %v307
  %489 = vmatpush.bf16.msra.mxu0 %v305
  %490 = vmatpush.bf16.msra.mxu0 %v303
  %491 = vmatpush.bf16.msra.mxu0 %v301
  %492 = vmatmul.bf16.gmra.mxu0 %v100
  %v493 = vpop.f32.mrf.mxu0
  %v494 = vadd.f32 %v85, %v493
  %v495 = vpop.f32.mrf.mxu0
  %v496 = vadd.f32 %v85, %v495
  %497 = vdwg.mxu0
  %498 = vmatpush.bf16.msra.mxu0 %v331
  %499 = vmatpush.bf16.msra.mxu0 %v329
  %500 = vmatpush.bf16.msra.mxu0 %v327
  %501 = vmatpush.bf16.msra.mxu0 %v325
  %502 = vmatpush.bf16.msra.mxu0 %v323
  %503 = vmatpush.bf16.msra.mxu0 %v321
  %504 = vmatpush.bf16.msra.mxu0 %v319
  %505 = vmatpush.bf16.msra.mxu0 %v317
  %506 = vmatmul.bf16.gmra.mxu0 %v101
  %v507 = vpop.f32.mrf.mxu0
  %v508 = vadd.f32 %v494, %v507
  %v509 = vpop.f32.mrf.mxu0
  %v510 = vadd.f32 %v496, %v509
  %511 = vdwg.mxu0
  %512 = vmatpush.bf16.msra.mxu0 %v347
  %513 = vmatpush.bf16.msra.mxu0 %v345
  %514 = vmatpush.bf16.msra.mxu0 %v343
  %515 = vmatpush.bf16.msra.mxu0 %v341
  %516 = vmatpush.bf16.msra.mxu0 %v339
  %517 = vmatpush.bf16.msra.mxu0 %v337
  %518 = vmatpush.bf16.msra.mxu0 %v335
  %519 = vmatpush.bf16.msra.mxu0 %v333
  %520 = vmatmul.bf16.gmra.mxu0 %v102
  %v521 = vpop.f32.mrf.mxu0
  %v522 = vadd.f32 %v508, %v521
  %v523 = vpop.f32.mrf.mxu0
  %v524 = vadd.f32 %v510, %v523
  %525 = vdwg.mxu0
  %526 = vmatpush.bf16.msra.mxu0 %v363
  %527 = vmatpush.bf16.msra.mxu0 %v361
  %528 = vmatpush.bf16.msra.mxu0 %v359
  %529 = vmatpush.bf16.msra.mxu0 %v357
  %530 = vmatpush.bf16.msra.mxu0 %v355
  %531 = vmatpush.bf16.msra.mxu0 %v353
  %532 = vmatpush.bf16.msra.mxu0 %v351
  %533 = vmatpush.bf16.msra.mxu0 %v349
  %534 = vmatmul.bf16.gmra.mxu0 %v103
  %v535 = vpop.f32.mrf.mxu0
  %v536 = vadd.f32 %v522, %v535
  %v537 = vpop.f32.mrf.mxu0
  %v538 = vadd.f32 %v524, %v537
  %539 = vdwg.mxu0
  %vm540 = vcmp.ge.f32.partialorder %v480, 0.0
  %vm541 = vcmp.ge.f32.partialorder %v482, 0.0
  %v542 = vmul.f32 %v480, 0.2
  %v543 = vmul.f32 %v482, 0.2
  %v544 = vsel %vm540, %v480, %v542
  %v545 = vsel %vm541, %v482, %v543
  %v546 = vxor.u32 %v536, 2147483648
  %v547 = vxor.u32 %v538, 2147483648
  %v548 = vmul.f32 %v546, 1.442695
  %v549 = vpow.pop %v548
  %v550 = vmul.f32 %v547, 1.442695
  %v551 = vpow.pop %v550
  %v552 = vadd.f32 %v549, 1.0
  %v553 = vadd.f32 %v551, 1.0
  %v554 = vrcp.pop %v552
  %v555 = vmul.f32 %v552, %v554
  %v556 = vsub.f32 1.0, %v555
  %v557 = vmul.f32 %v554, %v556
  %v558 = vadd.f32 %v554, %v557
  %vm559 = vweird.f32 %v552
  %vm560 = vweird.f32 %v554
  %vm561 = vmor %vm559, %vm560
  %v562 = vsel %vm561, %v554, %v558
  %v563 = vand.u32 2147483647, %v552
  %vm564 = vcmp.eq.f32.partialorder %v563, 8.507059e+37
  %v565 = vand.u32 %v552, 2147483648
  %v566 = vor.u32 1.1754944e-38, %v565
  %v567 = vsel %vm564, %v566, %v562
  %v568 = vmul.f32 1.0, %v567
  %v569 = vrcp.pop %v553
  %v570 = vmul.f32 %v553, %v569
  %v571 = vsub.f32 1.0, %v570
  %v572 = vmul.f32 %v569, %v571
  %v573 = vadd.f32 %v569, %v572
  %vm574 = vweird.f32 %v553
  %vm575 = vweird.f32 %v569
  %vm576 = vmor %vm574, %vm575
  %v577 = vsel %vm576, %v569, %v573
  %v578 = vand.u32 2147483647, %v553
  %vm579 = vcmp.eq.f32.partialorder %v578, 8.507059e+37
  %v580 = vand.u32 %v553, 2147483648
  %v581 = vor.u32 1.1754944e-38, %v580
  %v582 = vsel %vm579, %v581, %v577
  %v583 = vmul.f32 1.0, %v582
  %v584 = vmul.f32 %v544, %v568
  %v585 = vmul.f32 %v545, %v583
  %v586 = vpack.c.bf16 %v584, %v584
  %v587 = vpack.c.bf16 %v585, %v585
  %588 = vst [vmem:[%s3] sm:$0xf] %v586
  %589 = vst [vmem:[%s3 + $0x4] sm:$0xf] %v587
  // Predicated region
  $region14: #{gated_generator_forward.35} parent=0 // pred_check
    _
  $region15: #{gated_generator_forward.35} parent=0 // pred_check_branch
    %591 = sbr.rel (0) target = $region17
  $region16: #{gated_generator_forward.35} parent=0 // pred_region
    _
  $region17: #{gated_generator_forward.35} parent=0 // pred_fallthru
    _
  // Predicated region
  $region18: #{gated_generator_forward.35} parent=0 // pred_check
    _
  $region19: #{gated_generator_forward.35} parent=0 // pred_check_branch
    %593 = sbr.rel (0) target = $region21
  $region20: #{gated_generator_forward.35} parent=0 // pred_region
    _
  $region21: #{gated_generator_forward.35} parent=0 // pred_fallthru
    _

// kernel: gated_generator_forward.36
$region0: #{gated_generator_forward.36}
  #allocation0 [shape = 'u32[]', space=smem, size = 0x4, offset = 0x4, fixed_abs, tag = 'smem constant byte address 0x4 - core index']
  #allocation1 [shape = 'u32[72,128]{1,0:T(1,128)}', space=vmem, size = 0x9000, scoped, tag = 'internal scratch']
  %s0 = inlined_call_operand.vmem [shape: bf16[16,384], index: 0, kind: input, shape index: {}]
  %s1 = inlined_call_operand.vmem [shape: bf16[384,256], index: 1, kind: input, shape index: {}]
  %s2 = inlined_call_operand.vmem [shape: f32[1,256], index: 2, kind: input, shape index: {}]
  %s3 = inlined_call_operand.vmem [shape: bf16[16,128], index: 3, kind: output, shape index: {}]
  %s4 = sld [smem:[#allocation0]]
  $region22: #{gated_generator_forward.36} parent=0
    _
  %s6 = ssub.s32 1, %s4
  %s7 = scalar_select 0, %s6, %s4
  // Predicated region
  $region2: #{gated_generator_forward.36} parent=0 // pred_check
    _
  $region3: #{gated_generator_forward.36} parent=0 // pred_check_branch
    %9 = sbr.rel (0) target = $region5
  $region4: #{gated_generator_forward.36} parent=0 // pred_region
    _
  $region5: #{gated_generator_forward.36} parent=0 // pred_fallthru
    _
  // Predicated region
  $region6: #{gated_generator_forward.36} parent=0 // pred_check
    _
  $region7: #{gated_generator_forward.36} parent=0 // pred_check_branch
    %11 = sbr.rel (0) target = $region9
  $region8: #{gated_generator_forward.36} parent=0 // pred_region
    _
  $region9: #{gated_generator_forward.36} parent=0 // pred_fallthru
    _
  // Predicated region
  $region10: #{gated_generator_forward.36} parent=0 // pred_check
    _
  $region11: #{gated_generator_forward.36} parent=0 // pred_check_branch
    %13 = sbr.rel (0) target = $region13
  $region12: #{gated_generator_forward.36} parent=0 // pred_region
    _
  $region13: #{gated_generator_forward.36} parent=0 // pred_fallthru
    _
  %v14 = vld [vmem:[%s0] sm:$0xff]
  %v15 = vld [vmem:[%s0 + $0x8] sm:$0xf]
  %v16 = vld [vmem:[%s0 + $0xc] sm:$0xff]
  %v17 = vld [vmem:[%s0 + $0x14] sm:$0xf]
  %v18 = vld [vmem:[%s1] sm:$0xff]
  %v19 = vld [vmem:[%s1 + $0x8] sm:$0xff]
  %v20 = vld [vmem:[%s1 + $0x10] sm:$0xff]
  %v21 = vld [vmem:[%s1 + $0x18] sm:$0xff]
  %v22 = vld [vmem:[%s1 + $0x20] sm:$0xff]
  %v23 = vld [vmem:[%s1 + $0x28] sm:$0xff]
  %v24 = vld [vmem:[%s1 + $0x30] sm:$0xff]
  %v25 = vld [vmem:[%s1 + $0x38] sm:$0xff]
  %v26 = vld [vmem:[%s1 + $0x40] sm:$0xff]
  %v27 = vld [vmem:[%s1 + $0x48] sm:$0xff]
  %v28 = vld [vmem:[%s1 + $0x50] sm:$0xff]
  %v29 = vld [vmem:[%s1 + $0x58] sm:$0xff]
  %v30 = vld [vmem:[%s1 + $0x60] sm:$0xff]
  %v31 = vld [vmem:[%s1 + $0x68] sm:$0xff]
  %v32 = vld [vmem:[%s1 + $0x70] sm:$0xff]
  %v33 = vld [vmem:[%s1 + $0x78] sm:$0xff]
  %v34 = vld [vmem:[%s1 + $0x80] sm:$0xff]
  %v35 = vld [vmem:[%s1 + $0x88] sm:$0xff]
  %v36 = vld [vmem:[%s1 + $0x90] sm:$0xff]
  %v37 = vld [vmem:[%s1 + $0x98] sm:$0xff]
  %v38 = vld [vmem:[%s1 + $0xa0] sm:$0xff]
  %v39 = vld [vmem:[%s1 + $0xa8] sm:$0xff]
  %v40 = vld [vmem:[%s1 + $0xb0] sm:$0xff]
  %v41 = vld [vmem:[%s1 + $0xb8] sm:$0xff]
  %v42 = vld [vmem:[%s1 + $0xc0] sm:$0xff]
  %v43 = vld [vmem:[%s1 + $0xc8] sm:$0xff]
  %v44 = vld [vmem:[%s1 + $0xd0] sm:$0xff]
  %v45 = vld [vmem:[%s1 + $0xd8] sm:$0xff]
  %v46 = vld [vmem:[%s1 + $0xe0] sm:$0xff]
  %v47 = vld [vmem:[%s1 + $0xe8] sm:$0xff]
  %v48 = vld [vmem:[%s1 + $0xf0] sm:$0xff]
  %v49 = vld [vmem:[%s1 + $0xf8] sm:$0xff]
  %v50 = vld [vmem:[%s1 + $0x100] sm:$0xff]
  %v51 = vld [vmem:[%s1 + $0x108] sm:$0xff]
  %v52 = vld [vmem:[%s1 + $0x110] sm:$0xff]
  %v53 = vld [vmem:[%s1 + $0x118] sm:$0xff]
  %v54 = vld [vmem:[%s1 + $0x120] sm:$0xff]
  %v55 = vld [vmem:[%s1 + $0x128] sm:$0xff]
  %v56 = vld [vmem:[%s1 + $0x130] sm:$0xff]
  %v57 = vld [vmem:[%s1 + $0x138] sm:$0xff]
  %v58 = vld [vmem:[%s1 + $0x140] sm:$0xff]
  %v59 = vld [vmem:[%s1 + $0x148] sm:$0xff]
  %v60 = vld [vmem:[%s1 + $0x150] sm:$0xff]
  %v61 = vld [vmem:[%s1 + $0x158] sm:$0xff]
  %v62 = vld [vmem:[%s1 + $0x160] sm:$0xff]
  %v63 = vld [vmem:[%s1 + $0x168] sm:$0xff]
  %v64 = vld [vmem:[%s1 + $0x170] sm:$0xff]
  %v65 = vld [vmem:[%s1 + $0x178] sm:$0xff]
  %v66 = vld [vmem:[%s2] sm:$0x3]
  %v68 = vperm.slane %v66, 0
  %v69 = vperm.slane %v66, 1
  %v76 = vunpack.c.l.b16 %v14
  %v77 = vunpack.c.h.b16 %v14
  %v78 = vunpack.c.l.b16 %v15
  %v79 = vunpack.c.l.b16 %v16
  %v80 = vunpack.c.h.b16 %v16
  %v81 = vunpack.c.l.b16 %v17
  %v82 = vpack.c.b16 %v79, %v76
  %v83 = vpack.c.b16 %v80, %v77
  %v84 = vpack.c.b16 %v81, %v78
  %v136 = vunpack.c.l.b16 %v18
  %v137 = vunpack.c.h.b16 %v18
  %v138 = vunpack.c.l.b16 %v19
  %v139 = vunpack.c.h.b16 %v19
  %v140 = vunpack.c.l.b16 %v20
  %v141 = vunpack.c.h.b16 %v20
  %v142 = vunpack.c.l.b16 %v21
  %v143 = vunpack.c.h.b16 %v21
  %v144 = vunpack.c.l.b16 %v22
  %v145 = vunpack.c.h.b16 %v22
  %v146 = vunpack.c.l.b16 %v23
  %v147 = vunpack.c.h.b16 %v23
  %v148 = vunpack.c.l.b16 %v24
  %v149 = vunpack.c.h.b16 %v24
  %v150 = vunpack.c.l.b16 %v25
  %v151 = vunpack.c.h.b16 %v25
  %v152 = vunpack.c.l.b16 %v26
  %v153 = vunpack.c.h.b16 %v26
  %v154 = vunpack.c.l.b16 %v27
  %v155 = vunpack.c.h.b16 %v27
  %v156 = vunpack.c.l.b16 %v28
  %v157 = vunpack.c.h.b16 %v28
  %v158 = vunpack.c.l.b16 %v29
  %v159 = vunpack.c.h.b16 %v29
  %v160 = vunpack.c.l.b16 %v30
  %v161 = vunpack.c.h.b16 %v30
  %v162 = vunpack.c.l.b16 %v31
  %v163 = vunpack.c.h.b16 %v31
  %v164 = vunpack.c.l.b16 %v32
  %v165 = vunpack.c.h.b16 %v32
  %v166 = vunpack.c.l.b16 %v33
  %v167 = vunpack.c.h.b16 %v33
  %v168 = vunpack.c.l.b16 %v34
  %v169 = vunpack.c.h.b16 %v34
  %v170 = vunpack.c.l.b16 %v35
  %v171 = vunpack.c.h.b16 %v35
  %v172 = vunpack.c.l.b16 %v36
  %v173 = vunpack.c.h.b16 %v36
  %v174 = vunpack.c.l.b16 %v37
  %v175 = vunpack.c.h.b16 %v37
  %v176 = vunpack.c.l.b16 %v38
  %v177 = vunpack.c.h.b16 %v38
  %v178 = vunpack.c.l.b16 %v39
  %v179 = vunpack.c.h.b16 %v39
  %v180 = vunpack.c.l.b16 %v40
  %v181 = vunpack.c.h.b16 %v40
  %v182 = vunpack.c.l.b16 %v41
  %v183 = vunpack.c.h.b16 %v41
  %v184 = vunpack.c.l.b16 %v42
  %v185 = vunpack.c.h.b16 %v42
  %v186 = vunpack.c.l.b16 %v43
  %v187 = vunpack.c.h.b16 %v43
  %v188 = vunpack.c.l.b16 %v44
  %v189 = vunpack.c.h.b16 %v44
  %v190 = vunpack.c.l.b16 %v45
  %v191 = vunpack.c.h.b16 %v45
  %v192 = vunpack.c.l.b16 %v46
  %v193 = vunpack.c.h.b16 %v46
  %v194 = vunpack.c.l.b16 %v47
  %v195 = vunpack.c.h.b16 %v47
  %v196 = vunpack.c.l.b16 %v48
  %v197 = vunpack.c.h.b16 %v48
  %v198 = vunpack.c.l.b16 %v49
  %v199 = vunpack.c.h.b16 %v49
  %v200 = vunpack.c.l.b16 %v50
  %v201 = vunpack.c.h.b16 %v50
  %v202 = vunpack.c.l.b16 %v51
  %v203 = vunpack.c.h.b16 %v51
  %v204 = vunpack.c.l.b16 %v52
  %v205 = vunpack.c.h.b16 %v52
  %v206 = vunpack.c.l.b16 %v53
  %v207 = vunpack.c.h.b16 %v53
  %v208 = vunpack.c.l.b16 %v54
  %v209 = vunpack.c.h.b16 %v54
  %v210 = vunpack.c.l.b16 %v55
  %v211 = vunpack.c.h.b16 %v55
  %v212 = vunpack.c.l.b16 %v56
  %v213 = vunpack.c.h.b16 %v56
  %v214 = vunpack.c.l.b16 %v57
  %v215 = vunpack.c.h.b16 %v57
  %v216 = vunpack.c.l.b16 %v58
  %v217 = vunpack.c.h.b16 %v58
  %v218 = vunpack.c.l.b16 %v59
  %v219 = vunpack.c.h.b16 %v59
  %v220 = vunpack.c.l.b16 %v60
  %v221 = vunpack.c.h.b16 %v60
  %v222 = vunpack.c.l.b16 %v61
  %v223 = vunpack.c.h.b16 %v61
  %v224 = vunpack.c.l.b16 %v62
  %v225 = vunpack.c.h.b16 %v62
  %v226 = vunpack.c.l.b16 %v63
  %v227 = vunpack.c.h.b16 %v63
  %v228 = vunpack.c.l.b16 %v64
  %v229 = vunpack.c.h.b16 %v64
  %v230 = vunpack.c.l.b16 %v65
  %v231 = vunpack.c.h.b16 %v65
  %v232 = vpack.c.b16 %v138, %v136
  %v233 = vpack.c.b16 %v139, %v137
  %v234 = vpack.c.b16 %v142, %v140
  %v235 = vpack.c.b16 %v143, %v141
  %v236 = vpack.c.b16 %v146, %v144
  %v237 = vpack.c.b16 %v147, %v145
  %v238 = vpack.c.b16 %v150, %v148
  %v239 = vpack.c.b16 %v151, %v149
  %v240 = vpack.c.b16 %v154, %v152
  %v241 = vpack.c.b16 %v155, %v153
  %v242 = vpack.c.b16 %v158, %v156
  %v243 = vpack.c.b16 %v159, %v157
  %v244 = vpack.c.b16 %v162, %v160
  %v245 = vpack.c.b16 %v163, %v161
  %v246 = vpack.c.b16 %v166, %v164
  %v247 = vpack.c.b16 %v167, %v165
  %v248 = vpack.c.b16 %v170, %v168
  %v249 = vpack.c.b16 %v171, %v169
  %v250 = vpack.c.b16 %v174, %v172
  %v251 = vpack.c.b16 %v175, %v173
  %v252 = vpack.c.b16 %v178, %v176
  %v253 = vpack.c.b16 %v179, %v177
  %v254 = vpack.c.b16 %v182, %v180
  %v255 = vpack.c.b16 %v183, %v181
  %v256 = vpack.c.b16 %v186, %v184
  %v257 = vpack.c.b16 %v187, %v185
  %v258 = vpack.c.b16 %v190, %v188
  %v259 = vpack.c.b16 %v191, %v189
  %v260 = vpack.c.b16 %v194, %v192
  %v261 = vpack.c.b16 %v195, %v193
  %v262 = vpack.c.b16 %v198, %v196
  %v263 = vpack.c.b16 %v199, %v197
  %v264 = vpack.c.b16 %v202, %v200
  %v265 = vpack.c.b16 %v203, %v201
  %v266 = vpack.c.b16 %v206, %v204
  %v267 = vpack.c.b16 %v207, %v205
  %v268 = vpack.c.b16 %v210, %v208
  %v269 = vpack.c.b16 %v211, %v209
  %v270 = vpack.c.b16 %v214, %v212
  %v271 = vpack.c.b16 %v215, %v213
  %v272 = vpack.c.b16 %v218, %v216
  %v273 = vpack.c.b16 %v219, %v217
  %v274 = vpack.c.b16 %v222, %v220
  %v275 = vpack.c.b16 %v223, %v221
  %v276 = vpack.c.b16 %v226, %v224
  %v277 = vpack.c.b16 %v227, %v225
  %v278 = vpack.c.b16 %v230, %v228
  %v279 = vpack.c.b16 %v231, %v229
  %328 = vmatpush.bf16.msra.mxu0 %v246
  %329 = vmatpush.bf16.msra.mxu0 %v244
  %330 = vmatpush.bf16.msra.mxu0 %v242
  %331 = vmatpush.bf16.msra.mxu0 %v240
  %332 = vmatpush.bf16.msra.mxu0 %v238
  %333 = vmatpush.bf16.msra.mxu0 %v236
  %334 = vmatpush.bf16.msra.mxu0 %v234
  %335 = vmatpush.bf16.msra.mxu0 %v232
  %336 = vmatmul.bf16.gmra.mxu0 %v82
  %v337 = vpop.f32.mrf.mxu0
  %v338 = vadd.f32 %v68, %v337
  %v339 = vpop.f32.mrf.mxu0
  %v340 = vadd.f32 %v68, %v339
  %341 = vdwg.mxu0
  %342 = vmatpush.bf16.msra.mxu0 %v262
  %343 = vmatpush.bf16.msra.mxu0 %v260
  %344 = vmatpush.bf16.msra.mxu0 %v258
  %345 = vmatpush.bf16.msra.mxu0 %v256
  %346 = vmatpush.bf16.msra.mxu0 %v254
  %347 = vmatpush.bf16.msra.mxu0 %v252
  %348 = vmatpush.bf16.msra.mxu0 %v250
  %349 = vmatpush.bf16.msra.mxu0 %v248
  %350 = vmatmul.bf16.gmra.mxu0 %v83
  %v351 = vpop.f32.mrf.mxu0
  %v352 = vadd.f32 %v338, %v351
  %v353 = vpop.f32.mrf.mxu0
  %v354 = vadd.f32 %v340, %v353
  %355 = vdwg.mxu0
  %356 = vmatpush.bf16.msra.mxu0 %v278
  %357 = vmatpush.bf16.msra.mxu0 %v276
  %358 = vmatpush.bf16.msra.mxu0 %v274
  %359 = vmatpush.bf16.msra.mxu0 %v272
  %360 = vmatpush.bf16.msra.mxu0 %v270
  %361 = vmatpush.bf16.msra.mxu0 %v268
  %362 = vmatpush.bf16.msra.mxu0 %v266
  %363 = vmatpush.bf16.msra.mxu0 %v264
  %364 = vmatmul.bf16.gmra.mxu0 %v84
  %v365 = vpop.f32.mrf.mxu0
  %v366 = vadd.f32 %v352, %v365
  %v367 = vpop.f32.mrf.mxu0
  %v368 = vadd.f32 %v354, %v367
  %369 = vdwg.mxu0
  %370 = vmatpush.bf16.msra.mxu0 %v247
  %371 = vmatpush.bf16.msra.mxu0 %v245
  %372 = vmatpush.bf16.msra.mxu0 %v243
  %373 = vmatpush.bf16.msra.mxu0 %v241
  %374 = vmatpush.bf16.msra.mxu0 %v239
  %375 = vmatpush.bf16.msra.mxu0 %v237
  %376 = vmatpush.bf16.msra.mxu0 %v235
  %377 = vmatpush.bf16.msra.mxu0 %v233
  %378 = vmatmul.bf16.gmra.mxu0 %v82
  %v379 = vpop.f32.mrf.mxu0
  %v380 = vadd.f32 %v69, %v379
  %v381 = vpop.f32.mrf.mxu0
  %v382 = vadd.f32 %v69, %v381
  %383 = vdwg.mxu0
  %384 = vmatpush.bf16.msra.mxu0 %v263
  %385 = vmatpush.bf16.msra.mxu0 %v261
  %386 = vmatpush.bf16.msra.mxu0 %v259
  %387 = vmatpush.bf16.msra.mxu0 %v257
  %388 = vmatpush.bf16.msra.mxu0 %v255
  %389 = vmatpush.bf16.msra.mxu0 %v253
  %390 = vmatpush.bf16.msra.mxu0 %v251
  %391 = vmatpush.bf16.msra.mxu0 %v249
  %392 = vmatmul.bf16.gmra.mxu0 %v83
  %v393 = vpop.f32.mrf.mxu0
  %v394 = vadd.f32 %v380, %v393
  %v395 = vpop.f32.mrf.mxu0
  %v396 = vadd.f32 %v382, %v395
  %397 = vdwg.mxu0
  %398 = vmatpush.bf16.msra.mxu0 %v279
  %399 = vmatpush.bf16.msra.mxu0 %v277
  %400 = vmatpush.bf16.msra.mxu0 %v275
  %401 = vmatpush.bf16.msra.mxu0 %v273
  %402 = vmatpush.bf16.msra.mxu0 %v271
  %403 = vmatpush.bf16.msra.mxu0 %v269
  %404 = vmatpush.bf16.msra.mxu0 %v267
  %405 = vmatpush.bf16.msra.mxu0 %v265
  %406 = vmatmul.bf16.gmra.mxu0 %v84
  %v407 = vpop.f32.mrf.mxu0
  %v408 = vadd.f32 %v394, %v407
  %v409 = vpop.f32.mrf.mxu0
  %v410 = vadd.f32 %v396, %v409
  %411 = vdwg.mxu0
  %vm412 = vcmp.ge.f32.partialorder %v366, 0.0
  %vm413 = vcmp.ge.f32.partialorder %v368, 0.0
  %v414 = vmul.f32 %v366, 0.2
  %v415 = vmul.f32 %v368, 0.2
  %v416 = vsel %vm412, %v366, %v414
  %v417 = vsel %vm413, %v368, %v415
  %v418 = vxor.u32 %v408, 2147483648
  %v419 = vxor.u32 %v410, 2147483648
  %v420 = vmul.f32 %v418, 1.442695
  %v421 = vpow.pop %v420
  %v422 = vmul.f32 %v419, 1.442695
  %v423 = vpow.pop %v422
  %v424 = vadd.f32 %v421, 1.0
  %v425 = vadd.f32 %v423, 1.0
  %v426 = vrcp.pop %v424
  %v427 = vmul.f32 %v424, %v426
  %v428 = vsub.f32 1.0, %v427
  %v429 = vmul.f32 %v426, %v428
  %v430 = vadd.f32 %v426, %v429
  %vm431 = vweird.f32 %v424
  %vm432 = vweird.f32 %v426
  %vm433 = vmor %vm431, %vm432
  %v434 = vsel %vm433, %v426, %v430
  %v435 = vand.u32 2147483647, %v424
  %vm436 = vcmp.eq.f32.partialorder %v435, 8.507059e+37
  %v437 = vand.u32 %v424, 2147483648
  %v438 = vor.u32 1.1754944e-38, %v437
  %v439 = vsel %vm436, %v438, %v434
  %v440 = vmul.f32 1.0, %v439
  %v441 = vrcp.pop %v425
  %v442 = vmul.f32 %v425, %v441
  %v443 = vsub.f32 1.0, %v442
  %v444 = vmul.f32 %v441, %v443
  %v445 = vadd.f32 %v441, %v444
  %vm446 = vweird.f32 %v425
  %vm447 = vweird.f32 %v441
  %vm448 = vmor %vm446, %vm447
  %v449 = vsel %vm448, %v441, %v445
  %v450 = vand.u32 2147483647, %v425
  %vm451 = vcmp.eq.f32.partialorder %v450, 8.507059e+37
  %v452 = vand.u32 %v425, 2147483648
  %v453 = vor.u32 1.1754944e-38, %v452
  %v454 = vsel %vm451, %v453, %v449
  %v455 = vmul.f32 1.0, %v454
  %v456 = vmul.f32 %v416, %v440
  %v457 = vmul.f32 %v417, %v455
  %v458 = vpack.c.bf16 %v456, %v456
  %v459 = vpack.c.bf16 %v457, %v457
  %460 = vst [vmem:[%s3] sm:$0xf] %v458
  %461 = vst [vmem:[%s3 + $0x4] sm:$0xf] %v459
  // Predicated region
  $region14: #{gated_generator_forward.36} parent=0 // pred_check
    _
  $region15: #{gated_generator_forward.36} parent=0 // pred_check_branch
    %463 = sbr.rel (0) target = $region17
  $region16: #{gated_generator_forward.36} parent=0 // pred_region
    _
  $region17: #{gated_generator_forward.36} parent=0 // pred_fallthru
    _
  // Predicated region
  $region18: #{gated_generator_forward.36} parent=0 // pred_check
    _
  $region19: #{gated_generator_forward.36} parent=0 // pred_check_branch
    %465 = sbr.rel (0) target = $region21
  $region20: #{gated_generator_forward.36} parent=0 // pred_region
    _
  $region21: #{gated_generator_forward.36} parent=0 // pred_fallthru
    _

// kernel: gated_generator_forward.44
$region0: #{gated_generator_forward.44}
  #allocation0 [shape = 'u32[]', space=smem, size = 0x4, offset = 0x4, fixed_abs, tag = 'smem constant byte address 0x4 - core index']
  #allocation1 [shape = 'u32[72,128]{1,0:T(1,128)}', space=vmem, size = 0x9000, scoped, tag = 'internal scratch']
  %s0 = inlined_call_operand.vmem [shape: bf16[16,384], index: 0, kind: input, shape index: {}]
  %s1 = inlined_call_operand.vmem [shape: bf16[384,128], index: 1, kind: input, shape index: {}]
  %s2 = inlined_call_operand.vmem [shape: f32[1,128], index: 2, kind: input, shape index: {}]
  %s3 = inlined_call_operand.vmem [shape: bf16[16,128], index: 3, kind: output, shape index: {}]
  %s4 = sld [smem:[#allocation0]]
  $region22: #{gated_generator_forward.44} parent=0
    _
  %s6 = ssub.s32 1, %s4
  %s7 = scalar_select 0, %s6, %s4
  // Predicated region
  $region2: #{gated_generator_forward.44} parent=0 // pred_check
    _
  $region3: #{gated_generator_forward.44} parent=0 // pred_check_branch
    %9 = sbr.rel (0) target = $region5
  $region4: #{gated_generator_forward.44} parent=0 // pred_region
    _
  $region5: #{gated_generator_forward.44} parent=0 // pred_fallthru
    _
  // Predicated region
  $region6: #{gated_generator_forward.44} parent=0 // pred_check
    _
  $region7: #{gated_generator_forward.44} parent=0 // pred_check_branch
    %11 = sbr.rel (0) target = $region9
  $region8: #{gated_generator_forward.44} parent=0 // pred_region
    _
  $region9: #{gated_generator_forward.44} parent=0 // pred_fallthru
    _
  // Predicated region
  $region10: #{gated_generator_forward.44} parent=0 // pred_check
    _
  $region11: #{gated_generator_forward.44} parent=0 // pred_check_branch
    %13 = sbr.rel (0) target = $region13
  $region12: #{gated_generator_forward.44} parent=0 // pred_region
    _
  $region13: #{gated_generator_forward.44} parent=0 // pred_fallthru
    _
  %v14 = vld [vmem:[%s0] sm:$0xff]
  %v15 = vld [vmem:[%s0 + $0x8] sm:$0xf]
  %v16 = vld [vmem:[%s0 + $0xc] sm:$0xff]
  %v17 = vld [vmem:[%s0 + $0x14] sm:$0xf]
  %v18 = vld [vmem:[%s1] sm:$0xf]
  %v19 = vld [vmem:[%s1 + $0x4] sm:$0xf]
  %v20 = vld [vmem:[%s1 + $0x8] sm:$0xf]
  %v21 = vld [vmem:[%s1 + $0xc] sm:$0xf]
  %v22 = vld [vmem:[%s1 + $0x10] sm:$0xf]
  %v23 = vld [vmem:[%s1 + $0x14] sm:$0xf]
  %v24 = vld [vmem:[%s1 + $0x18] sm:$0xf]
  %v25 = vld [vmem:[%s1 + $0x1c] sm:$0xf]
  %v26 = vld [vmem:[%s1 + $0x20] sm:$0xf]
  %v27 = vld [vmem:[%s1 + $0x24] sm:$0xf]
  %v28 = vld [vmem:[%s1 + $0x28] sm:$0xf]
  %v29 = vld [vmem:[%s1 + $0x2c] sm:$0xf]
  %v30 = vld [vmem:[%s1 + $0x30] sm:$0xf]
  %v31 = vld [vmem:[%s1 + $0x34] sm:$0xf]
  %v32 = vld [vmem:[%s1 + $0x38] sm:$0xf]
  %v33 = vld [vmem:[%s1 + $0x3c] sm:$0xf]
  %v34 = vld [vmem:[%s1 + $0x40] sm:$0xf]
  %v35 = vld [vmem:[%s1 + $0x44] sm:$0xf]
  %v36 = vld [vmem:[%s1 + $0x48] sm:$0xf]
  %v37 = vld [vmem:[%s1 + $0x4c] sm:$0xf]
  %v38 = vld [vmem:[%s1 + $0x50] sm:$0xf]
  %v39 = vld [vmem:[%s1 + $0x54] sm:$0xf]
  %v40 = vld [vmem:[%s1 + $0x58] sm:$0xf]
  %v41 = vld [vmem:[%s1 + $0x5c] sm:$0xf]
  %v42 = vld [vmem:[%s1 + $0x60] sm:$0xf]
  %v43 = vld [vmem:[%s1 + $0x64] sm:$0xf]
  %v44 = vld [vmem:[%s1 + $0x68] sm:$0xf]
  %v45 = vld [vmem:[%s1 + $0x6c] sm:$0xf]
  %v46 = vld [vmem:[%s1 + $0x70] sm:$0xf]
  %v47 = vld [vmem:[%s1 + $0x74] sm:$0xf]
  %v48 = vld [vmem:[%s1 + $0x78] sm:$0xf]
  %v49 = vld [vmem:[%s1 + $0x7c] sm:$0xf]
  %v50 = vld [vmem:[%s1 + $0x80] sm:$0xf]
  %v51 = vld [vmem:[%s1 + $0x84] sm:$0xf]
  %v52 = vld [vmem:[%s1 + $0x88] sm:$0xf]
  %v53 = vld [vmem:[%s1 + $0x8c] sm:$0xf]
  %v54 = vld [vmem:[%s1 + $0x90] sm:$0xf]
  %v55 = vld [vmem:[%s1 + $0x94] sm:$0xf]
  %v56 = vld [vmem:[%s1 + $0x98] sm:$0xf]
  %v57 = vld [vmem:[%s1 + $0x9c] sm:$0xf]
  %v58 = vld [vmem:[%s1 + $0xa0] sm:$0xf]
  %v59 = vld [vmem:[%s1 + $0xa4] sm:$0xf]
  %v60 = vld [vmem:[%s1 + $0xa8] sm:$0xf]
  %v61 = vld [vmem:[%s1 + $0xac] sm:$0xf]
  %v62 = vld [vmem:[%s1 + $0xb0] sm:$0xf]
  %v63 = vld [vmem:[%s1 + $0xb4] sm:$0xf]
  %v64 = vld [vmem:[%s1 + $0xb8] sm:$0xf]
  %v65 = vld [vmem:[%s1 + $0xbc] sm:$0xf]
  %v66 = vld [vmem:[%s2] sm:$0x1]
  %v68 = vperm.slane %v66, 0
  %v74 = vunpack.c.l.b16 %v14
  %v75 = vunpack.c.h.b16 %v14
  %v76 = vunpack.c.l.b16 %v15
  %v77 = vunpack.c.l.b16 %v16
  %v78 = vunpack.c.h.b16 %v16
  %v79 = vunpack.c.l.b16 %v17
  %v80 = vpack.c.b16 %v77, %v74
  %v81 = vpack.c.b16 %v78, %v75
  %v82 = vpack.c.b16 %v79, %v76
  %v134 = vunpack.c.l.b16 %v18
  %v135 = vunpack.c.l.b16 %v19
  %v136 = vunpack.c.l.b16 %v20
  %v137 = vunpack.c.l.b16 %v21
  %v138 = vunpack.c.l.b16 %v22
  %v139 = vunpack.c.l.b16 %v23
  %v140 = vunpack.c.l.b16 %v24
  %v141 = vunpack.c.l.b16 %v25
  %v142 = vunpack.c.l.b16 %v26
  %v143 = vunpack.c.l.b16 %v27
  %v144 = vunpack.c.l.b16 %v28
  %v145 = vunpack.c.l.b16 %v29
  %v146 = vunpack.c.l.b16 %v30
  %v147 = vunpack.c.l.b16 %v31
  %v148 = vunpack.c.l.b16 %v32
  %v149 = vunpack.c.l.b16 %v33
  %v150 = vunpack.c.l.b16 %v34
  %v151 = vunpack.c.l.b16 %v35
  %v152 = vunpack.c.l.b16 %v36
  %v153 = vunpack.c.l.b16 %v37
  %v154 = vunpack.c.l.b16 %v38
  %v155 = vunpack.c.l.b16 %v39
  %v156 = vunpack.c.l.b16 %v40
  %v157 = vunpack.c.l.b16 %v41
  %v158 = vunpack.c.l.b16 %v42
  %v159 = vunpack.c.l.b16 %v43
  %v160 = vunpack.c.l.b16 %v44
  %v161 = vunpack.c.l.b16 %v45
  %v162 = vunpack.c.l.b16 %v46
  %v163 = vunpack.c.l.b16 %v47
  %v164 = vunpack.c.l.b16 %v48
  %v165 = vunpack.c.l.b16 %v49
  %v166 = vunpack.c.l.b16 %v50
  %v167 = vunpack.c.l.b16 %v51
  %v168 = vunpack.c.l.b16 %v52
  %v169 = vunpack.c.l.b16 %v53
  %v170 = vunpack.c.l.b16 %v54
  %v171 = vunpack.c.l.b16 %v55
  %v172 = vunpack.c.l.b16 %v56
  %v173 = vunpack.c.l.b16 %v57
  %v174 = vunpack.c.l.b16 %v58
  %v175 = vunpack.c.l.b16 %v59
  %v176 = vunpack.c.l.b16 %v60
  %v177 = vunpack.c.l.b16 %v61
  %v178 = vunpack.c.l.b16 %v62
  %v179 = vunpack.c.l.b16 %v63
  %v180 = vunpack.c.l.b16 %v64
  %v181 = vunpack.c.l.b16 %v65
  %v182 = vpack.c.b16 %v135, %v134
  %v183 = vpack.c.b16 %v137, %v136
  %v184 = vpack.c.b16 %v139, %v138
  %v185 = vpack.c.b16 %v141, %v140
  %v186 = vpack.c.b16 %v143, %v142
  %v187 = vpack.c.b16 %v145, %v144
  %v188 = vpack.c.b16 %v147, %v146
  %v189 = vpack.c.b16 %v149, %v148
  %v190 = vpack.c.b16 %v151, %v150
  %v191 = vpack.c.b16 %v153, %v152
  %v192 = vpack.c.b16 %v155, %v154
  %v193 = vpack.c.b16 %v157, %v156
  %v194 = vpack.c.b16 %v159, %v158
  %v195 = vpack.c.b16 %v161, %v160
  %v196 = vpack.c.b16 %v163, %v162
  %v197 = vpack.c.b16 %v165, %v164
  %v198 = vpack.c.b16 %v167, %v166
  %v199 = vpack.c.b16 %v169, %v168
  %v200 = vpack.c.b16 %v171, %v170
  %v201 = vpack.c.b16 %v173, %v172
  %v202 = vpack.c.b16 %v175, %v174
  %v203 = vpack.c.b16 %v177, %v176
  %v204 = vpack.c.b16 %v179, %v178
  %v205 = vpack.c.b16 %v181, %v180
  %230 = vmatpush.bf16.msra.mxu0 %v189
  %231 = vmatpush.bf16.msra.mxu0 %v188
  %232 = vmatpush.bf16.msra.mxu0 %v187
  %233 = vmatpush.bf16.msra.mxu0 %v186
  %234 = vmatpush.bf16.msra.mxu0 %v185
  %235 = vmatpush.bf16.msra.mxu0 %v184
  %236 = vmatpush.bf16.msra.mxu0 %v183
  %237 = vmatpush.bf16.msra.mxu0 %v182
  %238 = vmatmul.bf16.gmra.mxu0 %v80
  %v239 = vpop.f32.mrf.mxu0
  %v240 = vadd.f32 %v68, %v239
  %v241 = vpop.f32.mrf.mxu0
  %v242 = vadd.f32 %v68, %v241
  %243 = vdwg.mxu0
  %244 = vmatpush.bf16.msra.mxu0 %v197
  %245 = vmatpush.bf16.msra.mxu0 %v196
  %246 = vmatpush.bf16.msra.mxu0 %v195
  %247 = vmatpush.bf16.msra.mxu0 %v194
  %248 = vmatpush.bf16.msra.mxu0 %v193
  %249 = vmatpush.bf16.msra.mxu0 %v192
  %250 = vmatpush.bf16.msra.mxu0 %v191
  %251 = vmatpush.bf16.msra.mxu0 %v190
  %252 = vmatmul.bf16.gmra.mxu0 %v81
  %v253 = vpop.f32.mrf.mxu0
  %v254 = vadd.f32 %v240, %v253
  %v255 = vpop.f32.mrf.mxu0
  %v256 = vadd.f32 %v242, %v255
  %257 = vdwg.mxu0
  %258 = vmatpush.bf16.msra.mxu0 %v205
  %259 = vmatpush.bf16.msra.mxu0 %v204
  %260 = vmatpush.bf16.msra.mxu0 %v203
  %261 = vmatpush.bf16.msra.mxu0 %v202
  %262 = vmatpush.bf16.msra.mxu0 %v201
  %263 = vmatpush.bf16.msra.mxu0 %v200
  %264 = vmatpush.bf16.msra.mxu0 %v199
  %265 = vmatpush.bf16.msra.mxu0 %v198
  %266 = vmatmul.bf16.gmra.mxu0 %v82
  %v267 = vpop.f32.mrf.mxu0
  %v268 = vadd.f32 %v254, %v267
  %v269 = vpop.f32.mrf.mxu0
  %v270 = vadd.f32 %v256, %v269
  %271 = vdwg.mxu0
  %vm272 = vcmp.ge.f32.partialorder %v268, 0.0
  %vm273 = vcmp.ge.f32.partialorder %v270, 0.0
  %v274 = vmul.f32 %v268, 0.2
  %v275 = vmul.f32 %v270, 0.2
  %v276 = vsel %vm272, %v268, %v274
  %v277 = vsel %vm273, %v270, %v275
  %v278 = vpack.c.bf16 %v276, %v276
  %v279 = vpack.c.bf16 %v277, %v277
  %280 = vst [vmem:[%s3] sm:$0xf] %v278
  %281 = vst [vmem:[%s3 + $0x4] sm:$0xf] %v279
  // Predicated region
  $region14: #{gated_generator_forward.44} parent=0 // pred_check
    _
  $region15: #{gated_generator_forward.44} parent=0 // pred_check_branch
    %283 = sbr.rel (0) target = $region17
  $region16: #{gated_generator_forward.44} parent=0 // pred_region
    _
  $region17: #{gated_generator_forward.44} parent=0 // pred_fallthru
    _
  // Predicated region
  $region18: #{gated_generator_forward.44} parent=0 // pred_check
    _
  $region19: #{gated_generator_forward.44} parent=0 // pred_check_branch
    %285 = sbr.rel (0) target = $region21
  $region20: #{gated_generator_forward.44} parent=0 // pred_region
    _
  $region21: #{gated_generator_forward.44} parent=0 // pred_fallthru
    _

// kernel: gated_generator_forward.46
$region0: #{gated_generator_forward.46}
  #allocation0 [shape = 'u32[]', space=smem, size = 0x4, offset = 0x4, fixed_abs, tag = 'smem constant byte address 0x4 - core index']
  #allocation1 [shape = 'u32[72,128]{1,0:T(1,128)}', space=vmem, size = 0x9000, scoped, tag = 'internal scratch']
  %s0 = inlined_call_operand.vmem [shape: bf16[32,256], index: 0, kind: input, shape index: {}]
  %s1 = inlined_call_operand.vmem [shape: bf16[256,128], index: 1, kind: input, shape index: {}]
  %s2 = inlined_call_operand.vmem [shape: f32[1,128], index: 2, kind: input, shape index: {}]
  %s3 = inlined_call_operand.vmem [shape: bf16[32,128], index: 3, kind: output, shape index: {}]
  %s4 = sld [smem:[#allocation0]]
  $region22: #{gated_generator_forward.46} parent=0
    _
  %s6 = ssub.s32 1, %s4
  %s7 = scalar_select 0, %s6, %s4
  // Predicated region
  $region2: #{gated_generator_forward.46} parent=0 // pred_check
    _
  $region3: #{gated_generator_forward.46} parent=0 // pred_check_branch
    %9 = sbr.rel (0) target = $region5
  $region4: #{gated_generator_forward.46} parent=0 // pred_region
    _
  $region5: #{gated_generator_forward.46} parent=0 // pred_fallthru
    _
  // Predicated region
  $region6: #{gated_generator_forward.46} parent=0 // pred_check
    _
  $region7: #{gated_generator_forward.46} parent=0 // pred_check_branch
    %11 = sbr.rel (0) target = $region9
  $region8: #{gated_generator_forward.46} parent=0 // pred_region
    _
  $region9: #{gated_generator_forward.46} parent=0 // pred_fallthru
    _
  // Predicated region
  $region10: #{gated_generator_forward.46} parent=0 // pred_check
    _
  $region11: #{gated_generator_forward.46} parent=0 // pred_check_branch
    %13 = sbr.rel (0) target = $region13
  $region12: #{gated_generator_forward.46} parent=0 // pred_region
    _
  $region13: #{gated_generator_forward.46} parent=0 // pred_fallthru
    _
  %v14 = vld [vmem:[%s0] sm:$0xff]
  %v15 = vld [vmem:[%s0 + $0x8] sm:$0xff]
  %v16 = vld [vmem:[%s0 + $0x10] sm:$0xff]
  %v17 = vld [vmem:[%s0 + $0x18] sm:$0xff]
  %v18 = vld [vmem:[%s1] sm:$0xf]
  %v19 = vld [vmem:[%s1 + $0x4] sm:$0xf]
  %v20 = vld [vmem:[%s1 + $0x8] sm:$0xf]
  %v21 = vld [vmem:[%s1 + $0xc] sm:$0xf]
  %v22 = vld [vmem:[%s1 + $0x10] sm:$0xf]
  %v23 = vld [vmem:[%s1 + $0x14] sm:$0xf]
  %v24 = vld [vmem:[%s1 + $0x18] sm:$0xf]
  %v25 = vld [vmem:[%s1 + $0x1c] sm:$0xf]
  %v26 = vld [vmem:[%s1 + $0x20] sm:$0xf]
  %v27 = vld [vmem:[%s1 + $0x24] sm:$0xf]
  %v28 = vld [vmem:[%s1 + $0x28] sm:$0xf]
  %v29 = vld [vmem:[%s1 + $0x2c] sm:$0xf]
  %v30 = vld [vmem:[%s1 + $0x30] sm:$0xf]
  %v31 = vld [vmem:[%s1 + $0x34] sm:$0xf]
  %v32 = vld [vmem:[%s1 + $0x38] sm:$0xf]
  %v33 = vld [vmem:[%s1 + $0x3c] sm:$0xf]
  %v34 = vld [vmem:[%s1 + $0x40] sm:$0xf]
  %v35 = vld [vmem:[%s1 + $0x44] sm:$0xf]
  %v36 = vld [vmem:[%s1 + $0x48] sm:$0xf]
  %v37 = vld [vmem:[%s1 + $0x4c] sm:$0xf]
  %v38 = vld [vmem:[%s1 + $0x50] sm:$0xf]
  %v39 = vld [vmem:[%s1 + $0x54] sm:$0xf]
  %v40 = vld [vmem:[%s1 + $0x58] sm:$0xf]
  %v41 = vld [vmem:[%s1 + $0x5c] sm:$0xf]
  %v42 = vld [vmem:[%s1 + $0x60] sm:$0xf]
  %v43 = vld [vmem:[%s1 + $0x64] sm:$0xf]
  %v44 = vld [vmem:[%s1 + $0x68] sm:$0xf]
  %v45 = vld [vmem:[%s1 + $0x6c] sm:$0xf]
  %v46 = vld [vmem:[%s1 + $0x70] sm:$0xf]
  %v47 = vld [vmem:[%s1 + $0x74] sm:$0xf]
  %v48 = vld [vmem:[%s1 + $0x78] sm:$0xf]
  %v49 = vld [vmem:[%s1 + $0x7c] sm:$0xf]
  %v50 = vld [vmem:[%s2] sm:$0x1]
  %v52 = vperm.slane %v50, 0
  %v58 = vunpack.c.l.b16 %v14
  %v59 = vunpack.c.h.b16 %v14
  %v60 = vunpack.c.l.b16 %v15
  %v61 = vunpack.c.h.b16 %v15
  %v62 = vunpack.c.l.b16 %v16
  %v63 = vunpack.c.h.b16 %v16
  %v64 = vunpack.c.l.b16 %v17
  %v65 = vunpack.c.h.b16 %v17
  %v66 = vpack.c.b16 %v60, %v58
  %v67 = vpack.c.b16 %v61, %v59
  %v68 = vpack.c.b16 %v64, %v62
  %v69 = vpack.c.b16 %v65, %v63
  %v106 = vunpack.c.l.b16 %v18
  %v107 = vunpack.c.l.b16 %v19
  %v108 = vunpack.c.l.b16 %v20
  %v109 = vunpack.c.l.b16 %v21
  %v110 = vunpack.c.l.b16 %v22
  %v111 = vunpack.c.l.b16 %v23
  %v112 = vunpack.c.l.b16 %v24
  %v113 = vunpack.c.l.b16 %v25
  %v114 = vunpack.c.l.b16 %v26
  %v115 = vunpack.c.l.b16 %v27
  %v116 = vunpack.c.l.b16 %v28
  %v117 = vunpack.c.l.b16 %v29
  %v118 = vunpack.c.l.b16 %v30
  %v119 = vunpack.c.l.b16 %v31
  %v120 = vunpack.c.l.b16 %v32
  %v121 = vunpack.c.l.b16 %v33
  %v122 = vunpack.c.l.b16 %v34
  %v123 = vunpack.c.l.b16 %v35
  %v124 = vunpack.c.l.b16 %v36
  %v125 = vunpack.c.l.b16 %v37
  %v126 = vunpack.c.l.b16 %v38
  %v127 = vunpack.c.l.b16 %v39
  %v128 = vunpack.c.l.b16 %v40
  %v129 = vunpack.c.l.b16 %v41
  %v130 = vunpack.c.l.b16 %v42
  %v131 = vunpack.c.l.b16 %v43
  %v132 = vunpack.c.l.b16 %v44
  %v133 = vunpack.c.l.b16 %v45
  %v134 = vunpack.c.l.b16 %v46
  %v135 = vunpack.c.l.b16 %v47
  %v136 = vunpack.c.l.b16 %v48
  %v137 = vunpack.c.l.b16 %v49
  %v138 = vpack.c.b16 %v107, %v106
  %v139 = vpack.c.b16 %v109, %v108
  %v140 = vpack.c.b16 %v111, %v110
  %v141 = vpack.c.b16 %v113, %v112
  %v142 = vpack.c.b16 %v115, %v114
  %v143 = vpack.c.b16 %v117, %v116
  %v144 = vpack.c.b16 %v119, %v118
  %v145 = vpack.c.b16 %v121, %v120
  %v146 = vpack.c.b16 %v123, %v122
  %v147 = vpack.c.b16 %v125, %v124
  %v148 = vpack.c.b16 %v127, %v126
  %v149 = vpack.c.b16 %v129, %v128
  %v150 = vpack.c.b16 %v131, %v130
  %v151 = vpack.c.b16 %v133, %v132
  %v152 = vpack.c.b16 %v135, %v134
  %v153 = vpack.c.b16 %v137, %v136
  %170 = vmatpush.bf16.msra.mxu0 %v145
  %171 = vmatpush.bf16.msra.mxu0 %v144
  %172 = vmatpush.bf16.msra.mxu0 %v143
  %173 = vmatpush.bf16.msra.mxu0 %v142
  %174 = vmatpush.bf16.msra.mxu0 %v141
  %175 = vmatpush.bf16.msra.mxu0 %v140
  %176 = vmatpush.bf16.msra.mxu0 %v139
  %177 = vmatpush.bf16.msra.mxu0 %v138
  %178 = vmatmul.bf16.gmra.mxu0 %v66
  %v179 = vpop.f32.mrf.mxu0
  %v180 = vadd.f32 %v52, %v179
  %v181 = vpop.f32.mrf.mxu0
  %v182 = vadd.f32 %v52, %v181
  %183 = vmatmul.bf16.gmra.mxu0 %v68
  %v184 = vpop.f32.mrf.mxu0
  %v185 = vadd.f32 %v52, %v184
  %v186 = vpop.f32.mrf.mxu0
  %v187 = vadd.f32 %v52, %v186
  %188 = vdwg.mxu0
  %189 = vmatpush.bf16.msra.mxu0 %v153
  %190 = vmatpush.bf16.msra.mxu0 %v152
  %191 = vmatpush.bf16.msra.mxu0 %v151
  %192 = vmatpush.bf16.msra.mxu0 %v150
  %193 = vmatpush.bf16.msra.mxu0 %v149
  %194 = vmatpush.bf16.msra.mxu0 %v148
  %195 = vmatpush.bf16.msra.mxu0 %v147
  %196 = vmatpush.bf16.msra.mxu0 %v146
  %197 = vmatmul.bf16.gmra.mxu0 %v67
  %v198 = vpop.f32.mrf.mxu0
  %v199 = vadd.f32 %v180, %v198
  %v200 = vpop.f32.mrf.mxu0
  %v201 = vadd.f32 %v182, %v200
  %202 = vmatmul.bf16.gmra.mxu0 %v69
  %v203 = vpop.f32.mrf.mxu0
  %v204 = vadd.f32 %v185, %v203
  %v205 = vpop.f32.mrf.mxu0
  %v206 = vadd.f32 %v187, %v205
  %207 = vdwg.mxu0
  %vm208 = vcmp.ge.f32.partialorder %v199, 0.0
  %vm209 = vcmp.ge.f32.partialorder %v201, 0.0
  %vm210 = vcmp.ge.f32.partialorder %v204, 0.0
  %vm211 = vcmp.ge.f32.partialorder %v206, 0.0
  %v212 = vmul.f32 %v199, 0.2
  %v213 = vmul.f32 %v201, 0.2
  %v214 = vmul.f32 %v204, 0.2
  %v215 = vmul.f32 %v206, 0.2
  %v216 = vsel %vm208, %v199, %v212
  %v217 = vsel %vm209, %v201, %v213
  %v218 = vsel %vm210, %v204, %v214
  %v219 = vsel %vm211, %v206, %v215
  %v220 = vpack.c.bf16 %v216, %v216
  %v221 = vpack.c.bf16 %v217, %v217
  %v222 = vpack.c.bf16 %v218, %v218
  %v223 = vpack.c.bf16 %v219, %v219
  %224 = vst [vmem:[%s3] sm:$0xf] %v220
  %225 = vst [vmem:[%s3 + $0x4] sm:$0xf] %v221
  %226 = vst [vmem:[%s3 + $0x8] sm:$0xf] %v222
  %227 = vst [vmem:[%s3 + $0xc] sm:$0xf] %v223
  // Predicated region
  $region14: #{gated_generator_forward.46} parent=0 // pred_check
    _
  $region15: #{gated_generator_forward.46} parent=0 // pred_check_branch
    %229 = sbr.rel (0) target = $region17
  $region16: #{gated_generator_forward.46} parent=0 // pred_region
    _
  $region17: #{gated_generator_forward.46} parent=0 // pred_fallthru
    _
  // Predicated region
  $region18: #{gated_generator_forward.46} parent=0 // pred_check
    _
  $region19: #{gated_generator_forward.46} parent=0 // pred_check_branch
    %231 = sbr.rel (0) target = $region21
  $region20: #{gated_generator_forward.46} parent=0 // pred_region
    _
  $region21: #{gated_generator_forward.46} parent=0 // pred_fallthru
    _

// kernel: gated_generator_forward.47
$region0: #{gated_generator_forward.47}
  #allocation0 [shape = 'u32[]', space=smem, size = 0x4, offset = 0x4, fixed_abs, tag = 'smem constant byte address 0x4 - core index']
  #allocation1 [shape = 'u32[72,128]{1,0:T(1,128)}', space=vmem, size = 0x9000, scoped, tag = 'internal scratch']
  %s0 = inlined_call_operand.vmem [shape: bf16[32,512], index: 0, kind: input, shape index: {}]
  %s1 = inlined_call_operand.vmem [shape: bf16[512,256], index: 1, kind: input, shape index: {}]
  %s2 = inlined_call_operand.vmem [shape: f32[1,256], index: 2, kind: input, shape index: {}]
  %s3 = inlined_call_operand.vmem [shape: f32[32,128], index: 3, kind: output, shape index: {}]
  %s4 = sld [smem:[#allocation0]]
  $region22: #{gated_generator_forward.47} parent=0
    _
  %s6 = ssub.s32 1, %s4
  %s7 = scalar_select 0, %s6, %s4
  // Predicated region
  $region2: #{gated_generator_forward.47} parent=0 // pred_check
    _
  $region3: #{gated_generator_forward.47} parent=0 // pred_check_branch
    %9 = sbr.rel (0) target = $region5
  $region4: #{gated_generator_forward.47} parent=0 // pred_region
    _
  $region5: #{gated_generator_forward.47} parent=0 // pred_fallthru
    _
  // Predicated region
  $region6: #{gated_generator_forward.47} parent=0 // pred_check
    _
  $region7: #{gated_generator_forward.47} parent=0 // pred_check_branch
    %11 = sbr.rel (0) target = $region9
  $region8: #{gated_generator_forward.47} parent=0 // pred_region
    _
  $region9: #{gated_generator_forward.47} parent=0 // pred_fallthru
    _
  // Predicated region
  $region10: #{gated_generator_forward.47} parent=0 // pred_check
    _
  $region11: #{gated_generator_forward.47} parent=0 // pred_check_branch
    %13 = sbr.rel (0) target = $region13
  $region12: #{gated_generator_forward.47} parent=0 // pred_region
    _
  $region13: #{gated_generator_forward.47} parent=0 // pred_fallthru
    _
  %v14 = vld [vmem:[%s0] sm:$0xff]
  %v15 = vld [vmem:[%s0 + $0x8] sm:$0xff]
  %v16 = vld [vmem:[%s0 + $0x10] sm:$0xff]
  %v17 = vld [vmem:[%s0 + $0x18] sm:$0xff]
  %v18 = vld [vmem:[%s0 + $0x20] sm:$0xff]
  %v19 = vld [vmem:[%s0 + $0x28] sm:$0xff]
  %v20 = vld [vmem:[%s0 + $0x30] sm:$0xff]
  %v21 = vld [vmem:[%s0 + $0x38] sm:$0xff]
  %v22 = vld [vmem:[%s1] sm:$0xff]
  %v23 = vld [vmem:[%s1 + $0x8] sm:$0xff]
  %v24 = vld [vmem:[%s1 + $0x10] sm:$0xff]
  %v25 = vld [vmem:[%s1 + $0x18] sm:$0xff]
  %v26 = vld [vmem:[%s1 + $0x20] sm:$0xff]
  %v27 = vld [vmem:[%s1 + $0x28] sm:$0xff]
  %v28 = vld [vmem:[%s1 + $0x30] sm:$0xff]
  %v29 = vld [vmem:[%s1 + $0x38] sm:$0xff]
  %v30 = vld [vmem:[%s1 + $0x40] sm:$0xff]
  %v31 = vld [vmem:[%s1 + $0x48] sm:$0xff]
  %v32 = vld [vmem:[%s1 + $0x50] sm:$0xff]
  %v33 = vld [vmem:[%s1 + $0x58] sm:$0xff]
  %v34 = vld [vmem:[%s1 + $0x60] sm:$0xff]
  %v35 = vld [vmem:[%s1 + $0x68] sm:$0xff]
  %v36 = vld [vmem:[%s1 + $0x70] sm:$0xff]
  %v37 = vld [vmem:[%s1 + $0x78] sm:$0xff]
  %v38 = vld [vmem:[%s1 + $0x80] sm:$0xff]
  %v39 = vld [vmem:[%s1 + $0x88] sm:$0xff]
  %v40 = vld [vmem:[%s1 + $0x90] sm:$0xff]
  %v41 = vld [vmem:[%s1 + $0x98] sm:$0xff]
  %v42 = vld [vmem:[%s1 + $0xa0] sm:$0xff]
  %v43 = vld [vmem:[%s1 + $0xa8] sm:$0xff]
  %v44 = vld [vmem:[%s1 + $0xb0] sm:$0xff]
  %v45 = vld [vmem:[%s1 + $0xb8] sm:$0xff]
  %v46 = vld [vmem:[%s1 + $0xc0] sm:$0xff]
  %v47 = vld [vmem:[%s1 + $0xc8] sm:$0xff]
  %v48 = vld [vmem:[%s1 + $0xd0] sm:$0xff]
  %v49 = vld [vmem:[%s1 + $0xd8] sm:$0xff]
  %v50 = vld [vmem:[%s1 + $0xe0] sm:$0xff]
  %v51 = vld [vmem:[%s1 + $0xe8] sm:$0xff]
  %v52 = vld [vmem:[%s1 + $0xf0] sm:$0xff]
  %v53 = vld [vmem:[%s1 + $0xf8] sm:$0xff]
  %v54 = vld [vmem:[%s1 + $0x100] sm:$0xff]
  %v55 = vld [vmem:[%s1 + $0x108] sm:$0xff]
  %v56 = vld [vmem:[%s1 + $0x110] sm:$0xff]
  %v57 = vld [vmem:[%s1 + $0x118] sm:$0xff]
  %v58 = vld [vmem:[%s1 + $0x120] sm:$0xff]
  %v59 = vld [vmem:[%s1 + $0x128] sm:$0xff]
  %v60 = vld [vmem:[%s1 + $0x130] sm:$0xff]
  %v61 = vld [vmem:[%s1 + $0x138] sm:$0xff]
  %v62 = vld [vmem:[%s1 + $0x140] sm:$0xff]
  %v63 = vld [vmem:[%s1 + $0x148] sm:$0xff]
  %v64 = vld [vmem:[%s1 + $0x150] sm:$0xff]
  %v65 = vld [vmem:[%s1 + $0x158] sm:$0xff]
  %v66 = vld [vmem:[%s1 + $0x160] sm:$0xff]
  %v67 = vld [vmem:[%s1 + $0x168] sm:$0xff]
  %v68 = vld [vmem:[%s1 + $0x170] sm:$0xff]
  %v69 = vld [vmem:[%s1 + $0x178] sm:$0xff]
  %v70 = vld [vmem:[%s1 + $0x180] sm:$0xff]
  %v71 = vld [vmem:[%s1 + $0x188] sm:$0xff]
  %v72 = vld [vmem:[%s1 + $0x190] sm:$0xff]
  %v73 = vld [vmem:[%s1 + $0x198] sm:$0xff]
  %v74 = vld [vmem:[%s1 + $0x1a0] sm:$0xff]
  %v75 = vld [vmem:[%s1 + $0x1a8] sm:$0xff]
  %v76 = vld [vmem:[%s1 + $0x1b0] sm:$0xff]
  %v77 = vld [vmem:[%s1 + $0x1b8] sm:$0xff]
  %v78 = vld [vmem:[%s1 + $0x1c0] sm:$0xff]
  %v79 = vld [vmem:[%s1 + $0x1c8] sm:$0xff]
  %v80 = vld [vmem:[%s1 + $0x1d0] sm:$0xff]
  %v81 = vld [vmem:[%s1 + $0x1d8] sm:$0xff]
  %v82 = vld [vmem:[%s1 + $0x1e0] sm:$0xff]
  %v83 = vld [vmem:[%s1 + $0x1e8] sm:$0xff]
  %v84 = vld [vmem:[%s1 + $0x1f0] sm:$0xff]
  %v85 = vld [vmem:[%s1 + $0x1f8] sm:$0xff]
  %v86 = vld [vmem:[%s2] sm:$0x3]
  %v88 = vperm.slane %v86, 0
  %v89 = vperm.slane %v86, 1
  %v100 = vunpack.c.l.b16 %v14
  %v101 = vunpack.c.h.b16 %v14
  %v102 = vunpack.c.l.b16 %v15
  %v103 = vunpack.c.h.b16 %v15
  %v104 = vunpack.c.l.b16 %v16
  %v105 = vunpack.c.h.b16 %v16
  %v106 = vunpack.c.l.b16 %v17
  %v107 = vunpack.c.h.b16 %v17
  %v108 = vunpack.c.l.b16 %v18
  %v109 = vunpack.c.h.b16 %v18
  %v110 = vunpack.c.l.b16 %v19
  %v111 = vunpack.c.h.b16 %v19
  %v112 = vunpack.c.l.b16 %v20
  %v113 = vunpack.c.h.b16 %v20
  %v114 = vunpack.c.l.b16 %v21
  %v115 = vunpack.c.h.b16 %v21
  %v116 = vpack.c.b16 %v104, %v100
  %v117 = vpack.c.b16 %v105, %v101
  %v118 = vpack.c.b16 %v106, %v102
  %v119 = vpack.c.b16 %v107, %v103
  %v120 = vpack.c.b16 %v112, %v108
  %v121 = vpack.c.b16 %v113, %v109
  %v122 = vpack.c.b16 %v114, %v110
  %v123 = vpack.c.b16 %v115, %v111
  %v196 = vunpack.c.l.b16 %v22
  %v197 = vunpack.c.h.b16 %v22
  %v198 = vunpack.c.l.b16 %v23
  %v199 = vunpack.c.h.b16 %v23
  %v200 = vunpack.c.l.b16 %v24
  %v201 = vunpack.c.h.b16 %v24
  %v202 = vunpack.c.l.b16 %v25
  %v203 = vunpack.c.h.b16 %v25
  %v204 = vunpack.c.l.b16 %v26
  %v205 = vunpack.c.h.b16 %v26
  %v206 = vunpack.c.l.b16 %v27
  %v207 = vunpack.c.h.b16 %v27
  %v208 = vunpack.c.l.b16 %v28
  %v209 = vunpack.c.h.b16 %v28
  %v210 = vunpack.c.l.b16 %v29
  %v211 = vunpack.c.h.b16 %v29
  %v212 = vunpack.c.l.b16 %v30
  %v213 = vunpack.c.h.b16 %v30
  %v214 = vunpack.c.l.b16 %v31
  %v215 = vunpack.c.h.b16 %v31
  %v216 = vunpack.c.l.b16 %v32
  %v217 = vunpack.c.h.b16 %v32
  %v218 = vunpack.c.l.b16 %v33
  %v219 = vunpack.c.h.b16 %v33
  %v220 = vunpack.c.l.b16 %v34
  %v221 = vunpack.c.h.b16 %v34
  %v222 = vunpack.c.l.b16 %v35
  %v223 = vunpack.c.h.b16 %v35
  %v224 = vunpack.c.l.b16 %v36
  %v225 = vunpack.c.h.b16 %v36
  %v226 = vunpack.c.l.b16 %v37
  %v227 = vunpack.c.h.b16 %v37
  %v228 = vunpack.c.l.b16 %v38
  %v229 = vunpack.c.h.b16 %v38
  %v230 = vunpack.c.l.b16 %v39
  %v231 = vunpack.c.h.b16 %v39
  %v232 = vunpack.c.l.b16 %v40
  %v233 = vunpack.c.h.b16 %v40
  %v234 = vunpack.c.l.b16 %v41
  %v235 = vunpack.c.h.b16 %v41
  %v236 = vunpack.c.l.b16 %v42
  %v237 = vunpack.c.h.b16 %v42
  %v238 = vunpack.c.l.b16 %v43
  %v239 = vunpack.c.h.b16 %v43
  %v240 = vunpack.c.l.b16 %v44
  %v241 = vunpack.c.h.b16 %v44
  %v242 = vunpack.c.l.b16 %v45
  %v243 = vunpack.c.h.b16 %v45
  %v244 = vunpack.c.l.b16 %v46
  %v245 = vunpack.c.h.b16 %v46
  %v246 = vunpack.c.l.b16 %v47
  %v247 = vunpack.c.h.b16 %v47
  %v248 = vunpack.c.l.b16 %v48
  %v249 = vunpack.c.h.b16 %v48
  %v250 = vunpack.c.l.b16 %v49
  %v251 = vunpack.c.h.b16 %v49
  %v252 = vunpack.c.l.b16 %v50
  %v253 = vunpack.c.h.b16 %v50
  %v254 = vunpack.c.l.b16 %v51
  %v255 = vunpack.c.h.b16 %v51
  %v256 = vunpack.c.l.b16 %v52
  %v257 = vunpack.c.h.b16 %v52
  %v258 = vunpack.c.l.b16 %v53
  %v259 = vunpack.c.h.b16 %v53
  %v260 = vunpack.c.l.b16 %v54
  %v261 = vunpack.c.h.b16 %v54
  %v262 = vunpack.c.l.b16 %v55
  %v263 = vunpack.c.h.b16 %v55
  %v264 = vunpack.c.l.b16 %v56
  %v265 = vunpack.c.h.b16 %v56
  %v266 = vunpack.c.l.b16 %v57
  %v267 = vunpack.c.h.b16 %v57
  %v268 = vunpack.c.l.b16 %v58
  %v269 = vunpack.c.h.b16 %v58
  %v270 = vunpack.c.l.b16 %v59
  %v271 = vunpack.c.h.b16 %v59
  %v272 = vunpack.c.l.b16 %v60
  %v273 = vunpack.c.h.b16 %v60
  %v274 = vunpack.c.l.b16 %v61
  %v275 = vunpack.c.h.b16 %v61
  %v276 = vunpack.c.l.b16 %v62
  %v277 = vunpack.c.h.b16 %v62
  %v278 = vunpack.c.l.b16 %v63
  %v279 = vunpack.c.h.b16 %v63
  %v280 = vunpack.c.l.b16 %v64
  %v281 = vunpack.c.h.b16 %v64
  %v282 = vunpack.c.l.b16 %v65
  %v283 = vunpack.c.h.b16 %v65
  %v284 = vunpack.c.l.b16 %v66
  %v285 = vunpack.c.h.b16 %v66
  %v286 = vunpack.c.l.b16 %v67
  %v287 = vunpack.c.h.b16 %v67
  %v288 = vunpack.c.l.b16 %v68
  %v289 = vunpack.c.h.b16 %v68
  %v290 = vunpack.c.l.b16 %v69
  %v291 = vunpack.c.h.b16 %v69
  %v292 = vunpack.c.l.b16 %v70
  %v293 = vunpack.c.h.b16 %v70
  %v294 = vunpack.c.l.b16 %v71
  %v295 = vunpack.c.h.b16 %v71
  %v296 = vunpack.c.l.b16 %v72
  %v297 = vunpack.c.h.b16 %v72
  %v298 = vunpack.c.l.b16 %v73
  %v299 = vunpack.c.h.b16 %v73
  %v300 = vunpack.c.l.b16 %v74
  %v301 = vunpack.c.h.b16 %v74
  %v302 = vunpack.c.l.b16 %v75
  %v303 = vunpack.c.h.b16 %v75
  %v304 = vunpack.c.l.b16 %v76
  %v305 = vunpack.c.h.b16 %v76
  %v306 = vunpack.c.l.b16 %v77
  %v307 = vunpack.c.h.b16 %v77
  %v308 = vunpack.c.l.b16 %v78
  %v309 = vunpack.c.h.b16 %v78
  %v310 = vunpack.c.l.b16 %v79
  %v311 = vunpack.c.h.b16 %v79
  %v312 = vunpack.c.l.b16 %v80
  %v313 = vunpack.c.h.b16 %v80
  %v314 = vunpack.c.l.b16 %v81
  %v315 = vunpack.c.h.b16 %v81
  %v316 = vunpack.c.l.b16 %v82
  %v317 = vunpack.c.h.b16 %v82
  %v318 = vunpack.c.l.b16 %v83
  %v319 = vunpack.c.h.b16 %v83
  %v320 = vunpack.c.l.b16 %v84
  %v321 = vunpack.c.h.b16 %v84
  %v322 = vunpack.c.l.b16 %v85
  %v323 = vunpack.c.h.b16 %v85
  %v324 = vpack.c.b16 %v198, %v196
  %v325 = vpack.c.b16 %v199, %v197
  %v326 = vpack.c.b16 %v202, %v200
  %v327 = vpack.c.b16 %v203, %v201
  %v328 = vpack.c.b16 %v206, %v204
  %v329 = vpack.c.b16 %v207, %v205
  %v330 = vpack.c.b16 %v210, %v208
  %v331 = vpack.c.b16 %v211, %v209
  %v332 = vpack.c.b16 %v214, %v212
  %v333 = vpack.c.b16 %v215, %v213
  %v334 = vpack.c.b16 %v218, %v216
  %v335 = vpack.c.b16 %v219, %v217
  %v336 = vpack.c.b16 %v222, %v220
  %v337 = vpack.c.b16 %v223, %v221
  %v338 = vpack.c.b16 %v226, %v224
  %v339 = vpack.c.b16 %v227, %v225
  %v340 = vpack.c.b16 %v230, %v228
  %v341 = vpack.c.b16 %v231, %v229
  %v342 = vpack.c.b16 %v234, %v232
  %v343 = vpack.c.b16 %v235, %v233
  %v344 = vpack.c.b16 %v238, %v236
  %v345 = vpack.c.b16 %v239, %v237
  %v346 = vpack.c.b16 %v242, %v240
  %v347 = vpack.c.b16 %v243, %v241
  %v348 = vpack.c.b16 %v246, %v244
  %v349 = vpack.c.b16 %v247, %v245
  %v350 = vpack.c.b16 %v250, %v248
  %v351 = vpack.c.b16 %v251, %v249
  %v352 = vpack.c.b16 %v254, %v252
  %v353 = vpack.c.b16 %v255, %v253
  %v354 = vpack.c.b16 %v258, %v256
  %v355 = vpack.c.b16 %v259, %v257
  %v356 = vpack.c.b16 %v262, %v260
  %v357 = vpack.c.b16 %v263, %v261
  %v358 = vpack.c.b16 %v266, %v264
  %v359 = vpack.c.b16 %v267, %v265
  %v360 = vpack.c.b16 %v270, %v268
  %v361 = vpack.c.b16 %v271, %v269
  %v362 = vpack.c.b16 %v274, %v272
  %v363 = vpack.c.b16 %v275, %v273
  %v364 = vpack.c.b16 %v278, %v276
  %v365 = vpack.c.b16 %v279, %v277
  %v366 = vpack.c.b16 %v282, %v280
  %v367 = vpack.c.b16 %v283, %v281
  %v368 = vpack.c.b16 %v286, %v284
  %v369 = vpack.c.b16 %v287, %v285
  %v370 = vpack.c.b16 %v290, %v288
  %v371 = vpack.c.b16 %v291, %v289
  %v372 = vpack.c.b16 %v294, %v292
  %v373 = vpack.c.b16 %v295, %v293
  %v374 = vpack.c.b16 %v298, %v296
  %v375 = vpack.c.b16 %v299, %v297
  %v376 = vpack.c.b16 %v302, %v300
  %v377 = vpack.c.b16 %v303, %v301
  %v378 = vpack.c.b16 %v306, %v304
  %v379 = vpack.c.b16 %v307, %v305
  %v380 = vpack.c.b16 %v310, %v308
  %v381 = vpack.c.b16 %v311, %v309
  %v382 = vpack.c.b16 %v314, %v312
  %v383 = vpack.c.b16 %v315, %v313
  %v384 = vpack.c.b16 %v318, %v316
  %v385 = vpack.c.b16 %v319, %v317
  %v386 = vpack.c.b16 %v322, %v320
  %v387 = vpack.c.b16 %v323, %v321
  %452 = vmatpush.bf16.msra.mxu0 %v338
  %453 = vmatpush.bf16.msra.mxu0 %v336
  %454 = vmatpush.bf16.msra.mxu0 %v334
  %455 = vmatpush.bf16.msra.mxu0 %v332
  %456 = vmatpush.bf16.msra.mxu0 %v330
  %457 = vmatpush.bf16.msra.mxu0 %v328
  %458 = vmatpush.bf16.msra.mxu0 %v326
  %459 = vmatpush.bf16.msra.mxu0 %v324
  %460 = vmatmul.bf16.gmra.mxu0 %v116
  %v461 = vpop.f32.mrf.mxu0
  %v462 = vadd.f32 %v88, %v461
  %v463 = vpop.f32.mrf.mxu0
  %v464 = vadd.f32 %v88, %v463
  %465 = vmatmul.bf16.gmra.mxu0 %v120
  %v466 = vpop.f32.mrf.mxu0
  %v467 = vadd.f32 %v88, %v466
  %v468 = vpop.f32.mrf.mxu0
  %v469 = vadd.f32 %v88, %v468
  %470 = vdwg.mxu0
  %471 = vmatpush.bf16.msra.mxu0 %v354
  %472 = vmatpush.bf16.msra.mxu0 %v352
  %473 = vmatpush.bf16.msra.mxu0 %v350
  %474 = vmatpush.bf16.msra.mxu0 %v348
  %475 = vmatpush.bf16.msra.mxu0 %v346
  %476 = vmatpush.bf16.msra.mxu0 %v344
  %477 = vmatpush.bf16.msra.mxu0 %v342
  %478 = vmatpush.bf16.msra.mxu0 %v340
  %479 = vmatmul.bf16.gmra.mxu0 %v117
  %v480 = vpop.f32.mrf.mxu0
  %v481 = vadd.f32 %v462, %v480
  %v482 = vpop.f32.mrf.mxu0
  %v483 = vadd.f32 %v464, %v482
  %484 = vmatmul.bf16.gmra.mxu0 %v121
  %v485 = vpop.f32.mrf.mxu0
  %v486 = vadd.f32 %v467, %v485
  %v487 = vpop.f32.mrf.mxu0
  %v488 = vadd.f32 %v469, %v487
  %489 = vdwg.mxu0
  %490 = vmatpush.bf16.msra.mxu0 %v370
  %491 = vmatpush.bf16.msra.mxu0 %v368
  %492 = vmatpush.bf16.msra.mxu0 %v366
  %493 = vmatpush.bf16.msra.mxu0 %v364
  %494 = vmatpush.bf16.msra.mxu0 %v362
  %495 = vmatpush.bf16.msra.mxu0 %v360
  %496 = vmatpush.bf16.msra.mxu0 %v358
  %497 = vmatpush.bf16.msra.mxu0 %v356
  %498 = vmatmul.bf16.gmra.mxu0 %v118
  %v499 = vpop.f32.mrf.mxu0
  %v500 = vadd.f32 %v481, %v499
  %v501 = vpop.f32.mrf.mxu0
  %v502 = vadd.f32 %v483, %v501
  %503 = vmatmul.bf16.gmra.mxu0 %v122
  %v504 = vpop.f32.mrf.mxu0
  %v505 = vadd.f32 %v486, %v504
  %v506 = vpop.f32.mrf.mxu0
  %v507 = vadd.f32 %v488, %v506
  %508 = vdwg.mxu0
  %509 = vmatpush.bf16.msra.mxu0 %v386
  %510 = vmatpush.bf16.msra.mxu0 %v384
  %511 = vmatpush.bf16.msra.mxu0 %v382
  %512 = vmatpush.bf16.msra.mxu0 %v380
  %513 = vmatpush.bf16.msra.mxu0 %v378
  %514 = vmatpush.bf16.msra.mxu0 %v376
  %515 = vmatpush.bf16.msra.mxu0 %v374
  %516 = vmatpush.bf16.msra.mxu0 %v372
  %517 = vmatmul.bf16.gmra.mxu0 %v119
  %v518 = vpop.f32.mrf.mxu0
  %v519 = vadd.f32 %v500, %v518
  %v520 = vpop.f32.mrf.mxu0
  %v521 = vadd.f32 %v502, %v520
  %522 = vmatmul.bf16.gmra.mxu0 %v123
  %v523 = vpop.f32.mrf.mxu0
  %v524 = vadd.f32 %v505, %v523
  %v525 = vpop.f32.mrf.mxu0
  %v526 = vadd.f32 %v507, %v525
  %527 = vdwg.mxu0
  %528 = vmatpush.bf16.msra.mxu0 %v339
  %529 = vmatpush.bf16.msra.mxu0 %v337
  %530 = vmatpush.bf16.msra.mxu0 %v335
  %531 = vmatpush.bf16.msra.mxu0 %v333
  %532 = vmatpush.bf16.msra.mxu0 %v331
  %533 = vmatpush.bf16.msra.mxu0 %v329
  %534 = vmatpush.bf16.msra.mxu0 %v327
  %535 = vmatpush.bf16.msra.mxu0 %v325
  %536 = vmatmul.bf16.gmra.mxu0 %v116
  %v537 = vpop.f32.mrf.mxu0
  %v538 = vadd.f32 %v89, %v537
  %v539 = vpop.f32.mrf.mxu0
  %v540 = vadd.f32 %v89, %v539
  %541 = vmatmul.bf16.gmra.mxu0 %v120
  %v542 = vpop.f32.mrf.mxu0
  %v543 = vadd.f32 %v89, %v542
  %v544 = vpop.f32.mrf.mxu0
  %v545 = vadd.f32 %v89, %v544
  %546 = vdwg.mxu0
  %547 = vmatpush.bf16.msra.mxu0 %v355
  %548 = vmatpush.bf16.msra.mxu0 %v353
  %549 = vmatpush.bf16.msra.mxu0 %v351
  %550 = vmatpush.bf16.msra.mxu0 %v349
  %551 = vmatpush.bf16.msra.mxu0 %v347
  %552 = vmatpush.bf16.msra.mxu0 %v345
  %553 = vmatpush.bf16.msra.mxu0 %v343
  %554 = vmatpush.bf16.msra.mxu0 %v341
  %555 = vmatmul.bf16.gmra.mxu0 %v117
  %v556 = vpop.f32.mrf.mxu0
  %v557 = vadd.f32 %v538, %v556
  %v558 = vpop.f32.mrf.mxu0
  %v559 = vadd.f32 %v540, %v558
  %560 = vmatmul.bf16.gmra.mxu0 %v121
  %v561 = vpop.f32.mrf.mxu0
  %v562 = vadd.f32 %v543, %v561
  %v563 = vpop.f32.mrf.mxu0
  %v564 = vadd.f32 %v545, %v563
  %565 = vdwg.mxu0
  %566 = vmatpush.bf16.msra.mxu0 %v371
  %567 = vmatpush.bf16.msra.mxu0 %v369
  %568 = vmatpush.bf16.msra.mxu0 %v367
  %569 = vmatpush.bf16.msra.mxu0 %v365
  %570 = vmatpush.bf16.msra.mxu0 %v363
  %571 = vmatpush.bf16.msra.mxu0 %v361
  %572 = vmatpush.bf16.msra.mxu0 %v359
  %573 = vmatpush.bf16.msra.mxu0 %v357
  %574 = vmatmul.bf16.gmra.mxu0 %v118
  %v575 = vpop.f32.mrf.mxu0
  %v576 = vadd.f32 %v557, %v575
  %v577 = vpop.f32.mrf.mxu0
  %v578 = vadd.f32 %v559, %v577
  %579 = vmatmul.bf16.gmra.mxu0 %v122
  %v580 = vpop.f32.mrf.mxu0
  %v581 = vadd.f32 %v562, %v580
  %v582 = vpop.f32.mrf.mxu0
  %v583 = vadd.f32 %v564, %v582
  %584 = vdwg.mxu0
  %585 = vmatpush.bf16.msra.mxu0 %v387
  %586 = vmatpush.bf16.msra.mxu0 %v385
  %587 = vmatpush.bf16.msra.mxu0 %v383
  %588 = vmatpush.bf16.msra.mxu0 %v381
  %589 = vmatpush.bf16.msra.mxu0 %v379
  %590 = vmatpush.bf16.msra.mxu0 %v377
  %591 = vmatpush.bf16.msra.mxu0 %v375
  %592 = vmatpush.bf16.msra.mxu0 %v373
  %593 = vmatmul.bf16.gmra.mxu0 %v119
  %v594 = vpop.f32.mrf.mxu0
  %v595 = vadd.f32 %v576, %v594
  %v596 = vpop.f32.mrf.mxu0
  %v597 = vadd.f32 %v578, %v596
  %598 = vmatmul.bf16.gmra.mxu0 %v123
  %v599 = vpop.f32.mrf.mxu0
  %v600 = vadd.f32 %v581, %v599
  %v601 = vpop.f32.mrf.mxu0
  %v602 = vadd.f32 %v583, %v601
  %603 = vdwg.mxu0
  %v604 = vtanh.pop %v519
  %v605 = vtanh.pop %v521
  %v606 = vtanh.pop %v524
  %v607 = vtanh.pop %v526
  %v608 = vxor.u32 %v595, 2147483648
  %v609 = vxor.u32 %v597, 2147483648
  %v610 = vxor.u32 %v600, 2147483648
  %v611 = vxor.u32 %v602, 2147483648
  %v612 = vmul.f32 %v608, 1.442695
  %v613 = vpow.pop %v612
  %v614 = vmul.f32 %v609, 1.442695
  %v615 = vpow.pop %v614
  %v616 = vmul.f32 %v610, 1.442695
  %v617 = vpow.pop %v616
  %v618 = vmul.f32 %v611, 1.442695
  %v619 = vpow.pop %v618
  %v620 = vadd.f32 %v613, 1.0
  %v621 = vadd.f32 %v615, 1.0
  %v622 = vadd.f32 %v617, 1.0
  %v623 = vadd.f32 %v619, 1.0
  %v624 = vrcp.pop %v620
  %v625 = vmul.f32 %v620, %v624
  %v626 = vsub.f32 1.0, %v625
  %v627 = vmul.f32 %v624, %v626
  %v628 = vadd.f32 %v624, %v627
  %vm629 = vweird.f32 %v620
  %vm630 = vweird.f32 %v624
  %vm631 = vmor %vm629, %vm630
  %v632 = vsel %vm631, %v624, %v628
  %v633 = vand.u32 2147483647, %v620
  %vm634 = vcmp.eq.f32.partialorder %v633, 8.507059e+37
  %v635 = vand.u32 %v620, 2147483648
  %v636 = vor.u32 1.1754944e-38, %v635
  %v637 = vsel %vm634, %v636, %v632
  %v638 = vmul.f32 1.0, %v637
  %v639 = vrcp.pop %v621
  %v640 = vmul.f32 %v621, %v639
  %v641 = vsub.f32 1.0, %v640
  %v642 = vmul.f32 %v639, %v641
  %v643 = vadd.f32 %v639, %v642
  %vm644 = vweird.f32 %v621
  %vm645 = vweird.f32 %v639
  %vm646 = vmor %vm644, %vm645
  %v647 = vsel %vm646, %v639, %v643
  %v648 = vand.u32 2147483647, %v621
  %vm649 = vcmp.eq.f32.partialorder %v648, 8.507059e+37
  %v650 = vand.u32 %v621, 2147483648
  %v651 = vor.u32 1.1754944e-38, %v650
  %v652 = vsel %vm649, %v651, %v647
  %v653 = vmul.f32 1.0, %v652
  %v654 = vrcp.pop %v622
  %v655 = vmul.f32 %v622, %v654
  %v656 = vsub.f32 1.0, %v655
  %v657 = vmul.f32 %v654, %v656
  %v658 = vadd.f32 %v654, %v657
  %vm659 = vweird.f32 %v622
  %vm660 = vweird.f32 %v654
  %vm661 = vmor %vm659, %vm660
  %v662 = vsel %vm661, %v654, %v658
  %v663 = vand.u32 2147483647, %v622
  %vm664 = vcmp.eq.f32.partialorder %v663, 8.507059e+37
  %v665 = vand.u32 %v622, 2147483648
  %v666 = vor.u32 1.1754944e-38, %v665
  %v667 = vsel %vm664, %v666, %v662
  %v668 = vmul.f32 1.0, %v667
  %v669 = vrcp.pop %v623
  %v670 = vmul.f32 %v623, %v669
  %v671 = vsub.f32 1.0, %v670
  %v672 = vmul.f32 %v669, %v671
  %v673 = vadd.f32 %v669, %v672
  %vm674 = vweird.f32 %v623
  %vm675 = vweird.f32 %v669
  %vm676 = vmor %vm674, %vm675
  %v677 = vsel %vm676, %v669, %v673
  %v678 = vand.u32 2147483647, %v623
  %vm679 = vcmp.eq.f32.partialorder %v678, 8.507059e+37
  %v680 = vand.u32 %v623, 2147483648
  %v681 = vor.u32 1.1754944e-38, %v680
  %v682 = vsel %vm679, %v681, %v677
  %v683 = vmul.f32 1.0, %v682
  %v684 = vmul.f32 %v604, %v638
  %v685 = vmul.f32 %v605, %v653
  %v686 = vmul.f32 %v606, %v668
  %v687 = vmul.f32 %v607, %v683
  %688 = vst [vmem:[%s3] sm:$0xff] %v684
  %689 = vst [vmem:[%s3 + $0x8] sm:$0xff] %v685
  %690 = vst [vmem:[%s3 + $0x10] sm:$0xff] %v686
  %691 = vst [vmem:[%s3 + $0x18] sm:$0xff] %v687
  // Predicated region
  $region14: #{gated_generator_forward.47} parent=0 // pred_check
    _
  $region15: #{gated_generator_forward.47} parent=0 // pred_check_branch
    %693 = sbr.rel (0) target = $region17
  $region16: #{gated_generator_forward.47} parent=0 // pred_region
    _
  $region17: #{gated_generator_forward.47} parent=0 // pred_fallthru
    _
  // Predicated region
  $region18: #{gated_generator_forward.47} parent=0 // pred_check
    _
  $region19: #{gated_generator_forward.47} parent=0 // pred_check_branch
    %695 = sbr.rel (0) target = $region21
  $region20: #{gated_generator_forward.47} parent=0 // pred_region
    _
  $region21: #{gated_generator_forward.47} parent=0 // pred_fallthru
    _

// kernel: gated_generator_forward.50
$region0: #{gated_generator_forward.50}
  #allocation0 [shape = 'u32[]', space=smem, size = 0x4, offset = 0x4, fixed_abs, tag = 'smem constant byte address 0x4 - core index']
  #allocation1 [shape = 'u32[72,128]{1,0:T(1,128)}', space=vmem, size = 0x9000, scoped, tag = 'internal scratch']
  %s0 = inlined_call_operand.vmem [shape: bf16[80,256], index: 0, kind: input, shape index: {}]
  %s1 = inlined_call_operand.vmem [shape: bf16[256,256], index: 1, kind: input, shape index: {}]
  %s2 = inlined_call_operand.vmem [shape: f32[1,256], index: 2, kind: input, shape index: {}]
  %s3 = inlined_call_operand.vmem [shape: bf16[80,128], index: 3, kind: output, shape index: {}]
  %s4 = sld [smem:[#allocation0]]
  $region22: #{gated_generator_forward.50} parent=0
    _
  %s6 = ssub.s32 1, %s4
  %s7 = scalar_select 0, %s6, %s4
  // Predicated region
  $region2: #{gated_generator_forward.50} parent=0 // pred_check
    _
  $region3: #{gated_generator_forward.50} parent=0 // pred_check_branch
    %9 = sbr.rel (0) target = $region5
  $region4: #{gated_generator_forward.50} parent=0 // pred_region
    _
  $region5: #{gated_generator_forward.50} parent=0 // pred_fallthru
    _
  // Predicated region
  $region6: #{gated_generator_forward.50} parent=0 // pred_check
    _
  $region7: #{gated_generator_forward.50} parent=0 // pred_check_branch
    %11 = sbr.rel (0) target = $region9
  $region8: #{gated_generator_forward.50} parent=0 // pred_region
    _
  $region9: #{gated_generator_forward.50} parent=0 // pred_fallthru
    _
  // Predicated region
  $region10: #{gated_generator_forward.50} parent=0 // pred_check
    _
  $region11: #{gated_generator_forward.50} parent=0 // pred_check_branch
    %13 = sbr.rel (0) target = $region13
  $region12: #{gated_generator_forward.50} parent=0 // pred_region
    _
  $region13: #{gated_generator_forward.50} parent=0 // pred_fallthru
    _
  %v14 = vld [vmem:[%s0] sm:$0xff]
  %v15 = vld [vmem:[%s0 + $0x8] sm:$0xff]
  %v16 = vld [vmem:[%s0 + $0x10] sm:$0xff]
  %v17 = vld [vmem:[%s0 + $0x18] sm:$0xff]
  %v18 = vld [vmem:[%s0 + $0x20] sm:$0xff]
  %v19 = vld [vmem:[%s0 + $0x28] sm:$0xff]
  %v20 = vld [vmem:[%s0 + $0x30] sm:$0xff]
  %v21 = vld [vmem:[%s0 + $0x38] sm:$0xff]
  %v22 = vld [vmem:[%s0 + $0x40] sm:$0xff]
  %v23 = vld [vmem:[%s0 + $0x48] sm:$0xff]
  %v24 = vld [vmem:[%s1] sm:$0xff]
  %v25 = vld [vmem:[%s1 + $0x8] sm:$0xff]
  %v26 = vld [vmem:[%s1 + $0x10] sm:$0xff]
  %v27 = vld [vmem:[%s1 + $0x18] sm:$0xff]
  %v28 = vld [vmem:[%s1 + $0x20] sm:$0xff]
  %v29 = vld [vmem:[%s1 + $0x28] sm:$0xff]
  %v30 = vld [vmem:[%s1 + $0x30] sm:$0xff]
  %v31 = vld [vmem:[%s1 + $0x38] sm:$0xff]
  %v32 = vld [vmem:[%s1 + $0x40] sm:$0xff]
  %v33 = vld [vmem:[%s1 + $0x48] sm:$0xff]
  %v34 = vld [vmem:[%s1 + $0x50] sm:$0xff]
  %v35 = vld [vmem:[%s1 + $0x58] sm:$0xff]
  %v36 = vld [vmem:[%s1 + $0x60] sm:$0xff]
  %v37 = vld [vmem:[%s1 + $0x68] sm:$0xff]
  %v38 = vld [vmem:[%s1 + $0x70] sm:$0xff]
  %v39 = vld [vmem:[%s1 + $0x78] sm:$0xff]
  %v40 = vld [vmem:[%s1 + $0x80] sm:$0xff]
  %v41 = vld [vmem:[%s1 + $0x88] sm:$0xff]
  %v42 = vld [vmem:[%s1 + $0x90] sm:$0xff]
  %v43 = vld [vmem:[%s1 + $0x98] sm:$0xff]
  %v44 = vld [vmem:[%s1 + $0xa0] sm:$0xff]
  %v45 = vld [vmem:[%s1 + $0xa8] sm:$0xff]
  %v46 = vld [vmem:[%s1 + $0xb0] sm:$0xff]
  %v47 = vld [vmem:[%s1 + $0xb8] sm:$0xff]
  %v48 = vld [vmem:[%s1 + $0xc0] sm:$0xff]
  %v49 = vld [vmem:[%s1 + $0xc8] sm:$0xff]
  %v50 = vld [vmem:[%s1 + $0xd0] sm:$0xff]
  %v51 = vld [vmem:[%s1 + $0xd8] sm:$0xff]
  %v52 = vld [vmem:[%s1 + $0xe0] sm:$0xff]
  %v53 = vld [vmem:[%s1 + $0xe8] sm:$0xff]
  %v54 = vld [vmem:[%s1 + $0xf0] sm:$0xff]
  %v55 = vld [vmem:[%s1 + $0xf8] sm:$0xff]
  %v56 = vld [vmem:[%s2] sm:$0x3]
  %v58 = vperm.slane %v56, 0
  %v59 = vperm.slane %v56, 1
  %v72 = vunpack.c.l.b16 %v14
  %v73 = vunpack.c.h.b16 %v14
  %v74 = vunpack.c.l.b16 %v15
  %v75 = vunpack.c.h.b16 %v15
  %v76 = vunpack.c.l.b16 %v16
  %v77 = vunpack.c.h.b16 %v16
  %v78 = vunpack.c.l.b16 %v17
  %v79 = vunpack.c.h.b16 %v17
  %v80 = vunpack.c.l.b16 %v18
  %v81 = vunpack.c.h.b16 %v18
  %v82 = vunpack.c.l.b16 %v19
  %v83 = vunpack.c.h.b16 %v19
  %v84 = vunpack.c.l.b16 %v20
  %v85 = vunpack.c.h.b16 %v20
  %v86 = vunpack.c.l.b16 %v21
  %v87 = vunpack.c.h.b16 %v21
  %v88 = vunpack.c.l.b16 %v22
  %v89 = vunpack.c.h.b16 %v22
  %v90 = vunpack.c.l.b16 %v23
  %v91 = vunpack.c.h.b16 %v23
  %v92 = vpack.c.b16 %v74, %v72
  %v93 = vpack.c.b16 %v75, %v73
  %v94 = vpack.c.b16 %v78, %v76
  %v95 = vpack.c.b16 %v79, %v77
  %v96 = vpack.c.b16 %v82, %v80
  %v97 = vpack.c.b16 %v83, %v81
  %v98 = vpack.c.b16 %v86, %v84
  %v99 = vpack.c.b16 %v87, %v85
  %v100 = vpack.c.b16 %v90, %v88
  %v101 = vpack.c.b16 %v91, %v89
  %v144 = vunpack.c.l.b16 %v24
  %v145 = vunpack.c.h.b16 %v24
  %v146 = vunpack.c.l.b16 %v25
  %v147 = vunpack.c.h.b16 %v25
  %v148 = vunpack.c.l.b16 %v26
  %v149 = vunpack.c.h.b16 %v26
  %v150 = vunpack.c.l.b16 %v27
  %v151 = vunpack.c.h.b16 %v27
  %v152 = vunpack.c.l.b16 %v28
  %v153 = vunpack.c.h.b16 %v28
  %v154 = vunpack.c.l.b16 %v29
  %v155 = vunpack.c.h.b16 %v29
  %v156 = vunpack.c.l.b16 %v30
  %v157 = vunpack.c.h.b16 %v30
  %v158 = vunpack.c.l.b16 %v31
  %v159 = vunpack.c.h.b16 %v31
  %v160 = vunpack.c.l.b16 %v32
  %v161 = vunpack.c.h.b16 %v32
  %v162 = vunpack.c.l.b16 %v33
  %v163 = vunpack.c.h.b16 %v33
  %v164 = vunpack.c.l.b16 %v34
  %v165 = vunpack.c.h.b16 %v34
  %v166 = vunpack.c.l.b16 %v35
  %v167 = vunpack.c.h.b16 %v35
  %v168 = vunpack.c.l.b16 %v36
  %v169 = vunpack.c.h.b16 %v36
  %v170 = vunpack.c.l.b16 %v37
  %v171 = vunpack.c.h.b16 %v37
  %v172 = vunpack.c.l.b16 %v38
  %v173 = vunpack.c.h.b16 %v38
  %v174 = vunpack.c.l.b16 %v39
  %v175 = vunpack.c.h.b16 %v39
  %v176 = vunpack.c.l.b16 %v40
  %v177 = vunpack.c.h.b16 %v40
  %v178 = vunpack.c.l.b16 %v41
  %v179 = vunpack.c.h.b16 %v41
  %v180 = vunpack.c.l.b16 %v42
  %v181 = vunpack.c.h.b16 %v42
  %v182 = vunpack.c.l.b16 %v43
  %v183 = vunpack.c.h.b16 %v43
  %v184 = vunpack.c.l.b16 %v44
  %v185 = vunpack.c.h.b16 %v44
  %v186 = vunpack.c.l.b16 %v45
  %v187 = vunpack.c.h.b16 %v45
  %v188 = vunpack.c.l.b16 %v46
  %v189 = vunpack.c.h.b16 %v46
  %v190 = vunpack.c.l.b16 %v47
  %v191 = vunpack.c.h.b16 %v47
  %v192 = vunpack.c.l.b16 %v48
  %v193 = vunpack.c.h.b16 %v48
  %v194 = vunpack.c.l.b16 %v49
  %v195 = vunpack.c.h.b16 %v49
  %v196 = vunpack.c.l.b16 %v50
  %v197 = vunpack.c.h.b16 %v50
  %v198 = vunpack.c.l.b16 %v51
  %v199 = vunpack.c.h.b16 %v51
  %v200 = vunpack.c.l.b16 %v52
  %v201 = vunpack.c.h.b16 %v52
  %v202 = vunpack.c.l.b16 %v53
  %v203 = vunpack.c.h.b16 %v53
  %v204 = vunpack.c.l.b16 %v54
  %v205 = vunpack.c.h.b16 %v54
  %v206 = vunpack.c.l.b16 %v55
  %v207 = vunpack.c.h.b16 %v55
  %v208 = vpack.c.b16 %v146, %v144
  %v209 = vpack.c.b16 %v147, %v145
  %v210 = vpack.c.b16 %v150, %v148
  %v211 = vpack.c.b16 %v151, %v149
  %v212 = vpack.c.b16 %v154, %v152
  %v213 = vpack.c.b16 %v155, %v153
  %v214 = vpack.c.b16 %v158, %v156
  %v215 = vpack.c.b16 %v159, %v157
  %v216 = vpack.c.b16 %v162, %v160
  %v217 = vpack.c.b16 %v163, %v161
  %v218 = vpack.c.b16 %v166, %v164
  %v219 = vpack.c.b16 %v167, %v165
  %v220 = vpack.c.b16 %v170, %v168
  %v221 = vpack.c.b16 %v171, %v169
  %v222 = vpack.c.b16 %v174, %v172
  %v223 = vpack.c.b16 %v175, %v173
  %v224 = vpack.c.b16 %v178, %v176
  %v225 = vpack.c.b16 %v179, %v177
  %v226 = vpack.c.b16 %v182, %v180
  %v227 = vpack.c.b16 %v183, %v181
  %v228 = vpack.c.b16 %v186, %v184
  %v229 = vpack.c.b16 %v187, %v185
  %v230 = vpack.c.b16 %v190, %v188
  %v231 = vpack.c.b16 %v191, %v189
  %v232 = vpack.c.b16 %v194, %v192
  %v233 = vpack.c.b16 %v195, %v193
  %v234 = vpack.c.b16 %v198, %v196
  %v235 = vpack.c.b16 %v199, %v197
  %v236 = vpack.c.b16 %v202, %v200
  %v237 = vpack.c.b16 %v203, %v201
  %v238 = vpack.c.b16 %v206, %v204
  %v239 = vpack.c.b16 %v207, %v205
  %272 = vmatpush.bf16.msra.mxu0 %v222
  %273 = vmatpush.bf16.msra.mxu0 %v220
  %274 = vmatpush.bf16.msra.mxu0 %v218
  %275 = vmatpush.bf16.msra.mxu0 %v216
  %276 = vmatpush.bf16.msra.mxu0 %v214
  %277 = vmatpush.bf16.msra.mxu0 %v212
  %278 = vmatpush.bf16.msra.mxu0 %v210
  %279 = vmatpush.bf16.msra.mxu0 %v208
  %280 = vmatmul.bf16.gmra.mxu0 %v92
  %v281 = vpop.f32.mrf.mxu0
  %v282 = vadd.f32 %v58, %v281
  %v283 = vpop.f32.mrf.mxu0
  %v284 = vadd.f32 %v58, %v283
  %285 = vmatmul.bf16.gmra.mxu0 %v94
  %v286 = vpop.f32.mrf.mxu0
  %v287 = vadd.f32 %v58, %v286
  %v288 = vpop.f32.mrf.mxu0
  %v289 = vadd.f32 %v58, %v288
  %290 = vmatmul.bf16.gmra.mxu0 %v96
  %v291 = vpop.f32.mrf.mxu0
  %v292 = vadd.f32 %v58, %v291
  %v293 = vpop.f32.mrf.mxu0
  %v294 = vadd.f32 %v58, %v293
  %295 = vmatmul.bf16.gmra.mxu0 %v98
  %v296 = vpop.f32.mrf.mxu0
  %v297 = vadd.f32 %v58, %v296
  %v298 = vpop.f32.mrf.mxu0
  %v299 = vadd.f32 %v58, %v298
  %300 = vmatmul.bf16.gmra.mxu0 %v100
  %v301 = vpop.f32.mrf.mxu0
  %v302 = vadd.f32 %v58, %v301
  %v303 = vpop.f32.mrf.mxu0
  %v304 = vadd.f32 %v58, %v303
  %305 = vdwg.mxu0
  %306 = vmatpush.bf16.msra.mxu0 %v238
  %307 = vmatpush.bf16.msra.mxu0 %v236
  %308 = vmatpush.bf16.msra.mxu0 %v234
  %309 = vmatpush.bf16.msra.mxu0 %v232
  %310 = vmatpush.bf16.msra.mxu0 %v230
  %311 = vmatpush.bf16.msra.mxu0 %v228
  %312 = vmatpush.bf16.msra.mxu0 %v226
  %313 = vmatpush.bf16.msra.mxu0 %v224
  %314 = vmatmul.bf16.gmra.mxu0 %v93
  %v315 = vpop.f32.mrf.mxu0
  %v316 = vadd.f32 %v282, %v315
  %v317 = vpop.f32.mrf.mxu0
  %v318 = vadd.f32 %v284, %v317
  %319 = vmatmul.bf16.gmra.mxu0 %v95
  %v320 = vpop.f32.mrf.mxu0
  %v321 = vadd.f32 %v287, %v320
  %v322 = vpop.f32.mrf.mxu0
  %v323 = vadd.f32 %v289, %v322
  %324 = vmatmul.bf16.gmra.mxu0 %v97
  %v325 = vpop.f32.mrf.mxu0
  %v326 = vadd.f32 %v292, %v325
  %v327 = vpop.f32.mrf.mxu0
  %v328 = vadd.f32 %v294, %v327
  %329 = vmatmul.bf16.gmra.mxu0 %v99
  %v330 = vpop.f32.mrf.mxu0
  %v331 = vadd.f32 %v297, %v330
  %v332 = vpop.f32.mrf.mxu0
  %v333 = vadd.f32 %v299, %v332
  %334 = vmatmul.bf16.gmra.mxu0 %v101
  %v335 = vpop.f32.mrf.mxu0
  %v336 = vadd.f32 %v302, %v335
  %v337 = vpop.f32.mrf.mxu0
  %v338 = vadd.f32 %v304, %v337
  %339 = vdwg.mxu0
  %340 = vmatpush.bf16.msra.mxu0 %v223
  %341 = vmatpush.bf16.msra.mxu0 %v221
  %342 = vmatpush.bf16.msra.mxu0 %v219
  %343 = vmatpush.bf16.msra.mxu0 %v217
  %344 = vmatpush.bf16.msra.mxu0 %v215
  %345 = vmatpush.bf16.msra.mxu0 %v213
  %346 = vmatpush.bf16.msra.mxu0 %v211
  %347 = vmatpush.bf16.msra.mxu0 %v209
  %348 = vmatmul.bf16.gmra.mxu0 %v92
  %v349 = vpop.f32.mrf.mxu0
  %v350 = vadd.f32 %v59, %v349
  %v351 = vpop.f32.mrf.mxu0
  %v352 = vadd.f32 %v59, %v351
  %353 = vmatmul.bf16.gmra.mxu0 %v94
  %v354 = vpop.f32.mrf.mxu0
  %v355 = vadd.f32 %v59, %v354
  %v356 = vpop.f32.mrf.mxu0
  %v357 = vadd.f32 %v59, %v356
  %358 = vmatmul.bf16.gmra.mxu0 %v96
  %v359 = vpop.f32.mrf.mxu0
  %v360 = vadd.f32 %v59, %v359
  %v361 = vpop.f32.mrf.mxu0
  %v362 = vadd.f32 %v59, %v361
  %363 = vmatmul.bf16.gmra.mxu0 %v98
  %v364 = vpop.f32.mrf.mxu0
  %v365 = vadd.f32 %v59, %v364
  %v366 = vpop.f32.mrf.mxu0
  %v367 = vadd.f32 %v59, %v366
  %368 = vmatmul.bf16.gmra.mxu0 %v100
  %v369 = vpop.f32.mrf.mxu0
  %v370 = vadd.f32 %v59, %v369
  %v371 = vpop.f32.mrf.mxu0
  %v372 = vadd.f32 %v59, %v371
  %373 = vdwg.mxu0
  %374 = vmatpush.bf16.msra.mxu0 %v239
  %375 = vmatpush.bf16.msra.mxu0 %v237
  %376 = vmatpush.bf16.msra.mxu0 %v235
  %377 = vmatpush.bf16.msra.mxu0 %v233
  %378 = vmatpush.bf16.msra.mxu0 %v231
  %379 = vmatpush.bf16.msra.mxu0 %v229
  %380 = vmatpush.bf16.msra.mxu0 %v227
  %381 = vmatpush.bf16.msra.mxu0 %v225
  %382 = vmatmul.bf16.gmra.mxu0 %v93
  %v383 = vpop.f32.mrf.mxu0
  %v384 = vadd.f32 %v350, %v383
  %v385 = vpop.f32.mrf.mxu0
  %v386 = vadd.f32 %v352, %v385
  %387 = vmatmul.bf16.gmra.mxu0 %v95
  %v388 = vpop.f32.mrf.mxu0
  %v389 = vadd.f32 %v355, %v388
  %v390 = vpop.f32.mrf.mxu0
  %v391 = vadd.f32 %v357, %v390
  %392 = vmatmul.bf16.gmra.mxu0 %v97
  %v393 = vpop.f32.mrf.mxu0
  %v394 = vadd.f32 %v360, %v393
  %v395 = vpop.f32.mrf.mxu0
  %v396 = vadd.f32 %v362, %v395
  %397 = vmatmul.bf16.gmra.mxu0 %v99
  %v398 = vpop.f32.mrf.mxu0
  %v399 = vadd.f32 %v365, %v398
  %v400 = vpop.f32.mrf.mxu0
  %v401 = vadd.f32 %v367, %v400
  %402 = vmatmul.bf16.gmra.mxu0 %v101
  %v403 = vpop.f32.mrf.mxu0
  %v404 = vadd.f32 %v370, %v403
  %v405 = vpop.f32.mrf.mxu0
  %v406 = vadd.f32 %v372, %v405
  %407 = vdwg.mxu0
  %vm408 = vcmp.ge.f32.partialorder %v316, 0.0
  %vm409 = vcmp.ge.f32.partialorder %v318, 0.0
  %vm410 = vcmp.ge.f32.partialorder %v321, 0.0
  %vm411 = vcmp.ge.f32.partialorder %v323, 0.0
  %vm412 = vcmp.ge.f32.partialorder %v326, 0.0
  %vm413 = vcmp.ge.f32.partialorder %v328, 0.0
  %vm414 = vcmp.ge.f32.partialorder %v331, 0.0
  %vm415 = vcmp.ge.f32.partialorder %v333, 0.0
  %vm416 = vcmp.ge.f32.partialorder %v336, 0.0
  %vm417 = vcmp.ge.f32.partialorder %v338, 0.0
  %v418 = vmul.f32 %v316, 0.2
  %v419 = vmul.f32 %v318, 0.2
  %v420 = vmul.f32 %v321, 0.2
  %v421 = vmul.f32 %v323, 0.2
  %v422 = vmul.f32 %v326, 0.2
  %v423 = vmul.f32 %v328, 0.2
  %v424 = vmul.f32 %v331, 0.2
  %v425 = vmul.f32 %v333, 0.2
  %v426 = vmul.f32 %v336, 0.2
  %v427 = vmul.f32 %v338, 0.2
  %v428 = vsel %vm408, %v316, %v418
  %v429 = vsel %vm409, %v318, %v419
  %v430 = vsel %vm410, %v321, %v420
  %v431 = vsel %vm411, %v323, %v421
  %v432 = vsel %vm412, %v326, %v422
  %v433 = vsel %vm413, %v328, %v423
  %v434 = vsel %vm414, %v331, %v424
  %v435 = vsel %vm415, %v333, %v425
  %v436 = vsel %vm416, %v336, %v426
  %v437 = vsel %vm417, %v338, %v427
  %v438 = vxor.u32 %v384, 2147483648
  %v439 = vxor.u32 %v386, 2147483648
  %v440 = vxor.u32 %v389, 2147483648
  %v441 = vxor.u32 %v391, 2147483648
  %v442 = vxor.u32 %v394, 2147483648
  %v443 = vxor.u32 %v396, 2147483648
  %v444 = vxor.u32 %v399, 2147483648
  %v445 = vxor.u32 %v401, 2147483648
  %v446 = vxor.u32 %v404, 2147483648
  %v447 = vxor.u32 %v406, 2147483648
  %v448 = vmul.f32 %v438, 1.442695
  %v449 = vpow.pop %v448
  %v450 = vmul.f32 %v439, 1.442695
  %v451 = vpow.pop %v450
  %v452 = vmul.f32 %v440, 1.442695
  %v453 = vpow.pop %v452
  %v454 = vmul.f32 %v441, 1.442695
  %v455 = vpow.pop %v454
  %v456 = vmul.f32 %v442, 1.442695
  %v457 = vpow.pop %v456
  %v458 = vmul.f32 %v443, 1.442695
  %v459 = vpow.pop %v458
  %v460 = vmul.f32 %v444, 1.442695
  %v461 = vpow.pop %v460
  %v462 = vmul.f32 %v445, 1.442695
  %v463 = vpow.pop %v462
  %v464 = vmul.f32 %v446, 1.442695
  %v465 = vpow.pop %v464
  %v466 = vmul.f32 %v447, 1.442695
  %v467 = vpow.pop %v466
  %v468 = vadd.f32 %v449, 1.0
  %v469 = vadd.f32 %v451, 1.0
  %v470 = vadd.f32 %v453, 1.0
  %v471 = vadd.f32 %v455, 1.0
  %v472 = vadd.f32 %v457, 1.0
  %v473 = vadd.f32 %v459, 1.0
  %v474 = vadd.f32 %v461, 1.0
  %v475 = vadd.f32 %v463, 1.0
  %v476 = vadd.f32 %v465, 1.0
  %v477 = vadd.f32 %v467, 1.0
  %v478 = vrcp.pop %v468
  %v479 = vmul.f32 %v468, %v478
  %v480 = vsub.f32 1.0, %v479
  %v481 = vmul.f32 %v478, %v480
  %v482 = vadd.f32 %v478, %v481
  %vm483 = vweird.f32 %v468
  %vm484 = vweird.f32 %v478
  %vm485 = vmor %vm483, %vm484
  %v486 = vsel %vm485, %v478, %v482
  %v487 = vand.u32 2147483647, %v468
  %vm488 = vcmp.eq.f32.partialorder %v487, 8.507059e+37
  %v489 = vand.u32 %v468, 2147483648
  %v490 = vor.u32 1.1754944e-38, %v489
  %v491 = vsel %vm488, %v490, %v486
  %v492 = vmul.f32 1.0, %v491
  %v493 = vrcp.pop %v469
  %v494 = vmul.f32 %v469, %v493
  %v495 = vsub.f32 1.0, %v494
  %v496 = vmul.f32 %v493, %v495
  %v497 = vadd.f32 %v493, %v496
  %vm498 = vweird.f32 %v469
  %vm499 = vweird.f32 %v493
  %vm500 = vmor %vm498, %vm499
  %v501 = vsel %vm500, %v493, %v497
  %v502 = vand.u32 2147483647, %v469
  %vm503 = vcmp.eq.f32.partialorder %v502, 8.507059e+37
  %v504 = vand.u32 %v469, 2147483648
  %v505 = vor.u32 1.1754944e-38, %v504
  %v506 = vsel %vm503, %v505, %v501
  %v507 = vmul.f32 1.0, %v506
  %v508 = vrcp.pop %v470
  %v509 = vmul.f32 %v470, %v508
  %v510 = vsub.f32 1.0, %v509
  %v511 = vmul.f32 %v508, %v510
  %v512 = vadd.f32 %v508, %v511
  %vm513 = vweird.f32 %v470
  %vm514 = vweird.f32 %v508
  %vm515 = vmor %vm513, %vm514
  %v516 = vsel %vm515, %v508, %v512
  %v517 = vand.u32 2147483647, %v470
  %vm518 = vcmp.eq.f32.partialorder %v517, 8.507059e+37
  %v519 = vand.u32 %v470, 2147483648
  %v520 = vor.u32 1.1754944e-38, %v519
  %v521 = vsel %vm518, %v520, %v516
  %v522 = vmul.f32 1.0, %v521
  %v523 = vrcp.pop %v471
  %v524 = vmul.f32 %v471, %v523
  %v525 = vsub.f32 1.0, %v524
  %v526 = vmul.f32 %v523, %v525
  %v527 = vadd.f32 %v523, %v526
  %vm528 = vweird.f32 %v471
  %vm529 = vweird.f32 %v523
  %vm530 = vmor %vm528, %vm529
  %v531 = vsel %vm530, %v523, %v527
  %v532 = vand.u32 2147483647, %v471
  %vm533 = vcmp.eq.f32.partialorder %v532, 8.507059e+37
  %v534 = vand.u32 %v471, 2147483648
  %v535 = vor.u32 1.1754944e-38, %v534
  %v536 = vsel %vm533, %v535, %v531
  %v537 = vmul.f32 1.0, %v536
  %v538 = vrcp.pop %v472
  %v539 = vmul.f32 %v472, %v538
  %v540 = vsub.f32 1.0, %v539
  %v541 = vmul.f32 %v538, %v540
  %v542 = vadd.f32 %v538, %v541
  %vm543 = vweird.f32 %v472
  %vm544 = vweird.f32 %v538
  %vm545 = vmor %vm543, %vm544
  %v546 = vsel %vm545, %v538, %v542
  %v547 = vand.u32 2147483647, %v472
  %vm548 = vcmp.eq.f32.partialorder %v547, 8.507059e+37
  %v549 = vand.u32 %v472, 2147483648
  %v550 = vor.u32 1.1754944e-38, %v549
  %v551 = vsel %vm548, %v550, %v546
  %v552 = vmul.f32 1.0, %v551
  %v553 = vrcp.pop %v473
  %v554 = vmul.f32 %v473, %v553
  %v555 = vsub.f32 1.0, %v554
  %v556 = vmul.f32 %v553, %v555
  %v557 = vadd.f32 %v553, %v556
  %vm558 = vweird.f32 %v473
  %vm559 = vweird.f32 %v553
  %vm560 = vmor %vm558, %vm559
  %v561 = vsel %vm560, %v553, %v557
  %v562 = vand.u32 2147483647, %v473
  %vm563 = vcmp.eq.f32.partialorder %v562, 8.507059e+37
  %v564 = vand.u32 %v473, 2147483648
  %v565 = vor.u32 1.1754944e-38, %v564
  %v566 = vsel %vm563, %v565, %v561
  %v567 = vmul.f32 1.0, %v566
  %v568 = vrcp.pop %v474
  %v569 = vmul.f32 %v474, %v568
  %v570 = vsub.f32 1.0, %v569
  %v571 = vmul.f32 %v568, %v570
  %v572 = vadd.f32 %v568, %v571
  %vm573 = vweird.f32 %v474
  %vm574 = vweird.f32 %v568
  %vm575 = vmor %vm573, %vm574
  %v576 = vsel %vm575, %v568, %v572
  %v577 = vand.u32 2147483647, %v474
  %vm578 = vcmp.eq.f32.partialorder %v577, 8.507059e+37
  %v579 = vand.u32 %v474, 2147483648
  %v580 = vor.u32 1.1754944e-38, %v579
  %v581 = vsel %vm578, %v580, %v576
  %v582 = vmul.f32 1.0, %v581
  %v583 = vrcp.pop %v475
  %v584 = vmul.f32 %v475, %v583
  %v585 = vsub.f32 1.0, %v584
  %v586 = vmul.f32 %v583, %v585
  %v587 = vadd.f32 %v583, %v586
  %vm588 = vweird.f32 %v475
  %vm589 = vweird.f32 %v583
  %vm590 = vmor %vm588, %vm589
  %v591 = vsel %vm590, %v583, %v587
  %v592 = vand.u32 2147483647, %v475
  %vm593 = vcmp.eq.f32.partialorder %v592, 8.507059e+37
  %v594 = vand.u32 %v475, 2147483648
  %v595 = vor.u32 1.1754944e-38, %v594
  %v596 = vsel %vm593, %v595, %v591
  %v597 = vmul.f32 1.0, %v596
  %v598 = vrcp.pop %v476
  %v599 = vmul.f32 %v476, %v598
  %v600 = vsub.f32 1.0, %v599
  %v601 = vmul.f32 %v598, %v600
  %v602 = vadd.f32 %v598, %v601
  %vm603 = vweird.f32 %v476
  %vm604 = vweird.f32 %v598
  %vm605 = vmor %vm603, %vm604
  %v606 = vsel %vm605, %v598, %v602
  %v607 = vand.u32 2147483647, %v476
  %vm608 = vcmp.eq.f32.partialorder %v607, 8.507059e+37
  %v609 = vand.u32 %v476, 2147483648
  %v610 = vor.u32 1.1754944e-38, %v609
  %v611 = vsel %vm608, %v610, %v606
  %v612 = vmul.f32 1.0, %v611
  %v613 = vrcp.pop %v477
  %v614 = vmul.f32 %v477, %v613
  %v615 = vsub.f32 1.0, %v614
  %v616 = vmul.f32 %v613, %v615
  %v617 = vadd.f32 %v613, %v616
  %vm618 = vweird.f32 %v477
  %vm619 = vweird.f32 %v613
  %vm620 = vmor %vm618, %vm619
  %v621 = vsel %vm620, %v613, %v617
  %v622 = vand.u32 2147483647, %v477
  %vm623 = vcmp.eq.f32.partialorder %v622, 8.507059e+37
  %v624 = vand.u32 %v477, 2147483648
  %v625 = vor.u32 1.1754944e-38, %v624
  %v626 = vsel %vm623, %v625, %v621
  %v627 = vmul.f32 1.0, %v626
  %v628 = vmul.f32 %v428, %v492
  %v629 = vmul.f32 %v429, %v507
  %v630 = vmul.f32 %v430, %v522
  %v631 = vmul.f32 %v431, %v537
  %v632 = vmul.f32 %v432, %v552
  %v633 = vmul.f32 %v433, %v567
  %v634 = vmul.f32 %v434, %v582
  %v635 = vmul.f32 %v435, %v597
  %v636 = vmul.f32 %v436, %v612
  %v637 = vmul.f32 %v437, %v627
  %v638 = vpack.c.bf16 %v628, %v628
  %v639 = vpack.c.bf16 %v629, %v629
  %v640 = vpack.c.bf16 %v630, %v630
  %v641 = vpack.c.bf16 %v631, %v631
  %v642 = vpack.c.bf16 %v632, %v632
  %v643 = vpack.c.bf16 %v633, %v633
  %v644 = vpack.c.bf16 %v634, %v634
  %v645 = vpack.c.bf16 %v635, %v635
  %v646 = vpack.c.bf16 %v636, %v636
  %v647 = vpack.c.bf16 %v637, %v637
  %648 = vst [vmem:[%s3] sm:$0xf] %v638
  %649 = vst [vmem:[%s3 + $0x4] sm:$0xf] %v639
  %650 = vst [vmem:[%s3 + $0x8] sm:$0xf] %v640
  %651 = vst [vmem:[%s3 + $0xc] sm:$0xf] %v641
  %652 = vst [vmem:[%s3 + $0x10] sm:$0xf] %v642
  %653 = vst [vmem:[%s3 + $0x14] sm:$0xf] %v643
  %654 = vst [vmem:[%s3 + $0x18] sm:$0xf] %v644
  %655 = vst [vmem:[%s3 + $0x1c] sm:$0xf] %v645
  %656 = vst [vmem:[%s3 + $0x20] sm:$0xf] %v646
  %657 = vst [vmem:[%s3 + $0x24] sm:$0xf] %v647
  // Predicated region
  $region14: #{gated_generator_forward.50} parent=0 // pred_check
    _
  $region15: #{gated_generator_forward.50} parent=0 // pred_check_branch
    %659 = sbr.rel (0) target = $region17
  $region16: #{gated_generator_forward.50} parent=0 // pred_region
    _
  $region17: #{gated_generator_forward.50} parent=0 // pred_fallthru
    _
  // Predicated region
  $region18: #{gated_generator_forward.50} parent=0 // pred_check
    _
  $region19: #{gated_generator_forward.50} parent=0 // pred_check_branch
    %661 = sbr.rel (0) target = $region21
  $region20: #{gated_generator_forward.50} parent=0 // pred_region
    _
  $region21: #{gated_generator_forward.50} parent=0 // pred_fallthru
    _

// kernel: gated_generator_forward.51
$region0: #{gated_generator_forward.51}
  #allocation0 [shape = 'u32[]', space=smem, size = 0x4, offset = 0x4, fixed_abs, tag = 'smem constant byte address 0x4 - core index']
  #allocation1 [shape = 'u32[72,128]{1,0:T(1,128)}', space=vmem, size = 0x9000, scoped, tag = 'internal scratch']
  %s0 = inlined_call_operand.vmem [shape: bf16[32,512], index: 0, kind: input, shape index: {}]
  %s1 = inlined_call_operand.vmem [shape: bf16[512,256], index: 1, kind: input, shape index: {}]
  %s2 = inlined_call_operand.vmem [shape: f32[1,256], index: 2, kind: input, shape index: {}]
  %s3 = inlined_call_operand.vmem [shape: bf16[32,128], index: 3, kind: output, shape index: {}]
  %s4 = sld [smem:[#allocation0]]
  $region22: #{gated_generator_forward.51} parent=0
    _
  %s6 = ssub.s32 1, %s4
  %s7 = scalar_select 0, %s6, %s4
  // Predicated region
  $region2: #{gated_generator_forward.51} parent=0 // pred_check
    _
  $region3: #{gated_generator_forward.51} parent=0 // pred_check_branch
    %9 = sbr.rel (0) target = $region5
  $region4: #{gated_generator_forward.51} parent=0 // pred_region
    _
  $region5: #{gated_generator_forward.51} parent=0 // pred_fallthru
    _
  // Predicated region
  $region6: #{gated_generator_forward.51} parent=0 // pred_check
    _
  $region7: #{gated_generator_forward.51} parent=0 // pred_check_branch
    %11 = sbr.rel (0) target = $region9
  $region8: #{gated_generator_forward.51} parent=0 // pred_region
    _
  $region9: #{gated_generator_forward.51} parent=0 // pred_fallthru
    _
  // Predicated region
  $region10: #{gated_generator_forward.51} parent=0 // pred_check
    _
  $region11: #{gated_generator_forward.51} parent=0 // pred_check_branch
    %13 = sbr.rel (0) target = $region13
  $region12: #{gated_generator_forward.51} parent=0 // pred_region
    _
  $region13: #{gated_generator_forward.51} parent=0 // pred_fallthru
    _
  %v14 = vld [vmem:[%s0] sm:$0xff]
  %v15 = vld [vmem:[%s0 + $0x8] sm:$0xff]
  %v16 = vld [vmem:[%s0 + $0x10] sm:$0xff]
  %v17 = vld [vmem:[%s0 + $0x18] sm:$0xff]
  %v18 = vld [vmem:[%s0 + $0x20] sm:$0xff]
  %v19 = vld [vmem:[%s0 + $0x28] sm:$0xff]
  %v20 = vld [vmem:[%s0 + $0x30] sm:$0xff]
  %v21 = vld [vmem:[%s0 + $0x38] sm:$0xff]
  %v22 = vld [vmem:[%s1] sm:$0xff]
  %v23 = vld [vmem:[%s1 + $0x8] sm:$0xff]
  %v24 = vld [vmem:[%s1 + $0x10] sm:$0xff]
  %v25 = vld [vmem:[%s1 + $0x18] sm:$0xff]
  %v26 = vld [vmem:[%s1 + $0x20] sm:$0xff]
  %v27 = vld [vmem:[%s1 + $0x28] sm:$0xff]
  %v28 = vld [vmem:[%s1 + $0x30] sm:$0xff]
  %v29 = vld [vmem:[%s1 + $0x38] sm:$0xff]
  %v30 = vld [vmem:[%s1 + $0x40] sm:$0xff]
  %v31 = vld [vmem:[%s1 + $0x48] sm:$0xff]
  %v32 = vld [vmem:[%s1 + $0x50] sm:$0xff]
  %v33 = vld [vmem:[%s1 + $0x58] sm:$0xff]
  %v34 = vld [vmem:[%s1 + $0x60] sm:$0xff]
  %v35 = vld [vmem:[%s1 + $0x68] sm:$0xff]
  %v36 = vld [vmem:[%s1 + $0x70] sm:$0xff]
  %v37 = vld [vmem:[%s1 + $0x78] sm:$0xff]
  %v38 = vld [vmem:[%s1 + $0x80] sm:$0xff]
  %v39 = vld [vmem:[%s1 + $0x88] sm:$0xff]
  %v40 = vld [vmem:[%s1 + $0x90] sm:$0xff]
  %v41 = vld [vmem:[%s1 + $0x98] sm:$0xff]
  %v42 = vld [vmem:[%s1 + $0xa0] sm:$0xff]
  %v43 = vld [vmem:[%s1 + $0xa8] sm:$0xff]
  %v44 = vld [vmem:[%s1 + $0xb0] sm:$0xff]
  %v45 = vld [vmem:[%s1 + $0xb8] sm:$0xff]
  %v46 = vld [vmem:[%s1 + $0xc0] sm:$0xff]
  %v47 = vld [vmem:[%s1 + $0xc8] sm:$0xff]
  %v48 = vld [vmem:[%s1 + $0xd0] sm:$0xff]
  %v49 = vld [vmem:[%s1 + $0xd8] sm:$0xff]
  %v50 = vld [vmem:[%s1 + $0xe0] sm:$0xff]
  %v51 = vld [vmem:[%s1 + $0xe8] sm:$0xff]
  %v52 = vld [vmem:[%s1 + $0xf0] sm:$0xff]
  %v53 = vld [vmem:[%s1 + $0xf8] sm:$0xff]
  %v54 = vld [vmem:[%s1 + $0x100] sm:$0xff]
  %v55 = vld [vmem:[%s1 + $0x108] sm:$0xff]
  %v56 = vld [vmem:[%s1 + $0x110] sm:$0xff]
  %v57 = vld [vmem:[%s1 + $0x118] sm:$0xff]
  %v58 = vld [vmem:[%s1 + $0x120] sm:$0xff]
  %v59 = vld [vmem:[%s1 + $0x128] sm:$0xff]
  %v60 = vld [vmem:[%s1 + $0x130] sm:$0xff]
  %v61 = vld [vmem:[%s1 + $0x138] sm:$0xff]
  %v62 = vld [vmem:[%s1 + $0x140] sm:$0xff]
  %v63 = vld [vmem:[%s1 + $0x148] sm:$0xff]
  %v64 = vld [vmem:[%s1 + $0x150] sm:$0xff]
  %v65 = vld [vmem:[%s1 + $0x158] sm:$0xff]
  %v66 = vld [vmem:[%s1 + $0x160] sm:$0xff]
  %v67 = vld [vmem:[%s1 + $0x168] sm:$0xff]
  %v68 = vld [vmem:[%s1 + $0x170] sm:$0xff]
  %v69 = vld [vmem:[%s1 + $0x178] sm:$0xff]
  %v70 = vld [vmem:[%s1 + $0x180] sm:$0xff]
  %v71 = vld [vmem:[%s1 + $0x188] sm:$0xff]
  %v72 = vld [vmem:[%s1 + $0x190] sm:$0xff]
  %v73 = vld [vmem:[%s1 + $0x198] sm:$0xff]
  %v74 = vld [vmem:[%s1 + $0x1a0] sm:$0xff]
  %v75 = vld [vmem:[%s1 + $0x1a8] sm:$0xff]
  %v76 = vld [vmem:[%s1 + $0x1b0] sm:$0xff]
  %v77 = vld [vmem:[%s1 + $0x1b8] sm:$0xff]
  %v78 = vld [vmem:[%s1 + $0x1c0] sm:$0xff]
  %v79 = vld [vmem:[%s1 + $0x1c8] sm:$0xff]
  %v80 = vld [vmem:[%s1 + $0x1d0] sm:$0xff]
  %v81 = vld [vmem:[%s1 + $0x1d8] sm:$0xff]
  %v82 = vld [vmem:[%s1 + $0x1e0] sm:$0xff]
  %v83 = vld [vmem:[%s1 + $0x1e8] sm:$0xff]
  %v84 = vld [vmem:[%s1 + $0x1f0] sm:$0xff]
  %v85 = vld [vmem:[%s1 + $0x1f8] sm:$0xff]
  %v86 = vld [vmem:[%s2] sm:$0x3]
  %v88 = vperm.slane %v86, 0
  %v89 = vperm.slane %v86, 1
  %v100 = vunpack.c.l.b16 %v14
  %v101 = vunpack.c.h.b16 %v14
  %v102 = vunpack.c.l.b16 %v15
  %v103 = vunpack.c.h.b16 %v15
  %v104 = vunpack.c.l.b16 %v16
  %v105 = vunpack.c.h.b16 %v16
  %v106 = vunpack.c.l.b16 %v17
  %v107 = vunpack.c.h.b16 %v17
  %v108 = vunpack.c.l.b16 %v18
  %v109 = vunpack.c.h.b16 %v18
  %v110 = vunpack.c.l.b16 %v19
  %v111 = vunpack.c.h.b16 %v19
  %v112 = vunpack.c.l.b16 %v20
  %v113 = vunpack.c.h.b16 %v20
  %v114 = vunpack.c.l.b16 %v21
  %v115 = vunpack.c.h.b16 %v21
  %v116 = vpack.c.b16 %v104, %v100
  %v117 = vpack.c.b16 %v105, %v101
  %v118 = vpack.c.b16 %v106, %v102
  %v119 = vpack.c.b16 %v107, %v103
  %v120 = vpack.c.b16 %v112, %v108
  %v121 = vpack.c.b16 %v113, %v109
  %v122 = vpack.c.b16 %v114, %v110
  %v123 = vpack.c.b16 %v115, %v111
  %v196 = vunpack.c.l.b16 %v22
  %v197 = vunpack.c.h.b16 %v22
  %v198 = vunpack.c.l.b16 %v23
  %v199 = vunpack.c.h.b16 %v23
  %v200 = vunpack.c.l.b16 %v24
  %v201 = vunpack.c.h.b16 %v24
  %v202 = vunpack.c.l.b16 %v25
  %v203 = vunpack.c.h.b16 %v25
  %v204 = vunpack.c.l.b16 %v26
  %v205 = vunpack.c.h.b16 %v26
  %v206 = vunpack.c.l.b16 %v27
  %v207 = vunpack.c.h.b16 %v27
  %v208 = vunpack.c.l.b16 %v28
  %v209 = vunpack.c.h.b16 %v28
  %v210 = vunpack.c.l.b16 %v29
  %v211 = vunpack.c.h.b16 %v29
  %v212 = vunpack.c.l.b16 %v30
  %v213 = vunpack.c.h.b16 %v30
  %v214 = vunpack.c.l.b16 %v31
  %v215 = vunpack.c.h.b16 %v31
  %v216 = vunpack.c.l.b16 %v32
  %v217 = vunpack.c.h.b16 %v32
  %v218 = vunpack.c.l.b16 %v33
  %v219 = vunpack.c.h.b16 %v33
  %v220 = vunpack.c.l.b16 %v34
  %v221 = vunpack.c.h.b16 %v34
  %v222 = vunpack.c.l.b16 %v35
  %v223 = vunpack.c.h.b16 %v35
  %v224 = vunpack.c.l.b16 %v36
  %v225 = vunpack.c.h.b16 %v36
  %v226 = vunpack.c.l.b16 %v37
  %v227 = vunpack.c.h.b16 %v37
  %v228 = vunpack.c.l.b16 %v38
  %v229 = vunpack.c.h.b16 %v38
  %v230 = vunpack.c.l.b16 %v39
  %v231 = vunpack.c.h.b16 %v39
  %v232 = vunpack.c.l.b16 %v40
  %v233 = vunpack.c.h.b16 %v40
  %v234 = vunpack.c.l.b16 %v41
  %v235 = vunpack.c.h.b16 %v41
  %v236 = vunpack.c.l.b16 %v42
  %v237 = vunpack.c.h.b16 %v42
  %v238 = vunpack.c.l.b16 %v43
  %v239 = vunpack.c.h.b16 %v43
  %v240 = vunpack.c.l.b16 %v44
  %v241 = vunpack.c.h.b16 %v44
  %v242 = vunpack.c.l.b16 %v45
  %v243 = vunpack.c.h.b16 %v45
  %v244 = vunpack.c.l.b16 %v46
  %v245 = vunpack.c.h.b16 %v46
  %v246 = vunpack.c.l.b16 %v47
  %v247 = vunpack.c.h.b16 %v47
  %v248 = vunpack.c.l.b16 %v48
  %v249 = vunpack.c.h.b16 %v48
  %v250 = vunpack.c.l.b16 %v49
  %v251 = vunpack.c.h.b16 %v49
  %v252 = vunpack.c.l.b16 %v50
  %v253 = vunpack.c.h.b16 %v50
  %v254 = vunpack.c.l.b16 %v51
  %v255 = vunpack.c.h.b16 %v51
  %v256 = vunpack.c.l.b16 %v52
  %v257 = vunpack.c.h.b16 %v52
  %v258 = vunpack.c.l.b16 %v53
  %v259 = vunpack.c.h.b16 %v53
  %v260 = vunpack.c.l.b16 %v54
  %v261 = vunpack.c.h.b16 %v54
  %v262 = vunpack.c.l.b16 %v55
  %v263 = vunpack.c.h.b16 %v55
  %v264 = vunpack.c.l.b16 %v56
  %v265 = vunpack.c.h.b16 %v56
  %v266 = vunpack.c.l.b16 %v57
  %v267 = vunpack.c.h.b16 %v57
  %v268 = vunpack.c.l.b16 %v58
  %v269 = vunpack.c.h.b16 %v58
  %v270 = vunpack.c.l.b16 %v59
  %v271 = vunpack.c.h.b16 %v59
  %v272 = vunpack.c.l.b16 %v60
  %v273 = vunpack.c.h.b16 %v60
  %v274 = vunpack.c.l.b16 %v61
  %v275 = vunpack.c.h.b16 %v61
  %v276 = vunpack.c.l.b16 %v62
  %v277 = vunpack.c.h.b16 %v62
  %v278 = vunpack.c.l.b16 %v63
  %v279 = vunpack.c.h.b16 %v63
  %v280 = vunpack.c.l.b16 %v64
  %v281 = vunpack.c.h.b16 %v64
  %v282 = vunpack.c.l.b16 %v65
  %v283 = vunpack.c.h.b16 %v65
  %v284 = vunpack.c.l.b16 %v66
  %v285 = vunpack.c.h.b16 %v66
  %v286 = vunpack.c.l.b16 %v67
  %v287 = vunpack.c.h.b16 %v67
  %v288 = vunpack.c.l.b16 %v68
  %v289 = vunpack.c.h.b16 %v68
  %v290 = vunpack.c.l.b16 %v69
  %v291 = vunpack.c.h.b16 %v69
  %v292 = vunpack.c.l.b16 %v70
  %v293 = vunpack.c.h.b16 %v70
  %v294 = vunpack.c.l.b16 %v71
  %v295 = vunpack.c.h.b16 %v71
  %v296 = vunpack.c.l.b16 %v72
  %v297 = vunpack.c.h.b16 %v72
  %v298 = vunpack.c.l.b16 %v73
  %v299 = vunpack.c.h.b16 %v73
  %v300 = vunpack.c.l.b16 %v74
  %v301 = vunpack.c.h.b16 %v74
  %v302 = vunpack.c.l.b16 %v75
  %v303 = vunpack.c.h.b16 %v75
  %v304 = vunpack.c.l.b16 %v76
  %v305 = vunpack.c.h.b16 %v76
  %v306 = vunpack.c.l.b16 %v77
  %v307 = vunpack.c.h.b16 %v77
  %v308 = vunpack.c.l.b16 %v78
  %v309 = vunpack.c.h.b16 %v78
  %v310 = vunpack.c.l.b16 %v79
  %v311 = vunpack.c.h.b16 %v79
  %v312 = vunpack.c.l.b16 %v80
  %v313 = vunpack.c.h.b16 %v80
  %v314 = vunpack.c.l.b16 %v81
  %v315 = vunpack.c.h.b16 %v81
  %v316 = vunpack.c.l.b16 %v82
  %v317 = vunpack.c.h.b16 %v82
  %v318 = vunpack.c.l.b16 %v83
  %v319 = vunpack.c.h.b16 %v83
  %v320 = vunpack.c.l.b16 %v84
  %v321 = vunpack.c.h.b16 %v84
  %v322 = vunpack.c.l.b16 %v85
  %v323 = vunpack.c.h.b16 %v85
  %v324 = vpack.c.b16 %v198, %v196
  %v325 = vpack.c.b16 %v199, %v197
  %v326 = vpack.c.b16 %v202, %v200
  %v327 = vpack.c.b16 %v203, %v201
  %v328 = vpack.c.b16 %v206, %v204
  %v329 = vpack.c.b16 %v207, %v205
  %v330 = vpack.c.b16 %v210, %v208
  %v331 = vpack.c.b16 %v211, %v209
  %v332 = vpack.c.b16 %v214, %v212
  %v333 = vpack.c.b16 %v215, %v213
  %v334 = vpack.c.b16 %v218, %v216
  %v335 = vpack.c.b16 %v219, %v217
  %v336 = vpack.c.b16 %v222, %v220
  %v337 = vpack.c.b16 %v223, %v221
  %v338 = vpack.c.b16 %v226, %v224
  %v339 = vpack.c.b16 %v227, %v225
  %v340 = vpack.c.b16 %v230, %v228
  %v341 = vpack.c.b16 %v231, %v229
  %v342 = vpack.c.b16 %v234, %v232
  %v343 = vpack.c.b16 %v235, %v233
  %v344 = vpack.c.b16 %v238, %v236
  %v345 = vpack.c.b16 %v239, %v237
  %v346 = vpack.c.b16 %v242, %v240
  %v347 = vpack.c.b16 %v243, %v241
  %v348 = vpack.c.b16 %v246, %v244
  %v349 = vpack.c.b16 %v247, %v245
  %v350 = vpack.c.b16 %v250, %v248
  %v351 = vpack.c.b16 %v251, %v249
  %v352 = vpack.c.b16 %v254, %v252
  %v353 = vpack.c.b16 %v255, %v253
  %v354 = vpack.c.b16 %v258, %v256
  %v355 = vpack.c.b16 %v259, %v257
  %v356 = vpack.c.b16 %v262, %v260
  %v357 = vpack.c.b16 %v263, %v261
  %v358 = vpack.c.b16 %v266, %v264
  %v359 = vpack.c.b16 %v267, %v265
  %v360 = vpack.c.b16 %v270, %v268
  %v361 = vpack.c.b16 %v271, %v269
  %v362 = vpack.c.b16 %v274, %v272
  %v363 = vpack.c.b16 %v275, %v273
  %v364 = vpack.c.b16 %v278, %v276
  %v365 = vpack.c.b16 %v279, %v277
  %v366 = vpack.c.b16 %v282, %v280
  %v367 = vpack.c.b16 %v283, %v281
  %v368 = vpack.c.b16 %v286, %v284
  %v369 = vpack.c.b16 %v287, %v285
  %v370 = vpack.c.b16 %v290, %v288
  %v371 = vpack.c.b16 %v291, %v289
  %v372 = vpack.c.b16 %v294, %v292
  %v373 = vpack.c.b16 %v295, %v293
  %v374 = vpack.c.b16 %v298, %v296
  %v375 = vpack.c.b16 %v299, %v297
  %v376 = vpack.c.b16 %v302, %v300
  %v377 = vpack.c.b16 %v303, %v301
  %v378 = vpack.c.b16 %v306, %v304
  %v379 = vpack.c.b16 %v307, %v305
  %v380 = vpack.c.b16 %v310, %v308
  %v381 = vpack.c.b16 %v311, %v309
  %v382 = vpack.c.b16 %v314, %v312
  %v383 = vpack.c.b16 %v315, %v313
  %v384 = vpack.c.b16 %v318, %v316
  %v385 = vpack.c.b16 %v319, %v317
  %v386 = vpack.c.b16 %v322, %v320
  %v387 = vpack.c.b16 %v323, %v321
  %452 = vmatpush.bf16.msra.mxu0 %v338
  %453 = vmatpush.bf16.msra.mxu0 %v336
  %454 = vmatpush.bf16.msra.mxu0 %v334
  %455 = vmatpush.bf16.msra.mxu0 %v332
  %456 = vmatpush.bf16.msra.mxu0 %v330
  %457 = vmatpush.bf16.msra.mxu0 %v328
  %458 = vmatpush.bf16.msra.mxu0 %v326
  %459 = vmatpush.bf16.msra.mxu0 %v324
  %460 = vmatmul.bf16.gmra.mxu0 %v116
  %v461 = vpop.f32.mrf.mxu0
  %v462 = vadd.f32 %v88, %v461
  %v463 = vpop.f32.mrf.mxu0
  %v464 = vadd.f32 %v88, %v463
  %465 = vmatmul.bf16.gmra.mxu0 %v120
  %v466 = vpop.f32.mrf.mxu0
  %v467 = vadd.f32 %v88, %v466
  %v468 = vpop.f32.mrf.mxu0
  %v469 = vadd.f32 %v88, %v468
  %470 = vdwg.mxu0
  %471 = vmatpush.bf16.msra.mxu0 %v354
  %472 = vmatpush.bf16.msra.mxu0 %v352
  %473 = vmatpush.bf16.msra.mxu0 %v350
  %474 = vmatpush.bf16.msra.mxu0 %v348
  %475 = vmatpush.bf16.msra.mxu0 %v346
  %476 = vmatpush.bf16.msra.mxu0 %v344
  %477 = vmatpush.bf16.msra.mxu0 %v342
  %478 = vmatpush.bf16.msra.mxu0 %v340
  %479 = vmatmul.bf16.gmra.mxu0 %v117
  %v480 = vpop.f32.mrf.mxu0
  %v481 = vadd.f32 %v462, %v480
  %v482 = vpop.f32.mrf.mxu0
  %v483 = vadd.f32 %v464, %v482
  %484 = vmatmul.bf16.gmra.mxu0 %v121
  %v485 = vpop.f32.mrf.mxu0
  %v486 = vadd.f32 %v467, %v485
  %v487 = vpop.f32.mrf.mxu0
  %v488 = vadd.f32 %v469, %v487
  %489 = vdwg.mxu0
  %490 = vmatpush.bf16.msra.mxu0 %v370
  %491 = vmatpush.bf16.msra.mxu0 %v368
  %492 = vmatpush.bf16.msra.mxu0 %v366
  %493 = vmatpush.bf16.msra.mxu0 %v364
  %494 = vmatpush.bf16.msra.mxu0 %v362
  %495 = vmatpush.bf16.msra.mxu0 %v360
  %496 = vmatpush.bf16.msra.mxu0 %v358
  %497 = vmatpush.bf16.msra.mxu0 %v356
  %498 = vmatmul.bf16.gmra.mxu0 %v118
  %v499 = vpop.f32.mrf.mxu0
  %v500 = vadd.f32 %v481, %v499
  %v501 = vpop.f32.mrf.mxu0
  %v502 = vadd.f32 %v483, %v501
  %503 = vmatmul.bf16.gmra.mxu0 %v122
  %v504 = vpop.f32.mrf.mxu0
  %v505 = vadd.f32 %v486, %v504
  %v506 = vpop.f32.mrf.mxu0
  %v507 = vadd.f32 %v488, %v506
  %508 = vdwg.mxu0
  %509 = vmatpush.bf16.msra.mxu0 %v386
  %510 = vmatpush.bf16.msra.mxu0 %v384
  %511 = vmatpush.bf16.msra.mxu0 %v382
  %512 = vmatpush.bf16.msra.mxu0 %v380
  %513 = vmatpush.bf16.msra.mxu0 %v378
  %514 = vmatpush.bf16.msra.mxu0 %v376
  %515 = vmatpush.bf16.msra.mxu0 %v374
  %516 = vmatpush.bf16.msra.mxu0 %v372
  %517 = vmatmul.bf16.gmra.mxu0 %v119
  %v518 = vpop.f32.mrf.mxu0
  %v519 = vadd.f32 %v500, %v518
  %v520 = vpop.f32.mrf.mxu0
  %v521 = vadd.f32 %v502, %v520
  %522 = vmatmul.bf16.gmra.mxu0 %v123
  %v523 = vpop.f32.mrf.mxu0
  %v524 = vadd.f32 %v505, %v523
  %v525 = vpop.f32.mrf.mxu0
  %v526 = vadd.f32 %v507, %v525
  %527 = vdwg.mxu0
  %528 = vmatpush.bf16.msra.mxu0 %v339
  %529 = vmatpush.bf16.msra.mxu0 %v337
  %530 = vmatpush.bf16.msra.mxu0 %v335
  %531 = vmatpush.bf16.msra.mxu0 %v333
  %532 = vmatpush.bf16.msra.mxu0 %v331
  %533 = vmatpush.bf16.msra.mxu0 %v329
  %534 = vmatpush.bf16.msra.mxu0 %v327
  %535 = vmatpush.bf16.msra.mxu0 %v325
  %536 = vmatmul.bf16.gmra.mxu0 %v116
  %v537 = vpop.f32.mrf.mxu0
  %v538 = vadd.f32 %v89, %v537
  %v539 = vpop.f32.mrf.mxu0
  %v540 = vadd.f32 %v89, %v539
  %541 = vmatmul.bf16.gmra.mxu0 %v120
  %v542 = vpop.f32.mrf.mxu0
  %v543 = vadd.f32 %v89, %v542
  %v544 = vpop.f32.mrf.mxu0
  %v545 = vadd.f32 %v89, %v544
  %546 = vdwg.mxu0
  %547 = vmatpush.bf16.msra.mxu0 %v355
  %548 = vmatpush.bf16.msra.mxu0 %v353
  %549 = vmatpush.bf16.msra.mxu0 %v351
  %550 = vmatpush.bf16.msra.mxu0 %v349
  %551 = vmatpush.bf16.msra.mxu0 %v347
  %552 = vmatpush.bf16.msra.mxu0 %v345
  %553 = vmatpush.bf16.msra.mxu0 %v343
  %554 = vmatpush.bf16.msra.mxu0 %v341
  %555 = vmatmul.bf16.gmra.mxu0 %v117
  %v556 = vpop.f32.mrf.mxu0
  %v557 = vadd.f32 %v538, %v556
  %v558 = vpop.f32.mrf.mxu0
  %v559 = vadd.f32 %v540, %v558
  %560 = vmatmul.bf16.gmra.mxu0 %v121
  %v561 = vpop.f32.mrf.mxu0
  %v562 = vadd.f32 %v543, %v561
  %v563 = vpop.f32.mrf.mxu0
  %v564 = vadd.f32 %v545, %v563
  %565 = vdwg.mxu0
  %566 = vmatpush.bf16.msra.mxu0 %v371
  %567 = vmatpush.bf16.msra.mxu0 %v369
  %568 = vmatpush.bf16.msra.mxu0 %v367
  %569 = vmatpush.bf16.msra.mxu0 %v365
  %570 = vmatpush.bf16.msra.mxu0 %v363
  %571 = vmatpush.bf16.msra.mxu0 %v361
  %572 = vmatpush.bf16.msra.mxu0 %v359
  %573 = vmatpush.bf16.msra.mxu0 %v357
  %574 = vmatmul.bf16.gmra.mxu0 %v118
  %v575 = vpop.f32.mrf.mxu0
  %v576 = vadd.f32 %v557, %v575
  %v577 = vpop.f32.mrf.mxu0
  %v578 = vadd.f32 %v559, %v577
  %579 = vmatmul.bf16.gmra.mxu0 %v122
  %v580 = vpop.f32.mrf.mxu0
  %v581 = vadd.f32 %v562, %v580
  %v582 = vpop.f32.mrf.mxu0
  %v583 = vadd.f32 %v564, %v582
  %584 = vdwg.mxu0
  %585 = vmatpush.bf16.msra.mxu0 %v387
  %586 = vmatpush.bf16.msra.mxu0 %v385
  %587 = vmatpush.bf16.msra.mxu0 %v383
  %588 = vmatpush.bf16.msra.mxu0 %v381
  %589 = vmatpush.bf16.msra.mxu0 %v379
  %590 = vmatpush.bf16.msra.mxu0 %v377
  %591 = vmatpush.bf16.msra.mxu0 %v375
  %592 = vmatpush.bf16.msra.mxu0 %v373
  %593 = vmatmul.bf16.gmra.mxu0 %v119
  %v594 = vpop.f32.mrf.mxu0
  %v595 = vadd.f32 %v576, %v594
  %v596 = vpop.f32.mrf.mxu0
  %v597 = vadd.f32 %v578, %v596
  %598 = vmatmul.bf16.gmra.mxu0 %v123
  %v599 = vpop.f32.mrf.mxu0
  %v600 = vadd.f32 %v581, %v599
  %v601 = vpop.f32.mrf.mxu0
  %v602 = vadd.f32 %v583, %v601
  %603 = vdwg.mxu0
  %vm604 = vcmp.ge.f32.partialorder %v519, 0.0
  %vm605 = vcmp.ge.f32.partialorder %v521, 0.0
  %vm606 = vcmp.ge.f32.partialorder %v524, 0.0
  %vm607 = vcmp.ge.f32.partialorder %v526, 0.0
  %v608 = vmul.f32 %v519, 0.2
  %v609 = vmul.f32 %v521, 0.2
  %v610 = vmul.f32 %v524, 0.2
  %v611 = vmul.f32 %v526, 0.2
  %v612 = vsel %vm604, %v519, %v608
  %v613 = vsel %vm605, %v521, %v609
  %v614 = vsel %vm606, %v524, %v610
  %v615 = vsel %vm607, %v526, %v611
  %v616 = vxor.u32 %v595, 2147483648
  %v617 = vxor.u32 %v597, 2147483648
  %v618 = vxor.u32 %v600, 2147483648
  %v619 = vxor.u32 %v602, 2147483648
  %v620 = vmul.f32 %v616, 1.442695
  %v621 = vpow.pop %v620
  %v622 = vmul.f32 %v617, 1.442695
  %v623 = vpow.pop %v622
  %v624 = vmul.f32 %v618, 1.442695
  %v625 = vpow.pop %v624
  %v626 = vmul.f32 %v619, 1.442695
  %v627 = vpow.pop %v626
  %v628 = vadd.f32 %v621, 1.0
  %v629 = vadd.f32 %v623, 1.0
  %v630 = vadd.f32 %v625, 1.0
  %v631 = vadd.f32 %v627, 1.0
  %v632 = vrcp.pop %v628
  %v633 = vmul.f32 %v628, %v632
  %v634 = vsub.f32 1.0, %v633
  %v635 = vmul.f32 %v632, %v634
  %v636 = vadd.f32 %v632, %v635
  %vm637 = vweird.f32 %v628
  %vm638 = vweird.f32 %v632
  %vm639 = vmor %vm637, %vm638
  %v640 = vsel %vm639, %v632, %v636
  %v641 = vand.u32 2147483647, %v628
  %vm642 = vcmp.eq.f32.partialorder %v641, 8.507059e+37
  %v643 = vand.u32 %v628, 2147483648
  %v644 = vor.u32 1.1754944e-38, %v643
  %v645 = vsel %vm642, %v644, %v640
  %v646 = vmul.f32 1.0, %v645
  %v647 = vrcp.pop %v629
  %v648 = vmul.f32 %v629, %v647
  %v649 = vsub.f32 1.0, %v648
  %v650 = vmul.f32 %v647, %v649
  %v651 = vadd.f32 %v647, %v650
  %vm652 = vweird.f32 %v629
  %vm653 = vweird.f32 %v647
  %vm654 = vmor %vm652, %vm653
  %v655 = vsel %vm654, %v647, %v651
  %v656 = vand.u32 2147483647, %v629
  %vm657 = vcmp.eq.f32.partialorder %v656, 8.507059e+37
  %v658 = vand.u32 %v629, 2147483648
  %v659 = vor.u32 1.1754944e-38, %v658
  %v660 = vsel %vm657, %v659, %v655
  %v661 = vmul.f32 1.0, %v660
  %v662 = vrcp.pop %v630
  %v663 = vmul.f32 %v630, %v662
  %v664 = vsub.f32 1.0, %v663
  %v665 = vmul.f32 %v662, %v664
  %v666 = vadd.f32 %v662, %v665
  %vm667 = vweird.f32 %v630
  %vm668 = vweird.f32 %v662
  %vm669 = vmor %vm667, %vm668
  %v670 = vsel %vm669, %v662, %v666
  %v671 = vand.u32 2147483647, %v630
  %vm672 = vcmp.eq.f32.partialorder %v671, 8.507059e+37
  %v673 = vand.u32 %v630, 2147483648
  %v674 = vor.u32 1.1754944e-38, %v673
  %v675 = vsel %vm672, %v674, %v670
  %v676 = vmul.f32 1.0, %v675
  %v677 = vrcp.pop %v631
  %v678 = vmul.f32 %v631, %v677
  %v679 = vsub.f32 1.0, %v678
  %v680 = vmul.f32 %v677, %v679
  %v681 = vadd.f32 %v677, %v680
  %vm682 = vweird.f32 %v631
  %vm683 = vweird.f32 %v677
  %vm684 = vmor %vm682, %vm683
  %v685 = vsel %vm684, %v677, %v681
  %v686 = vand.u32 2147483647, %v631
  %vm687 = vcmp.eq.f32.partialorder %v686, 8.507059e+37
  %v688 = vand.u32 %v631, 2147483648
  %v689 = vor.u32 1.1754944e-38, %v688
  %v690 = vsel %vm687, %v689, %v685
  %v691 = vmul.f32 1.0, %v690
  %v692 = vmul.f32 %v612, %v646
  %v693 = vmul.f32 %v613, %v661
  %v694 = vmul.f32 %v614, %v676
  %v695 = vmul.f32 %v615, %v691
  %v696 = vpack.c.bf16 %v692, %v692
  %v697 = vpack.c.bf16 %v693, %v693
  %v698 = vpack.c.bf16 %v694, %v694
  %v699 = vpack.c.bf16 %v695, %v695
  %700 = vst [vmem:[%s3] sm:$0xf] %v696
  %701 = vst [vmem:[%s3 + $0x4] sm:$0xf] %v697
  %702 = vst [vmem:[%s3 + $0x8] sm:$0xf] %v698
  %703 = vst [vmem:[%s3 + $0xc] sm:$0xf] %v699
  // Predicated region
  $region14: #{gated_generator_forward.51} parent=0 // pred_check
    _
  $region15: #{gated_generator_forward.51} parent=0 // pred_check_branch
    %705 = sbr.rel (0) target = $region17
  $region16: #{gated_generator_forward.51} parent=0 // pred_region
    _
  $region17: #{gated_generator_forward.51} parent=0 // pred_fallthru
    _
  // Predicated region
  $region18: #{gated_generator_forward.51} parent=0 // pred_check
    _
  $region19: #{gated_generator_forward.51} parent=0 // pred_check_branch
    %707 = sbr.rel (0) target = $region21
  $region20: #{gated_generator_forward.51} parent=0 // pred_region
    _
  $region21: #{gated_generator_forward.51} parent=0 // pred_fallthru
    _

// kernel: gated_generator_forward.52
$region0: #{gated_generator_forward.52}
  #allocation0 [shape = 'u32[]', space=smem, size = 0x4, offset = 0x4, fixed_abs, tag = 'smem constant byte address 0x4 - core index']
  #allocation1 [shape = 'u32[72,128]{1,0:T(1,128)}', space=vmem, size = 0x9000, scoped, tag = 'internal scratch']
  %s0 = inlined_call_operand.vmem [shape: bf16[32,384], index: 0, kind: input, shape index: {}]
  %s1 = inlined_call_operand.vmem [shape: bf16[384,256], index: 1, kind: input, shape index: {}]
  %s2 = inlined_call_operand.vmem [shape: f32[1,256], index: 2, kind: input, shape index: {}]
  %s3 = inlined_call_operand.vmem [shape: bf16[32,128], index: 3, kind: output, shape index: {}]
  %s4 = sld [smem:[#allocation0]]
  $region22: #{gated_generator_forward.52} parent=0
    _
  %s6 = ssub.s32 1, %s4
  %s7 = scalar_select 0, %s6, %s4
  // Predicated region
  $region2: #{gated_generator_forward.52} parent=0 // pred_check
    _
  $region3: #{gated_generator_forward.52} parent=0 // pred_check_branch
    %9 = sbr.rel (0) target = $region5
  $region4: #{gated_generator_forward.52} parent=0 // pred_region
    _
  $region5: #{gated_generator_forward.52} parent=0 // pred_fallthru
    _
  // Predicated region
  $region6: #{gated_generator_forward.52} parent=0 // pred_check
    _
  $region7: #{gated_generator_forward.52} parent=0 // pred_check_branch
    %11 = sbr.rel (0) target = $region9
  $region8: #{gated_generator_forward.52} parent=0 // pred_region
    _
  $region9: #{gated_generator_forward.52} parent=0 // pred_fallthru
    _
  // Predicated region
  $region10: #{gated_generator_forward.52} parent=0 // pred_check
    _
  $region11: #{gated_generator_forward.52} parent=0 // pred_check_branch
    %13 = sbr.rel (0) target = $region13
  $region12: #{gated_generator_forward.52} parent=0 // pred_region
    _
  $region13: #{gated_generator_forward.52} parent=0 // pred_fallthru
    _
  %v14 = vld [vmem:[%s0] sm:$0xff]
  %v15 = vld [vmem:[%s0 + $0x8] sm:$0xf]
  %v16 = vld [vmem:[%s0 + $0xc] sm:$0xff]
  %v17 = vld [vmem:[%s0 + $0x14] sm:$0xf]
  %v18 = vld [vmem:[%s0 + $0x18] sm:$0xff]
  %v19 = vld [vmem:[%s0 + $0x20] sm:$0xf]
  %v20 = vld [vmem:[%s0 + $0x24] sm:$0xff]
  %v21 = vld [vmem:[%s0 + $0x2c] sm:$0xf]
  %v22 = vld [vmem:[%s1] sm:$0xff]
  %v23 = vld [vmem:[%s1 + $0x8] sm:$0xff]
  %v24 = vld [vmem:[%s1 + $0x10] sm:$0xff]
  %v25 = vld [vmem:[%s1 + $0x18] sm:$0xff]
  %v26 = vld [vmem:[%s1 + $0x20] sm:$0xff]
  %v27 = vld [vmem:[%s1 + $0x28] sm:$0xff]
  %v28 = vld [vmem:[%s1 + $0x30] sm:$0xff]
  %v29 = vld [vmem:[%s1 + $0x38] sm:$0xff]
  %v30 = vld [vmem:[%s1 + $0x40] sm:$0xff]
  %v31 = vld [vmem:[%s1 + $0x48] sm:$0xff]
  %v32 = vld [vmem:[%s1 + $0x50] sm:$0xff]
  %v33 = vld [vmem:[%s1 + $0x58] sm:$0xff]
  %v34 = vld [vmem:[%s1 + $0x60] sm:$0xff]
  %v35 = vld [vmem:[%s1 + $0x68] sm:$0xff]
  %v36 = vld [vmem:[%s1 + $0x70] sm:$0xff]
  %v37 = vld [vmem:[%s1 + $0x78] sm:$0xff]
  %v38 = vld [vmem:[%s1 + $0x80] sm:$0xff]
  %v39 = vld [vmem:[%s1 + $0x88] sm:$0xff]
  %v40 = vld [vmem:[%s1 + $0x90] sm:$0xff]
  %v41 = vld [vmem:[%s1 + $0x98] sm:$0xff]
  %v42 = vld [vmem:[%s1 + $0xa0] sm:$0xff]
  %v43 = vld [vmem:[%s1 + $0xa8] sm:$0xff]
  %v44 = vld [vmem:[%s1 + $0xb0] sm:$0xff]
  %v45 = vld [vmem:[%s1 + $0xb8] sm:$0xff]
  %v46 = vld [vmem:[%s1 + $0xc0] sm:$0xff]
  %v47 = vld [vmem:[%s1 + $0xc8] sm:$0xff]
  %v48 = vld [vmem:[%s1 + $0xd0] sm:$0xff]
  %v49 = vld [vmem:[%s1 + $0xd8] sm:$0xff]
  %v50 = vld [vmem:[%s1 + $0xe0] sm:$0xff]
  %v51 = vld [vmem:[%s1 + $0xe8] sm:$0xff]
  %v52 = vld [vmem:[%s1 + $0xf0] sm:$0xff]
  %v53 = vld [vmem:[%s1 + $0xf8] sm:$0xff]
  %v54 = vld [vmem:[%s1 + $0x100] sm:$0xff]
  %v55 = vld [vmem:[%s1 + $0x108] sm:$0xff]
  %v56 = vld [vmem:[%s1 + $0x110] sm:$0xff]
  %v57 = vld [vmem:[%s1 + $0x118] sm:$0xff]
  %v58 = vld [vmem:[%s1 + $0x120] sm:$0xff]
  %v59 = vld [vmem:[%s1 + $0x128] sm:$0xff]
  %v60 = vld [vmem:[%s1 + $0x130] sm:$0xff]
  %v61 = vld [vmem:[%s1 + $0x138] sm:$0xff]
  %v62 = vld [vmem:[%s1 + $0x140] sm:$0xff]
  %v63 = vld [vmem:[%s1 + $0x148] sm:$0xff]
  %v64 = vld [vmem:[%s1 + $0x150] sm:$0xff]
  %v65 = vld [vmem:[%s1 + $0x158] sm:$0xff]
  %v66 = vld [vmem:[%s1 + $0x160] sm:$0xff]
  %v67 = vld [vmem:[%s1 + $0x168] sm:$0xff]
  %v68 = vld [vmem:[%s1 + $0x170] sm:$0xff]
  %v69 = vld [vmem:[%s1 + $0x178] sm:$0xff]
  %v70 = vld [vmem:[%s2] sm:$0x3]
  %v72 = vperm.slane %v70, 0
  %v73 = vperm.slane %v70, 1
  %v84 = vunpack.c.l.b16 %v14
  %v85 = vunpack.c.h.b16 %v14
  %v86 = vunpack.c.l.b16 %v15
  %v87 = vunpack.c.l.b16 %v16
  %v88 = vunpack.c.h.b16 %v16
  %v89 = vunpack.c.l.b16 %v17
  %v90 = vunpack.c.l.b16 %v18
  %v91 = vunpack.c.h.b16 %v18
  %v92 = vunpack.c.l.b16 %v19
  %v93 = vunpack.c.l.b16 %v20
  %v94 = vunpack.c.h.b16 %v20
  %v95 = vunpack.c.l.b16 %v21
  %v96 = vpack.c.b16 %v87, %v84
  %v97 = vpack.c.b16 %v88, %v85
  %v98 = vpack.c.b16 %v89, %v86
  %v99 = vpack.c.b16 %v93, %v90
  %v100 = vpack.c.b16 %v94, %v91
  %v101 = vpack.c.b16 %v95, %v92
  %v156 = vunpack.c.l.b16 %v22
  %v157 = vunpack.c.h.b16 %v22
  %v158 = vunpack.c.l.b16 %v23
  %v159 = vunpack.c.h.b16 %v23
  %v160 = vunpack.c.l.b16 %v24
  %v161 = vunpack.c.h.b16 %v24
  %v162 = vunpack.c.l.b16 %v25
  %v163 = vunpack.c.h.b16 %v25
  %v164 = vunpack.c.l.b16 %v26
  %v165 = vunpack.c.h.b16 %v26
  %v166 = vunpack.c.l.b16 %v27
  %v167 = vunpack.c.h.b16 %v27
  %v168 = vunpack.c.l.b16 %v28
  %v169 = vunpack.c.h.b16 %v28
  %v170 = vunpack.c.l.b16 %v29
  %v171 = vunpack.c.h.b16 %v29
  %v172 = vunpack.c.l.b16 %v30
  %v173 = vunpack.c.h.b16 %v30
  %v174 = vunpack.c.l.b16 %v31
  %v175 = vunpack.c.h.b16 %v31
  %v176 = vunpack.c.l.b16 %v32
  %v177 = vunpack.c.h.b16 %v32
  %v178 = vunpack.c.l.b16 %v33
  %v179 = vunpack.c.h.b16 %v33
  %v180 = vunpack.c.l.b16 %v34
  %v181 = vunpack.c.h.b16 %v34
  %v182 = vunpack.c.l.b16 %v35
  %v183 = vunpack.c.h.b16 %v35
  %v184 = vunpack.c.l.b16 %v36
  %v185 = vunpack.c.h.b16 %v36
  %v186 = vunpack.c.l.b16 %v37
  %v187 = vunpack.c.h.b16 %v37
  %v188 = vunpack.c.l.b16 %v38
  %v189 = vunpack.c.h.b16 %v38
  %v190 = vunpack.c.l.b16 %v39
  %v191 = vunpack.c.h.b16 %v39
  %v192 = vunpack.c.l.b16 %v40
  %v193 = vunpack.c.h.b16 %v40
  %v194 = vunpack.c.l.b16 %v41
  %v195 = vunpack.c.h.b16 %v41
  %v196 = vunpack.c.l.b16 %v42
  %v197 = vunpack.c.h.b16 %v42
  %v198 = vunpack.c.l.b16 %v43
  %v199 = vunpack.c.h.b16 %v43
  %v200 = vunpack.c.l.b16 %v44
  %v201 = vunpack.c.h.b16 %v44
  %v202 = vunpack.c.l.b16 %v45
  %v203 = vunpack.c.h.b16 %v45
  %v204 = vunpack.c.l.b16 %v46
  %v205 = vunpack.c.h.b16 %v46
  %v206 = vunpack.c.l.b16 %v47
  %v207 = vunpack.c.h.b16 %v47
  %v208 = vunpack.c.l.b16 %v48
  %v209 = vunpack.c.h.b16 %v48
  %v210 = vunpack.c.l.b16 %v49
  %v211 = vunpack.c.h.b16 %v49
  %v212 = vunpack.c.l.b16 %v50
  %v213 = vunpack.c.h.b16 %v50
  %v214 = vunpack.c.l.b16 %v51
  %v215 = vunpack.c.h.b16 %v51
  %v216 = vunpack.c.l.b16 %v52
  %v217 = vunpack.c.h.b16 %v52
  %v218 = vunpack.c.l.b16 %v53
  %v219 = vunpack.c.h.b16 %v53
  %v220 = vunpack.c.l.b16 %v54
  %v221 = vunpack.c.h.b16 %v54
  %v222 = vunpack.c.l.b16 %v55
  %v223 = vunpack.c.h.b16 %v55
  %v224 = vunpack.c.l.b16 %v56
  %v225 = vunpack.c.h.b16 %v56
  %v226 = vunpack.c.l.b16 %v57
  %v227 = vunpack.c.h.b16 %v57
  %v228 = vunpack.c.l.b16 %v58
  %v229 = vunpack.c.h.b16 %v58
  %v230 = vunpack.c.l.b16 %v59
  %v231 = vunpack.c.h.b16 %v59
  %v232 = vunpack.c.l.b16 %v60
  %v233 = vunpack.c.h.b16 %v60
  %v234 = vunpack.c.l.b16 %v61
  %v235 = vunpack.c.h.b16 %v61
  %v236 = vunpack.c.l.b16 %v62
  %v237 = vunpack.c.h.b16 %v62
  %v238 = vunpack.c.l.b16 %v63
  %v239 = vunpack.c.h.b16 %v63
  %v240 = vunpack.c.l.b16 %v64
  %v241 = vunpack.c.h.b16 %v64
  %v242 = vunpack.c.l.b16 %v65
  %v243 = vunpack.c.h.b16 %v65
  %v244 = vunpack.c.l.b16 %v66
  %v245 = vunpack.c.h.b16 %v66
  %v246 = vunpack.c.l.b16 %v67
  %v247 = vunpack.c.h.b16 %v67
  %v248 = vunpack.c.l.b16 %v68
  %v249 = vunpack.c.h.b16 %v68
  %v250 = vunpack.c.l.b16 %v69
  %v251 = vunpack.c.h.b16 %v69
  %v252 = vpack.c.b16 %v158, %v156
  %v253 = vpack.c.b16 %v159, %v157
  %v254 = vpack.c.b16 %v162, %v160
  %v255 = vpack.c.b16 %v163, %v161
  %v256 = vpack.c.b16 %v166, %v164
  %v257 = vpack.c.b16 %v167, %v165
  %v258 = vpack.c.b16 %v170, %v168
  %v259 = vpack.c.b16 %v171, %v169
  %v260 = vpack.c.b16 %v174, %v172
  %v261 = vpack.c.b16 %v175, %v173
  %v262 = vpack.c.b16 %v178, %v176
  %v263 = vpack.c.b16 %v179, %v177
  %v264 = vpack.c.b16 %v182, %v180
  %v265 = vpack.c.b16 %v183, %v181
  %v266 = vpack.c.b16 %v186, %v184
  %v267 = vpack.c.b16 %v187, %v185
  %v268 = vpack.c.b16 %v190, %v188
  %v269 = vpack.c.b16 %v191, %v189
  %v270 = vpack.c.b16 %v194, %v192
  %v271 = vpack.c.b16 %v195, %v193
  %v272 = vpack.c.b16 %v198, %v196
  %v273 = vpack.c.b16 %v199, %v197
  %v274 = vpack.c.b16 %v202, %v200
  %v275 = vpack.c.b16 %v203, %v201
  %v276 = vpack.c.b16 %v206, %v204
  %v277 = vpack.c.b16 %v207, %v205
  %v278 = vpack.c.b16 %v210, %v208
  %v279 = vpack.c.b16 %v211, %v209
  %v280 = vpack.c.b16 %v214, %v212
  %v281 = vpack.c.b16 %v215, %v213
  %v282 = vpack.c.b16 %v218, %v216
  %v283 = vpack.c.b16 %v219, %v217
  %v284 = vpack.c.b16 %v222, %v220
  %v285 = vpack.c.b16 %v223, %v221
  %v286 = vpack.c.b16 %v226, %v224
  %v287 = vpack.c.b16 %v227, %v225
  %v288 = vpack.c.b16 %v230, %v228
  %v289 = vpack.c.b16 %v231, %v229
  %v290 = vpack.c.b16 %v234, %v232
  %v291 = vpack.c.b16 %v235, %v233
  %v292 = vpack.c.b16 %v238, %v236
  %v293 = vpack.c.b16 %v239, %v237
  %v294 = vpack.c.b16 %v242, %v240
  %v295 = vpack.c.b16 %v243, %v241
  %v296 = vpack.c.b16 %v246, %v244
  %v297 = vpack.c.b16 %v247, %v245
  %v298 = vpack.c.b16 %v250, %v248
  %v299 = vpack.c.b16 %v251, %v249
  %348 = vmatpush.bf16.msra.mxu0 %v266
  %349 = vmatpush.bf16.msra.mxu0 %v264
  %350 = vmatpush.bf16.msra.mxu0 %v262
  %351 = vmatpush.bf16.msra.mxu0 %v260
  %352 = vmatpush.bf16.msra.mxu0 %v258
  %353 = vmatpush.bf16.msra.mxu0 %v256
  %354 = vmatpush.bf16.msra.mxu0 %v254
  %355 = vmatpush.bf16.msra.mxu0 %v252
  %356 = vmatmul.bf16.gmra.mxu0 %v96
  %v357 = vpop.f32.mrf.mxu0
  %v358 = vadd.f32 %v72, %v357
  %v359 = vpop.f32.mrf.mxu0
  %v360 = vadd.f32 %v72, %v359
  %361 = vmatmul.bf16.gmra.mxu0 %v99
  %v362 = vpop.f32.mrf.mxu0
  %v363 = vadd.f32 %v72, %v362
  %v364 = vpop.f32.mrf.mxu0
  %v365 = vadd.f32 %v72, %v364
  %366 = vdwg.mxu0
  %367 = vmatpush.bf16.msra.mxu0 %v282
  %368 = vmatpush.bf16.msra.mxu0 %v280
  %369 = vmatpush.bf16.msra.mxu0 %v278
  %370 = vmatpush.bf16.msra.mxu0 %v276
  %371 = vmatpush.bf16.msra.mxu0 %v274
  %372 = vmatpush.bf16.msra.mxu0 %v272
  %373 = vmatpush.bf16.msra.mxu0 %v270
  %374 = vmatpush.bf16.msra.mxu0 %v268
  %375 = vmatmul.bf16.gmra.mxu0 %v97
  %v376 = vpop.f32.mrf.mxu0
  %v377 = vadd.f32 %v358, %v376
  %v378 = vpop.f32.mrf.mxu0
  %v379 = vadd.f32 %v360, %v378
  %380 = vmatmul.bf16.gmra.mxu0 %v100
  %v381 = vpop.f32.mrf.mxu0
  %v382 = vadd.f32 %v363, %v381
  %v383 = vpop.f32.mrf.mxu0
  %v384 = vadd.f32 %v365, %v383
  %385 = vdwg.mxu0
  %386 = vmatpush.bf16.msra.mxu0 %v298
  %387 = vmatpush.bf16.msra.mxu0 %v296
  %388 = vmatpush.bf16.msra.mxu0 %v294
  %389 = vmatpush.bf16.msra.mxu0 %v292
  %390 = vmatpush.bf16.msra.mxu0 %v290
  %391 = vmatpush.bf16.msra.mxu0 %v288
  %392 = vmatpush.bf16.msra.mxu0 %v286
  %393 = vmatpush.bf16.msra.mxu0 %v284
  %394 = vmatmul.bf16.gmra.mxu0 %v98
  %v395 = vpop.f32.mrf.mxu0
  %v396 = vadd.f32 %v377, %v395
  %v397 = vpop.f32.mrf.mxu0
  %v398 = vadd.f32 %v379, %v397
  %399 = vmatmul.bf16.gmra.mxu0 %v101
  %v400 = vpop.f32.mrf.mxu0
  %v401 = vadd.f32 %v382, %v400
  %v402 = vpop.f32.mrf.mxu0
  %v403 = vadd.f32 %v384, %v402
  %404 = vdwg.mxu0
  %405 = vmatpush.bf16.msra.mxu0 %v267
  %406 = vmatpush.bf16.msra.mxu0 %v265
  %407 = vmatpush.bf16.msra.mxu0 %v263
  %408 = vmatpush.bf16.msra.mxu0 %v261
  %409 = vmatpush.bf16.msra.mxu0 %v259
  %410 = vmatpush.bf16.msra.mxu0 %v257
  %411 = vmatpush.bf16.msra.mxu0 %v255
  %412 = vmatpush.bf16.msra.mxu0 %v253
  %413 = vmatmul.bf16.gmra.mxu0 %v96
  %v414 = vpop.f32.mrf.mxu0
  %v415 = vadd.f32 %v73, %v414
  %v416 = vpop.f32.mrf.mxu0
  %v417 = vadd.f32 %v73, %v416
  %418 = vmatmul.bf16.gmra.mxu0 %v99
  %v419 = vpop.f32.mrf.mxu0
  %v420 = vadd.f32 %v73, %v419
  %v421 = vpop.f32.mrf.mxu0
  %v422 = vadd.f32 %v73, %v421
  %423 = vdwg.mxu0
  %424 = vmatpush.bf16.msra.mxu0 %v283
  %425 = vmatpush.bf16.msra.mxu0 %v281
  %426 = vmatpush.bf16.msra.mxu0 %v279
  %427 = vmatpush.bf16.msra.mxu0 %v277
  %428 = vmatpush.bf16.msra.mxu0 %v275
  %429 = vmatpush.bf16.msra.mxu0 %v273
  %430 = vmatpush.bf16.msra.mxu0 %v271
  %431 = vmatpush.bf16.msra.mxu0 %v269
  %432 = vmatmul.bf16.gmra.mxu0 %v97
  %v433 = vpop.f32.mrf.mxu0
  %v434 = vadd.f32 %v415, %v433
  %v435 = vpop.f32.mrf.mxu0
  %v436 = vadd.f32 %v417, %v435
  %437 = vmatmul.bf16.gmra.mxu0 %v100
  %v438 = vpop.f32.mrf.mxu0
  %v439 = vadd.f32 %v420, %v438
  %v440 = vpop.f32.mrf.mxu0
  %v441 = vadd.f32 %v422, %v440
  %442 = vdwg.mxu0
  %443 = vmatpush.bf16.msra.mxu0 %v299
  %444 = vmatpush.bf16.msra.mxu0 %v297
  %445 = vmatpush.bf16.msra.mxu0 %v295
  %446 = vmatpush.bf16.msra.mxu0 %v293
  %447 = vmatpush.bf16.msra.mxu0 %v291
  %448 = vmatpush.bf16.msra.mxu0 %v289
  %449 = vmatpush.bf16.msra.mxu0 %v287
  %450 = vmatpush.bf16.msra.mxu0 %v285
  %451 = vmatmul.bf16.gmra.mxu0 %v98
  %v452 = vpop.f32.mrf.mxu0
  %v453 = vadd.f32 %v434, %v452
  %v454 = vpop.f32.mrf.mxu0
  %v455 = vadd.f32 %v436, %v454
  %456 = vmatmul.bf16.gmra.mxu0 %v101
  %v457 = vpop.f32.mrf.mxu0
  %v458 = vadd.f32 %v439, %v457
  %v459 = vpop.f32.mrf.mxu0
  %v460 = vadd.f32 %v441, %v459
  %461 = vdwg.mxu0
  %vm462 = vcmp.ge.f32.partialorder %v396, 0.0
  %vm463 = vcmp.ge.f32.partialorder %v398, 0.0
  %vm464 = vcmp.ge.f32.partialorder %v401, 0.0
  %vm465 = vcmp.ge.f32.partialorder %v403, 0.0
  %v466 = vmul.f32 %v396, 0.2
  %v467 = vmul.f32 %v398, 0.2
  %v468 = vmul.f32 %v401, 0.2
  %v469 = vmul.f32 %v403, 0.2
  %v470 = vsel %vm462, %v396, %v466
  %v471 = vsel %vm463, %v398, %v467
  %v472 = vsel %vm464, %v401, %v468
  %v473 = vsel %vm465, %v403, %v469
  %v474 = vxor.u32 %v453, 2147483648
  %v475 = vxor.u32 %v455, 2147483648
  %v476 = vxor.u32 %v458, 2147483648
  %v477 = vxor.u32 %v460, 2147483648
  %v478 = vmul.f32 %v474, 1.442695
  %v479 = vpow.pop %v478
  %v480 = vmul.f32 %v475, 1.442695
  %v481 = vpow.pop %v480
  %v482 = vmul.f32 %v476, 1.442695
  %v483 = vpow.pop %v482
  %v484 = vmul.f32 %v477, 1.442695
  %v485 = vpow.pop %v484
  %v486 = vadd.f32 %v479, 1.0
  %v487 = vadd.f32 %v481, 1.0
  %v488 = vadd.f32 %v483, 1.0
  %v489 = vadd.f32 %v485, 1.0
  %v490 = vrcp.pop %v486
  %v491 = vmul.f32 %v486, %v490
  %v492 = vsub.f32 1.0, %v491
  %v493 = vmul.f32 %v490, %v492
  %v494 = vadd.f32 %v490, %v493
  %vm495 = vweird.f32 %v486
  %vm496 = vweird.f32 %v490
  %vm497 = vmor %vm495, %vm496
  %v498 = vsel %vm497, %v490, %v494
  %v499 = vand.u32 2147483647, %v486
  %vm500 = vcmp.eq.f32.partialorder %v499, 8.507059e+37
  %v501 = vand.u32 %v486, 2147483648
  %v502 = vor.u32 1.1754944e-38, %v501
  %v503 = vsel %vm500, %v502, %v498
  %v504 = vmul.f32 1.0, %v503
  %v505 = vrcp.pop %v487
  %v506 = vmul.f32 %v487, %v505
  %v507 = vsub.f32 1.0, %v506
  %v508 = vmul.f32 %v505, %v507
  %v509 = vadd.f32 %v505, %v508
  %vm510 = vweird.f32 %v487
  %vm511 = vweird.f32 %v505
  %vm512 = vmor %vm510, %vm511
  %v513 = vsel %vm512, %v505, %v509
  %v514 = vand.u32 2147483647, %v487
  %vm515 = vcmp.eq.f32.partialorder %v514, 8.507059e+37
  %v516 = vand.u32 %v487, 2147483648
  %v517 = vor.u32 1.1754944e-38, %v516
  %v518 = vsel %vm515, %v517, %v513
  %v519 = vmul.f32 1.0, %v518
  %v520 = vrcp.pop %v488
  %v521 = vmul.f32 %v488, %v520
  %v522 = vsub.f32 1.0, %v521
  %v523 = vmul.f32 %v520, %v522
  %v524 = vadd.f32 %v520, %v523
  %vm525 = vweird.f32 %v488
  %vm526 = vweird.f32 %v520
  %vm527 = vmor %vm525, %vm526
  %v528 = vsel %vm527, %v520, %v524
  %v529 = vand.u32 2147483647, %v488
  %vm530 = vcmp.eq.f32.partialorder %v529, 8.507059e+37
  %v531 = vand.u32 %v488, 2147483648
  %v532 = vor.u32 1.1754944e-38, %v531
  %v533 = vsel %vm530, %v532, %v528
  %v534 = vmul.f32 1.0, %v533
  %v535 = vrcp.pop %v489
  %v536 = vmul.f32 %v489, %v535
  %v537 = vsub.f32 1.0, %v536
  %v538 = vmul.f32 %v535, %v537
  %v539 = vadd.f32 %v535, %v538
  %vm540 = vweird.f32 %v489
  %vm541 = vweird.f32 %v535
  %vm542 = vmor %vm540, %vm541
  %v543 = vsel %vm542, %v535, %v539
  %v544 = vand.u32 2147483647, %v489
  %vm545 = vcmp.eq.f32.partialorder %v544, 8.507059e+37
  %v546 = vand.u32 %v489, 2147483648
  %v547 = vor.u32 1.1754944e-38, %v546
  %v548 = vsel %vm545, %v547, %v543
  %v549 = vmul.f32 1.0, %v548
  %v550 = vmul.f32 %v470, %v504
  %v551 = vmul.f32 %v471, %v519
  %v552 = vmul.f32 %v472, %v534
  %v553 = vmul.f32 %v473, %v549
  %v554 = vpack.c.bf16 %v550, %v550
  %v555 = vpack.c.bf16 %v551, %v551
  %v556 = vpack.c.bf16 %v552, %v552
  %v557 = vpack.c.bf16 %v553, %v553
  %558 = vst [vmem:[%s3] sm:$0xf] %v554
  %559 = vst [vmem:[%s3 + $0x4] sm:$0xf] %v555
  %560 = vst [vmem:[%s3 + $0x8] sm:$0xf] %v556
  %561 = vst [vmem:[%s3 + $0xc] sm:$0xf] %v557
  // Predicated region
  $region14: #{gated_generator_forward.52} parent=0 // pred_check
    _
  $region15: #{gated_generator_forward.52} parent=0 // pred_check_branch
    %563 = sbr.rel (0) target = $region17
  $region16: #{gated_generator_forward.52} parent=0 // pred_region
    _
  $region17: #{gated_generator_forward.52} parent=0 // pred_fallthru
    _
  // Predicated region
  $region18: #{gated_generator_forward.52} parent=0 // pred_check
    _
  $region19: #{gated_generator_forward.52} parent=0 // pred_check_branch
    %565 = sbr.rel (0) target = $region21
  $region20: #{gated_generator_forward.52} parent=0 // pred_region
    _
  $region21: #{gated_generator_forward.52} parent=0 // pred_fallthru
    _

// kernel: gated_generator_forward.60
$region0: #{gated_generator_forward.60}
  #allocation0 [shape = 'u32[]', space=smem, size = 0x4, offset = 0x4, fixed_abs, tag = 'smem constant byte address 0x4 - core index']
  #allocation1 [shape = 'u32[72,128]{1,0:T(1,128)}', space=vmem, size = 0x9000, scoped, tag = 'internal scratch']
  %s0 = inlined_call_operand.vmem [shape: bf16[80,384], index: 0, kind: input, shape index: {}]
  %s1 = inlined_call_operand.vmem [shape: bf16[384,128], index: 1, kind: input, shape index: {}]
  %s2 = inlined_call_operand.vmem [shape: f32[1,128], index: 2, kind: input, shape index: {}]
  %s3 = inlined_call_operand.vmem [shape: bf16[80,128], index: 3, kind: output, shape index: {}]
  %s4 = sld [smem:[#allocation0]]
  $region22: #{gated_generator_forward.60} parent=0
    _
  %s6 = ssub.s32 1, %s4
  %s7 = scalar_select 0, %s6, %s4
  // Predicated region
  $region2: #{gated_generator_forward.60} parent=0 // pred_check
    _
  $region3: #{gated_generator_forward.60} parent=0 // pred_check_branch
    %9 = sbr.rel (0) target = $region5
  $region4: #{gated_generator_forward.60} parent=0 // pred_region
    _
  $region5: #{gated_generator_forward.60} parent=0 // pred_fallthru
    _
  // Predicated region
  $region6: #{gated_generator_forward.60} parent=0 // pred_check
    _
  $region7: #{gated_generator_forward.60} parent=0 // pred_check_branch
    %11 = sbr.rel (0) target = $region9
  $region8: #{gated_generator_forward.60} parent=0 // pred_region
    _
  $region9: #{gated_generator_forward.60} parent=0 // pred_fallthru
    _
  // Predicated region
  $region10: #{gated_generator_forward.60} parent=0 // pred_check
    _
  $region11: #{gated_generator_forward.60} parent=0 // pred_check_branch
    %13 = sbr.rel (0) target = $region13
  $region12: #{gated_generator_forward.60} parent=0 // pred_region
    _
  $region13: #{gated_generator_forward.60} parent=0 // pred_fallthru
    _
  %v14 = vld [vmem:[%s0] sm:$0xff]
  %v15 = vld [vmem:[%s0 + $0x8] sm:$0xf]
  %v16 = vld [vmem:[%s0 + $0xc] sm:$0xff]
  %v17 = vld [vmem:[%s0 + $0x14] sm:$0xf]
  %v18 = vld [vmem:[%s0 + $0x18] sm:$0xff]
  %v19 = vld [vmem:[%s0 + $0x20] sm:$0xf]
  %v20 = vld [vmem:[%s0 + $0x24] sm:$0xff]
  %v21 = vld [vmem:[%s0 + $0x2c] sm:$0xf]
  %v22 = vld [vmem:[%s0 + $0x30] sm:$0xff]
  %v23 = vld [vmem:[%s0 + $0x38] sm:$0xf]
  %v24 = vld [vmem:[%s0 + $0x3c] sm:$0xff]
  %v25 = vld [vmem:[%s0 + $0x44] sm:$0xf]
  %v26 = vld [vmem:[%s0 + $0x48] sm:$0xff]
  %v27 = vld [vmem:[%s0 + $0x50] sm:$0xf]
  %v28 = vld [vmem:[%s0 + $0x54] sm:$0xff]
  %v29 = vld [vmem:[%s0 + $0x5c] sm:$0xf]
  %v30 = vld [vmem:[%s0 + $0x60] sm:$0xff]
  %v31 = vld [vmem:[%s0 + $0x68] sm:$0xf]
  %v32 = vld [vmem:[%s0 + $0x6c] sm:$0xff]
  %v33 = vld [vmem:[%s0 + $0x74] sm:$0xf]
  %v34 = vld [vmem:[%s1] sm:$0xf]
  %v35 = vld [vmem:[%s1 + $0x4] sm:$0xf]
  %v36 = vld [vmem:[%s1 + $0x8] sm:$0xf]
  %v37 = vld [vmem:[%s1 + $0xc] sm:$0xf]
  %v38 = vld [vmem:[%s1 + $0x10] sm:$0xf]
  %v39 = vld [vmem:[%s1 + $0x14] sm:$0xf]
  %v40 = vld [vmem:[%s1 + $0x18] sm:$0xf]
  %v41 = vld [vmem:[%s1 + $0x1c] sm:$0xf]
  %v42 = vld [vmem:[%s1 + $0x20] sm:$0xf]
  %v43 = vld [vmem:[%s1 + $0x24] sm:$0xf]
  %v44 = vld [vmem:[%s1 + $0x28] sm:$0xf]
  %v45 = vld [vmem:[%s1 + $0x2c] sm:$0xf]
  %v46 = vld [vmem:[%s1 + $0x30] sm:$0xf]
  %v47 = vld [vmem:[%s1 + $0x34] sm:$0xf]
  %v48 = vld [vmem:[%s1 + $0x38] sm:$0xf]
  %v49 = vld [vmem:[%s1 + $0x3c] sm:$0xf]
  %v50 = vld [vmem:[%s1 + $0x40] sm:$0xf]
  %v51 = vld [vmem:[%s1 + $0x44] sm:$0xf]
  %v52 = vld [vmem:[%s1 + $0x48] sm:$0xf]
  %v53 = vld [vmem:[%s1 + $0x4c] sm:$0xf]
  %v54 = vld [vmem:[%s1 + $0x50] sm:$0xf]
  %v55 = vld [vmem:[%s1 + $0x54] sm:$0xf]
  %v56 = vld [vmem:[%s1 + $0x58] sm:$0xf]
  %v57 = vld [vmem:[%s1 + $0x5c] sm:$0xf]
  %v58 = vld [vmem:[%s1 + $0x60] sm:$0xf]
  %v59 = vld [vmem:[%s1 + $0x64] sm:$0xf]
  %v60 = vld [vmem:[%s1 + $0x68] sm:$0xf]
  %v61 = vld [vmem:[%s1 + $0x6c] sm:$0xf]
  %v62 = vld [vmem:[%s1 + $0x70] sm:$0xf]
  %v63 = vld [vmem:[%s1 + $0x74] sm:$0xf]
  %v64 = vld [vmem:[%s1 + $0x78] sm:$0xf]
  %v65 = vld [vmem:[%s1 + $0x7c] sm:$0xf]
  %v66 = vld [vmem:[%s1 + $0x80] sm:$0xf]
  %v67 = vld [vmem:[%s1 + $0x84] sm:$0xf]
  %v68 = vld [vmem:[%s1 + $0x88] sm:$0xf]
  %v69 = vld [vmem:[%s1 + $0x8c] sm:$0xf]
  %v70 = vld [vmem:[%s1 + $0x90] sm:$0xf]
  %v71 = vld [vmem:[%s1 + $0x94] sm:$0xf]
  %v72 = vld [vmem:[%s1 + $0x98] sm:$0xf]
  %v73 = vld [vmem:[%s1 + $0x9c] sm:$0xf]
  %v74 = vld [vmem:[%s1 + $0xa0] sm:$0xf]
  %v75 = vld [vmem:[%s1 + $0xa4] sm:$0xf]
  %v76 = vld [vmem:[%s1 + $0xa8] sm:$0xf]
  %v77 = vld [vmem:[%s1 + $0xac] sm:$0xf]
  %v78 = vld [vmem:[%s1 + $0xb0] sm:$0xf]
  %v79 = vld [vmem:[%s1 + $0xb4] sm:$0xf]
  %v80 = vld [vmem:[%s1 + $0xb8] sm:$0xf]
  %v81 = vld [vmem:[%s1 + $0xbc] sm:$0xf]
  %v82 = vld [vmem:[%s2] sm:$0x1]
  %v84 = vperm.slane %v82, 0
  %v106 = vunpack.c.l.b16 %v14
  %v107 = vunpack.c.h.b16 %v14
  %v108 = vunpack.c.l.b16 %v15
  %v109 = vunpack.c.l.b16 %v16
  %v110 = vunpack.c.h.b16 %v16
  %v111 = vunpack.c.l.b16 %v17
  %v112 = vunpack.c.l.b16 %v18
  %v113 = vunpack.c.h.b16 %v18
  %v114 = vunpack.c.l.b16 %v19
  %v115 = vunpack.c.l.b16 %v20
  %v116 = vunpack.c.h.b16 %v20
  %v117 = vunpack.c.l.b16 %v21
  %v118 = vunpack.c.l.b16 %v22
  %v119 = vunpack.c.h.b16 %v22
  %v120 = vunpack.c.l.b16 %v23
  %v121 = vunpack.c.l.b16 %v24
  %v122 = vunpack.c.h.b16 %v24
  %v123 = vunpack.c.l.b16 %v25
  %v124 = vunpack.c.l.b16 %v26
  %v125 = vunpack.c.h.b16 %v26
  %v126 = vunpack.c.l.b16 %v27
  %v127 = vunpack.c.l.b16 %v28
  %v128 = vunpack.c.h.b16 %v28
  %v129 = vunpack.c.l.b16 %v29
  %v130 = vunpack.c.l.b16 %v30
  %v131 = vunpack.c.h.b16 %v30
  %v132 = vunpack.c.l.b16 %v31
  %v133 = vunpack.c.l.b16 %v32
  %v134 = vunpack.c.h.b16 %v32
  %v135 = vunpack.c.l.b16 %v33
  %v136 = vpack.c.b16 %v109, %v106
  %v137 = vpack.c.b16 %v110, %v107
  %v138 = vpack.c.b16 %v111, %v108
  %v139 = vpack.c.b16 %v115, %v112
  %v140 = vpack.c.b16 %v116, %v113
  %v141 = vpack.c.b16 %v117, %v114
  %v142 = vpack.c.b16 %v121, %v118
  %v143 = vpack.c.b16 %v122, %v119
  %v144 = vpack.c.b16 %v123, %v120
  %v145 = vpack.c.b16 %v127, %v124
  %v146 = vpack.c.b16 %v128, %v125
  %v147 = vpack.c.b16 %v129, %v126
  %v148 = vpack.c.b16 %v133, %v130
  %v149 = vpack.c.b16 %v134, %v131
  %v150 = vpack.c.b16 %v135, %v132
  %v214 = vunpack.c.l.b16 %v34
  %v215 = vunpack.c.l.b16 %v35
  %v216 = vunpack.c.l.b16 %v36
  %v217 = vunpack.c.l.b16 %v37
  %v218 = vunpack.c.l.b16 %v38
  %v219 = vunpack.c.l.b16 %v39
  %v220 = vunpack.c.l.b16 %v40
  %v221 = vunpack.c.l.b16 %v41
  %v222 = vunpack.c.l.b16 %v42
  %v223 = vunpack.c.l.b16 %v43
  %v224 = vunpack.c.l.b16 %v44
  %v225 = vunpack.c.l.b16 %v45
  %v226 = vunpack.c.l.b16 %v46
  %v227 = vunpack.c.l.b16 %v47
  %v228 = vunpack.c.l.b16 %v48
  %v229 = vunpack.c.l.b16 %v49
  %v230 = vunpack.c.l.b16 %v50
  %v231 = vunpack.c.l.b16 %v51
  %v232 = vunpack.c.l.b16 %v52
  %v233 = vunpack.c.l.b16 %v53
  %v234 = vunpack.c.l.b16 %v54
  %v235 = vunpack.c.l.b16 %v55
  %v236 = vunpack.c.l.b16 %v56
  %v237 = vunpack.c.l.b16 %v57
  %v238 = vunpack.c.l.b16 %v58
  %v239 = vunpack.c.l.b16 %v59
  %v240 = vunpack.c.l.b16 %v60
  %v241 = vunpack.c.l.b16 %v61
  %v242 = vunpack.c.l.b16 %v62
  %v243 = vunpack.c.l.b16 %v63
  %v244 = vunpack.c.l.b16 %v64
  %v245 = vunpack.c.l.b16 %v65
  %v246 = vunpack.c.l.b16 %v66
  %v247 = vunpack.c.l.b16 %v67
  %v248 = vunpack.c.l.b16 %v68
  %v249 = vunpack.c.l.b16 %v69
  %v250 = vunpack.c.l.b16 %v70
  %v251 = vunpack.c.l.b16 %v71
  %v252 = vunpack.c.l.b16 %v72
  %v253 = vunpack.c.l.b16 %v73
  %v254 = vunpack.c.l.b16 %v74
  %v255 = vunpack.c.l.b16 %v75
  %v256 = vunpack.c.l.b16 %v76
  %v257 = vunpack.c.l.b16 %v77
  %v258 = vunpack.c.l.b16 %v78
  %v259 = vunpack.c.l.b16 %v79
  %v260 = vunpack.c.l.b16 %v80
  %v261 = vunpack.c.l.b16 %v81
  %v262 = vpack.c.b16 %v215, %v214
  %v263 = vpack.c.b16 %v217, %v216
  %v264 = vpack.c.b16 %v219, %v218
  %v265 = vpack.c.b16 %v221, %v220
  %v266 = vpack.c.b16 %v223, %v222
  %v267 = vpack.c.b16 %v225, %v224
  %v268 = vpack.c.b16 %v227, %v226
  %v269 = vpack.c.b16 %v229, %v228
  %v270 = vpack.c.b16 %v231, %v230
  %v271 = vpack.c.b16 %v233, %v232
  %v272 = vpack.c.b16 %v235, %v234
  %v273 = vpack.c.b16 %v237, %v236
  %v274 = vpack.c.b16 %v239, %v238
  %v275 = vpack.c.b16 %v241, %v240
  %v276 = vpack.c.b16 %v243, %v242
  %v277 = vpack.c.b16 %v245, %v244
  %v278 = vpack.c.b16 %v247, %v246
  %v279 = vpack.c.b16 %v249, %v248
  %v280 = vpack.c.b16 %v251, %v250
  %v281 = vpack.c.b16 %v253, %v252
  %v282 = vpack.c.b16 %v255, %v254
  %v283 = vpack.c.b16 %v257, %v256
  %v284 = vpack.c.b16 %v259, %v258
  %v285 = vpack.c.b16 %v261, %v260
  %310 = vmatpush.bf16.msra.mxu0 %v269
  %311 = vmatpush.bf16.msra.mxu0 %v268
  %312 = vmatpush.bf16.msra.mxu0 %v267
  %313 = vmatpush.bf16.msra.mxu0 %v266
  %314 = vmatpush.bf16.msra.mxu0 %v265
  %315 = vmatpush.bf16.msra.mxu0 %v264
  %316 = vmatpush.bf16.msra.mxu0 %v263
  %317 = vmatpush.bf16.msra.mxu0 %v262
  %318 = vmatmul.bf16.gmra.mxu0 %v136
  %v319 = vpop.f32.mrf.mxu0
  %v320 = vadd.f32 %v84, %v319
  %v321 = vpop.f32.mrf.mxu0
  %v322 = vadd.f32 %v84, %v321
  %323 = vmatmul.bf16.gmra.mxu0 %v139
  %v324 = vpop.f32.mrf.mxu0
  %v325 = vadd.f32 %v84, %v324
  %v326 = vpop.f32.mrf.mxu0
  %v327 = vadd.f32 %v84, %v326
  %328 = vmatmul.bf16.gmra.mxu0 %v142
  %v329 = vpop.f32.mrf.mxu0
  %v330 = vadd.f32 %v84, %v329
  %v331 = vpop.f32.mrf.mxu0
  %v332 = vadd.f32 %v84, %v331
  %333 = vmatmul.bf16.gmra.mxu0 %v145
  %v334 = vpop.f32.mrf.mxu0
  %v335 = vadd.f32 %v84, %v334
  %v336 = vpop.f32.mrf.mxu0
  %v337 = vadd.f32 %v84, %v336
  %338 = vmatmul.bf16.gmra.mxu0 %v148
  %v339 = vpop.f32.mrf.mxu0
  %v340 = vadd.f32 %v84, %v339
  %v341 = vpop.f32.mrf.mxu0
  %v342 = vadd.f32 %v84, %v341
  %343 = vdwg.mxu0
  %344 = vmatpush.bf16.msra.mxu0 %v277
  %345 = vmatpush.bf16.msra.mxu0 %v276
  %346 = vmatpush.bf16.msra.mxu0 %v275
  %347 = vmatpush.bf16.msra.mxu0 %v274
  %348 = vmatpush.bf16.msra.mxu0 %v273
  %349 = vmatpush.bf16.msra.mxu0 %v272
  %350 = vmatpush.bf16.msra.mxu0 %v271
  %351 = vmatpush.bf16.msra.mxu0 %v270
  %352 = vmatmul.bf16.gmra.mxu0 %v137
  %v353 = vpop.f32.mrf.mxu0
  %v354 = vadd.f32 %v320, %v353
  %v355 = vpop.f32.mrf.mxu0
  %v356 = vadd.f32 %v322, %v355
  %357 = vmatmul.bf16.gmra.mxu0 %v140
  %v358 = vpop.f32.mrf.mxu0
  %v359 = vadd.f32 %v325, %v358
  %v360 = vpop.f32.mrf.mxu0
  %v361 = vadd.f32 %v327, %v360
  %362 = vmatmul.bf16.gmra.mxu0 %v143
  %v363 = vpop.f32.mrf.mxu0
  %v364 = vadd.f32 %v330, %v363
  %v365 = vpop.f32.mrf.mxu0
  %v366 = vadd.f32 %v332, %v365
  %367 = vmatmul.bf16.gmra.mxu0 %v146
  %v368 = vpop.f32.mrf.mxu0
  %v369 = vadd.f32 %v335, %v368
  %v370 = vpop.f32.mrf.mxu0
  %v371 = vadd.f32 %v337, %v370
  %372 = vmatmul.bf16.gmra.mxu0 %v149
  %v373 = vpop.f32.mrf.mxu0
  %v374 = vadd.f32 %v340, %v373
  %v375 = vpop.f32.mrf.mxu0
  %v376 = vadd.f32 %v342, %v375
  %377 = vdwg.mxu0
  %378 = vmatpush.bf16.msra.mxu0 %v285
  %379 = vmatpush.bf16.msra.mxu0 %v284
  %380 = vmatpush.bf16.msra.mxu0 %v283
  %381 = vmatpush.bf16.msra.mxu0 %v282
  %382 = vmatpush.bf16.msra.mxu0 %v281
  %383 = vmatpush.bf16.msra.mxu0 %v280
  %384 = vmatpush.bf16.msra.mxu0 %v279
  %385 = vmatpush.bf16.msra.mxu0 %v278
  %386 = vmatmul.bf16.gmra.mxu0 %v138
  %v387 = vpop.f32.mrf.mxu0
  %v388 = vadd.f32 %v354, %v387
  %v389 = vpop.f32.mrf.mxu0
  %v390 = vadd.f32 %v356, %v389
  %391 = vmatmul.bf16.gmra.mxu0 %v141
  %v392 = vpop.f32.mrf.mxu0
  %v393 = vadd.f32 %v359, %v392
  %v394 = vpop.f32.mrf.mxu0
  %v395 = vadd.f32 %v361, %v394
  %396 = vmatmul.bf16.gmra.mxu0 %v144
  %v397 = vpop.f32.mrf.mxu0
  %v398 = vadd.f32 %v364, %v397
  %v399 = vpop.f32.mrf.mxu0
  %v400 = vadd.f32 %v366, %v399
  %401 = vmatmul.bf16.gmra.mxu0 %v147
  %v402 = vpop.f32.mrf.mxu0
  %v403 = vadd.f32 %v369, %v402
  %v404 = vpop.f32.mrf.mxu0
  %v405 = vadd.f32 %v371, %v404
  %406 = vmatmul.bf16.gmra.mxu0 %v150
  %v407 = vpop.f32.mrf.mxu0
  %v408 = vadd.f32 %v374, %v407
  %v409 = vpop.f32.mrf.mxu0
  %v410 = vadd.f32 %v376, %v409
  %411 = vdwg.mxu0
  %vm412 = vcmp.ge.f32.partialorder %v388, 0.0
  %vm413 = vcmp.ge.f32.partialorder %v390, 0.0
  %vm414 = vcmp.ge.f32.partialorder %v393, 0.0
  %vm415 = vcmp.ge.f32.partialorder %v395, 0.0
  %vm416 = vcmp.ge.f32.partialorder %v398, 0.0
  %vm417 = vcmp.ge.f32.partialorder %v400, 0.0
  %vm418 = vcmp.ge.f32.partialorder %v403, 0.0
  %vm419 = vcmp.ge.f32.partialorder %v405, 0.0
  %vm420 = vcmp.ge.f32.partialorder %v408, 0.0
  %vm421 = vcmp.ge.f32.partialorder %v410, 0.0
  %v422 = vmul.f32 %v388, 0.2
  %v423 = vmul.f32 %v390, 0.2
  %v424 = vmul.f32 %v393, 0.2
  %v425 = vmul.f32 %v395, 0.2
  %v426 = vmul.f32 %v398, 0.2
  %v427 = vmul.f32 %v400, 0.2
  %v428 = vmul.f32 %v403, 0.2
  %v429 = vmul.f32 %v405, 0.2
  %v430 = vmul.f32 %v408, 0.2
  %v431 = vmul.f32 %v410, 0.2
  %v432 = vsel %vm412, %v388, %v422
  %v433 = vsel %vm413, %v390, %v423
  %v434 = vsel %vm414, %v393, %v424
  %v435 = vsel %vm415, %v395, %v425
  %v436 = vsel %vm416, %v398, %v426
  %v437 = vsel %vm417, %v400, %v427
  %v438 = vsel %vm418, %v403, %v428
  %v439 = vsel %vm419, %v405, %v429
  %v440 = vsel %vm420, %v408, %v430
  %v441 = vsel %vm421, %v410, %v431
  %v442 = vpack.c.bf16 %v432, %v432
  %v443 = vpack.c.bf16 %v433, %v433
  %v444 = vpack.c.bf16 %v434, %v434
  %v445 = vpack.c.bf16 %v435, %v435
  %v446 = vpack.c.bf16 %v436, %v436
  %v447 = vpack.c.bf16 %v437, %v437
  %v448 = vpack.c.bf16 %v438, %v438
  %v449 = vpack.c.bf16 %v439, %v439
  %v450 = vpack.c.bf16 %v440, %v440
  %v451 = vpack.c.bf16 %v441, %v441
  %452 = vst [vmem:[%s3] sm:$0xf] %v442
  %453 = vst [vmem:[%s3 + $0x4] sm:$0xf] %v443
  %454 = vst [vmem:[%s3 + $0x8] sm:$0xf] %v444
  %455 = vst [vmem:[%s3 + $0xc] sm:$0xf] %v445
  %456 = vst [vmem:[%s3 + $0x10] sm:$0xf] %v446
  %457 = vst [vmem:[%s3 + $0x14] sm:$0xf] %v447
  %458 = vst [vmem:[%s3 + $0x18] sm:$0xf] %v448
  %459 = vst [vmem:[%s3 + $0x1c] sm:$0xf] %v449
  %460 = vst [vmem:[%s3 + $0x20] sm:$0xf] %v450
  %461 = vst [vmem:[%s3 + $0x24] sm:$0xf] %v451
  // Predicated region
  $region14: #{gated_generator_forward.60} parent=0 // pred_check
    _
  $region15: #{gated_generator_forward.60} parent=0 // pred_check_branch
    %463 = sbr.rel (0) target = $region17
  $region16: #{gated_generator_forward.60} parent=0 // pred_region
    _
  $region17: #{gated_generator_forward.60} parent=0 // pred_fallthru
    _
  // Predicated region
  $region18: #{gated_generator_forward.60} parent=0 // pred_check
    _
  $region19: #{gated_generator_forward.60} parent=0 // pred_check_branch
    %465 = sbr.rel (0) target = $region21
  $region20: #{gated_generator_forward.60} parent=0 // pred_region
    _
  $region21: #{gated_generator_forward.60} parent=0 // pred_fallthru
    _

// kernel: gated_generator_forward.62
$region0: #{gated_generator_forward.62}
  #allocation0 [shape = 'u32[]', space=smem, size = 0x4, offset = 0x4, fixed_abs, tag = 'smem constant byte address 0x4 - core index']
  #allocation1 [shape = 'u32[72,128]{1,0:T(1,128)}', space=vmem, size = 0x9000, scoped, tag = 'internal scratch']
  %s0 = inlined_call_operand.vmem [shape: bf16[288,256], index: 0, kind: input, shape index: {}]
  %s1 = inlined_call_operand.vmem [shape: bf16[256,128], index: 1, kind: input, shape index: {}]
  %s2 = inlined_call_operand.vmem [shape: f32[1,128], index: 2, kind: input, shape index: {}]
  %s3 = inlined_call_operand.vmem [shape: bf16[288,128], index: 3, kind: output, shape index: {}]
  %s4 = sld [smem:[#allocation0]]
  $region22: #{gated_generator_forward.62} parent=0
    _
  %s6 = ssub.s32 1, %s4
  %s7 = scalar_select 0, %s6, %s4
  // Predicated region
  $region2: #{gated_generator_forward.62} parent=0 // pred_check
    _
  $region3: #{gated_generator_forward.62} parent=0 // pred_check_branch
    %9 = sbr.rel (0) target = $region5
  $region4: #{gated_generator_forward.62} parent=0 // pred_region
    _
  $region5: #{gated_generator_forward.62} parent=0 // pred_fallthru
    _
  // Predicated region
  $region6: #{gated_generator_forward.62} parent=0 // pred_check
    _
  $region7: #{gated_generator_forward.62} parent=0 // pred_check_branch
    %11 = sbr.rel (0) target = $region9
  $region8: #{gated_generator_forward.62} parent=0 // pred_region
    _
  $region9: #{gated_generator_forward.62} parent=0 // pred_fallthru
    _
  // Predicated region
  $region10: #{gated_generator_forward.62} parent=0 // pred_check
    _
  $region11: #{gated_generator_forward.62} parent=0 // pred_check_branch
    %13 = sbr.rel (0) target = $region13
  $region12: #{gated_generator_forward.62} parent=0 // pred_region
    _
  $region13: #{gated_generator_forward.62} parent=0 // pred_fallthru
    _
  %v14 = vld [vmem:[%s0] sm:$0xff]
  %v15 = vld [vmem:[%s0 + $0x8] sm:$0xff]
  %v16 = vld [vmem:[%s0 + $0x10] sm:$0xff]
  %v17 = vld [vmem:[%s0 + $0x18] sm:$0xff]
  %v18 = vld [vmem:[%s0 + $0x20] sm:$0xff]
  %v19 = vld [vmem:[%s0 + $0x28] sm:$0xff]
  %v20 = vld [vmem:[%s0 + $0x30] sm:$0xff]
  %v21 = vld [vmem:[%s0 + $0x38] sm:$0xff]
  %v22 = vld [vmem:[%s0 + $0x40] sm:$0xff]
  %v23 = vld [vmem:[%s0 + $0x48] sm:$0xff]
  %v24 = vld [vmem:[%s0 + $0x50] sm:$0xff]
  %v25 = vld [vmem:[%s0 + $0x58] sm:$0xff]
  %v26 = vld [vmem:[%s0 + $0x60] sm:$0xff]
  %v27 = vld [vmem:[%s0 + $0x68] sm:$0xff]
  %v28 = vld [vmem:[%s0 + $0x70] sm:$0xff]
  %v29 = vld [vmem:[%s0 + $0x78] sm:$0xff]
  %v30 = vld [vmem:[%s0 + $0x80] sm:$0xff]
  %v31 = vld [vmem:[%s0 + $0x88] sm:$0xff]
  %v32 = vld [vmem:[%s0 + $0x90] sm:$0xff]
  %v33 = vld [vmem:[%s0 + $0x98] sm:$0xff]
  %v34 = vld [vmem:[%s0 + $0xa0] sm:$0xff]
  %v35 = vld [vmem:[%s0 + $0xa8] sm:$0xff]
  %v36 = vld [vmem:[%s0 + $0xb0] sm:$0xff]
  %v37 = vld [vmem:[%s0 + $0xb8] sm:$0xff]
  %v38 = vld [vmem:[%s0 + $0xc0] sm:$0xff]
  %v39 = vld [vmem:[%s0 + $0xc8] sm:$0xff]
  %v40 = vld [vmem:[%s0 + $0xd0] sm:$0xff]
  %v41 = vld [vmem:[%s0 + $0xd8] sm:$0xff]
  %v42 = vld [vmem:[%s0 + $0xe0] sm:$0xff]
  %v43 = vld [vmem:[%s0 + $0xe8] sm:$0xff]
  %v44 = vld [vmem:[%s0 + $0xf0] sm:$0xff]
  %v45 = vld [vmem:[%s0 + $0xf8] sm:$0xff]
  %v46 = vld [vmem:[%s0 + $0x100] sm:$0xff]
  %v47 = vld [vmem:[%s0 + $0x108] sm:$0xff]
  %v48 = vld [vmem:[%s0 + $0x110] sm:$0xff]
  %v49 = vld [vmem:[%s0 + $0x118] sm:$0xff]
  %v50 = vld [vmem:[%s1] sm:$0xf]
  %v51 = vld [vmem:[%s1 + $0x4] sm:$0xf]
  %v52 = vld [vmem:[%s1 + $0x8] sm:$0xf]
  %v53 = vld [vmem:[%s1 + $0xc] sm:$0xf]
  %v54 = vld [vmem:[%s1 + $0x10] sm:$0xf]
  %v55 = vld [vmem:[%s1 + $0x14] sm:$0xf]
  %v56 = vld [vmem:[%s1 + $0x18] sm:$0xf]
  %v57 = vld [vmem:[%s1 + $0x1c] sm:$0xf]
  %v58 = vld [vmem:[%s1 + $0x20] sm:$0xf]
  %v59 = vld [vmem:[%s1 + $0x24] sm:$0xf]
  %v60 = vld [vmem:[%s1 + $0x28] sm:$0xf]
  %v61 = vld [vmem:[%s1 + $0x2c] sm:$0xf]
  %v62 = vld [vmem:[%s1 + $0x30] sm:$0xf]
  %v63 = vld [vmem:[%s1 + $0x34] sm:$0xf]
  %v64 = vld [vmem:[%s1 + $0x38] sm:$0xf]
  %v65 = vld [vmem:[%s1 + $0x3c] sm:$0xf]
  %v66 = vld [vmem:[%s1 + $0x40] sm:$0xf]
  %v67 = vld [vmem:[%s1 + $0x44] sm:$0xf]
  %v68 = vld [vmem:[%s1 + $0x48] sm:$0xf]
  %v69 = vld [vmem:[%s1 + $0x4c] sm:$0xf]
  %v70 = vld [vmem:[%s1 + $0x50] sm:$0xf]
  %v71 = vld [vmem:[%s1 + $0x54] sm:$0xf]
  %v72 = vld [vmem:[%s1 + $0x58] sm:$0xf]
  %v73 = vld [vmem:[%s1 + $0x5c] sm:$0xf]
  %v74 = vld [vmem:[%s1 + $0x60] sm:$0xf]
  %v75 = vld [vmem:[%s1 + $0x64] sm:$0xf]
  %v76 = vld [vmem:[%s1 + $0x68] sm:$0xf]
  %v77 = vld [vmem:[%s1 + $0x6c] sm:$0xf]
  %v78 = vld [vmem:[%s1 + $0x70] sm:$0xf]
  %v79 = vld [vmem:[%s1 + $0x74] sm:$0xf]
  %v80 = vld [vmem:[%s1 + $0x78] sm:$0xf]
  %v81 = vld [vmem:[%s1 + $0x7c] sm:$0xf]
  %v82 = vld [vmem:[%s2] sm:$0x1]
  %v84 = vperm.slane %v82, 0
  %v122 = vunpack.c.l.b16 %v14
  %v123 = vunpack.c.h.b16 %v14
  %v124 = vunpack.c.l.b16 %v15
  %v125 = vunpack.c.h.b16 %v15
  %v126 = vunpack.c.l.b16 %v16
  %v127 = vunpack.c.h.b16 %v16
  %v128 = vunpack.c.l.b16 %v17
  %v129 = vunpack.c.h.b16 %v17
  %v130 = vunpack.c.l.b16 %v18
  %v131 = vunpack.c.h.b16 %v18
  %v132 = vunpack.c.l.b16 %v19
  %v133 = vunpack.c.h.b16 %v19
  %v134 = vunpack.c.l.b16 %v20
  %v135 = vunpack.c.h.b16 %v20
  %v136 = vunpack.c.l.b16 %v21
  %v137 = vunpack.c.h.b16 %v21
  %v138 = vunpack.c.l.b16 %v22
  %v139 = vunpack.c.h.b16 %v22
  %v140 = vunpack.c.l.b16 %v23
  %v141 = vunpack.c.h.b16 %v23
  %v142 = vunpack.c.l.b16 %v24
  %v143 = vunpack.c.h.b16 %v24
  %v144 = vunpack.c.l.b16 %v25
  %v145 = vunpack.c.h.b16 %v25
  %v146 = vunpack.c.l.b16 %v26
  %v147 = vunpack.c.h.b16 %v26
  %v148 = vunpack.c.l.b16 %v27
  %v149 = vunpack.c.h.b16 %v27
  %v150 = vunpack.c.l.b16 %v28
  %v151 = vunpack.c.h.b16 %v28
  %v152 = vunpack.c.l.b16 %v29
  %v153 = vunpack.c.h.b16 %v29
  %v154 = vunpack.c.l.b16 %v30
  %v155 = vunpack.c.h.b16 %v30
  %v156 = vunpack.c.l.b16 %v31
  %v157 = vunpack.c.h.b16 %v31
  %v158 = vunpack.c.l.b16 %v32
  %v159 = vunpack.c.h.b16 %v32
  %v160 = vunpack.c.l.b16 %v33
  %v161 = vunpack.c.h.b16 %v33
  %v162 = vunpack.c.l.b16 %v34
  %v163 = vunpack.c.h.b16 %v34
  %v164 = vunpack.c.l.b16 %v35
  %v165 = vunpack.c.h.b16 %v35
  %v166 = vunpack.c.l.b16 %v36
  %v167 = vunpack.c.h.b16 %v36
  %v168 = vunpack.c.l.b16 %v37
  %v169 = vunpack.c.h.b16 %v37
  %v170 = vunpack.c.l.b16 %v38
  %v171 = vunpack.c.h.b16 %v38
  %v172 = vunpack.c.l.b16 %v39
  %v173 = vunpack.c.h.b16 %v39
  %v174 = vunpack.c.l.b16 %v40
  %v175 = vunpack.c.h.b16 %v40
  %v176 = vunpack.c.l.b16 %v41
  %v177 = vunpack.c.h.b16 %v41
  %v178 = vunpack.c.l.b16 %v42
  %v179 = vunpack.c.h.b16 %v42
  %v180 = vunpack.c.l.b16 %v43
  %v181 = vunpack.c.h.b16 %v43
  %v182 = vunpack.c.l.b16 %v44
  %v183 = vunpack.c.h.b16 %v44
  %v184 = vunpack.c.l.b16 %v45
  %v185 = vunpack.c.h.b16 %v45
  %v186 = vunpack.c.l.b16 %v46
  %v187 = vunpack.c.h.b16 %v46
  %v188 = vunpack.c.l.b16 %v47
  %v189 = vunpack.c.h.b16 %v47
  %v190 = vunpack.c.l.b16 %v48
  %v191 = vunpack.c.h.b16 %v48
  %v192 = vunpack.c.l.b16 %v49
  %v193 = vunpack.c.h.b16 %v49
  %v194 = vpack.c.b16 %v124, %v122
  %v195 = vpack.c.b16 %v125, %v123
  %v196 = vpack.c.b16 %v128, %v126
  %v197 = vpack.c.b16 %v129, %v127
  %v198 = vpack.c.b16 %v132, %v130
  %v199 = vpack.c.b16 %v133, %v131
  %v200 = vpack.c.b16 %v136, %v134
  %v201 = vpack.c.b16 %v137, %v135
  %v202 = vpack.c.b16 %v140, %v138
  %v203 = vpack.c.b16 %v141, %v139
  %v204 = vpack.c.b16 %v144, %v142
  %v205 = vpack.c.b16 %v145, %v143
  %v206 = vpack.c.b16 %v148, %v146
  %v207 = vpack.c.b16 %v149, %v147
  %v208 = vpack.c.b16 %v152, %v150
  %v209 = vpack.c.b16 %v153, %v151
  %v210 = vpack.c.b16 %v156, %v154
  %v211 = vpack.c.b16 %v157, %v155
  %v212 = vpack.c.b16 %v160, %v158
  %v213 = vpack.c.b16 %v161, %v159
  %v214 = vpack.c.b16 %v164, %v162
  %v215 = vpack.c.b16 %v165, %v163
  %v216 = vpack.c.b16 %v168, %v166
  %v217 = vpack.c.b16 %v169, %v167
  %v218 = vpack.c.b16 %v172, %v170
  %v219 = vpack.c.b16 %v173, %v171
  %v220 = vpack.c.b16 %v176, %v174
  %v221 = vpack.c.b16 %v177, %v175
  %v222 = vpack.c.b16 %v180, %v178
  %v223 = vpack.c.b16 %v181, %v179
  %v224 = vpack.c.b16 %v184, %v182
  %v225 = vpack.c.b16 %v185, %v183
  %v226 = vpack.c.b16 %v188, %v186
  %v227 = vpack.c.b16 %v189, %v187
  %v228 = vpack.c.b16 %v192, %v190
  %v229 = vpack.c.b16 %v193, %v191
  %v298 = vunpack.c.l.b16 %v50
  %v299 = vunpack.c.l.b16 %v51
  %v300 = vunpack.c.l.b16 %v52
  %v301 = vunpack.c.l.b16 %v53
  %v302 = vunpack.c.l.b16 %v54
  %v303 = vunpack.c.l.b16 %v55
  %v304 = vunpack.c.l.b16 %v56
  %v305 = vunpack.c.l.b16 %v57
  %v306 = vunpack.c.l.b16 %v58
  %v307 = vunpack.c.l.b16 %v59
  %v308 = vunpack.c.l.b16 %v60
  %v309 = vunpack.c.l.b16 %v61
  %v310 = vunpack.c.l.b16 %v62
  %v311 = vunpack.c.l.b16 %v63
  %v312 = vunpack.c.l.b16 %v64
  %v313 = vunpack.c.l.b16 %v65
  %v314 = vunpack.c.l.b16 %v66
  %v315 = vunpack.c.l.b16 %v67
  %v316 = vunpack.c.l.b16 %v68
  %v317 = vunpack.c.l.b16 %v69
  %v318 = vunpack.c.l.b16 %v70
  %v319 = vunpack.c.l.b16 %v71
  %v320 = vunpack.c.l.b16 %v72
  %v321 = vunpack.c.l.b16 %v73
  %v322 = vunpack.c.l.b16 %v74
  %v323 = vunpack.c.l.b16 %v75
  %v324 = vunpack.c.l.b16 %v76
  %v325 = vunpack.c.l.b16 %v77
  %v326 = vunpack.c.l.b16 %v78
  %v327 = vunpack.c.l.b16 %v79
  %v328 = vunpack.c.l.b16 %v80
  %v329 = vunpack.c.l.b16 %v81
  %v330 = vpack.c.b16 %v299, %v298
  %v331 = vpack.c.b16 %v301, %v300
  %v332 = vpack.c.b16 %v303, %v302
  %v333 = vpack.c.b16 %v305, %v304
  %v334 = vpack.c.b16 %v307, %v306
  %v335 = vpack.c.b16 %v309, %v308
  %v336 = vpack.c.b16 %v311, %v310
  %v337 = vpack.c.b16 %v313, %v312
  %v338 = vpack.c.b16 %v315, %v314
  %v339 = vpack.c.b16 %v317, %v316
  %v340 = vpack.c.b16 %v319, %v318
  %v341 = vpack.c.b16 %v321, %v320
  %v342 = vpack.c.b16 %v323, %v322
  %v343 = vpack.c.b16 %v325, %v324
  %v344 = vpack.c.b16 %v327, %v326
  %v345 = vpack.c.b16 %v329, %v328
  %362 = vmatpush.bf16.msra.mxu0 %v337
  %363 = vmatpush.bf16.msra.mxu0 %v336
  %364 = vmatpush.bf16.msra.mxu0 %v335
  %365 = vmatpush.bf16.msra.mxu0 %v334
  %366 = vmatpush.bf16.msra.mxu0 %v333
  %367 = vmatpush.bf16.msra.mxu0 %v332
  %368 = vmatpush.bf16.msra.mxu0 %v331
  %369 = vmatpush.bf16.msra.mxu0 %v330
  %370 = vmatmul.bf16.gmra.mxu0 %v194
  %v371 = vpop.f32.mrf.mxu0
  %v372 = vadd.f32 %v84, %v371
  %v373 = vpop.f32.mrf.mxu0
  %v374 = vadd.f32 %v84, %v373
  %375 = vmatmul.bf16.gmra.mxu0 %v196
  %v376 = vpop.f32.mrf.mxu0
  %v377 = vadd.f32 %v84, %v376
  %v378 = vpop.f32.mrf.mxu0
  %v379 = vadd.f32 %v84, %v378
  %380 = vmatmul.bf16.gmra.mxu0 %v198
  %v381 = vpop.f32.mrf.mxu0
  %v382 = vadd.f32 %v84, %v381
  %v383 = vpop.f32.mrf.mxu0
  %v384 = vadd.f32 %v84, %v383
  %385 = vmatmul.bf16.gmra.mxu0 %v200
  %v386 = vpop.f32.mrf.mxu0
  %v387 = vadd.f32 %v84, %v386
  %v388 = vpop.f32.mrf.mxu0
  %v389 = vadd.f32 %v84, %v388
  %390 = vmatmul.bf16.gmra.mxu0 %v202
  %v391 = vpop.f32.mrf.mxu0
  %v392 = vadd.f32 %v84, %v391
  %v393 = vpop.f32.mrf.mxu0
  %v394 = vadd.f32 %v84, %v393
  %395 = vmatmul.bf16.gmra.mxu0 %v204
  %v396 = vpop.f32.mrf.mxu0
  %v397 = vadd.f32 %v84, %v396
  %v398 = vpop.f32.mrf.mxu0
  %v399 = vadd.f32 %v84, %v398
  %400 = vmatmul.bf16.gmra.mxu0 %v206
  %v401 = vpop.f32.mrf.mxu0
  %v402 = vadd.f32 %v84, %v401
  %v403 = vpop.f32.mrf.mxu0
  %v404 = vadd.f32 %v84, %v403
  %405 = vmatmul.bf16.gmra.mxu0 %v208
  %v406 = vpop.f32.mrf.mxu0
  %v407 = vadd.f32 %v84, %v406
  %v408 = vpop.f32.mrf.mxu0
  %v409 = vadd.f32 %v84, %v408
  %410 = vmatmul.bf16.gmra.mxu0 %v210
  %v411 = vpop.f32.mrf.mxu0
  %v412 = vadd.f32 %v84, %v411
  %v413 = vpop.f32.mrf.mxu0
  %v414 = vadd.f32 %v84, %v413
  %415 = vmatmul.bf16.gmra.mxu0 %v212
  %v416 = vpop.f32.mrf.mxu0
  %v417 = vadd.f32 %v84, %v416
  %v418 = vpop.f32.mrf.mxu0
  %v419 = vadd.f32 %v84, %v418
  %420 = vmatmul.bf16.gmra.mxu0 %v214
  %v421 = vpop.f32.mrf.mxu0
  %v422 = vadd.f32 %v84, %v421
  %v423 = vpop.f32.mrf.mxu0
  %v424 = vadd.f32 %v84, %v423
  %425 = vmatmul.bf16.gmra.mxu0 %v216
  %v426 = vpop.f32.mrf.mxu0
  %v427 = vadd.f32 %v84, %v426
  %v428 = vpop.f32.mrf.mxu0
  %v429 = vadd.f32 %v84, %v428
  %430 = vmatmul.bf16.gmra.mxu0 %v218
  %v431 = vpop.f32.mrf.mxu0
  %v432 = vadd.f32 %v84, %v431
  %v433 = vpop.f32.mrf.mxu0
  %v434 = vadd.f32 %v84, %v433
  %435 = vmatmul.bf16.gmra.mxu0 %v220
  %v436 = vpop.f32.mrf.mxu0
  %v437 = vadd.f32 %v84, %v436
  %v438 = vpop.f32.mrf.mxu0
  %v439 = vadd.f32 %v84, %v438
  %440 = vmatmul.bf16.gmra.mxu0 %v222
  %v441 = vpop.f32.mrf.mxu0
  %v442 = vadd.f32 %v84, %v441
  %v443 = vpop.f32.mrf.mxu0
  %v444 = vadd.f32 %v84, %v443
  %445 = vmatmul.bf16.gmra.mxu0 %v224
  %v446 = vpop.f32.mrf.mxu0
  %v447 = vadd.f32 %v84, %v446
  %v448 = vpop.f32.mrf.mxu0
  %v449 = vadd.f32 %v84, %v448
  %450 = vmatmul.bf16.gmra.mxu0 %v226
  %v451 = vpop.f32.mrf.mxu0
  %v452 = vadd.f32 %v84, %v451
  %v453 = vpop.f32.mrf.mxu0
  %v454 = vadd.f32 %v84, %v453
  %455 = vmatmul.bf16.gmra.mxu0 %v228
  %v456 = vpop.f32.mrf.mxu0
  %v457 = vadd.f32 %v84, %v456
  %v458 = vpop.f32.mrf.mxu0
  %v459 = vadd.f32 %v84, %v458
  %460 = vdwg.mxu0
  %461 = vmatpush.bf16.msra.mxu0 %v345
  %462 = vmatpush.bf16.msra.mxu0 %v344
  %463 = vmatpush.bf16.msra.mxu0 %v343
  %464 = vmatpush.bf16.msra.mxu0 %v342
  %465 = vmatpush.bf16.msra.mxu0 %v341
  %466 = vmatpush.bf16.msra.mxu0 %v340
  %467 = vmatpush.bf16.msra.mxu0 %v339
  %468 = vmatpush.bf16.msra.mxu0 %v338
  %469 = vmatmul.bf16.gmra.mxu0 %v195
  %v470 = vpop.f32.mrf.mxu0
  %v471 = vadd.f32 %v372, %v470
  %v472 = vpop.f32.mrf.mxu0
  %v473 = vadd.f32 %v374, %v472
  %474 = vmatmul.bf16.gmra.mxu0 %v197
  %v475 = vpop.f32.mrf.mxu0
  %v476 = vadd.f32 %v377, %v475
  %v477 = vpop.f32.mrf.mxu0
  %v478 = vadd.f32 %v379, %v477
  %479 = vmatmul.bf16.gmra.mxu0 %v199
  %v480 = vpop.f32.mrf.mxu0
  %v481 = vadd.f32 %v382, %v480
  %v482 = vpop.f32.mrf.mxu0
  %v483 = vadd.f32 %v384, %v482
  %484 = vmatmul.bf16.gmra.mxu0 %v201
  %v485 = vpop.f32.mrf.mxu0
  %v486 = vadd.f32 %v387, %v485
  %v487 = vpop.f32.mrf.mxu0
  %v488 = vadd.f32 %v389, %v487
  %489 = vmatmul.bf16.gmra.mxu0 %v203
  %v490 = vpop.f32.mrf.mxu0
  %v491 = vadd.f32 %v392, %v490
  %v492 = vpop.f32.mrf.mxu0
  %v493 = vadd.f32 %v394, %v492
  %494 = vmatmul.bf16.gmra.mxu0 %v205
  %v495 = vpop.f32.mrf.mxu0
  %v496 = vadd.f32 %v397, %v495
  %v497 = vpop.f32.mrf.mxu0
  %v498 = vadd.f32 %v399, %v497
  %499 = vmatmul.bf16.gmra.mxu0 %v207
  %v500 = vpop.f32.mrf.mxu0
  %v501 = vadd.f32 %v402, %v500
  %v502 = vpop.f32.mrf.mxu0
  %v503 = vadd.f32 %v404, %v502
  %504 = vmatmul.bf16.gmra.mxu0 %v209
  %v505 = vpop.f32.mrf.mxu0
  %v506 = vadd.f32 %v407, %v505
  %v507 = vpop.f32.mrf.mxu0
  %v508 = vadd.f32 %v409, %v507
  %509 = vmatmul.bf16.gmra.mxu0 %v211
  %v510 = vpop.f32.mrf.mxu0
  %v511 = vadd.f32 %v412, %v510
  %v512 = vpop.f32.mrf.mxu0
  %v513 = vadd.f32 %v414, %v512
  %514 = vmatmul.bf16.gmra.mxu0 %v213
  %v515 = vpop.f32.mrf.mxu0
  %v516 = vadd.f32 %v417, %v515
  %v517 = vpop.f32.mrf.mxu0
  %v518 = vadd.f32 %v419, %v517
  %519 = vmatmul.bf16.gmra.mxu0 %v215
  %v520 = vpop.f32.mrf.mxu0
  %v521 = vadd.f32 %v422, %v520
  %v522 = vpop.f32.mrf.mxu0
  %v523 = vadd.f32 %v424, %v522
  %524 = vmatmul.bf16.gmra.mxu0 %v217
  %v525 = vpop.f32.mrf.mxu0
  %v526 = vadd.f32 %v427, %v525
  %v527 = vpop.f32.mrf.mxu0
  %v528 = vadd.f32 %v429, %v527
  %529 = vmatmul.bf16.gmra.mxu0 %v219
  %v530 = vpop.f32.mrf.mxu0
  %v531 = vadd.f32 %v432, %v530
  %v532 = vpop.f32.mrf.mxu0
  %v533 = vadd.f32 %v434, %v532
  %534 = vmatmul.bf16.gmra.mxu0 %v221
  %v535 = vpop.f32.mrf.mxu0
  %v536 = vadd.f32 %v437, %v535
  %v537 = vpop.f32.mrf.mxu0
  %v538 = vadd.f32 %v439, %v537
  %539 = vmatmul.bf16.gmra.mxu0 %v223
  %v540 = vpop.f32.mrf.mxu0
  %v541 = vadd.f32 %v442, %v540
  %v542 = vpop.f32.mrf.mxu0
  %v543 = vadd.f32 %v444, %v542
  %544 = vmatmul.bf16.gmra.mxu0 %v225
  %v545 = vpop.f32.mrf.mxu0
  %v546 = vadd.f32 %v447, %v545
  %v547 = vpop.f32.mrf.mxu0
  %v548 = vadd.f32 %v449, %v547
  %549 = vmatmul.bf16.gmra.mxu0 %v227
  %v550 = vpop.f32.mrf.mxu0
  %v551 = vadd.f32 %v452, %v550
  %v552 = vpop.f32.mrf.mxu0
  %v553 = vadd.f32 %v454, %v552
  %554 = vmatmul.bf16.gmra.mxu0 %v229
  %v555 = vpop.f32.mrf.mxu0
  %v556 = vadd.f32 %v457, %v555
  %v557 = vpop.f32.mrf.mxu0
  %v558 = vadd.f32 %v459, %v557
  %559 = vdwg.mxu0
  %vm560 = vcmp.ge.f32.partialorder %v471, 0.0
  %vm561 = vcmp.ge.f32.partialorder %v473, 0.0
  %vm562 = vcmp.ge.f32.partialorder %v476, 0.0
  %vm563 = vcmp.ge.f32.partialorder %v478, 0.0
  %vm564 = vcmp.ge.f32.partialorder %v481, 0.0
  %vm565 = vcmp.ge.f32.partialorder %v483, 0.0
  %vm566 = vcmp.ge.f32.partialorder %v486, 0.0
  %vm567 = vcmp.ge.f32.partialorder %v488, 0.0
  %vm568 = vcmp.ge.f32.partialorder %v491, 0.0
  %vm569 = vcmp.ge.f32.partialorder %v493, 0.0
  %vm570 = vcmp.ge.f32.partialorder %v496, 0.0
  %vm571 = vcmp.ge.f32.partialorder %v498, 0.0
  %vm572 = vcmp.ge.f32.partialorder %v501, 0.0
  %vm573 = vcmp.ge.f32.partialorder %v503, 0.0
  %vm574 = vcmp.ge.f32.partialorder %v506, 0.0
  %vm575 = vcmp.ge.f32.partialorder %v508, 0.0
  %vm576 = vcmp.ge.f32.partialorder %v511, 0.0
  %vm577 = vcmp.ge.f32.partialorder %v513, 0.0
  %vm578 = vcmp.ge.f32.partialorder %v516, 0.0
  %vm579 = vcmp.ge.f32.partialorder %v518, 0.0
  %vm580 = vcmp.ge.f32.partialorder %v521, 0.0
  %vm581 = vcmp.ge.f32.partialorder %v523, 0.0
  %vm582 = vcmp.ge.f32.partialorder %v526, 0.0
  %vm583 = vcmp.ge.f32.partialorder %v528, 0.0
  %vm584 = vcmp.ge.f32.partialorder %v531, 0.0
  %vm585 = vcmp.ge.f32.partialorder %v533, 0.0
  %vm586 = vcmp.ge.f32.partialorder %v536, 0.0
  %vm587 = vcmp.ge.f32.partialorder %v538, 0.0
  %vm588 = vcmp.ge.f32.partialorder %v541, 0.0
  %vm589 = vcmp.ge.f32.partialorder %v543, 0.0
  %vm590 = vcmp.ge.f32.partialorder %v546, 0.0
  %vm591 = vcmp.ge.f32.partialorder %v548, 0.0
  %vm592 = vcmp.ge.f32.partialorder %v551, 0.0
  %vm593 = vcmp.ge.f32.partialorder %v553, 0.0
  %vm594 = vcmp.ge.f32.partialorder %v556, 0.0
  %vm595 = vcmp.ge.f32.partialorder %v558, 0.0
  %v596 = vmul.f32 %v471, 0.2
  %v597 = vmul.f32 %v473, 0.2
  %v598 = vmul.f32 %v476, 0.2
  %v599 = vmul.f32 %v478, 0.2
  %v600 = vmul.f32 %v481, 0.2
  %v601 = vmul.f32 %v483, 0.2
  %v602 = vmul.f32 %v486, 0.2
  %v603 = vmul.f32 %v488, 0.2
  %v604 = vmul.f32 %v491, 0.2
  %v605 = vmul.f32 %v493, 0.2
  %v606 = vmul.f32 %v496, 0.2
  %v607 = vmul.f32 %v498, 0.2
  %v608 = vmul.f32 %v501, 0.2
  %v609 = vmul.f32 %v503, 0.2
  %v610 = vmul.f32 %v506, 0.2
  %v611 = vmul.f32 %v508, 0.2
  %v612 = vmul.f32 %v511, 0.2
  %v613 = vmul.f32 %v513, 0.2
  %v614 = vmul.f32 %v516, 0.2
  %v615 = vmul.f32 %v518, 0.2
  %v616 = vmul.f32 %v521, 0.2
  %v617 = vmul.f32 %v523, 0.2
  %v618 = vmul.f32 %v526, 0.2
  %v619 = vmul.f32 %v528, 0.2
  %v620 = vmul.f32 %v531, 0.2
  %v621 = vmul.f32 %v533, 0.2
  %v622 = vmul.f32 %v536, 0.2
  %v623 = vmul.f32 %v538, 0.2
  %v624 = vmul.f32 %v541, 0.2
  %v625 = vmul.f32 %v543, 0.2
  %v626 = vmul.f32 %v546, 0.2
  %v627 = vmul.f32 %v548, 0.2
  %v628 = vmul.f32 %v551, 0.2
  %v629 = vmul.f32 %v553, 0.2
  %v630 = vmul.f32 %v556, 0.2
  %v631 = vmul.f32 %v558, 0.2
  %v632 = vsel %vm560, %v471, %v596
  %v633 = vsel %vm561, %v473, %v597
  %v634 = vsel %vm562, %v476, %v598
  %v635 = vsel %vm563, %v478, %v599
  %v636 = vsel %vm564, %v481, %v600
  %v637 = vsel %vm565, %v483, %v601
  %v638 = vsel %vm566, %v486, %v602
  %v639 = vsel %vm567, %v488, %v603
  %v640 = vsel %vm568, %v491, %v604
  %v641 = vsel %vm569, %v493, %v605
  %v642 = vsel %vm570, %v496, %v606
  %v643 = vsel %vm571, %v498, %v607
  %v644 = vsel %vm572, %v501, %v608
  %v645 = vsel %vm573, %v503, %v609
  %v646 = vsel %vm574, %v506, %v610
  %v647 = vsel %vm575, %v508, %v611
  %v648 = vsel %vm576, %v511, %v612
  %v649 = vsel %vm577, %v513, %v613
  %v650 = vsel %vm578, %v516, %v614
  %v651 = vsel %vm579, %v518, %v615
  %v652 = vsel %vm580, %v521, %v616
  %v653 = vsel %vm581, %v523, %v617
  %v654 = vsel %vm582, %v526, %v618
  %v655 = vsel %vm583, %v528, %v619
  %v656 = vsel %vm584, %v531, %v620
  %v657 = vsel %vm585, %v533, %v621
  %v658 = vsel %vm586, %v536, %v622
  %v659 = vsel %vm587, %v538, %v623
  %v660 = vsel %vm588, %v541, %v624
  %v661 = vsel %vm589, %v543, %v625
  %v662 = vsel %vm590, %v546, %v626
  %v663 = vsel %vm591, %v548, %v627
  %v664 = vsel %vm592, %v551, %v628
  %v665 = vsel %vm593, %v553, %v629
  %v666 = vsel %vm594, %v556, %v630
  %v667 = vsel %vm595, %v558, %v631
  %v668 = vpack.c.bf16 %v632, %v632
  %v669 = vpack.c.bf16 %v633, %v633
  %v670 = vpack.c.bf16 %v634, %v634
  %v671 = vpack.c.bf16 %v635, %v635
  %v672 = vpack.c.bf16 %v636, %v636
  %v673 = vpack.c.bf16 %v637, %v637
  %v674 = vpack.c.bf16 %v638, %v638
  %v675 = vpack.c.bf16 %v639, %v639
  %v676 = vpack.c.bf16 %v640, %v640
  %v677 = vpack.c.bf16 %v641, %v641
  %v678 = vpack.c.bf16 %v642, %v642
  %v679 = vpack.c.bf16 %v643, %v643
  %v680 = vpack.c.bf16 %v644, %v644
  %v681 = vpack.c.bf16 %v645, %v645
  %v682 = vpack.c.bf16 %v646, %v646
  %v683 = vpack.c.bf16 %v647, %v647
  %v684 = vpack.c.bf16 %v648, %v648
  %v685 = vpack.c.bf16 %v649, %v649
  %v686 = vpack.c.bf16 %v650, %v650
  %v687 = vpack.c.bf16 %v651, %v651
  %v688 = vpack.c.bf16 %v652, %v652
  %v689 = vpack.c.bf16 %v653, %v653
  %v690 = vpack.c.bf16 %v654, %v654
  %v691 = vpack.c.bf16 %v655, %v655
  %v692 = vpack.c.bf16 %v656, %v656
  %v693 = vpack.c.bf16 %v657, %v657
  %v694 = vpack.c.bf16 %v658, %v658
  %v695 = vpack.c.bf16 %v659, %v659
  %v696 = vpack.c.bf16 %v660, %v660
  %v697 = vpack.c.bf16 %v661, %v661
  %v698 = vpack.c.bf16 %v662, %v662
  %v699 = vpack.c.bf16 %v663, %v663
  %v700 = vpack.c.bf16 %v664, %v664
  %v701 = vpack.c.bf16 %v665, %v665
  %v702 = vpack.c.bf16 %v666, %v666
  %v703 = vpack.c.bf16 %v667, %v667
  %704 = vst [vmem:[%s3] sm:$0xf] %v668
  %705 = vst [vmem:[%s3 + $0x4] sm:$0xf] %v669
  %706 = vst [vmem:[%s3 + $0x8] sm:$0xf] %v670
  %707 = vst [vmem:[%s3 + $0xc] sm:$0xf] %v671
  %708 = vst [vmem:[%s3 + $0x10] sm:$0xf] %v672
  %709 = vst [vmem:[%s3 + $0x14] sm:$0xf] %v673
  %710 = vst [vmem:[%s3 + $0x18] sm:$0xf] %v674
  %711 = vst [vmem:[%s3 + $0x1c] sm:$0xf] %v675
  %712 = vst [vmem:[%s3 + $0x20] sm:$0xf] %v676
  %713 = vst [vmem:[%s3 + $0x24] sm:$0xf] %v677
  %714 = vst [vmem:[%s3 + $0x28] sm:$0xf] %v678
  %715 = vst [vmem:[%s3 + $0x2c] sm:$0xf] %v679
  %716 = vst [vmem:[%s3 + $0x30] sm:$0xf] %v680
  %717 = vst [vmem:[%s3 + $0x34] sm:$0xf] %v681
  %718 = vst [vmem:[%s3 + $0x38] sm:$0xf] %v682
  %719 = vst [vmem:[%s3 + $0x3c] sm:$0xf] %v683
  %720 = vst [vmem:[%s3 + $0x40] sm:$0xf] %v684
  %721 = vst [vmem:[%s3 + $0x44] sm:$0xf] %v685
  %722 = vst [vmem:[%s3 + $0x48] sm:$0xf] %v686
  %723 = vst [vmem:[%s3 + $0x4c] sm:$0xf] %v687
  %724 = vst [vmem:[%s3 + $0x50] sm:$0xf] %v688
  %725 = vst [vmem:[%s3 + $0x54] sm:$0xf] %v689
  %726 = vst [vmem:[%s3 + $0x58] sm:$0xf] %v690
  %727 = vst [vmem:[%s3 + $0x5c] sm:$0xf] %v691
  %728 = vst [vmem:[%s3 + $0x60] sm:$0xf] %v692
  %729 = vst [vmem:[%s3 + $0x64] sm:$0xf] %v693
  %730 = vst [vmem:[%s3 + $0x68] sm:$0xf] %v694
  %731 = vst [vmem:[%s3 + $0x6c] sm:$0xf] %v695
  %732 = vst [vmem:[%s3 + $0x70] sm:$0xf] %v696
  %733 = vst [vmem:[%s3 + $0x74] sm:$0xf] %v697
  %734 = vst [vmem:[%s3 + $0x78] sm:$0xf] %v698
  %735 = vst [vmem:[%s3 + $0x7c] sm:$0xf] %v699
  %736 = vst [vmem:[%s3 + $0x80] sm:$0xf] %v700
  %737 = vst [vmem:[%s3 + $0x84] sm:$0xf] %v701
  %738 = vst [vmem:[%s3 + $0x88] sm:$0xf] %v702
  %739 = vst [vmem:[%s3 + $0x8c] sm:$0xf] %v703
  // Predicated region
  $region14: #{gated_generator_forward.62} parent=0 // pred_check
    _
  $region15: #{gated_generator_forward.62} parent=0 // pred_check_branch
    %741 = sbr.rel (0) target = $region17
  $region16: #{gated_generator_forward.62} parent=0 // pred_region
    _
  $region17: #{gated_generator_forward.62} parent=0 // pred_fallthru
    _
  // Predicated region
  $region18: #{gated_generator_forward.62} parent=0 // pred_check
    _
  $region19: #{gated_generator_forward.62} parent=0 // pred_check_branch
    %743 = sbr.rel (0) target = $region21
  $region20: #{gated_generator_forward.62} parent=0 // pred_region
    _
  $region21: #{gated_generator_forward.62} parent=0 // pred_fallthru
    _

// kernel: gated_generator_forward.63
$region0: #{gated_generator_forward.63}
  #allocation0 [shape = 'u32[]', space=smem, size = 0x4, offset = 0x4, fixed_abs, tag = 'smem constant byte address 0x4 - core index']
  #allocation1 [shape = 'u32[72,128]{1,0:T(1,128)}', space=vmem, size = 0x9000, scoped, tag = 'internal scratch']
  %s0 = inlined_call_operand.vmem [shape: bf16[288,512], index: 0, kind: input, shape index: {}]
  %s1 = inlined_call_operand.vmem [shape: bf16[512,256], index: 1, kind: input, shape index: {}]
  %s2 = inlined_call_operand.vmem [shape: f32[1,256], index: 2, kind: input, shape index: {}]
  %s3 = inlined_call_operand.vmem [shape: f32[288,128], index: 3, kind: output, shape index: {}]
  %s4 = sld [smem:[#allocation0]]
  $region22: #{gated_generator_forward.63} parent=0
    _
  %s6 = ssub.s32 1, %s4
  %s7 = scalar_select 0, %s6, %s4
  // Predicated region
  $region2: #{gated_generator_forward.63} parent=0 // pred_check
    _
  $region3: #{gated_generator_forward.63} parent=0 // pred_check_branch
    %9 = sbr.rel (0) target = $region5
  $region4: #{gated_generator_forward.63} parent=0 // pred_region
    _
  $region5: #{gated_generator_forward.63} parent=0 // pred_fallthru
    _
  // Predicated region
  $region6: #{gated_generator_forward.63} parent=0 // pred_check
    _
  $region7: #{gated_generator_forward.63} parent=0 // pred_check_branch
    %11 = sbr.rel (0) target = $region9
  $region8: #{gated_generator_forward.63} parent=0 // pred_region
    _
  $region9: #{gated_generator_forward.63} parent=0 // pred_fallthru
    _
  // Predicated region
  $region10: #{gated_generator_forward.63} parent=0 // pred_check
    _
  $region11: #{gated_generator_forward.63} parent=0 // pred_check_branch
    %13 = sbr.rel (0) target = $region13
  $region12: #{gated_generator_forward.63} parent=0 // pred_region
    _
  $region13: #{gated_generator_forward.63} parent=0 // pred_fallthru
    _
  %v14 = vld [vmem:[%s0] sm:$0xff]
  %v15 = vld [vmem:[%s0 + $0x8] sm:$0xff]
  %v16 = vld [vmem:[%s0 + $0x10] sm:$0xff]
  %v17 = vld [vmem:[%s0 + $0x18] sm:$0xff]
  %v18 = vld [vmem:[%s0 + $0x20] sm:$0xff]
  %v19 = vld [vmem:[%s0 + $0x28] sm:$0xff]
  %v20 = vld [vmem:[%s0 + $0x30] sm:$0xff]
  %v21 = vld [vmem:[%s0 + $0x38] sm:$0xff]
  %v22 = vld [vmem:[%s0 + $0x40] sm:$0xff]
  %v23 = vld [vmem:[%s0 + $0x48] sm:$0xff]
  %v24 = vld [vmem:[%s0 + $0x50] sm:$0xff]
  %v25 = vld [vmem:[%s0 + $0x58] sm:$0xff]
  %v26 = vld [vmem:[%s0 + $0x60] sm:$0xff]
  %v27 = vld [vmem:[%s0 + $0x68] sm:$0xff]
  %v28 = vld [vmem:[%s0 + $0x70] sm:$0xff]
  %v29 = vld [vmem:[%s0 + $0x78] sm:$0xff]
  %v30 = vld [vmem:[%s0 + $0x80] sm:$0xff]
  %v31 = vld [vmem:[%s0 + $0x88] sm:$0xff]
  %v32 = vld [vmem:[%s0 + $0x90] sm:$0xff]
  %v33 = vld [vmem:[%s0 + $0x98] sm:$0xff]
  %v34 = vld [vmem:[%s0 + $0xa0] sm:$0xff]
  %v35 = vld [vmem:[%s0 + $0xa8] sm:$0xff]
  %v36 = vld [vmem:[%s0 + $0xb0] sm:$0xff]
  %v37 = vld [vmem:[%s0 + $0xb8] sm:$0xff]
  %v38 = vld [vmem:[%s0 + $0xc0] sm:$0xff]
  %v39 = vld [vmem:[%s0 + $0xc8] sm:$0xff]
  %v40 = vld [vmem:[%s0 + $0xd0] sm:$0xff]
  %v41 = vld [vmem:[%s0 + $0xd8] sm:$0xff]
  %v42 = vld [vmem:[%s0 + $0xe0] sm:$0xff]
  %v43 = vld [vmem:[%s0 + $0xe8] sm:$0xff]
  %v44 = vld [vmem:[%s0 + $0xf0] sm:$0xff]
  %v45 = vld [vmem:[%s0 + $0xf8] sm:$0xff]
  %v46 = vld [vmem:[%s0 + $0x100] sm:$0xff]
  %v47 = vld [vmem:[%s0 + $0x108] sm:$0xff]
  %v48 = vld [vmem:[%s0 + $0x110] sm:$0xff]
  %v49 = vld [vmem:[%s0 + $0x118] sm:$0xff]
  %v50 = vld [vmem:[%s0 + $0x120] sm:$0xff]
  %v51 = vld [vmem:[%s0 + $0x128] sm:$0xff]
  %v52 = vld [vmem:[%s0 + $0x130] sm:$0xff]
  %v53 = vld [vmem:[%s0 + $0x138] sm:$0xff]
  %v54 = vld [vmem:[%s0 + $0x140] sm:$0xff]
  %v55 = vld [vmem:[%s0 + $0x148] sm:$0xff]
  %v56 = vld [vmem:[%s0 + $0x150] sm:$0xff]
  %v57 = vld [vmem:[%s0 + $0x158] sm:$0xff]
  %v58 = vld [vmem:[%s0 + $0x160] sm:$0xff]
  %v59 = vld [vmem:[%s0 + $0x168] sm:$0xff]
  %v60 = vld [vmem:[%s0 + $0x170] sm:$0xff]
  %v61 = vld [vmem:[%s0 + $0x178] sm:$0xff]
  %v62 = vld [vmem:[%s0 + $0x180] sm:$0xff]
  %v63 = vld [vmem:[%s0 + $0x188] sm:$0xff]
  %v64 = vld [vmem:[%s0 + $0x190] sm:$0xff]
  %v65 = vld [vmem:[%s0 + $0x198] sm:$0xff]
  %v66 = vld [vmem:[%s0 + $0x1a0] sm:$0xff]
  %v67 = vld [vmem:[%s0 + $0x1a8] sm:$0xff]
  %v68 = vld [vmem:[%s0 + $0x1b0] sm:$0xff]
  %v69 = vld [vmem:[%s0 + $0x1b8] sm:$0xff]
  %v70 = vld [vmem:[%s0 + $0x1c0] sm:$0xff]
  %v71 = vld [vmem:[%s0 + $0x1c8] sm:$0xff]
  %v72 = vld [vmem:[%s0 + $0x1d0] sm:$0xff]
  %v73 = vld [vmem:[%s0 + $0x1d8] sm:$0xff]
  %v74 = vld [vmem:[%s0 + $0x1e0] sm:$0xff]
  %v75 = vld [vmem:[%s0 + $0x1e8] sm:$0xff]
  %v76 = vld [vmem:[%s0 + $0x1f0] sm:$0xff]
  %v77 = vld [vmem:[%s0 + $0x1f8] sm:$0xff]
  %v78 = vld [vmem:[%s0 + $0x200] sm:$0xff]
  %v79 = vld [vmem:[%s0 + $0x208] sm:$0xff]
  %v80 = vld [vmem:[%s0 + $0x210] sm:$0xff]
  %v81 = vld [vmem:[%s0 + $0x218] sm:$0xff]
  %v82 = vld [vmem:[%s0 + $0x220] sm:$0xff]
  %v83 = vld [vmem:[%s0 + $0x228] sm:$0xff]
  %v84 = vld [vmem:[%s0 + $0x230] sm:$0xff]
  %v85 = vld [vmem:[%s0 + $0x238] sm:$0xff]
  %v86 = vld [vmem:[%s1] sm:$0xff]
  %v87 = vld [vmem:[%s1 + $0x8] sm:$0xff]
  %v88 = vld [vmem:[%s1 + $0x10] sm:$0xff]
  %v89 = vld [vmem:[%s1 + $0x18] sm:$0xff]
  %v90 = vld [vmem:[%s1 + $0x20] sm:$0xff]
  %v91 = vld [vmem:[%s1 + $0x28] sm:$0xff]
  %v92 = vld [vmem:[%s1 + $0x30] sm:$0xff]
  %v93 = vld [vmem:[%s1 + $0x38] sm:$0xff]
  %v94 = vld [vmem:[%s1 + $0x40] sm:$0xff]
  %v95 = vld [vmem:[%s1 + $0x48] sm:$0xff]
  %v96 = vld [vmem:[%s1 + $0x50] sm:$0xff]
  %v97 = vld [vmem:[%s1 + $0x58] sm:$0xff]
  %v98 = vld [vmem:[%s1 + $0x60] sm:$0xff]
  %v99 = vld [vmem:[%s1 + $0x68] sm:$0xff]
  %v100 = vld [vmem:[%s1 + $0x70] sm:$0xff]
  %v101 = vld [vmem:[%s1 + $0x78] sm:$0xff]
  %v102 = vld [vmem:[%s1 + $0x80] sm:$0xff]
  %v103 = vld [vmem:[%s1 + $0x88] sm:$0xff]
  %v104 = vld [vmem:[%s1 + $0x90] sm:$0xff]
  %v105 = vld [vmem:[%s1 + $0x98] sm:$0xff]
  %v106 = vld [vmem:[%s1 + $0xa0] sm:$0xff]
  %v107 = vld [vmem:[%s1 + $0xa8] sm:$0xff]
  %v108 = vld [vmem:[%s1 + $0xb0] sm:$0xff]
  %v109 = vld [vmem:[%s1 + $0xb8] sm:$0xff]
  %v110 = vld [vmem:[%s1 + $0xc0] sm:$0xff]
  %v111 = vld [vmem:[%s1 + $0xc8] sm:$0xff]
  %v112 = vld [vmem:[%s1 + $0xd0] sm:$0xff]
  %v113 = vld [vmem:[%s1 + $0xd8] sm:$0xff]
  %v114 = vld [vmem:[%s1 + $0xe0] sm:$0xff]
  %v115 = vld [vmem:[%s1 + $0xe8] sm:$0xff]
  %v116 = vld [vmem:[%s1 + $0xf0] sm:$0xff]
  %v117 = vld [vmem:[%s1 + $0xf8] sm:$0xff]
  %v118 = vld [vmem:[%s1 + $0x100] sm:$0xff]
  %v119 = vld [vmem:[%s1 + $0x108] sm:$0xff]
  %v120 = vld [vmem:[%s1 + $0x110] sm:$0xff]
  %v121 = vld [vmem:[%s1 + $0x118] sm:$0xff]
  %v122 = vld [vmem:[%s1 + $0x120] sm:$0xff]
  %v123 = vld [vmem:[%s1 + $0x128] sm:$0xff]
  %v124 = vld [vmem:[%s1 + $0x130] sm:$0xff]
  %v125 = vld [vmem:[%s1 + $0x138] sm:$0xff]
  %v126 = vld [vmem:[%s1 + $0x140] sm:$0xff]
  %v127 = vld [vmem:[%s1 + $0x148] sm:$0xff]
  %v128 = vld [vmem:[%s1 + $0x150] sm:$0xff]
  %v129 = vld [vmem:[%s1 + $0x158] sm:$0xff]
  %v130 = vld [vmem:[%s1 + $0x160] sm:$0xff]
  %v131 = vld [vmem:[%s1 + $0x168] sm:$0xff]
  %v132 = vld [vmem:[%s1 + $0x170] sm:$0xff]
  %v133 = vld [vmem:[%s1 + $0x178] sm:$0xff]
  %v134 = vld [vmem:[%s1 + $0x180] sm:$0xff]
  %v135 = vld [vmem:[%s1 + $0x188] sm:$0xff]
  %v136 = vld [vmem:[%s1 + $0x190] sm:$0xff]
  %v137 = vld [vmem:[%s1 + $0x198] sm:$0xff]
  %v138 = vld [vmem:[%s1 + $0x1a0] sm:$0xff]
  %v139 = vld [vmem:[%s1 + $0x1a8] sm:$0xff]
  %v140 = vld [vmem:[%s1 + $0x1b0] sm:$0xff]
  %v141 = vld [vmem:[%s1 + $0x1b8] sm:$0xff]
  %v142 = vld [vmem:[%s1 + $0x1c0] sm:$0xff]
  %v143 = vld [vmem:[%s1 + $0x1c8] sm:$0xff]
  %v144 = vld [vmem:[%s1 + $0x1d0] sm:$0xff]
  %v145 = vld [vmem:[%s1 + $0x1d8] sm:$0xff]
  %v146 = vld [vmem:[%s1 + $0x1e0] sm:$0xff]
  %v147 = vld [vmem:[%s1 + $0x1e8] sm:$0xff]
  %v148 = vld [vmem:[%s1 + $0x1f0] sm:$0xff]
  %v149 = vld [vmem:[%s1 + $0x1f8] sm:$0xff]
  %v150 = vld [vmem:[%s2] sm:$0x3]
  %v152 = vperm.slane %v150, 0
  %v153 = vperm.slane %v150, 1
  %v228 = vunpack.c.l.b16 %v14
  %v229 = vunpack.c.h.b16 %v14
  %v230 = vunpack.c.l.b16 %v15
  %v231 = vunpack.c.h.b16 %v15
  %v232 = vunpack.c.l.b16 %v16
  %v233 = vunpack.c.h.b16 %v16
  %v234 = vunpack.c.l.b16 %v17
  %v235 = vunpack.c.h.b16 %v17
  %v236 = vunpack.c.l.b16 %v18
  %v237 = vunpack.c.h.b16 %v18
  %v238 = vunpack.c.l.b16 %v19
  %v239 = vunpack.c.h.b16 %v19
  %v240 = vunpack.c.l.b16 %v20
  %v241 = vunpack.c.h.b16 %v20
  %v242 = vunpack.c.l.b16 %v21
  %v243 = vunpack.c.h.b16 %v21
  %v244 = vunpack.c.l.b16 %v22
  %v245 = vunpack.c.h.b16 %v22
  %v246 = vunpack.c.l.b16 %v23
  %v247 = vunpack.c.h.b16 %v23
  %v248 = vunpack.c.l.b16 %v24
  %v249 = vunpack.c.h.b16 %v24
  %v250 = vunpack.c.l.b16 %v25
  %v251 = vunpack.c.h.b16 %v25
  %v252 = vunpack.c.l.b16 %v26
  %v253 = vunpack.c.h.b16 %v26
  %v254 = vunpack.c.l.b16 %v27
  %v255 = vunpack.c.h.b16 %v27
  %v256 = vunpack.c.l.b16 %v28
  %v257 = vunpack.c.h.b16 %v28
  %v258 = vunpack.c.l.b16 %v29
  %v259 = vunpack.c.h.b16 %v29
  %v260 = vunpack.c.l.b16 %v30
  %v261 = vunpack.c.h.b16 %v30
  %v262 = vunpack.c.l.b16 %v31
  %v263 = vunpack.c.h.b16 %v31
  %v264 = vunpack.c.l.b16 %v32
  %v265 = vunpack.c.h.b16 %v32
  %v266 = vunpack.c.l.b16 %v33
  %v267 = vunpack.c.h.b16 %v33
  %v268 = vunpack.c.l.b16 %v34
  %v269 = vunpack.c.h.b16 %v34
  %v270 = vunpack.c.l.b16 %v35
  %v271 = vunpack.c.h.b16 %v35
  %v272 = vunpack.c.l.b16 %v36
  %v273 = vunpack.c.h.b16 %v36
  %v274 = vunpack.c.l.b16 %v37
  %v275 = vunpack.c.h.b16 %v37
  %v276 = vunpack.c.l.b16 %v38
  %v277 = vunpack.c.h.b16 %v38
  %v278 = vunpack.c.l.b16 %v39
  %v279 = vunpack.c.h.b16 %v39
  %v280 = vunpack.c.l.b16 %v40
  %v281 = vunpack.c.h.b16 %v40
  %v282 = vunpack.c.l.b16 %v41
  %v283 = vunpack.c.h.b16 %v41
  %v284 = vunpack.c.l.b16 %v42
  %v285 = vunpack.c.h.b16 %v42
  %v286 = vunpack.c.l.b16 %v43
  %v287 = vunpack.c.h.b16 %v43
  %v288 = vunpack.c.l.b16 %v44
  %v289 = vunpack.c.h.b16 %v44
  %v290 = vunpack.c.l.b16 %v45
  %v291 = vunpack.c.h.b16 %v45
  %v292 = vunpack.c.l.b16 %v46
  %v293 = vunpack.c.h.b16 %v46
  %v294 = vunpack.c.l.b16 %v47
  %v295 = vunpack.c.h.b16 %v47
  %v296 = vunpack.c.l.b16 %v48
  %v297 = vunpack.c.h.b16 %v48
  %v298 = vunpack.c.l.b16 %v49
  %v299 = vunpack.c.h.b16 %v49
  %v300 = vunpack.c.l.b16 %v50
  %v301 = vunpack.c.h.b16 %v50
  %v302 = vunpack.c.l.b16 %v51
  %v303 = vunpack.c.h.b16 %v51
  %v304 = vunpack.c.l.b16 %v52
  %v305 = vunpack.c.h.b16 %v52
  %v306 = vunpack.c.l.b16 %v53
  %v307 = vunpack.c.h.b16 %v53
  %v308 = vunpack.c.l.b16 %v54
  %v309 = vunpack.c.h.b16 %v54
  %v310 = vunpack.c.l.b16 %v55
  %v311 = vunpack.c.h.b16 %v55
  %v312 = vunpack.c.l.b16 %v56
  %v313 = vunpack.c.h.b16 %v56
  %v314 = vunpack.c.l.b16 %v57
  %v315 = vunpack.c.h.b16 %v57
  %v316 = vunpack.c.l.b16 %v58
  %v317 = vunpack.c.h.b16 %v58
  %v318 = vunpack.c.l.b16 %v59
  %v319 = vunpack.c.h.b16 %v59
  %v320 = vunpack.c.l.b16 %v60
  %v321 = vunpack.c.h.b16 %v60
  %v322 = vunpack.c.l.b16 %v61
  %v323 = vunpack.c.h.b16 %v61
  %v324 = vunpack.c.l.b16 %v62
  %v325 = vunpack.c.h.b16 %v62
  %v326 = vunpack.c.l.b16 %v63
  %v327 = vunpack.c.h.b16 %v63
  %v328 = vunpack.c.l.b16 %v64
  %v329 = vunpack.c.h.b16 %v64
  %v330 = vunpack.c.l.b16 %v65
  %v331 = vunpack.c.h.b16 %v65
  %v332 = vunpack.c.l.b16 %v66
  %v333 = vunpack.c.h.b16 %v66
  %v334 = vunpack.c.l.b16 %v67
  %v335 = vunpack.c.h.b16 %v67
  %v336 = vunpack.c.l.b16 %v68
  %v337 = vunpack.c.h.b16 %v68
  %v338 = vunpack.c.l.b16 %v69
  %v339 = vunpack.c.h.b16 %v69
  %v340 = vunpack.c.l.b16 %v70
  %v341 = vunpack.c.h.b16 %v70
  %v342 = vunpack.c.l.b16 %v71
  %v343 = vunpack.c.h.b16 %v71
  %v344 = vunpack.c.l.b16 %v72
  %v345 = vunpack.c.h.b16 %v72
  %v346 = vunpack.c.l.b16 %v73
  %v347 = vunpack.c.h.b16 %v73
  %v348 = vunpack.c.l.b16 %v74
  %v349 = vunpack.c.h.b16 %v74
  %v350 = vunpack.c.l.b16 %v75
  %v351 = vunpack.c.h.b16 %v75
  %v352 = vunpack.c.l.b16 %v76
  %v353 = vunpack.c.h.b16 %v76
  %v354 = vunpack.c.l.b16 %v77
  %v355 = vunpack.c.h.b16 %v77
  %v356 = vunpack.c.l.b16 %v78
  %v357 = vunpack.c.h.b16 %v78
  %v358 = vunpack.c.l.b16 %v79
  %v359 = vunpack.c.h.b16 %v79
  %v360 = vunpack.c.l.b16 %v80
  %v361 = vunpack.c.h.b16 %v80
  %v362 = vunpack.c.l.b16 %v81
  %v363 = vunpack.c.h.b16 %v81
  %v364 = vunpack.c.l.b16 %v82
  %v365 = vunpack.c.h.b16 %v82
  %v366 = vunpack.c.l.b16 %v83
  %v367 = vunpack.c.h.b16 %v83
  %v368 = vunpack.c.l.b16 %v84
  %v369 = vunpack.c.h.b16 %v84
  %v370 = vunpack.c.l.b16 %v85
  %v371 = vunpack.c.h.b16 %v85
  %v372 = vpack.c.b16 %v232, %v228
  %v373 = vpack.c.b16 %v233, %v229
  %v374 = vpack.c.b16 %v234, %v230
  %v375 = vpack.c.b16 %v235, %v231
  %v376 = vpack.c.b16 %v240, %v236
  %v377 = vpack.c.b16 %v241, %v237
  %v378 = vpack.c.b16 %v242, %v238
  %v379 = vpack.c.b16 %v243, %v239
  %v380 = vpack.c.b16 %v248, %v244
  %v381 = vpack.c.b16 %v249, %v245
  %v382 = vpack.c.b16 %v250, %v246
  %v383 = vpack.c.b16 %v251, %v247
  %v384 = vpack.c.b16 %v256, %v252
  %v385 = vpack.c.b16 %v257, %v253
  %v386 = vpack.c.b16 %v258, %v254
  %v387 = vpack.c.b16 %v259, %v255
  %v388 = vpack.c.b16 %v264, %v260
  %v389 = vpack.c.b16 %v265, %v261
  %v390 = vpack.c.b16 %v266, %v262
  %v391 = vpack.c.b16 %v267, %v263
  %v392 = vpack.c.b16 %v272, %v268
  %v393 = vpack.c.b16 %v273, %v269
  %v394 = vpack.c.b16 %v274, %v270
  %v395 = vpack.c.b16 %v275, %v271
  %v396 = vpack.c.b16 %v280, %v276
  %v397 = vpack.c.b16 %v281, %v277
  %v398 = vpack.c.b16 %v282, %v278
  %v399 = vpack.c.b16 %v283, %v279
  %v400 = vpack.c.b16 %v288, %v284
  %v401 = vpack.c.b16 %v289, %v285
  %v402 = vpack.c.b16 %v290, %v286
  %v403 = vpack.c.b16 %v291, %v287
  %v404 = vpack.c.b16 %v296, %v292
  %v405 = vpack.c.b16 %v297, %v293
  %v406 = vpack.c.b16 %v298, %v294
  %v407 = vpack.c.b16 %v299, %v295
  %v408 = vpack.c.b16 %v304, %v300
  %v409 = vpack.c.b16 %v305, %v301
  %v410 = vpack.c.b16 %v306, %v302
  %v411 = vpack.c.b16 %v307, %v303
  %v412 = vpack.c.b16 %v312, %v308
  %v413 = vpack.c.b16 %v313, %v309
  %v414 = vpack.c.b16 %v314, %v310
  %v415 = vpack.c.b16 %v315, %v311
  %v416 = vpack.c.b16 %v320, %v316
  %v417 = vpack.c.b16 %v321, %v317
  %v418 = vpack.c.b16 %v322, %v318
  %v419 = vpack.c.b16 %v323, %v319
  %v420 = vpack.c.b16 %v328, %v324
  %v421 = vpack.c.b16 %v329, %v325
  %v422 = vpack.c.b16 %v330, %v326
  %v423 = vpack.c.b16 %v331, %v327
  %v424 = vpack.c.b16 %v336, %v332
  %v425 = vpack.c.b16 %v337, %v333
  %v426 = vpack.c.b16 %v338, %v334
  %v427 = vpack.c.b16 %v339, %v335
  %v428 = vpack.c.b16 %v344, %v340
  %v429 = vpack.c.b16 %v345, %v341
  %v430 = vpack.c.b16 %v346, %v342
  %v431 = vpack.c.b16 %v347, %v343
  %v432 = vpack.c.b16 %v352, %v348
  %v433 = vpack.c.b16 %v353, %v349
  %v434 = vpack.c.b16 %v354, %v350
  %v435 = vpack.c.b16 %v355, %v351
  %v436 = vpack.c.b16 %v360, %v356
  %v437 = vpack.c.b16 %v361, %v357
  %v438 = vpack.c.b16 %v362, %v358
  %v439 = vpack.c.b16 %v363, %v359
  %v440 = vpack.c.b16 %v368, %v364
  %v441 = vpack.c.b16 %v369, %v365
  %v442 = vpack.c.b16 %v370, %v366
  %v443 = vpack.c.b16 %v371, %v367
  %v580 = vunpack.c.l.b16 %v86
  %v581 = vunpack.c.h.b16 %v86
  %v582 = vunpack.c.l.b16 %v87
  %v583 = vunpack.c.h.b16 %v87
  %v584 = vunpack.c.l.b16 %v88
  %v585 = vunpack.c.h.b16 %v88
  %v586 = vunpack.c.l.b16 %v89
  %v587 = vunpack.c.h.b16 %v89
  %v588 = vunpack.c.l.b16 %v90
  %v589 = vunpack.c.h.b16 %v90
  %v590 = vunpack.c.l.b16 %v91
  %v591 = vunpack.c.h.b16 %v91
  %v592 = vunpack.c.l.b16 %v92
  %v593 = vunpack.c.h.b16 %v92
  %v594 = vunpack.c.l.b16 %v93
  %v595 = vunpack.c.h.b16 %v93
  %v596 = vunpack.c.l.b16 %v94
  %v597 = vunpack.c.h.b16 %v94
  %v598 = vunpack.c.l.b16 %v95
  %v599 = vunpack.c.h.b16 %v95
  %v600 = vunpack.c.l.b16 %v96
  %v601 = vunpack.c.h.b16 %v96
  %v602 = vunpack.c.l.b16 %v97
  %v603 = vunpack.c.h.b16 %v97
  %v604 = vunpack.c.l.b16 %v98
  %v605 = vunpack.c.h.b16 %v98
  %v606 = vunpack.c.l.b16 %v99
  %v607 = vunpack.c.h.b16 %v99
  %v608 = vunpack.c.l.b16 %v100
  %v609 = vunpack.c.h.b16 %v100
  %v610 = vunpack.c.l.b16 %v101
  %v611 = vunpack.c.h.b16 %v101
  %v612 = vunpack.c.l.b16 %v102
  %v613 = vunpack.c.h.b16 %v102
  %v614 = vunpack.c.l.b16 %v103
  %v615 = vunpack.c.h.b16 %v103
  %v616 = vunpack.c.l.b16 %v104
  %v617 = vunpack.c.h.b16 %v104
  %v618 = vunpack.c.l.b16 %v105
  %v619 = vunpack.c.h.b16 %v105
  %v620 = vunpack.c.l.b16 %v106
  %v621 = vunpack.c.h.b16 %v106
  %v622 = vunpack.c.l.b16 %v107
  %v623 = vunpack.c.h.b16 %v107
  %v624 = vunpack.c.l.b16 %v108
  %v625 = vunpack.c.h.b16 %v108
  %v626 = vunpack.c.l.b16 %v109
  %v627 = vunpack.c.h.b16 %v109
  %v628 = vunpack.c.l.b16 %v110
  %v629 = vunpack.c.h.b16 %v110
  %v630 = vunpack.c.l.b16 %v111
  %v631 = vunpack.c.h.b16 %v111
  %v632 = vunpack.c.l.b16 %v112
  %v633 = vunpack.c.h.b16 %v112
  %v634 = vunpack.c.l.b16 %v113
  %v635 = vunpack.c.h.b16 %v113
  %v636 = vunpack.c.l.b16 %v114
  %v637 = vunpack.c.h.b16 %v114
  %v638 = vunpack.c.l.b16 %v115
  %v639 = vunpack.c.h.b16 %v115
  %v640 = vunpack.c.l.b16 %v116
  %v641 = vunpack.c.h.b16 %v116
  %v642 = vunpack.c.l.b16 %v117
  %v643 = vunpack.c.h.b16 %v117
  %v644 = vunpack.c.l.b16 %v118
  %v645 = vunpack.c.h.b16 %v118
  %v646 = vunpack.c.l.b16 %v119
  %v647 = vunpack.c.h.b16 %v119
  %v648 = vunpack.c.l.b16 %v120
  %v649 = vunpack.c.h.b16 %v120
  %v650 = vunpack.c.l.b16 %v121
  %v651 = vunpack.c.h.b16 %v121
  %v652 = vunpack.c.l.b16 %v122
  %v653 = vunpack.c.h.b16 %v122
  %v654 = vunpack.c.l.b16 %v123
  %v655 = vunpack.c.h.b16 %v123
  %v656 = vunpack.c.l.b16 %v124
  %v657 = vunpack.c.h.b16 %v124
  %v658 = vunpack.c.l.b16 %v125
  %v659 = vunpack.c.h.b16 %v125
  %v660 = vunpack.c.l.b16 %v126
  %v661 = vunpack.c.h.b16 %v126
  %v662 = vunpack.c.l.b16 %v127
  %v663 = vunpack.c.h.b16 %v127
  %v664 = vunpack.c.l.b16 %v128
  %v665 = vunpack.c.h.b16 %v128
  %v666 = vunpack.c.l.b16 %v129
  %v667 = vunpack.c.h.b16 %v129
  %v668 = vunpack.c.l.b16 %v130
  %v669 = vunpack.c.h.b16 %v130
  %v670 = vunpack.c.l.b16 %v131
  %v671 = vunpack.c.h.b16 %v131
  %v672 = vunpack.c.l.b16 %v132
  %v673 = vunpack.c.h.b16 %v132
  %v674 = vunpack.c.l.b16 %v133
  %v675 = vunpack.c.h.b16 %v133
  %v676 = vunpack.c.l.b16 %v134
  %v677 = vunpack.c.h.b16 %v134
  %v678 = vunpack.c.l.b16 %v135
  %v679 = vunpack.c.h.b16 %v135
  %v680 = vunpack.c.l.b16 %v136
  %v681 = vunpack.c.h.b16 %v136
  %v682 = vunpack.c.l.b16 %v137
  %v683 = vunpack.c.h.b16 %v137
  %v684 = vunpack.c.l.b16 %v138
  %v685 = vunpack.c.h.b16 %v138
  %v686 = vunpack.c.l.b16 %v139
  %v687 = vunpack.c.h.b16 %v139
  %v688 = vunpack.c.l.b16 %v140
  %v689 = vunpack.c.h.b16 %v140
  %v690 = vunpack.c.l.b16 %v141
  %v691 = vunpack.c.h.b16 %v141
  %v692 = vunpack.c.l.b16 %v142
  %v693 = vunpack.c.h.b16 %v142
  %v694 = vunpack.c.l.b16 %v143
  %v695 = vunpack.c.h.b16 %v143
  %v696 = vunpack.c.l.b16 %v144
  %v697 = vunpack.c.h.b16 %v144
  %v698 = vunpack.c.l.b16 %v145
  %v699 = vunpack.c.h.b16 %v145
  %v700 = vunpack.c.l.b16 %v146
  %v701 = vunpack.c.h.b16 %v146
  %v702 = vunpack.c.l.b16 %v147
  %v703 = vunpack.c.h.b16 %v147
  %v704 = vunpack.c.l.b16 %v148
  %v705 = vunpack.c.h.b16 %v148
  %v706 = vunpack.c.l.b16 %v149
  %v707 = vunpack.c.h.b16 %v149
  %v708 = vpack.c.b16 %v582, %v580
  %v709 = vpack.c.b16 %v583, %v581
  %v710 = vpack.c.b16 %v586, %v584
  %v711 = vpack.c.b16 %v587, %v585
  %v712 = vpack.c.b16 %v590, %v588
  %v713 = vpack.c.b16 %v591, %v589
  %v714 = vpack.c.b16 %v594, %v592
  %v715 = vpack.c.b16 %v595, %v593
  %v716 = vpack.c.b16 %v598, %v596
  %v717 = vpack.c.b16 %v599, %v597
  %v718 = vpack.c.b16 %v602, %v600
  %v719 = vpack.c.b16 %v603, %v601
  %v720 = vpack.c.b16 %v606, %v604
  %v721 = vpack.c.b16 %v607, %v605
  %v722 = vpack.c.b16 %v610, %v608
  %v723 = vpack.c.b16 %v611, %v609
  %v724 = vpack.c.b16 %v614, %v612
  %v725 = vpack.c.b16 %v615, %v613
  %v726 = vpack.c.b16 %v618, %v616
  %v727 = vpack.c.b16 %v619, %v617
  %v728 = vpack.c.b16 %v622, %v620
  %v729 = vpack.c.b16 %v623, %v621
  %v730 = vpack.c.b16 %v626, %v624
  %v731 = vpack.c.b16 %v627, %v625
  %v732 = vpack.c.b16 %v630, %v628
  %v733 = vpack.c.b16 %v631, %v629
  %v734 = vpack.c.b16 %v634, %v632
  %v735 = vpack.c.b16 %v635, %v633
  %v736 = vpack.c.b16 %v638, %v636
  %v737 = vpack.c.b16 %v639, %v637
  %v738 = vpack.c.b16 %v642, %v640
  %v739 = vpack.c.b16 %v643, %v641
  %v740 = vpack.c.b16 %v646, %v644
  %v741 = vpack.c.b16 %v647, %v645
  %v742 = vpack.c.b16 %v650, %v648
  %v743 = vpack.c.b16 %v651, %v649
  %v744 = vpack.c.b16 %v654, %v652
  %v745 = vpack.c.b16 %v655, %v653
  %v746 = vpack.c.b16 %v658, %v656
  %v747 = vpack.c.b16 %v659, %v657
  %v748 = vpack.c.b16 %v662, %v660
  %v749 = vpack.c.b16 %v663, %v661
  %v750 = vpack.c.b16 %v666, %v664
  %v751 = vpack.c.b16 %v667, %v665
  %v752 = vpack.c.b16 %v670, %v668
  %v753 = vpack.c.b16 %v671, %v669
  %v754 = vpack.c.b16 %v674, %v672
  %v755 = vpack.c.b16 %v675, %v673
  %v756 = vpack.c.b16 %v678, %v676
  %v757 = vpack.c.b16 %v679, %v677
  %v758 = vpack.c.b16 %v682, %v680
  %v759 = vpack.c.b16 %v683, %v681
  %v760 = vpack.c.b16 %v686, %v684
  %v761 = vpack.c.b16 %v687, %v685
  %v762 = vpack.c.b16 %v690, %v688
  %v763 = vpack.c.b16 %v691, %v689
  %v764 = vpack.c.b16 %v694, %v692
  %v765 = vpack.c.b16 %v695, %v693
  %v766 = vpack.c.b16 %v698, %v696
  %v767 = vpack.c.b16 %v699, %v697
  %v768 = vpack.c.b16 %v702, %v700
  %v769 = vpack.c.b16 %v703, %v701
  %v770 = vpack.c.b16 %v706, %v704
  %v771 = vpack.c.b16 %v707, %v705
  %836 = vmatpush.bf16.msra.mxu0 %v722
  %837 = vmatpush.bf16.msra.mxu0 %v720
  %838 = vmatpush.bf16.msra.mxu0 %v718
  %839 = vmatpush.bf16.msra.mxu0 %v716
  %840 = vmatpush.bf16.msra.mxu0 %v714
  %841 = vmatpush.bf16.msra.mxu0 %v712
  %842 = vmatpush.bf16.msra.mxu0 %v710
  %843 = vmatpush.bf16.msra.mxu0 %v708
  %844 = vmatmul.bf16.gmra.mxu0 %v372
  %v845 = vpop.f32.mrf.mxu0
  %v846 = vadd.f32 %v152, %v845
  %v847 = vpop.f32.mrf.mxu0
  %v848 = vadd.f32 %v152, %v847
  %849 = vmatmul.bf16.gmra.mxu0 %v376
  %v850 = vpop.f32.mrf.mxu0
  %v851 = vadd.f32 %v152, %v850
  %v852 = vpop.f32.mrf.mxu0
  %v853 = vadd.f32 %v152, %v852
  %854 = vmatmul.bf16.gmra.mxu0 %v380
  %v855 = vpop.f32.mrf.mxu0
  %v856 = vadd.f32 %v152, %v855
  %v857 = vpop.f32.mrf.mxu0
  %v858 = vadd.f32 %v152, %v857
  %859 = vmatmul.bf16.gmra.mxu0 %v384
  %v860 = vpop.f32.mrf.mxu0
  %v861 = vadd.f32 %v152, %v860
  %v862 = vpop.f32.mrf.mxu0
  %v863 = vadd.f32 %v152, %v862
  %864 = vmatmul.bf16.gmra.mxu0 %v388
  %v865 = vpop.f32.mrf.mxu0
  %v866 = vadd.f32 %v152, %v865
  %v867 = vpop.f32.mrf.mxu0
  %v868 = vadd.f32 %v152, %v867
  %869 = vmatmul.bf16.gmra.mxu0 %v392
  %v870 = vpop.f32.mrf.mxu0
  %v871 = vadd.f32 %v152, %v870
  %v872 = vpop.f32.mrf.mxu0
  %v873 = vadd.f32 %v152, %v872
  %874 = vmatmul.bf16.gmra.mxu0 %v396
  %v875 = vpop.f32.mrf.mxu0
  %v876 = vadd.f32 %v152, %v875
  %v877 = vpop.f32.mrf.mxu0
  %v878 = vadd.f32 %v152, %v877
  %879 = vmatmul.bf16.gmra.mxu0 %v400
  %v880 = vpop.f32.mrf.mxu0
  %v881 = vadd.f32 %v152, %v880
  %v882 = vpop.f32.mrf.mxu0
  %v883 = vadd.f32 %v152, %v882
  %884 = vmatmul.bf16.gmra.mxu0 %v404
  %v885 = vpop.f32.mrf.mxu0
  %v886 = vadd.f32 %v152, %v885
  %v887 = vpop.f32.mrf.mxu0
  %v888 = vadd.f32 %v152, %v887
  %889 = vmatmul.bf16.gmra.mxu0 %v408
  %v890 = vpop.f32.mrf.mxu0
  %v891 = vadd.f32 %v152, %v890
  %v892 = vpop.f32.mrf.mxu0
  %v893 = vadd.f32 %v152, %v892
  %894 = vmatmul.bf16.gmra.mxu0 %v412
  %v895 = vpop.f32.mrf.mxu0
  %v896 = vadd.f32 %v152, %v895
  %v897 = vpop.f32.mrf.mxu0
  %v898 = vadd.f32 %v152, %v897
  %899 = vmatmul.bf16.gmra.mxu0 %v416
  %v900 = vpop.f32.mrf.mxu0
  %v901 = vadd.f32 %v152, %v900
  %v902 = vpop.f32.mrf.mxu0
  %v903 = vadd.f32 %v152, %v902
  %904 = vmatmul.bf16.gmra.mxu0 %v420
  %v905 = vpop.f32.mrf.mxu0
  %v906 = vadd.f32 %v152, %v905
  %v907 = vpop.f32.mrf.mxu0
  %v908 = vadd.f32 %v152, %v907
  %909 = vmatmul.bf16.gmra.mxu0 %v424
  %v910 = vpop.f32.mrf.mxu0
  %v911 = vadd.f32 %v152, %v910
  %v912 = vpop.f32.mrf.mxu0
  %v913 = vadd.f32 %v152, %v912
  %914 = vmatmul.bf16.gmra.mxu0 %v428
  %v915 = vpop.f32.mrf.mxu0
  %v916 = vadd.f32 %v152, %v915
  %v917 = vpop.f32.mrf.mxu0
  %v918 = vadd.f32 %v152, %v917
  %919 = vmatmul.bf16.gmra.mxu0 %v432
  %v920 = vpop.f32.mrf.mxu0
  %v921 = vadd.f32 %v152, %v920
  %v922 = vpop.f32.mrf.mxu0
  %v923 = vadd.f32 %v152, %v922
  %924 = vmatmul.bf16.gmra.mxu0 %v436
  %v925 = vpop.f32.mrf.mxu0
  %v926 = vadd.f32 %v152, %v925
  %v927 = vpop.f32.mrf.mxu0
  %v928 = vadd.f32 %v152, %v927
  %929 = vmatmul.bf16.gmra.mxu0 %v440
  %v930 = vpop.f32.mrf.mxu0
  %v931 = vadd.f32 %v152, %v930
  %v932 = vpop.f32.mrf.mxu0
  %v933 = vadd.f32 %v152, %v932
  %934 = vdwg.mxu0
  %935 = vmatpush.bf16.msra.mxu0 %v738
  %936 = vmatpush.bf16.msra.mxu0 %v736
  %937 = vmatpush.bf16.msra.mxu0 %v734
  %938 = vmatpush.bf16.msra.mxu0 %v732
  %939 = vmatpush.bf16.msra.mxu0 %v730
  %940 = vmatpush.bf16.msra.mxu0 %v728
  %941 = vmatpush.bf16.msra.mxu0 %v726
  %942 = vmatpush.bf16.msra.mxu0 %v724
  %943 = vmatmul.bf16.gmra.mxu0 %v373
  %v944 = vpop.f32.mrf.mxu0
  %v945 = vadd.f32 %v846, %v944
  %v946 = vpop.f32.mrf.mxu0
  %v947 = vadd.f32 %v848, %v946
  %948 = vmatmul.bf16.gmra.mxu0 %v377
  %v949 = vpop.f32.mrf.mxu0
  %v950 = vadd.f32 %v851, %v949
  %v951 = vpop.f32.mrf.mxu0
  %v952 = vadd.f32 %v853, %v951
  %953 = vmatmul.bf16.gmra.mxu0 %v381
  %v954 = vpop.f32.mrf.mxu0
  %v955 = vadd.f32 %v856, %v954
  %v956 = vpop.f32.mrf.mxu0
  %v957 = vadd.f32 %v858, %v956
  %958 = vmatmul.bf16.gmra.mxu0 %v385
  %v959 = vpop.f32.mrf.mxu0
  %v960 = vadd.f32 %v861, %v959
  %v961 = vpop.f32.mrf.mxu0
  %v962 = vadd.f32 %v863, %v961
  %963 = vmatmul.bf16.gmra.mxu0 %v389
  %v964 = vpop.f32.mrf.mxu0
  %v965 = vadd.f32 %v866, %v964
  %v966 = vpop.f32.mrf.mxu0
  %v967 = vadd.f32 %v868, %v966
  %968 = vmatmul.bf16.gmra.mxu0 %v393
  %v969 = vpop.f32.mrf.mxu0
  %v970 = vadd.f32 %v871, %v969
  %v971 = vpop.f32.mrf.mxu0
  %v972 = vadd.f32 %v873, %v971
  %973 = vmatmul.bf16.gmra.mxu0 %v397
  %v974 = vpop.f32.mrf.mxu0
  %v975 = vadd.f32 %v876, %v974
  %v976 = vpop.f32.mrf.mxu0
  %v977 = vadd.f32 %v878, %v976
  %978 = vmatmul.bf16.gmra.mxu0 %v401
  %v979 = vpop.f32.mrf.mxu0
  %v980 = vadd.f32 %v881, %v979
  %v981 = vpop.f32.mrf.mxu0
  %v982 = vadd.f32 %v883, %v981
  %983 = vmatmul.bf16.gmra.mxu0 %v405
  %v984 = vpop.f32.mrf.mxu0
  %v985 = vadd.f32 %v886, %v984
  %v986 = vpop.f32.mrf.mxu0
  %v987 = vadd.f32 %v888, %v986
  %988 = vmatmul.bf16.gmra.mxu0 %v409
  %v989 = vpop.f32.mrf.mxu0
  %v990 = vadd.f32 %v891, %v989
  %v991 = vpop.f32.mrf.mxu0
  %v992 = vadd.f32 %v893, %v991
  %993 = vmatmul.bf16.gmra.mxu0 %v413
  %v994 = vpop.f32.mrf.mxu0
  %v995 = vadd.f32 %v896, %v994
  %v996 = vpop.f32.mrf.mxu0
  %v997 = vadd.f32 %v898, %v996
  %998 = vmatmul.bf16.gmra.mxu0 %v417
  %v999 = vpop.f32.mrf.mxu0
  %v1000 = vadd.f32 %v901, %v999
  %v1001 = vpop.f32.mrf.mxu0
  %v1002 = vadd.f32 %v903, %v1001
  %1003 = vmatmul.bf16.gmra.mxu0 %v421
  %v1004 = vpop.f32.mrf.mxu0
  %v1005 = vadd.f32 %v906, %v1004
  %v1006 = vpop.f32.mrf.mxu0
  %v1007 = vadd.f32 %v908, %v1006
  %1008 = vmatmul.bf16.gmra.mxu0 %v425
  %v1009 = vpop.f32.mrf.mxu0
  %v1010 = vadd.f32 %v911, %v1009
  %v1011 = vpop.f32.mrf.mxu0
  %v1012 = vadd.f32 %v913, %v1011
  %1013 = vmatmul.bf16.gmra.mxu0 %v429
  %v1014 = vpop.f32.mrf.mxu0
  %v1015 = vadd.f32 %v916, %v1014
  %v1016 = vpop.f32.mrf.mxu0
  %v1017 = vadd.f32 %v918, %v1016
  %1018 = vmatmul.bf16.gmra.mxu0 %v433
  %v1019 = vpop.f32.mrf.mxu0
  %v1020 = vadd.f32 %v921, %v1019
  %v1021 = vpop.f32.mrf.mxu0
  %v1022 = vadd.f32 %v923, %v1021
  %1023 = vmatmul.bf16.gmra.mxu0 %v437
  %v1024 = vpop.f32.mrf.mxu0
  %v1025 = vadd.f32 %v926, %v1024
  %v1026 = vpop.f32.mrf.mxu0
  %v1027 = vadd.f32 %v928, %v1026
  %1028 = vmatmul.bf16.gmra.mxu0 %v441
  %v1029 = vpop.f32.mrf.mxu0
  %v1030 = vadd.f32 %v931, %v1029
  %v1031 = vpop.f32.mrf.mxu0
  %v1032 = vadd.f32 %v933, %v1031
  %1033 = vdwg.mxu0
  %1034 = vmatpush.bf16.msra.mxu0 %v754
  %1035 = vmatpush.bf16.msra.mxu0 %v752
  %1036 = vmatpush.bf16.msra.mxu0 %v750
  %1037 = vmatpush.bf16.msra.mxu0 %v748
  %1038 = vmatpush.bf16.msra.mxu0 %v746
  %1039 = vmatpush.bf16.msra.mxu0 %v744
  %1040 = vmatpush.bf16.msra.mxu0 %v742
  %1041 = vmatpush.bf16.msra.mxu0 %v740
  %1042 = vmatmul.bf16.gmra.mxu0 %v374
  %v1043 = vpop.f32.mrf.mxu0
  %v1044 = vadd.f32 %v945, %v1043
  %v1045 = vpop.f32.mrf.mxu0
  %v1046 = vadd.f32 %v947, %v1045
  %1047 = vmatmul.bf16.gmra.mxu0 %v378
  %v1048 = vpop.f32.mrf.mxu0
  %v1049 = vadd.f32 %v950, %v1048
  %v1050 = vpop.f32.mrf.mxu0
  %v1051 = vadd.f32 %v952, %v1050
  %1052 = vmatmul.bf16.gmra.mxu0 %v382
  %v1053 = vpop.f32.mrf.mxu0
  %v1054 = vadd.f32 %v955, %v1053
  %v1055 = vpop.f32.mrf.mxu0
  %v1056 = vadd.f32 %v957, %v1055
  %1057 = vmatmul.bf16.gmra.mxu0 %v386
  %v1058 = vpop.f32.mrf.mxu0
  %v1059 = vadd.f32 %v960, %v1058
  %v1060 = vpop.f32.mrf.mxu0
  %v1061 = vadd.f32 %v962, %v1060
  %1062 = vmatmul.bf16.gmra.mxu0 %v390
  %v1063 = vpop.f32.mrf.mxu0
  %v1064 = vadd.f32 %v965, %v1063
  %v1065 = vpop.f32.mrf.mxu0
  %v1066 = vadd.f32 %v967, %v1065
  %1067 = vmatmul.bf16.gmra.mxu0 %v394
  %v1068 = vpop.f32.mrf.mxu0
  %v1069 = vadd.f32 %v970, %v1068
  %v1070 = vpop.f32.mrf.mxu0
  %v1071 = vadd.f32 %v972, %v1070
  %1072 = vmatmul.bf16.gmra.mxu0 %v398
  %v1073 = vpop.f32.mrf.mxu0
  %v1074 = vadd.f32 %v975, %v1073
  %v1075 = vpop.f32.mrf.mxu0
  %v1076 = vadd.f32 %v977, %v1075
  %1077 = vmatmul.bf16.gmra.mxu0 %v402
  %v1078 = vpop.f32.mrf.mxu0
  %v1079 = vadd.f32 %v980, %v1078
  %v1080 = vpop.f32.mrf.mxu0
  %v1081 = vadd.f32 %v982, %v1080
  %1082 = vmatmul.bf16.gmra.mxu0 %v406
  %v1083 = vpop.f32.mrf.mxu0
  %v1084 = vadd.f32 %v985, %v1083
  %v1085 = vpop.f32.mrf.mxu0
  %v1086 = vadd.f32 %v987, %v1085
  %1087 = vmatmul.bf16.gmra.mxu0 %v410
  %v1088 = vpop.f32.mrf.mxu0
  %v1089 = vadd.f32 %v990, %v1088
  %v1090 = vpop.f32.mrf.mxu0
  %v1091 = vadd.f32 %v992, %v1090
  %1092 = vmatmul.bf16.gmra.mxu0 %v414
  %v1093 = vpop.f32.mrf.mxu0
  %v1094 = vadd.f32 %v995, %v1093
  %v1095 = vpop.f32.mrf.mxu0
  %v1096 = vadd.f32 %v997, %v1095
  %1097 = vmatmul.bf16.gmra.mxu0 %v418
  %v1098 = vpop.f32.mrf.mxu0
  %v1099 = vadd.f32 %v1000, %v1098
  %v1100 = vpop.f32.mrf.mxu0
  %v1101 = vadd.f32 %v1002, %v1100
  %1102 = vmatmul.bf16.gmra.mxu0 %v422
  %v1103 = vpop.f32.mrf.mxu0
  %v1104 = vadd.f32 %v1005, %v1103
  %v1105 = vpop.f32.mrf.mxu0
  %v1106 = vadd.f32 %v1007, %v1105
  %1107 = vmatmul.bf16.gmra.mxu0 %v426
  %v1108 = vpop.f32.mrf.mxu0
  %v1109 = vadd.f32 %v1010, %v1108
  %v1110 = vpop.f32.mrf.mxu0
  %v1111 = vadd.f32 %v1012, %v1110
  %1112 = vmatmul.bf16.gmra.mxu0 %v430
  %v1113 = vpop.f32.mrf.mxu0
  %v1114 = vadd.f32 %v1015, %v1113
  %v1115 = vpop.f32.mrf.mxu0
  %v1116 = vadd.f32 %v1017, %v1115
  %1117 = vmatmul.bf16.gmra.mxu0 %v434
  %v1118 = vpop.f32.mrf.mxu0
  %v1119 = vadd.f32 %v1020, %v1118
  %v1120 = vpop.f32.mrf.mxu0
  %v1121 = vadd.f32 %v1022, %v1120
  %1122 = vmatmul.bf16.gmra.mxu0 %v438
  %v1123 = vpop.f32.mrf.mxu0
  %v1124 = vadd.f32 %v1025, %v1123
  %v1125 = vpop.f32.mrf.mxu0
  %v1126 = vadd.f32 %v1027, %v1125
  %1127 = vmatmul.bf16.gmra.mxu0 %v442
  %v1128 = vpop.f32.mrf.mxu0
  %v1129 = vadd.f32 %v1030, %v1128
  %v1130 = vpop.f32.mrf.mxu0
  %v1131 = vadd.f32 %v1032, %v1130
  %1132 = vdwg.mxu0
  %1133 = vmatpush.bf16.msra.mxu0 %v770
  %1134 = vmatpush.bf16.msra.mxu0 %v768
  %1135 = vmatpush.bf16.msra.mxu0 %v766
  %1136 = vmatpush.bf16.msra.mxu0 %v764
  %1137 = vmatpush.bf16.msra.mxu0 %v762
  %1138 = vmatpush.bf16.msra.mxu0 %v760
  %1139 = vmatpush.bf16.msra.mxu0 %v758
  %1140 = vmatpush.bf16.msra.mxu0 %v756
  %1141 = vmatmul.bf16.gmra.mxu0 %v375
  %v1142 = vpop.f32.mrf.mxu0
  %v1143 = vadd.f32 %v1044, %v1142
  %v1144 = vpop.f32.mrf.mxu0
  %v1145 = vadd.f32 %v1046, %v1144
  %1146 = vmatmul.bf16.gmra.mxu0 %v379
  %v1147 = vpop.f32.mrf.mxu0
  %v1148 = vadd.f32 %v1049, %v1147
  %v1149 = vpop.f32.mrf.mxu0
  %v1150 = vadd.f32 %v1051, %v1149
  %1151 = vmatmul.bf16.gmra.mxu0 %v383
  %v1152 = vpop.f32.mrf.mxu0
  %v1153 = vadd.f32 %v1054, %v1152
  %v1154 = vpop.f32.mrf.mxu0
  %v1155 = vadd.f32 %v1056, %v1154
  %1156 = vmatmul.bf16.gmra.mxu0 %v387
  %v1157 = vpop.f32.mrf.mxu0
  %v1158 = vadd.f32 %v1059, %v1157
  %v1159 = vpop.f32.mrf.mxu0
  %v1160 = vadd.f32 %v1061, %v1159
  %1161 = vmatmul.bf16.gmra.mxu0 %v391
  %v1162 = vpop.f32.mrf.mxu0
  %v1163 = vadd.f32 %v1064, %v1162
  %v1164 = vpop.f32.mrf.mxu0
  %v1165 = vadd.f32 %v1066, %v1164
  %1166 = vmatmul.bf16.gmra.mxu0 %v395
  %v1167 = vpop.f32.mrf.mxu0
  %v1168 = vadd.f32 %v1069, %v1167
  %v1169 = vpop.f32.mrf.mxu0
  %v1170 = vadd.f32 %v1071, %v1169
  %1171 = vmatmul.bf16.gmra.mxu0 %v399
  %v1172 = vpop.f32.mrf.mxu0
  %v1173 = vadd.f32 %v1074, %v1172
  %v1174 = vpop.f32.mrf.mxu0
  %v1175 = vadd.f32 %v1076, %v1174
  %1176 = vmatmul.bf16.gmra.mxu0 %v403
  %v1177 = vpop.f32.mrf.mxu0
  %v1178 = vadd.f32 %v1079, %v1177
  %v1179 = vpop.f32.mrf.mxu0
  %v1180 = vadd.f32 %v1081, %v1179
  %1181 = vmatmul.bf16.gmra.mxu0 %v407
  %v1182 = vpop.f32.mrf.mxu0
  %v1183 = vadd.f32 %v1084, %v1182
  %v1184 = vpop.f32.mrf.mxu0
  %v1185 = vadd.f32 %v1086, %v1184
  %1186 = vmatmul.bf16.gmra.mxu0 %v411
  %v1187 = vpop.f32.mrf.mxu0
  %v1188 = vadd.f32 %v1089, %v1187
  %v1189 = vpop.f32.mrf.mxu0
  %v1190 = vadd.f32 %v1091, %v1189
  %1191 = vmatmul.bf16.gmra.mxu0 %v415
  %v1192 = vpop.f32.mrf.mxu0
  %v1193 = vadd.f32 %v1094, %v1192
  %v1194 = vpop.f32.mrf.mxu0
  %v1195 = vadd.f32 %v1096, %v1194
  %1196 = vmatmul.bf16.gmra.mxu0 %v419
  %v1197 = vpop.f32.mrf.mxu0
  %v1198 = vadd.f32 %v1099, %v1197
  %v1199 = vpop.f32.mrf.mxu0
  %v1200 = vadd.f32 %v1101, %v1199
  %1201 = vmatmul.bf16.gmra.mxu0 %v423
  %v1202 = vpop.f32.mrf.mxu0
  %v1203 = vadd.f32 %v1104, %v1202
  %v1204 = vpop.f32.mrf.mxu0
  %v1205 = vadd.f32 %v1106, %v1204
  %1206 = vmatmul.bf16.gmra.mxu0 %v427
  %v1207 = vpop.f32.mrf.mxu0
  %v1208 = vadd.f32 %v1109, %v1207
  %v1209 = vpop.f32.mrf.mxu0
  %v1210 = vadd.f32 %v1111, %v1209
  %1211 = vmatmul.bf16.gmra.mxu0 %v431
  %v1212 = vpop.f32.mrf.mxu0
  %v1213 = vadd.f32 %v1114, %v1212
  %v1214 = vpop.f32.mrf.mxu0
  %v1215 = vadd.f32 %v1116, %v1214
  %1216 = vmatmul.bf16.gmra.mxu0 %v435
  %v1217 = vpop.f32.mrf.mxu0
  %v1218 = vadd.f32 %v1119, %v1217
  %v1219 = vpop.f32.mrf.mxu0
  %v1220 = vadd.f32 %v1121, %v1219
  %1221 = vmatmul.bf16.gmra.mxu0 %v439
  %v1222 = vpop.f32.mrf.mxu0
  %v1223 = vadd.f32 %v1124, %v1222
  %v1224 = vpop.f32.mrf.mxu0
  %v1225 = vadd.f32 %v1126, %v1224
  %1226 = vmatmul.bf16.gmra.mxu0 %v443
  %v1227 = vpop.f32.mrf.mxu0
  %v1228 = vadd.f32 %v1129, %v1227
  %v1229 = vpop.f32.mrf.mxu0
  %v1230 = vadd.f32 %v1131, %v1229
  %1231 = vdwg.mxu0
  %1232 = vmatpush.bf16.msra.mxu0 %v723
  %1233 = vmatpush.bf16.msra.mxu0 %v721
  %1234 = vmatpush.bf16.msra.mxu0 %v719
  %1235 = vmatpush.bf16.msra.mxu0 %v717
  %1236 = vmatpush.bf16.msra.mxu0 %v715
  %1237 = vmatpush.bf16.msra.mxu0 %v713
  %1238 = vmatpush.bf16.msra.mxu0 %v711
  %1239 = vmatpush.bf16.msra.mxu0 %v709
  %1240 = vmatmul.bf16.gmra.mxu0 %v372
  %v1241 = vpop.f32.mrf.mxu0
  %v1242 = vadd.f32 %v153, %v1241
  %v1243 = vpop.f32.mrf.mxu0
  %v1244 = vadd.f32 %v153, %v1243
  %1245 = vmatmul.bf16.gmra.mxu0 %v376
  %v1246 = vpop.f32.mrf.mxu0
  %v1247 = vadd.f32 %v153, %v1246
  %v1248 = vpop.f32.mrf.mxu0
  %v1249 = vadd.f32 %v153, %v1248
  %1250 = vmatmul.bf16.gmra.mxu0 %v380
  %v1251 = vpop.f32.mrf.mxu0
  %v1252 = vadd.f32 %v153, %v1251
  %v1253 = vpop.f32.mrf.mxu0
  %v1254 = vadd.f32 %v153, %v1253
  %1255 = vmatmul.bf16.gmra.mxu0 %v384
  %v1256 = vpop.f32.mrf.mxu0
  %v1257 = vadd.f32 %v153, %v1256
  %v1258 = vpop.f32.mrf.mxu0
  %v1259 = vadd.f32 %v153, %v1258
  %1260 = vmatmul.bf16.gmra.mxu0 %v388
  %v1261 = vpop.f32.mrf.mxu0
  %v1262 = vadd.f32 %v153, %v1261
  %v1263 = vpop.f32.mrf.mxu0
  %v1264 = vadd.f32 %v153, %v1263
  %1265 = vmatmul.bf16.gmra.mxu0 %v392
  %v1266 = vpop.f32.mrf.mxu0
  %v1267 = vadd.f32 %v153, %v1266
  %v1268 = vpop.f32.mrf.mxu0
  %v1269 = vadd.f32 %v153, %v1268
  %1270 = vmatmul.bf16.gmra.mxu0 %v396
  %v1271 = vpop.f32.mrf.mxu0
  %v1272 = vadd.f32 %v153, %v1271
  %v1273 = vpop.f32.mrf.mxu0
  %v1274 = vadd.f32 %v153, %v1273
  %1275 = vmatmul.bf16.gmra.mxu0 %v400
  %v1276 = vpop.f32.mrf.mxu0
  %v1277 = vadd.f32 %v153, %v1276
  %v1278 = vpop.f32.mrf.mxu0
  %v1279 = vadd.f32 %v153, %v1278
  %1280 = vmatmul.bf16.gmra.mxu0 %v404
  %v1281 = vpop.f32.mrf.mxu0
  %v1282 = vadd.f32 %v153, %v1281
  %v1283 = vpop.f32.mrf.mxu0
  %v1284 = vadd.f32 %v153, %v1283
  %1285 = vmatmul.bf16.gmra.mxu0 %v408
  %v1286 = vpop.f32.mrf.mxu0
  %v1287 = vadd.f32 %v153, %v1286
  %v1288 = vpop.f32.mrf.mxu0
  %v1289 = vadd.f32 %v153, %v1288
  %1290 = vmatmul.bf16.gmra.mxu0 %v412
  %v1291 = vpop.f32.mrf.mxu0
  %v1292 = vadd.f32 %v153, %v1291
  %v1293 = vpop.f32.mrf.mxu0
  %v1294 = vadd.f32 %v153, %v1293
  %1295 = vmatmul.bf16.gmra.mxu0 %v416
  %v1296 = vpop.f32.mrf.mxu0
  %v1297 = vadd.f32 %v153, %v1296
  %v1298 = vpop.f32.mrf.mxu0
  %v1299 = vadd.f32 %v153, %v1298
  %1300 = vmatmul.bf16.gmra.mxu0 %v420
  %v1301 = vpop.f32.mrf.mxu0
  %v1302 = vadd.f32 %v153, %v1301
  %v1303 = vpop.f32.mrf.mxu0
  %v1304 = vadd.f32 %v153, %v1303
  %1305 = vmatmul.bf16.gmra.mxu0 %v424
  %v1306 = vpop.f32.mrf.mxu0
  %v1307 = vadd.f32 %v153, %v1306
  %v1308 = vpop.f32.mrf.mxu0
  %v1309 = vadd.f32 %v153, %v1308
  %1310 = vmatmul.bf16.gmra.mxu0 %v428
  %v1311 = vpop.f32.mrf.mxu0
  %v1312 = vadd.f32 %v153, %v1311
  %v1313 = vpop.f32.mrf.mxu0
  %v1314 = vadd.f32 %v153, %v1313
  %1315 = vmatmul.bf16.gmra.mxu0 %v432
  %v1316 = vpop.f32.mrf.mxu0
  %v1317 = vadd.f32 %v153, %v1316
  %v1318 = vpop.f32.mrf.mxu0
  %v1319 = vadd.f32 %v153, %v1318
  %1320 = vmatmul.bf16.gmra.mxu0 %v436
  %v1321 = vpop.f32.mrf.mxu0
  %v1322 = vadd.f32 %v153, %v1321
  %v1323 = vpop.f32.mrf.mxu0
  %v1324 = vadd.f32 %v153, %v1323
  %1325 = vmatmul.bf16.gmra.mxu0 %v440
  %v1326 = vpop.f32.mrf.mxu0
  %v1327 = vadd.f32 %v153, %v1326
  %v1328 = vpop.f32.mrf.mxu0
  %v1329 = vadd.f32 %v153, %v1328
  %1330 = vdwg.mxu0
  %1331 = vmatpush.bf16.msra.mxu0 %v739
  %1332 = vmatpush.bf16.msra.mxu0 %v737
  %1333 = vmatpush.bf16.msra.mxu0 %v735
  %1334 = vmatpush.bf16.msra.mxu0 %v733
  %1335 = vmatpush.bf16.msra.mxu0 %v731
  %1336 = vmatpush.bf16.msra.mxu0 %v729
  %1337 = vmatpush.bf16.msra.mxu0 %v727
  %1338 = vmatpush.bf16.msra.mxu0 %v725
  %1339 = vmatmul.bf16.gmra.mxu0 %v373
  %v1340 = vpop.f32.mrf.mxu0
  %v1341 = vadd.f32 %v1242, %v1340
  %v1342 = vpop.f32.mrf.mxu0
  %v1343 = vadd.f32 %v1244, %v1342
  %1344 = vmatmul.bf16.gmra.mxu0 %v377
  %v1345 = vpop.f32.mrf.mxu0
  %v1346 = vadd.f32 %v1247, %v1345
  %v1347 = vpop.f32.mrf.mxu0
  %v1348 = vadd.f32 %v1249, %v1347
  %1349 = vmatmul.bf16.gmra.mxu0 %v381
  %v1350 = vpop.f32.mrf.mxu0
  %v1351 = vadd.f32 %v1252, %v1350
  %v1352 = vpop.f32.mrf.mxu0
  %v1353 = vadd.f32 %v1254, %v1352
  %1354 = vmatmul.bf16.gmra.mxu0 %v385
  %v1355 = vpop.f32.mrf.mxu0
  %v1356 = vadd.f32 %v1257, %v1355
  %v1357 = vpop.f32.mrf.mxu0
  %v1358 = vadd.f32 %v1259, %v1357
  %1359 = vmatmul.bf16.gmra.mxu0 %v389
  %v1360 = vpop.f32.mrf.mxu0
  %v1361 = vadd.f32 %v1262, %v1360
  %v1362 = vpop.f32.mrf.mxu0
  %v1363 = vadd.f32 %v1264, %v1362
  %1364 = vmatmul.bf16.gmra.mxu0 %v393
  %v1365 = vpop.f32.mrf.mxu0
  %v1366 = vadd.f32 %v1267, %v1365
  %v1367 = vpop.f32.mrf.mxu0
  %v1368 = vadd.f32 %v1269, %v1367
  %1369 = vmatmul.bf16.gmra.mxu0 %v397
  %v1370 = vpop.f32.mrf.mxu0
  %v1371 = vadd.f32 %v1272, %v1370
  %v1372 = vpop.f32.mrf.mxu0
  %v1373 = vadd.f32 %v1274, %v1372
  %1374 = vmatmul.bf16.gmra.mxu0 %v401
  %v1375 = vpop.f32.mrf.mxu0
  %v1376 = vadd.f32 %v1277, %v1375
  %v1377 = vpop.f32.mrf.mxu0
  %v1378 = vadd.f32 %v1279, %v1377
  %1379 = vmatmul.bf16.gmra.mxu0 %v405
  %v1380 = vpop.f32.mrf.mxu0
  %v1381 = vadd.f32 %v1282, %v1380
  %v1382 = vpop.f32.mrf.mxu0
  %v1383 = vadd.f32 %v1284, %v1382
  %1384 = vmatmul.bf16.gmra.mxu0 %v409
  %v1385 = vpop.f32.mrf.mxu0
  %v1386 = vadd.f32 %v1287, %v1385
  %v1387 = vpop.f32.mrf.mxu0
  %v1388 = vadd.f32 %v1289, %v1387
  %1389 = vmatmul.bf16.gmra.mxu0 %v413
  %v1390 = vpop.f32.mrf.mxu0
  %v1391 = vadd.f32 %v1292, %v1390
  %v1392 = vpop.f32.mrf.mxu0
  %v1393 = vadd.f32 %v1294, %v1392
  %1394 = vmatmul.bf16.gmra.mxu0 %v417
  %v1395 = vpop.f32.mrf.mxu0
  %v1396 = vadd.f32 %v1297, %v1395
  %v1397 = vpop.f32.mrf.mxu0
  %v1398 = vadd.f32 %v1299, %v1397
  %1399 = vmatmul.bf16.gmra.mxu0 %v421
  %v1400 = vpop.f32.mrf.mxu0
  %v1401 = vadd.f32 %v1302, %v1400
  %v1402 = vpop.f32.mrf.mxu0
  %v1403 = vadd.f32 %v1304, %v1402
  %1404 = vmatmul.bf16.gmra.mxu0 %v425
  %v1405 = vpop.f32.mrf.mxu0
  %v1406 = vadd.f32 %v1307, %v1405
  %v1407 = vpop.f32.mrf.mxu0
  %v1408 = vadd.f32 %v1309, %v1407
  %1409 = vmatmul.bf16.gmra.mxu0 %v429
  %v1410 = vpop.f32.mrf.mxu0
  %v1411 = vadd.f32 %v1312, %v1410
  %v1412 = vpop.f32.mrf.mxu0
  %v1413 = vadd.f32 %v1314, %v1412
  %1414 = vmatmul.bf16.gmra.mxu0 %v433
  %v1415 = vpop.f32.mrf.mxu0
  %v1416 = vadd.f32 %v1317, %v1415
  %v1417 = vpop.f32.mrf.mxu0
  %v1418 = vadd.f32 %v1319, %v1417
  %1419 = vmatmul.bf16.gmra.mxu0 %v437
  %v1420 = vpop.f32.mrf.mxu0
  %v1421 = vadd.f32 %v1322, %v1420
  %v1422 = vpop.f32.mrf.mxu0
  %v1423 = vadd.f32 %v1324, %v1422
  %1424 = vmatmul.bf16.gmra.mxu0 %v441
  %v1425 = vpop.f32.mrf.mxu0
  %v1426 = vadd.f32 %v1327, %v1425
  %v1427 = vpop.f32.mrf.mxu0
  %v1428 = vadd.f32 %v1329, %v1427
  %1429 = vdwg.mxu0
  %1430 = vmatpush.bf16.msra.mxu0 %v755
  %1431 = vmatpush.bf16.msra.mxu0 %v753
  %1432 = vmatpush.bf16.msra.mxu0 %v751
  %1433 = vmatpush.bf16.msra.mxu0 %v749
  %1434 = vmatpush.bf16.msra.mxu0 %v747
  %1435 = vmatpush.bf16.msra.mxu0 %v745
  %1436 = vmatpush.bf16.msra.mxu0 %v743
  %1437 = vmatpush.bf16.msra.mxu0 %v741
  %1438 = vmatmul.bf16.gmra.mxu0 %v374
  %v1439 = vpop.f32.mrf.mxu0
  %v1440 = vadd.f32 %v1341, %v1439
  %v1441 = vpop.f32.mrf.mxu0
  %v1442 = vadd.f32 %v1343, %v1441
  %1443 = vmatmul.bf16.gmra.mxu0 %v378
  %v1444 = vpop.f32.mrf.mxu0
  %v1445 = vadd.f32 %v1346, %v1444
  %v1446 = vpop.f32.mrf.mxu0
  %v1447 = vadd.f32 %v1348, %v1446
  %1448 = vmatmul.bf16.gmra.mxu0 %v382
  %v1449 = vpop.f32.mrf.mxu0
  %v1450 = vadd.f32 %v1351, %v1449
  %v1451 = vpop.f32.mrf.mxu0
  %v1452 = vadd.f32 %v1353, %v1451
  %1453 = vmatmul.bf16.gmra.mxu0 %v386
  %v1454 = vpop.f32.mrf.mxu0
  %v1455 = vadd.f32 %v1356, %v1454
  %v1456 = vpop.f32.mrf.mxu0
  %v1457 = vadd.f32 %v1358, %v1456
  %1458 = vmatmul.bf16.gmra.mxu0 %v390
  %v1459 = vpop.f32.mrf.mxu0
  %v1460 = vadd.f32 %v1361, %v1459
  %v1461 = vpop.f32.mrf.mxu0
  %v1462 = vadd.f32 %v1363, %v1461
  %1463 = vmatmul.bf16.gmra.mxu0 %v394
  %v1464 = vpop.f32.mrf.mxu0
  %v1465 = vadd.f32 %v1366, %v1464
  %v1466 = vpop.f32.mrf.mxu0
  %v1467 = vadd.f32 %v1368, %v1466
  %1468 = vmatmul.bf16.gmra.mxu0 %v398
  %v1469 = vpop.f32.mrf.mxu0
  %v1470 = vadd.f32 %v1371, %v1469
  %v1471 = vpop.f32.mrf.mxu0
  %v1472 = vadd.f32 %v1373, %v1471
  %1473 = vmatmul.bf16.gmra.mxu0 %v402
  %v1474 = vpop.f32.mrf.mxu0
  %v1475 = vadd.f32 %v1376, %v1474
  %v1476 = vpop.f32.mrf.mxu0
  %v1477 = vadd.f32 %v1378, %v1476
  %1478 = vmatmul.bf16.gmra.mxu0 %v406
  %v1479 = vpop.f32.mrf.mxu0
  %v1480 = vadd.f32 %v1381, %v1479
  %v1481 = vpop.f32.mrf.mxu0
  %v1482 = vadd.f32 %v1383, %v1481
  %1483 = vmatmul.bf16.gmra.mxu0 %v410
  %v1484 = vpop.f32.mrf.mxu0
  %v1485 = vadd.f32 %v1386, %v1484
  %v1486 = vpop.f32.mrf.mxu0
  %v1487 = vadd.f32 %v1388, %v1486
  %1488 = vmatmul.bf16.gmra.mxu0 %v414
  %v1489 = vpop.f32.mrf.mxu0
  %v1490 = vadd.f32 %v1391, %v1489
  %v1491 = vpop.f32.mrf.mxu0
  %v1492 = vadd.f32 %v1393, %v1491
  %1493 = vmatmul.bf16.gmra.mxu0 %v418
  %v1494 = vpop.f32.mrf.mxu0
  %v1495 = vadd.f32 %v1396, %v1494
  %v1496 = vpop.f32.mrf.mxu0
  %v1497 = vadd.f32 %v1398, %v1496
  %1498 = vmatmul.bf16.gmra.mxu0 %v422
  %v1499 = vpop.f32.mrf.mxu0
  %v1500 = vadd.f32 %v1401, %v1499
  %v1501 = vpop.f32.mrf.mxu0
  %v1502 = vadd.f32 %v1403, %v1501
  %1503 = vmatmul.bf16.gmra.mxu0 %v426
  %v1504 = vpop.f32.mrf.mxu0
  %v1505 = vadd.f32 %v1406, %v1504
  %v1506 = vpop.f32.mrf.mxu0
  %v1507 = vadd.f32 %v1408, %v1506
  %1508 = vmatmul.bf16.gmra.mxu0 %v430
  %v1509 = vpop.f32.mrf.mxu0
  %v1510 = vadd.f32 %v1411, %v1509
  %v1511 = vpop.f32.mrf.mxu0
  %v1512 = vadd.f32 %v1413, %v1511
  %1513 = vmatmul.bf16.gmra.mxu0 %v434
  %v1514 = vpop.f32.mrf.mxu0
  %v1515 = vadd.f32 %v1416, %v1514
  %v1516 = vpop.f32.mrf.mxu0
  %v1517 = vadd.f32 %v1418, %v1516
  %1518 = vmatmul.bf16.gmra.mxu0 %v438
  %v1519 = vpop.f32.mrf.mxu0
  %v1520 = vadd.f32 %v1421, %v1519
  %v1521 = vpop.f32.mrf.mxu0
  %v1522 = vadd.f32 %v1423, %v1521
  %1523 = vmatmul.bf16.gmra.mxu0 %v442
  %v1524 = vpop.f32.mrf.mxu0
  %v1525 = vadd.f32 %v1426, %v1524
  %v1526 = vpop.f32.mrf.mxu0
  %v1527 = vadd.f32 %v1428, %v1526
  %1528 = vdwg.mxu0
  %1529 = vmatpush.bf16.msra.mxu0 %v771
  %1530 = vmatpush.bf16.msra.mxu0 %v769
  %1531 = vmatpush.bf16.msra.mxu0 %v767
  %1532 = vmatpush.bf16.msra.mxu0 %v765
  %1533 = vmatpush.bf16.msra.mxu0 %v763
  %1534 = vmatpush.bf16.msra.mxu0 %v761
  %1535 = vmatpush.bf16.msra.mxu0 %v759
  %1536 = vmatpush.bf16.msra.mxu0 %v757
  %1537 = vmatmul.bf16.gmra.mxu0 %v375
  %v1538 = vpop.f32.mrf.mxu0
  %v1539 = vadd.f32 %v1440, %v1538
  %v1540 = vpop.f32.mrf.mxu0
  %v1541 = vadd.f32 %v1442, %v1540
  %1542 = vmatmul.bf16.gmra.mxu0 %v379
  %v1543 = vpop.f32.mrf.mxu0
  %v1544 = vadd.f32 %v1445, %v1543
  %v1545 = vpop.f32.mrf.mxu0
  %v1546 = vadd.f32 %v1447, %v1545
  %1547 = vmatmul.bf16.gmra.mxu0 %v383
  %v1548 = vpop.f32.mrf.mxu0
  %v1549 = vadd.f32 %v1450, %v1548
  %v1550 = vpop.f32.mrf.mxu0
  %v1551 = vadd.f32 %v1452, %v1550
  %1552 = vmatmul.bf16.gmra.mxu0 %v387
  %v1553 = vpop.f32.mrf.mxu0
  %v1554 = vadd.f32 %v1455, %v1553
  %v1555 = vpop.f32.mrf.mxu0
  %v1556 = vadd.f32 %v1457, %v1555
  %1557 = vmatmul.bf16.gmra.mxu0 %v391
  %v1558 = vpop.f32.mrf.mxu0
  %v1559 = vadd.f32 %v1460, %v1558
  %v1560 = vpop.f32.mrf.mxu0
  %v1561 = vadd.f32 %v1462, %v1560
  %1562 = vmatmul.bf16.gmra.mxu0 %v395
  %v1563 = vpop.f32.mrf.mxu0
  %v1564 = vadd.f32 %v1465, %v1563
  %v1565 = vpop.f32.mrf.mxu0
  %v1566 = vadd.f32 %v1467, %v1565
  %1567 = vmatmul.bf16.gmra.mxu0 %v399
  %v1568 = vpop.f32.mrf.mxu0
  %v1569 = vadd.f32 %v1470, %v1568
  %v1570 = vpop.f32.mrf.mxu0
  %v1571 = vadd.f32 %v1472, %v1570
  %1572 = vmatmul.bf16.gmra.mxu0 %v403
  %v1573 = vpop.f32.mrf.mxu0
  %v1574 = vadd.f32 %v1475, %v1573
  %v1575 = vpop.f32.mrf.mxu0
  %v1576 = vadd.f32 %v1477, %v1575
  %1577 = vmatmul.bf16.gmra.mxu0 %v407
  %v1578 = vpop.f32.mrf.mxu0
  %v1579 = vadd.f32 %v1480, %v1578
  %v1580 = vpop.f32.mrf.mxu0
  %v1581 = vadd.f32 %v1482, %v1580
  %1582 = vmatmul.bf16.gmra.mxu0 %v411
  %v1583 = vpop.f32.mrf.mxu0
  %v1584 = vadd.f32 %v1485, %v1583
  %v1585 = vpop.f32.mrf.mxu0
  %v1586 = vadd.f32 %v1487, %v1585
  %1587 = vmatmul.bf16.gmra.mxu0 %v415
  %v1588 = vpop.f32.mrf.mxu0
  %v1589 = vadd.f32 %v1490, %v1588
  %v1590 = vpop.f32.mrf.mxu0
  %v1591 = vadd.f32 %v1492, %v1590
  %1592 = vmatmul.bf16.gmra.mxu0 %v419
  %v1593 = vpop.f32.mrf.mxu0
  %v1594 = vadd.f32 %v1495, %v1593
  %v1595 = vpop.f32.mrf.mxu0
  %v1596 = vadd.f32 %v1497, %v1595
  %1597 = vmatmul.bf16.gmra.mxu0 %v423
  %v1598 = vpop.f32.mrf.mxu0
  %v1599 = vadd.f32 %v1500, %v1598
  %v1600 = vpop.f32.mrf.mxu0
  %v1601 = vadd.f32 %v1502, %v1600
  %1602 = vmatmul.bf16.gmra.mxu0 %v427
  %v1603 = vpop.f32.mrf.mxu0
  %v1604 = vadd.f32 %v1505, %v1603
  %v1605 = vpop.f32.mrf.mxu0
  %v1606 = vadd.f32 %v1507, %v1605
  %1607 = vmatmul.bf16.gmra.mxu0 %v431
  %v1608 = vpop.f32.mrf.mxu0
  %v1609 = vadd.f32 %v1510, %v1608
  %v1610 = vpop.f32.mrf.mxu0
  %v1611 = vadd.f32 %v1512, %v1610
  %1612 = vmatmul.bf16.gmra.mxu0 %v435
  %v1613 = vpop.f32.mrf.mxu0
  %v1614 = vadd.f32 %v1515, %v1613
  %v1615 = vpop.f32.mrf.mxu0
  %v1616 = vadd.f32 %v1517, %v1615
  %1617 = vmatmul.bf16.gmra.mxu0 %v439
  %v1618 = vpop.f32.mrf.mxu0
  %v1619 = vadd.f32 %v1520, %v1618
  %v1620 = vpop.f32.mrf.mxu0
  %v1621 = vadd.f32 %v1522, %v1620
  %1622 = vmatmul.bf16.gmra.mxu0 %v443
  %v1623 = vpop.f32.mrf.mxu0
  %v1624 = vadd.f32 %v1525, %v1623
  %v1625 = vpop.f32.mrf.mxu0
  %v1626 = vadd.f32 %v1527, %v1625
  %1627 = vdwg.mxu0
  %v1628 = vtanh.pop %v1143
  %v1629 = vtanh.pop %v1145
  %v1630 = vtanh.pop %v1148
  %v1631 = vtanh.pop %v1150
  %v1632 = vtanh.pop %v1153
  %v1633 = vtanh.pop %v1155
  %v1634 = vtanh.pop %v1158
  %v1635 = vtanh.pop %v1160
  %v1636 = vtanh.pop %v1163
  %v1637 = vtanh.pop %v1165
  %v1638 = vtanh.pop %v1168
  %v1639 = vtanh.pop %v1170
  %v1640 = vtanh.pop %v1173
  %v1641 = vtanh.pop %v1175
  %v1642 = vtanh.pop %v1178
  %v1643 = vtanh.pop %v1180
  %v1644 = vtanh.pop %v1183
  %v1645 = vtanh.pop %v1185
  %v1646 = vtanh.pop %v1188
  %v1647 = vtanh.pop %v1190
  %v1648 = vtanh.pop %v1193
  %v1649 = vtanh.pop %v1195
  %v1650 = vtanh.pop %v1198
  %v1651 = vtanh.pop %v1200
  %v1652 = vtanh.pop %v1203
  %v1653 = vtanh.pop %v1205
  %v1654 = vtanh.pop %v1208
  %v1655 = vtanh.pop %v1210
  %v1656 = vtanh.pop %v1213
  %v1657 = vtanh.pop %v1215
  %v1658 = vtanh.pop %v1218
  %v1659 = vtanh.pop %v1220
  %v1660 = vtanh.pop %v1223
  %v1661 = vtanh.pop %v1225
  %v1662 = vtanh.pop %v1228
  %v1663 = vtanh.pop %v1230
  %v1664 = vxor.u32 %v1539, 2147483648
  %v1665 = vxor.u32 %v1541, 2147483648
  %v1666 = vxor.u32 %v1544, 2147483648
  %v1667 = vxor.u32 %v1546, 2147483648
  %v1668 = vxor.u32 %v1549, 2147483648
  %v1669 = vxor.u32 %v1551, 2147483648
  %v1670 = vxor.u32 %v1554, 2147483648
  %v1671 = vxor.u32 %v1556, 2147483648
  %v1672 = vxor.u32 %v1559, 2147483648
  %v1673 = vxor.u32 %v1561, 2147483648
  %v1674 = vxor.u32 %v1564, 2147483648
  %v1675 = vxor.u32 %v1566, 2147483648
  %v1676 = vxor.u32 %v1569, 2147483648
  %v1677 = vxor.u32 %v1571, 2147483648
  %v1678 = vxor.u32 %v1574, 2147483648
  %v1679 = vxor.u32 %v1576, 2147483648
  %v1680 = vxor.u32 %v1579, 2147483648
  %v1681 = vxor.u32 %v1581, 2147483648
  %v1682 = vxor.u32 %v1584, 2147483648
  %v1683 = vxor.u32 %v1586, 2147483648
  %v1684 = vxor.u32 %v1589, 2147483648
  %v1685 = vxor.u32 %v1591, 2147483648
  %v1686 = vxor.u32 %v1594, 2147483648
  %v1687 = vxor.u32 %v1596, 2147483648
  %v1688 = vxor.u32 %v1599, 2147483648
  %v1689 = vxor.u32 %v1601, 2147483648
  %v1690 = vxor.u32 %v1604, 2147483648
  %v1691 = vxor.u32 %v1606, 2147483648
  %v1692 = vxor.u32 %v1609, 2147483648
  %v1693 = vxor.u32 %v1611, 2147483648
  %v1694 = vxor.u32 %v1614, 2147483648
  %v1695 = vxor.u32 %v1616, 2147483648
  %v1696 = vxor.u32 %v1619, 2147483648
  %v1697 = vxor.u32 %v1621, 2147483648
  %v1698 = vxor.u32 %v1624, 2147483648
  %v1699 = vxor.u32 %v1626, 2147483648
  %v1700 = vmul.f32 %v1664, 1.442695
  %v1701 = vpow.pop %v1700
  %v1702 = vmul.f32 %v1665, 1.442695
  %v1703 = vpow.pop %v1702
  %v1704 = vmul.f32 %v1666, 1.442695
  %v1705 = vpow.pop %v1704
  %v1706 = vmul.f32 %v1667, 1.442695
  %v1707 = vpow.pop %v1706
  %v1708 = vmul.f32 %v1668, 1.442695
  %v1709 = vpow.pop %v1708
  %v1710 = vmul.f32 %v1669, 1.442695
  %v1711 = vpow.pop %v1710
  %v1712 = vmul.f32 %v1670, 1.442695
  %v1713 = vpow.pop %v1712
  %v1714 = vmul.f32 %v1671, 1.442695
  %v1715 = vpow.pop %v1714
  %v1716 = vmul.f32 %v1672, 1.442695
  %v1717 = vpow.pop %v1716
  %v1718 = vmul.f32 %v1673, 1.442695
  %v1719 = vpow.pop %v1718
  %v1720 = vmul.f32 %v1674, 1.442695
  %v1721 = vpow.pop %v1720
  %v1722 = vmul.f32 %v1675, 1.442695
  %v1723 = vpow.pop %v1722
  %v1724 = vmul.f32 %v1676, 1.442695
  %v1725 = vpow.pop %v1724
  %v1726 = vmul.f32 %v1677, 1.442695
  %v1727 = vpow.pop %v1726
  %v1728 = vmul.f32 %v1678, 1.442695
  %v1729 = vpow.pop %v1728
  %v1730 = vmul.f32 %v1679, 1.442695
  %v1731 = vpow.pop %v1730
  %v1732 = vmul.f32 %v1680, 1.442695
  %v1733 = vpow.pop %v1732
  %v1734 = vmul.f32 %v1681, 1.442695
  %v1735 = vpow.pop %v1734
  %v1736 = vmul.f32 %v1682, 1.442695
  %v1737 = vpow.pop %v1736
  %v1738 = vmul.f32 %v1683, 1.442695
  %v1739 = vpow.pop %v1738
  %v1740 = vmul.f32 %v1684, 1.442695
  %v1741 = vpow.pop %v1740
  %v1742 = vmul.f32 %v1685, 1.442695
  %v1743 = vpow.pop %v1742
  %v1744 = vmul.f32 %v1686, 1.442695
  %v1745 = vpow.pop %v1744
  %v1746 = vmul.f32 %v1687, 1.442695
  %v1747 = vpow.pop %v1746
  %v1748 = vmul.f32 %v1688, 1.442695
  %v1749 = vpow.pop %v1748
  %v1750 = vmul.f32 %v1689, 1.442695
  %v1751 = vpow.pop %v1750
  %v1752 = vmul.f32 %v1690, 1.442695
  %v1753 = vpow.pop %v1752
  %v1754 = vmul.f32 %v1691, 1.442695
  %v1755 = vpow.pop %v1754
  %v1756 = vmul.f32 %v1692, 1.442695
  %v1757 = vpow.pop %v1756
  %v1758 = vmul.f32 %v1693, 1.442695
  %v1759 = vpow.pop %v1758
  %v1760 = vmul.f32 %v1694, 1.442695
  %v1761 = vpow.pop %v1760
  %v1762 = vmul.f32 %v1695, 1.442695
  %v1763 = vpow.pop %v1762
  %v1764 = vmul.f32 %v1696, 1.442695
  %v1765 = vpow.pop %v1764
  %v1766 = vmul.f32 %v1697, 1.442695
  %v1767 = vpow.pop %v1766
  %v1768 = vmul.f32 %v1698, 1.442695
  %v1769 = vpow.pop %v1768
  %v1770 = vmul.f32 %v1699, 1.442695
  %v1771 = vpow.pop %v1770
  %v1772 = vadd.f32 %v1701, 1.0
  %v1773 = vadd.f32 %v1703, 1.0
  %v1774 = vadd.f32 %v1705, 1.0
  %v1775 = vadd.f32 %v1707, 1.0
  %v1776 = vadd.f32 %v1709, 1.0
  %v1777 = vadd.f32 %v1711, 1.0
  %v1778 = vadd.f32 %v1713, 1.0
  %v1779 = vadd.f32 %v1715, 1.0
  %v1780 = vadd.f32 %v1717, 1.0
  %v1781 = vadd.f32 %v1719, 1.0
  %v1782 = vadd.f32 %v1721, 1.0
  %v1783 = vadd.f32 %v1723, 1.0
  %v1784 = vadd.f32 %v1725, 1.0
  %v1785 = vadd.f32 %v1727, 1.0
  %v1786 = vadd.f32 %v1729, 1.0
  %v1787 = vadd.f32 %v1731, 1.0
  %v1788 = vadd.f32 %v1733, 1.0
  %v1789 = vadd.f32 %v1735, 1.0
  %v1790 = vadd.f32 %v1737, 1.0
  %v1791 = vadd.f32 %v1739, 1.0
  %v1792 = vadd.f32 %v1741, 1.0
  %v1793 = vadd.f32 %v1743, 1.0
  %v1794 = vadd.f32 %v1745, 1.0
  %v1795 = vadd.f32 %v1747, 1.0
  %v1796 = vadd.f32 %v1749, 1.0
  %v1797 = vadd.f32 %v1751, 1.0
  %v1798 = vadd.f32 %v1753, 1.0
  %v1799 = vadd.f32 %v1755, 1.0
  %v1800 = vadd.f32 %v1757, 1.0
  %v1801 = vadd.f32 %v1759, 1.0
  %v1802 = vadd.f32 %v1761, 1.0
  %v1803 = vadd.f32 %v1763, 1.0
  %v1804 = vadd.f32 %v1765, 1.0
  %v1805 = vadd.f32 %v1767, 1.0
  %v1806 = vadd.f32 %v1769, 1.0
  %v1807 = vadd.f32 %v1771, 1.0
  %v1808 = vrcp.pop %v1772
  %v1809 = vmul.f32 %v1772, %v1808
  %v1810 = vsub.f32 1.0, %v1809
  %v1811 = vmul.f32 %v1808, %v1810
  %v1812 = vadd.f32 %v1808, %v1811
  %vm1813 = vweird.f32 %v1772
  %vm1814 = vweird.f32 %v1808
  %vm1815 = vmor %vm1813, %vm1814
  %v1816 = vsel %vm1815, %v1808, %v1812
  %v1817 = vand.u32 2147483647, %v1772
  %vm1818 = vcmp.eq.f32.partialorder %v1817, 8.507059e+37
  %v1819 = vand.u32 %v1772, 2147483648
  %v1820 = vor.u32 1.1754944e-38, %v1819
  %v1821 = vsel %vm1818, %v1820, %v1816
  %v1822 = vmul.f32 1.0, %v1821
  %v1823 = vrcp.pop %v1773
  %v1824 = vmul.f32 %v1773, %v1823
  %v1825 = vsub.f32 1.0, %v1824
  %v1826 = vmul.f32 %v1823, %v1825
  %v1827 = vadd.f32 %v1823, %v1826
  %vm1828 = vweird.f32 %v1773
  %vm1829 = vweird.f32 %v1823
  %vm1830 = vmor %vm1828, %vm1829
  %v1831 = vsel %vm1830, %v1823, %v1827
  %v1832 = vand.u32 2147483647, %v1773
  %vm1833 = vcmp.eq.f32.partialorder %v1832, 8.507059e+37
  %v1834 = vand.u32 %v1773, 2147483648
  %v1835 = vor.u32 1.1754944e-38, %v1834
  %v1836 = vsel %vm1833, %v1835, %v1831
  %v1837 = vmul.f32 1.0, %v1836
  %v1838 = vrcp.pop %v1774
  %v1839 = vmul.f32 %v1774, %v1838
  %v1840 = vsub.f32 1.0, %v1839
  %v1841 = vmul.f32 %v1838, %v1840
  %v1842 = vadd.f32 %v1838, %v1841
  %vm1843 = vweird.f32 %v1774
  %vm1844 = vweird.f32 %v1838
  %vm1845 = vmor %vm1843, %vm1844
  %v1846 = vsel %vm1845, %v1838, %v1842
  %v1847 = vand.u32 2147483647, %v1774
  %vm1848 = vcmp.eq.f32.partialorder %v1847, 8.507059e+37
  %v1849 = vand.u32 %v1774, 2147483648
  %v1850 = vor.u32 1.1754944e-38, %v1849
  %v1851 = vsel %vm1848, %v1850, %v1846
  %v1852 = vmul.f32 1.0, %v1851
  %v1853 = vrcp.pop %v1775
  %v1854 = vmul.f32 %v1775, %v1853
  %v1855 = vsub.f32 1.0, %v1854
  %v1856 = vmul.f32 %v1853, %v1855
  %v1857 = vadd.f32 %v1853, %v1856
  %vm1858 = vweird.f32 %v1775
  %vm1859 = vweird.f32 %v1853
  %vm1860 = vmor %vm1858, %vm1859
  %v1861 = vsel %vm1860, %v1853, %v1857
  %v1862 = vand.u32 2147483647, %v1775
  %vm1863 = vcmp.eq.f32.partialorder %v1862, 8.507059e+37
  %v1864 = vand.u32 %v1775, 2147483648
  %v1865 = vor.u32 1.1754944e-38, %v1864
  %v1866 = vsel %vm1863, %v1865, %v1861
  %v1867 = vmul.f32 1.0, %v1866
  %v1868 = vrcp.pop %v1776
  %v1869 = vmul.f32 %v1776, %v1868
  %v1870 = vsub.f32 1.0, %v1869
  %v1871 = vmul.f32 %v1868, %v1870
  %v1872 = vadd.f32 %v1868, %v1871
  %vm1873 = vweird.f32 %v1776
  %vm1874 = vweird.f32 %v1868
  %vm1875 = vmor %vm1873, %vm1874
  %v1876 = vsel %vm1875, %v1868, %v1872
  %v1877 = vand.u32 2147483647, %v1776
  %vm1878 = vcmp.eq.f32.partialorder %v1877, 8.507059e+37
  %v1879 = vand.u32 %v1776, 2147483648
  %v1880 = vor.u32 1.1754944e-38, %v1879
  %v1881 = vsel %vm1878, %v1880, %v1876
  %v1882 = vmul.f32 1.0, %v1881
  %v1883 = vrcp.pop %v1777
  %v1884 = vmul.f32 %v1777, %v1883
  %v1885 = vsub.f32 1.0, %v1884
  %v1886 = vmul.f32 %v1883, %v1885
  %v1887 = vadd.f32 %v1883, %v1886
  %vm1888 = vweird.f32 %v1777
  %vm1889 = vweird.f32 %v1883
  %vm1890 = vmor %vm1888, %vm1889
  %v1891 = vsel %vm1890, %v1883, %v1887
  %v1892 = vand.u32 2147483647, %v1777
  %vm1893 = vcmp.eq.f32.partialorder %v1892, 8.507059e+37
  %v1894 = vand.u32 %v1777, 2147483648
  %v1895 = vor.u32 1.1754944e-38, %v1894
  %v1896 = vsel %vm1893, %v1895, %v1891
  %v1897 = vmul.f32 1.0, %v1896
  %v1898 = vrcp.pop %v1778
  %v1899 = vmul.f32 %v1778, %v1898
  %v1900 = vsub.f32 1.0, %v1899
  %v1901 = vmul.f32 %v1898, %v1900
  %v1902 = vadd.f32 %v1898, %v1901
  %vm1903 = vweird.f32 %v1778
  %vm1904 = vweird.f32 %v1898
  %vm1905 = vmor %vm1903, %vm1904
  %v1906 = vsel %vm1905, %v1898, %v1902
  %v1907 = vand.u32 2147483647, %v1778
  %vm1908 = vcmp.eq.f32.partialorder %v1907, 8.507059e+37
  %v1909 = vand.u32 %v1778, 2147483648
  %v1910 = vor.u32 1.1754944e-38, %v1909
  %v1911 = vsel %vm1908, %v1910, %v1906
  %v1912 = vmul.f32 1.0, %v1911
  %v1913 = vrcp.pop %v1779
  %v1914 = vmul.f32 %v1779, %v1913
  %v1915 = vsub.f32 1.0, %v1914
  %v1916 = vmul.f32 %v1913, %v1915
  %v1917 = vadd.f32 %v1913, %v1916
  %vm1918 = vweird.f32 %v1779
  %vm1919 = vweird.f32 %v1913
  %vm1920 = vmor %vm1918, %vm1919
  %v1921 = vsel %vm1920, %v1913, %v1917
  %v1922 = vand.u32 2147483647, %v1779
  %vm1923 = vcmp.eq.f32.partialorder %v1922, 8.507059e+37
  %v1924 = vand.u32 %v1779, 2147483648
  %v1925 = vor.u32 1.1754944e-38, %v1924
  %v1926 = vsel %vm1923, %v1925, %v1921
  %v1927 = vmul.f32 1.0, %v1926
  %v1928 = vrcp.pop %v1780
  %v1929 = vmul.f32 %v1780, %v1928
  %v1930 = vsub.f32 1.0, %v1929
  %v1931 = vmul.f32 %v1928, %v1930
  %v1932 = vadd.f32 %v1928, %v1931
  %vm1933 = vweird.f32 %v1780
  %vm1934 = vweird.f32 %v1928
  %vm1935 = vmor %vm1933, %vm1934
  %v1936 = vsel %vm1935, %v1928, %v1932
  %v1937 = vand.u32 2147483647, %v1780
  %vm1938 = vcmp.eq.f32.partialorder %v1937, 8.507059e+37
  %v1939 = vand.u32 %v1780, 2147483648
  %v1940 = vor.u32 1.1754944e-38, %v1939
  %v1941 = vsel %vm1938, %v1940, %v1936
  %v1942 = vmul.f32 1.0, %v1941
  %v1943 = vrcp.pop %v1781
  %v1944 = vmul.f32 %v1781, %v1943
  %v1945 = vsub.f32 1.0, %v1944
  %v1946 = vmul.f32 %v1943, %v1945
  %v1947 = vadd.f32 %v1943, %v1946
  %vm1948 = vweird.f32 %v1781
  %vm1949 = vweird.f32 %v1943
  %vm1950 = vmor %vm1948, %vm1949
  %v1951 = vsel %vm1950, %v1943, %v1947
  %v1952 = vand.u32 2147483647, %v1781
  %vm1953 = vcmp.eq.f32.partialorder %v1952, 8.507059e+37
  %v1954 = vand.u32 %v1781, 2147483648
  %v1955 = vor.u32 1.1754944e-38, %v1954
  %v1956 = vsel %vm1953, %v1955, %v1951
  %v1957 = vmul.f32 1.0, %v1956
  %v1958 = vrcp.pop %v1782
  %v1959 = vmul.f32 %v1782, %v1958
  %v1960 = vsub.f32 1.0, %v1959
  %v1961 = vmul.f32 %v1958, %v1960
  %v1962 = vadd.f32 %v1958, %v1961
  %vm1963 = vweird.f32 %v1782
  %vm1964 = vweird.f32 %v1958
  %vm1965 = vmor %vm1963, %vm1964
  %v1966 = vsel %vm1965, %v1958, %v1962
  %v1967 = vand.u32 2147483647, %v1782
  %vm1968 = vcmp.eq.f32.partialorder %v1967, 8.507059e+37
  %v1969 = vand.u32 %v1782, 2147483648
  %v1970 = vor.u32 1.1754944e-38, %v1969
  %v1971 = vsel %vm1968, %v1970, %v1966
  %v1972 = vmul.f32 1.0, %v1971
  %v1973 = vrcp.pop %v1783
  %v1974 = vmul.f32 %v1783, %v1973
  %v1975 = vsub.f32 1.0, %v1974
  %v1976 = vmul.f32 %v1973, %v1975
  %v1977 = vadd.f32 %v1973, %v1976
  %vm1978 = vweird.f32 %v1783
  %vm1979 = vweird.f32 %v1973
  %vm1980 = vmor %vm1978, %vm1979
  %v1981 = vsel %vm1980, %v1973, %v1977
  %v1982 = vand.u32 2147483647, %v1783
  %vm1983 = vcmp.eq.f32.partialorder %v1982, 8.507059e+37
  %v1984 = vand.u32 %v1783, 2147483648
  %v1985 = vor.u32 1.1754944e-38, %v1984
  %v1986 = vsel %vm1983, %v1985, %v1981
  %v1987 = vmul.f32 1.0, %v1986
  %v1988 = vrcp.pop %v1784
  %v1989 = vmul.f32 %v1784, %v1988
  %v1990 = vsub.f32 1.0, %v1989
  %v1991 = vmul.f32 %v1988, %v1990
  %v1992 = vadd.f32 %v1988, %v1991
  %vm1993 = vweird.f32 %v1784
  %vm1994 = vweird.f32 %v1988
  %vm1995 = vmor %vm1993, %vm1994
  %v1996 = vsel %vm1995, %v1988, %v1992
  %v1997 = vand.u32 2147483647, %v1784
  %vm1998 = vcmp.eq.f32.partialorder %v1997, 8.507059e+37
  %v1999 = vand.u32 %v1784, 2147483648
  %v2000 = vor.u32 1.1754944e-38, %v1999
  %v2001 = vsel %vm1998, %v2000, %v1996
  %v2002 = vmul.f32 1.0, %v2001
  %v2003 = vrcp.pop %v1785
  %v2004 = vmul.f32 %v1785, %v2003
  %v2005 = vsub.f32 1.0, %v2004
  %v2006 = vmul.f32 %v2003, %v2005
  %v2007 = vadd.f32 %v2003, %v2006
  %vm2008 = vweird.f32 %v1785
  %vm2009 = vweird.f32 %v2003
  %vm2010 = vmor %vm2008, %vm2009
  %v2011 = vsel %vm2010, %v2003, %v2007
  %v2012 = vand.u32 2147483647, %v1785
  %vm2013 = vcmp.eq.f32.partialorder %v2012, 8.507059e+37
  %v2014 = vand.u32 %v1785, 2147483648
  %v2015 = vor.u32 1.1754944e-38, %v2014
  %v2016 = vsel %vm2013, %v2015, %v2011
  %v2017 = vmul.f32 1.0, %v2016
  %v2018 = vrcp.pop %v1786
  %v2019 = vmul.f32 %v1786, %v2018
  %v2020 = vsub.f32 1.0, %v2019
  %v2021 = vmul.f32 %v2018, %v2020
  %v2022 = vadd.f32 %v2018, %v2021
  %vm2023 = vweird.f32 %v1786
  %vm2024 = vweird.f32 %v2018
  %vm2025 = vmor %vm2023, %vm2024
  %v2026 = vsel %vm2025, %v2018, %v2022
  %v2027 = vand.u32 2147483647, %v1786
  %vm2028 = vcmp.eq.f32.partialorder %v2027, 8.507059e+37
  %v2029 = vand.u32 %v1786, 2147483648
  %v2030 = vor.u32 1.1754944e-38, %v2029
  %v2031 = vsel %vm2028, %v2030, %v2026
  %v2032 = vmul.f32 1.0, %v2031
  %v2033 = vrcp.pop %v1787
  %v2034 = vmul.f32 %v1787, %v2033
  %v2035 = vsub.f32 1.0, %v2034
  %v2036 = vmul.f32 %v2033, %v2035
  %v2037 = vadd.f32 %v2033, %v2036
  %vm2038 = vweird.f32 %v1787
  %vm2039 = vweird.f32 %v2033
  %vm2040 = vmor %vm2038, %vm2039
  %v2041 = vsel %vm2040, %v2033, %v2037
  %v2042 = vand.u32 2147483647, %v1787
  %vm2043 = vcmp.eq.f32.partialorder %v2042, 8.507059e+37
  %v2044 = vand.u32 %v1787, 2147483648
  %v2045 = vor.u32 1.1754944e-38, %v2044
  %v2046 = vsel %vm2043, %v2045, %v2041
  %v2047 = vmul.f32 1.0, %v2046
  %v2048 = vrcp.pop %v1788
  %v2049 = vmul.f32 %v1788, %v2048
  %v2050 = vsub.f32 1.0, %v2049
  %v2051 = vmul.f32 %v2048, %v2050
  %v2052 = vadd.f32 %v2048, %v2051
  %vm2053 = vweird.f32 %v1788
  %vm2054 = vweird.f32 %v2048
  %vm2055 = vmor %vm2053, %vm2054
  %v2056 = vsel %vm2055, %v2048, %v2052
  %v2057 = vand.u32 2147483647, %v1788
  %vm2058 = vcmp.eq.f32.partialorder %v2057, 8.507059e+37
  %v2059 = vand.u32 %v1788, 2147483648
  %v2060 = vor.u32 1.1754944e-38, %v2059
  %v2061 = vsel %vm2058, %v2060, %v2056
  %v2062 = vmul.f32 1.0, %v2061
  %v2063 = vrcp.pop %v1789
  %v2064 = vmul.f32 %v1789, %v2063
  %v2065 = vsub.f32 1.0, %v2064
  %v2066 = vmul.f32 %v2063, %v2065
  %v2067 = vadd.f32 %v2063, %v2066
  %vm2068 = vweird.f32 %v1789
  %vm2069 = vweird.f32 %v2063
  %vm2070 = vmor %vm2068, %vm2069
  %v2071 = vsel %vm2070, %v2063, %v2067
  %v2072 = vand.u32 2147483647, %v1789
  %vm2073 = vcmp.eq.f32.partialorder %v2072, 8.507059e+37
  %v2074 = vand.u32 %v1789, 2147483648
  %v2075 = vor.u32 1.1754944e-38, %v2074
  %v2076 = vsel %vm2073, %v2075, %v2071
  %v2077 = vmul.f32 1.0, %v2076
  %v2078 = vrcp.pop %v1790
  %v2079 = vmul.f32 %v1790, %v2078
  %v2080 = vsub.f32 1.0, %v2079
  %v2081 = vmul.f32 %v2078, %v2080
  %v2082 = vadd.f32 %v2078, %v2081
  %vm2083 = vweird.f32 %v1790
  %vm2084 = vweird.f32 %v2078
  %vm2085 = vmor %vm2083, %vm2084
  %v2086 = vsel %vm2085, %v2078, %v2082
  %v2087 = vand.u32 2147483647, %v1790
  %vm2088 = vcmp.eq.f32.partialorder %v2087, 8.507059e+37
  %v2089 = vand.u32 %v1790, 2147483648
  %v2090 = vor.u32 1.1754944e-38, %v2089
  %v2091 = vsel %vm2088, %v2090, %v2086
  %v2092 = vmul.f32 1.0, %v2091
  %v2093 = vrcp.pop %v1791
  %v2094 = vmul.f32 %v1791, %v2093
  %v2095 = vsub.f32 1.0, %v2094
  %v2096 = vmul.f32 %v2093, %v2095
  %v2097 = vadd.f32 %v2093, %v2096
  %vm2098 = vweird.f32 %v1791
  %vm2099 = vweird.f32 %v2093
  %vm2100 = vmor %vm2098, %vm2099
  %v2101 = vsel %vm2100, %v2093, %v2097
  %v2102 = vand.u32 2147483647, %v1791
  %vm2103 = vcmp.eq.f32.partialorder %v2102, 8.507059e+37
  %v2104 = vand.u32 %v1791, 2147483648
  %v2105 = vor.u32 1.1754944e-38, %v2104
  %v2106 = vsel %vm2103, %v2105, %v2101
  %v2107 = vmul.f32 1.0, %v2106
  %v2108 = vrcp.pop %v1792
  %v2109 = vmul.f32 %v1792, %v2108
  %v2110 = vsub.f32 1.0, %v2109
  %v2111 = vmul.f32 %v2108, %v2110
  %v2112 = vadd.f32 %v2108, %v2111
  %vm2113 = vweird.f32 %v1792
  %vm2114 = vweird.f32 %v2108
  %vm2115 = vmor %vm2113, %vm2114
  %v2116 = vsel %vm2115, %v2108, %v2112
  %v2117 = vand.u32 2147483647, %v1792
  %vm2118 = vcmp.eq.f32.partialorder %v2117, 8.507059e+37
  %v2119 = vand.u32 %v1792, 2147483648
  %v2120 = vor.u32 1.1754944e-38, %v2119
  %v2121 = vsel %vm2118, %v2120, %v2116
  %v2122 = vmul.f32 1.0, %v2121
  %v2123 = vrcp.pop %v1793
  %v2124 = vmul.f32 %v1793, %v2123
  %v2125 = vsub.f32 1.0, %v2124
  %v2126 = vmul.f32 %v2123, %v2125
  %v2127 = vadd.f32 %v2123, %v2126
  %vm2128 = vweird.f32 %v1793
  %vm2129 = vweird.f32 %v2123
  %vm2130 = vmor %vm2128, %vm2129
  %v2131 = vsel %vm2130, %v2123, %v2127
  %v2132 = vand.u32 2147483647, %v1793
  %vm2133 = vcmp.eq.f32.partialorder %v2132, 8.507059e+37
  %v2134 = vand.u32 %v1793, 2147483648
  %v2135 = vor.u32 1.1754944e-38, %v2134
  %v2136 = vsel %vm2133, %v2135, %v2131
  %v2137 = vmul.f32 1.0, %v2136
  %v2138 = vrcp.pop %v1794
  %v2139 = vmul.f32 %v1794, %v2138
  %v2140 = vsub.f32 1.0, %v2139
  %v2141 = vmul.f32 %v2138, %v2140
  %v2142 = vadd.f32 %v2138, %v2141
  %vm2143 = vweird.f32 %v1794
  %vm2144 = vweird.f32 %v2138
  %vm2145 = vmor %vm2143, %vm2144
  %v2146 = vsel %vm2145, %v2138, %v2142
  %v2147 = vand.u32 2147483647, %v1794
  %vm2148 = vcmp.eq.f32.partialorder %v2147, 8.507059e+37
  %v2149 = vand.u32 %v1794, 2147483648
  %v2150 = vor.u32 1.1754944e-38, %v2149
  %v2151 = vsel %vm2148, %v2150, %v2146
  %v2152 = vmul.f32 1.0, %v2151
  %v2153 = vrcp.pop %v1795
  %v2154 = vmul.f32 %v1795, %v2153
  %v2155 = vsub.f32 1.0, %v2154
  %v2156 = vmul.f32 %v2153, %v2155
  %v2157 = vadd.f32 %v2153, %v2156
  %vm2158 = vweird.f32 %v1795
  %vm2159 = vweird.f32 %v2153
  %vm2160 = vmor %vm2158, %vm2159
  %v2161 = vsel %vm2160, %v2153, %v2157
  %v2162 = vand.u32 2147483647, %v1795
  %vm2163 = vcmp.eq.f32.partialorder %v2162, 8.507059e+37
  %v2164 = vand.u32 %v1795, 2147483648
  %v2165 = vor.u32 1.1754944e-38, %v2164
  %v2166 = vsel %vm2163, %v2165, %v2161
  %v2167 = vmul.f32 1.0, %v2166
  %v2168 = vrcp.pop %v1796
  %v2169 = vmul.f32 %v1796, %v2168
  %v2170 = vsub.f32 1.0, %v2169
  %v2171 = vmul.f32 %v2168, %v2170
  %v2172 = vadd.f32 %v2168, %v2171
  %vm2173 = vweird.f32 %v1796
  %vm2174 = vweird.f32 %v2168
  %vm2175 = vmor %vm2173, %vm2174
  %v2176 = vsel %vm2175, %v2168, %v2172
  %v2177 = vand.u32 2147483647, %v1796
  %vm2178 = vcmp.eq.f32.partialorder %v2177, 8.507059e+37
  %v2179 = vand.u32 %v1796, 2147483648
  %v2180 = vor.u32 1.1754944e-38, %v2179
  %v2181 = vsel %vm2178, %v2180, %v2176
  %v2182 = vmul.f32 1.0, %v2181
  %v2183 = vrcp.pop %v1797
  %v2184 = vmul.f32 %v1797, %v2183
  %v2185 = vsub.f32 1.0, %v2184
  %v2186 = vmul.f32 %v2183, %v2185
  %v2187 = vadd.f32 %v2183, %v2186
  %vm2188 = vweird.f32 %v1797
  %vm2189 = vweird.f32 %v2183
  %vm2190 = vmor %vm2188, %vm2189
  %v2191 = vsel %vm2190, %v2183, %v2187
  %v2192 = vand.u32 2147483647, %v1797
  %vm2193 = vcmp.eq.f32.partialorder %v2192, 8.507059e+37
  %v2194 = vand.u32 %v1797, 2147483648
  %v2195 = vor.u32 1.1754944e-38, %v2194
  %v2196 = vsel %vm2193, %v2195, %v2191
  %v2197 = vmul.f32 1.0, %v2196
  %v2198 = vrcp.pop %v1798
  %v2199 = vmul.f32 %v1798, %v2198
  %v2200 = vsub.f32 1.0, %v2199
  %v2201 = vmul.f32 %v2198, %v2200
  %v2202 = vadd.f32 %v2198, %v2201
  %vm2203 = vweird.f32 %v1798
  %vm2204 = vweird.f32 %v2198
  %vm2205 = vmor %vm2203, %vm2204
  %v2206 = vsel %vm2205, %v2198, %v2202
  %v2207 = vand.u32 2147483647, %v1798
  %vm2208 = vcmp.eq.f32.partialorder %v2207, 8.507059e+37
  %v2209 = vand.u32 %v1798, 2147483648
  %v2210 = vor.u32 1.1754944e-38, %v2209
  %v2211 = vsel %vm2208, %v2210, %v2206
  %v2212 = vmul.f32 1.0, %v2211
  %v2213 = vrcp.pop %v1799
  %v2214 = vmul.f32 %v1799, %v2213
  %v2215 = vsub.f32 1.0, %v2214
  %v2216 = vmul.f32 %v2213, %v2215
  %v2217 = vadd.f32 %v2213, %v2216
  %vm2218 = vweird.f32 %v1799
  %vm2219 = vweird.f32 %v2213
  %vm2220 = vmor %vm2218, %vm2219
  %v2221 = vsel %vm2220, %v2213, %v2217
  %v2222 = vand.u32 2147483647, %v1799
  %vm2223 = vcmp.eq.f32.partialorder %v2222, 8.507059e+37
  %v2224 = vand.u32 %v1799, 2147483648
  %v2225 = vor.u32 1.1754944e-38, %v2224
  %v2226 = vsel %vm2223, %v2225, %v2221
  %v2227 = vmul.f32 1.0, %v2226
  %v2228 = vrcp.pop %v1800
  %v2229 = vmul.f32 %v1800, %v2228
  %v2230 = vsub.f32 1.0, %v2229
  %v2231 = vmul.f32 %v2228, %v2230
  %v2232 = vadd.f32 %v2228, %v2231
  %vm2233 = vweird.f32 %v1800
  %vm2234 = vweird.f32 %v2228
  %vm2235 = vmor %vm2233, %vm2234
  %v2236 = vsel %vm2235, %v2228, %v2232
  %v2237 = vand.u32 2147483647, %v1800
  %vm2238 = vcmp.eq.f32.partialorder %v2237, 8.507059e+37
  %v2239 = vand.u32 %v1800, 2147483648
  %v2240 = vor.u32 1.1754944e-38, %v2239
  %v2241 = vsel %vm2238, %v2240, %v2236
  %v2242 = vmul.f32 1.0, %v2241
  %v2243 = vrcp.pop %v1801
  %v2244 = vmul.f32 %v1801, %v2243
  %v2245 = vsub.f32 1.0, %v2244
  %v2246 = vmul.f32 %v2243, %v2245
  %v2247 = vadd.f32 %v2243, %v2246
  %vm2248 = vweird.f32 %v1801
  %vm2249 = vweird.f32 %v2243
  %vm2250 = vmor %vm2248, %vm2249
  %v2251 = vsel %vm2250, %v2243, %v2247
  %v2252 = vand.u32 2147483647, %v1801
  %vm2253 = vcmp.eq.f32.partialorder %v2252, 8.507059e+37
  %v2254 = vand.u32 %v1801, 2147483648
  %v2255 = vor.u32 1.1754944e-38, %v2254
  %v2256 = vsel %vm2253, %v2255, %v2251
  %v2257 = vmul.f32 1.0, %v2256
  %v2258 = vrcp.pop %v1802
  %v2259 = vmul.f32 %v1802, %v2258
  %v2260 = vsub.f32 1.0, %v2259
  %v2261 = vmul.f32 %v2258, %v2260
  %v2262 = vadd.f32 %v2258, %v2261
  %vm2263 = vweird.f32 %v1802
  %vm2264 = vweird.f32 %v2258
  %vm2265 = vmor %vm2263, %vm2264
  %v2266 = vsel %vm2265, %v2258, %v2262
  %v2267 = vand.u32 2147483647, %v1802
  %vm2268 = vcmp.eq.f32.partialorder %v2267, 8.507059e+37
  %v2269 = vand.u32 %v1802, 2147483648
  %v2270 = vor.u32 1.1754944e-38, %v2269
  %v2271 = vsel %vm2268, %v2270, %v2266
  %v2272 = vmul.f32 1.0, %v2271
  %v2273 = vrcp.pop %v1803
  %v2274 = vmul.f32 %v1803, %v2273
  %v2275 = vsub.f32 1.0, %v2274
  %v2276 = vmul.f32 %v2273, %v2275
  %v2277 = vadd.f32 %v2273, %v2276
  %vm2278 = vweird.f32 %v1803
  %vm2279 = vweird.f32 %v2273
  %vm2280 = vmor %vm2278, %vm2279
  %v2281 = vsel %vm2280, %v2273, %v2277
  %v2282 = vand.u32 2147483647, %v1803
  %vm2283 = vcmp.eq.f32.partialorder %v2282, 8.507059e+37
  %v2284 = vand.u32 %v1803, 2147483648
  %v2285 = vor.u32 1.1754944e-38, %v2284
  %v2286 = vsel %vm2283, %v2285, %v2281
  %v2287 = vmul.f32 1.0, %v2286
  %v2288 = vrcp.pop %v1804
  %v2289 = vmul.f32 %v1804, %v2288
  %v2290 = vsub.f32 1.0, %v2289
  %v2291 = vmul.f32 %v2288, %v2290
  %v2292 = vadd.f32 %v2288, %v2291
  %vm2293 = vweird.f32 %v1804
  %vm2294 = vweird.f32 %v2288
  %vm2295 = vmor %vm2293, %vm2294
  %v2296 = vsel %vm2295, %v2288, %v2292
  %v2297 = vand.u32 2147483647, %v1804
  %vm2298 = vcmp.eq.f32.partialorder %v2297, 8.507059e+37
  %v2299 = vand.u32 %v1804, 2147483648
  %v2300 = vor.u32 1.1754944e-38, %v2299
  %v2301 = vsel %vm2298, %v2300, %v2296
  %v2302 = vmul.f32 1.0, %v2301
  %v2303 = vrcp.pop %v1805
  %v2304 = vmul.f32 %v1805, %v2303
  %v2305 = vsub.f32 1.0, %v2304
  %v2306 = vmul.f32 %v2303, %v2305
  %v2307 = vadd.f32 %v2303, %v2306
  %vm2308 = vweird.f32 %v1805
  %vm2309 = vweird.f32 %v2303
  %vm2310 = vmor %vm2308, %vm2309
  %v2311 = vsel %vm2310, %v2303, %v2307
  %v2312 = vand.u32 2147483647, %v1805
  %vm2313 = vcmp.eq.f32.partialorder %v2312, 8.507059e+37
  %v2314 = vand.u32 %v1805, 2147483648
  %v2315 = vor.u32 1.1754944e-38, %v2314
  %v2316 = vsel %vm2313, %v2315, %v2311
  %v2317 = vmul.f32 1.0, %v2316
  %v2318 = vrcp.pop %v1806
  %v2319 = vmul.f32 %v1806, %v2318
  %v2320 = vsub.f32 1.0, %v2319
  %v2321 = vmul.f32 %v2318, %v2320
  %v2322 = vadd.f32 %v2318, %v2321
  %vm2323 = vweird.f32 %v1806
  %vm2324 = vweird.f32 %v2318
  %vm2325 = vmor %vm2323, %vm2324
  %v2326 = vsel %vm2325, %v2318, %v2322
  %v2327 = vand.u32 2147483647, %v1806
  %vm2328 = vcmp.eq.f32.partialorder %v2327, 8.507059e+37
  %v2329 = vand.u32 %v1806, 2147483648
  %v2330 = vor.u32 1.1754944e-38, %v2329
  %v2331 = vsel %vm2328, %v2330, %v2326
  %v2332 = vmul.f32 1.0, %v2331
  %v2333 = vrcp.pop %v1807
  %v2334 = vmul.f32 %v1807, %v2333
  %v2335 = vsub.f32 1.0, %v2334
  %v2336 = vmul.f32 %v2333, %v2335
  %v2337 = vadd.f32 %v2333, %v2336
  %vm2338 = vweird.f32 %v1807
  %vm2339 = vweird.f32 %v2333
  %vm2340 = vmor %vm2338, %vm2339
  %v2341 = vsel %vm2340, %v2333, %v2337
  %v2342 = vand.u32 2147483647, %v1807
  %vm2343 = vcmp.eq.f32.partialorder %v2342, 8.507059e+37
  %v2344 = vand.u32 %v1807, 2147483648
  %v2345 = vor.u32 1.1754944e-38, %v2344
  %v2346 = vsel %vm2343, %v2345, %v2341
  %v2347 = vmul.f32 1.0, %v2346
  %v2348 = vmul.f32 %v1628, %v1822
  %v2349 = vmul.f32 %v1629, %v1837
  %v2350 = vmul.f32 %v1630, %v1852
  %v2351 = vmul.f32 %v1631, %v1867
  %v2352 = vmul.f32 %v1632, %v1882
  %v2353 = vmul.f32 %v1633, %v1897
  %v2354 = vmul.f32 %v1634, %v1912
  %v2355 = vmul.f32 %v1635, %v1927
  %v2356 = vmul.f32 %v1636, %v1942
  %v2357 = vmul.f32 %v1637, %v1957
  %v2358 = vmul.f32 %v1638, %v1972
  %v2359 = vmul.f32 %v1639, %v1987
  %v2360 = vmul.f32 %v1640, %v2002
  %v2361 = vmul.f32 %v1641, %v2017
  %v2362 = vmul.f32 %v1642, %v2032
  %v2363 = vmul.f32 %v1643, %v2047
  %v2364 = vmul.f32 %v1644, %v2062
  %v2365 = vmul.f32 %v1645, %v2077
  %v2366 = vmul.f32 %v1646, %v2092
  %v2367 = vmul.f32 %v1647, %v2107
  %v2368 = vmul.f32 %v1648, %v2122
  %v2369 = vmul.f32 %v1649, %v2137
  %v2370 = vmul.f32 %v1650, %v2152
  %v2371 = vmul.f32 %v1651, %v2167
  %v2372 = vmul.f32 %v1652, %v2182
  %v2373 = vmul.f32 %v1653, %v2197
  %v2374 = vmul.f32 %v1654, %v2212
  %v2375 = vmul.f32 %v1655, %v2227
  %v2376 = vmul.f32 %v1656, %v2242
  %v2377 = vmul.f32 %v1657, %v2257
  %v2378 = vmul.f32 %v1658, %v2272
  %v2379 = vmul.f32 %v1659, %v2287
  %v2380 = vmul.f32 %v1660, %v2302
  %v2381 = vmul.f32 %v1661, %v2317
  %v2382 = vmul.f32 %v1662, %v2332
  %v2383 = vmul.f32 %v1663, %v2347
  %2384 = vst [vmem:[%s3] sm:$0xff] %v2348
  %2385 = vst [vmem:[%s3 + $0x8] sm:$0xff] %v2349
  %2386 = vst [vmem:[%s3 + $0x10] sm:$0xff] %v2350
  %2387 = vst [vmem:[%s3 + $0x18] sm:$0xff] %v2351
  %2388 = vst [vmem:[%s3 + $0x20] sm:$0xff] %v2352
  %2389 = vst [vmem:[%s3 + $0x28] sm:$0xff] %v2353
  %2390 = vst [vmem:[%s3 + $0x30] sm:$0xff] %v2354
  %2391 = vst [vmem:[%s3 + $0x38] sm:$0xff] %v2355
  %2392 = vst [vmem:[%s3 + $0x40] sm:$0xff] %v2356
  %2393 = vst [vmem:[%s3 + $0x48] sm:$0xff] %v2357
  %2394 = vst [vmem:[%s3 + $0x50] sm:$0xff] %v2358
  %2395 = vst [vmem:[%s3 + $0x58] sm:$0xff] %v2359
  %2396 = vst [vmem:[%s3 + $0x60] sm:$0xff] %v2360
  %2397 = vst [vmem:[%s3 + $0x68] sm:$0xff] %v2361
  %2398 = vst [vmem:[%s3 + $0x70] sm:$0xff] %v2362
  %2399 = vst [vmem:[%s3 + $0x78] sm:$0xff] %v2363
  %2400 = vst [vmem:[%s3 + $0x80] sm:$0xff] %v2364
  %2401 = vst [vmem:[%s3 + $0x88] sm:$0xff] %v2365
  %2402 = vst [vmem:[%s3 + $0x90] sm:$0xff] %v2366
  %2403 = vst [vmem:[%s3 + $0x98] sm:$0xff] %v2367
  %2404 = vst [vmem:[%s3 + $0xa0] sm:$0xff] %v2368
  %2405 = vst [vmem:[%s3 + $0xa8] sm:$0xff] %v2369
  %2406 = vst [vmem:[%s3 + $0xb0] sm:$0xff] %v2370
  %2407 = vst [vmem:[%s3 + $0xb8] sm:$0xff] %v2371
  %2408 = vst [vmem:[%s3 + $0xc0] sm:$0xff] %v2372
  %2409 = vst [vmem:[%s3 + $0xc8] sm:$0xff] %v2373
  %2410 = vst [vmem:[%s3 + $0xd0] sm:$0xff] %v2374
  %2411 = vst [vmem:[%s3 + $0xd8] sm:$0xff] %v2375
  %2412 = vst [vmem:[%s3 + $0xe0] sm:$0xff] %v2376
  %2413 = vst [vmem:[%s3 + $0xe8] sm:$0xff] %v2377
  %2414 = vst [vmem:[%s3 + $0xf0] sm:$0xff] %v2378
  %2415 = vst [vmem:[%s3 + $0xf8] sm:$0xff] %v2379
  %2416 = vst [vmem:[%s3 + $0x100] sm:$0xff] %v2380
  %2417 = vst [vmem:[%s3 + $0x108] sm:$0xff] %v2381
  %2418 = vst [vmem:[%s3 + $0x110] sm:$0xff] %v2382
  %2419 = vst [vmem:[%s3 + $0x118] sm:$0xff] %v2383
  // Predicated region
  $region14: #{gated_generator_forward.63} parent=0 // pred_check
    _
  $region15: #{gated_generator_forward.63} parent=0 // pred_check_branch
    %2421 = sbr.rel (0) target = $region17
  $region16: #{gated_generator_forward.63} parent=0 // pred_region
    _
  $region17: #{gated_generator_forward.63} parent=0 // pred_fallthru
    _
  // Predicated region
  $region18: #{gated_generator_forward.63} parent=0 // pred_check
    _
  $region19: #{gated_generator_forward.63} parent=0 // pred_check_branch
    %2423 = sbr.rel (0) target = $region21
  $region20: #{gated_generator_forward.63} parent=0 // pred_region
    _
  $region21: #{gated_generator_forward.63} parent=0 // pred_fallthru
    _

</llo_original>
